<compile_context>
chip_gen: v7x
topology: tpu7x:2x2x1
jax: 0.10.0
libtpu: 0.0.40
codegen_flags: <defaults>
</compile_context>

<pallas_src>
import math

import jax
import jax.numpy as jnp
from jax.experimental import pallas as pl
from jax.experimental.pallas import tpu as pltpu

# Manifold / BN constants (module __init__ defaults).
K = 1.0
SQRT_K = 1.0
BN_GAMMA = 1.0
BN_RUNNING_VAR = 1.0
BN_EPS = 1e-5
# LorentzBatchNorm2d eval scale: gamma / sqrt(running_var + eps).
BN_SCALE = BN_GAMMA / math.sqrt(BN_RUNNING_VAR + BN_EPS)

KK_TAPS = 9      # 3x3 kernel, padding 1 (fixed by the module)
LANES = 128      # TPU lane width; the flattened pixel axis is chunked to this


def _fast_recip(x):
    """EUP approximate reciprocal + one Newton step: no true divide, ~f32 accurate."""
    r = pl.reciprocal(x, approx=True)
    return r * (2.0 - x * r)


def _fused_conv_bn_relu_kernel(taps_ref, w_ref, b_ref, o_ref):
    """Fused (implicit pad+projx) -> LorentzConv2d(3x3,p=1) -> LorentzBatchNorm2d(eval)
    -> LorentzReLU for one (batch, pixel-band) tile, channel-major lane-dense layout.

    taps_ref : (1, 9*C_img, band_chunks, 128)  VMEM  -- 27 shifted space taps per pixel
    w_ref    : (C_out, 1 + 9*C_img)            SMEM  -- LorentzFullyConnected nn.Linear W
    b_ref    : (C_out,)                        SMEM  -- LorentzFullyConnected bias
    o_ref    : (1, C_out, band_chunks, 128)    VMEM  -- [time, space...] output tile
    """
    _, f_sp, _, _ = taps_ref.shape
    _, c_out, _, _ = o_ref.shape
    c_sp = c_out - 1

    # ---- Pass 0: sum of squares over the 27 space taps (single live accumulator) --------
    sq = None
    for f in range(f_sp):
        a = taps_ref[0, f, :, :]
        sq = a * a if sq is None else sq + a * a

    # Lorentz direct concatenation; the time taps are eliminated algebraically: in-bounds
    # taps have t^2 = k + ||s||^2, zero-padded taps clamp to sqrt(k) (t^2 = k), so
    #   t_resc^2 = KK*k - (KK-1)/k + sum_taps ||s_tap||^2.
    t0 = KK_TAPS * K - (KK_TAPS - 1.0) / K
    t_resc = jnp.sqrt(jnp.maximum(t0 + sq, 1e-8))

    # ---- Pass 1: LorentzConv2d linearized kernel, channel-outer / tap-inner -------------
    # Unrolled VPU FMAs with SMEM scalar weights (deliberately NOT the MXU: K=27, N=8).
    # Only the space rows of the linear map are used (LorentzFullyConnected recomputes
    # time from the space norm).  Conv outputs are parked in o_ref; BN/ReLU is pass 2.
    ssq = None
    for c in range(c_sp):
        acc = t_resc * w_ref[1 + c, 0] + b_ref[1 + c]
        for f in range(f_sp):
            acc = acc + taps_ref[0, f, :, :] * w_ref[1 + c, 1 + f]
        o_ref[0, 1 + c, :, :] = acc.astype(o_ref.dtype)
        ssq = acc * acc if ssq is None else ssq + acc * acc

    # ---- LorentzBatchNorm2d (eval, fresh buffers): expmap0(logmap0(y) * BN_SCALE) -------
    yt = jnp.sqrt(ssq + K)                               # add_time: t = sqrt(||s||^2 + k)
    inv_norm = jax.lax.rsqrt(jnp.maximum(ssq, 1e-15))    # one rsqrt shared below
    sp_norm = ssq * inv_norm                             # ||s|| = ssq * rsqrt(ssq)
    # arccosh(yt/sqrt(k)) = log((yt + ||s||)/sqrt(k)); built from ssq directly (no z^2-1
    # cancellation near the origin).
    r = jnp.log((yt + sp_norm) * (1.0 / SQRT_K)) * BN_SCALE
    e = jnp.exp(r)
    sinh_r = 0.5 * (e - _fast_recip(e))                  # one exp + refined reciprocal
    bn_scale_sp = (SQRT_K * sinh_r) * inv_norm           # sqrt(k)*sinh(r)/||s||

    # ---- Pass 2: LorentzReLU (ReLU on BN'd space, recompute time) ------------------------
    osq = None
    for c in range(c_sp):
        s = jnp.maximum(o_ref[0, 1 + c, :, :].astype(jnp.float32) * bn_scale_sp, 0.0)
        o_ref[0, 1 + c, :, :] = s.astype(o_ref.dtype)
        osq = s * s if osq is None else osq + s * s
    o_ref[0, 0, :, :] = jnp.sqrt(osq + K).astype(o_ref.dtype)


def _pick_band_chunks(n_chunks, batch, target_px=8192):
    """128-lane pixel chunks per grid step.

    * multiple of 8 (sublane tiling) that divides n_chunks, or the full axis;
    * ~8192 px per step: with the channel-outer contraction only ~4 full-tile f32 arrays
      are live, so 64 chunks ~ 32 vregs (fits the 64-vreg file) while the ~0.35 us
      per-step overhead drops under ~15%.  VMEM is NOT the constraint: double-buffered
      taps+output at this size are ~1-2 MiB, far below even v7x's 64 MiB.
    * keep >= 2 parallel grid steps when possible so both v7x TensorCores get work
      (irrelevant on single-TC v5e/v6e).
    """
    target = max(1, target_px // LANES)
    cand = [d for d in range(8, n_chunks + 1, 8) if n_chunks % d == 0]
    if not cand:
        return n_chunks  # tiny pixel count: block dim equals the array dim (still legal)
    fit = [d for d in cand if d <= target]
    bc = max(fit) if fit else min(cand)
    if batch * (n_chunks // bc) < 2:
        smaller = [d for d in cand if n_chunks // d >= 2]
        if smaller:
            bc = max(smaller)
    return bc


def lorentz_input_block(x_nchw, w_full, b_full, *, band_chunks=None,
                        out_dtype=jnp.float32, channels_last=True):
    """Forward of LorentzInputBlock (eval).

    x_nchw : (B, img_dim, H, W) float image.
    w_full : (in_channels+1, 1 + 9*img_dim) nn.Linear weight of the LorentzFullyConnected.
    b_full : (in_channels+1,) its bias.
    Returns channel-last (B, H, W, in_channels+1) like the PyTorch module (set
    channels_last=False to keep the kernel's channel-major layout and skip the transpose
    when the consumer is another channel-major kernel).
    """
    B, C_img, H, W = x_nchw.shape
    C_out = w_full.shape[0]
    assert w_full.shape[1] == 1 + KK_TAPS * C_img

    x = x_nchw.astype(jnp.float32)
    # Spatial zero-padding of the raw image only; neither the hyperboloid time channel nor
    # a (B,H,W,9,C+1) patch tensor is ever materialized (both fused into the kernel).
    xp = jnp.pad(x, ((0, 0), (0, 0), (1, 1), (1, 1)))

    # im2col in the wrapper: 9 tap-shifted contiguous views, stacked tap-major /
    # channel-minor (matching the nn.Linear column order), pixels flattened into 128-lane
    # chunks so every in-kernel array is lane-dense.  ~9x reads of the tiny raw image,
    # cheap next to the VALU-bound kernel and the (C_out x) larger output.
    tap_views = [xp[:, :, di:di + H, dj:dj + W]
                 for di in range(3) for dj in range(3)]
    taps = jnp.stack(tap_views, axis=1).reshape(B, KK_TAPS * C_img, H * W)

    n_px = H * W
    pad_px = (-n_px) % LANES
    if pad_px:
        taps = jnp.pad(taps, ((0, 0), (0, 0), (0, pad_px)))
    n_chunks = (n_px + pad_px) // LANES
    taps = taps.reshape(B, KK_TAPS * C_img, n_chunks, LANES)

    if band_chunks is None:
        band_chunks = _pick_band_chunks(n_chunks, B)
    assert n_chunks % band_chunks == 0
    assert band_chunks % 8 == 0 or band_chunks == n_chunks
    n_band = n_chunks // band_chunks

    feat_spec = pl.BlockSpec((1, KK_TAPS * C_img, band_chunks, LANES),
                             lambda b, r: (b, 0, r, 0))
    smem_spec = pl.BlockSpec(memory_space=pltpu.MemorySpace.SMEM)
    out_spec = pl.BlockSpec((1, C_out, band_chunks, LANES), lambda b, r: (b, 0, r, 0))

    out = pl.pallas_call(
        _fused_conv_bn_relu_kernel,
        out_shape=jax.ShapeDtypeStruct((B, C_out, n_chunks, LANES), out_dtype),
        grid=(B, n_band),
        in_specs=[feat_spec, smem_spec, smem_spec],
        out_specs=out_spec,
        compiler_params=pltpu.CompilerParams(
            dimension_semantics=("parallel", "parallel")),
    )(taps, w_full.astype(jnp.float32), b_full.astype(jnp.float32))

    out = out.reshape(B, C_out, n_chunks * LANES)[:, :, :n_px].reshape(B, C_out, H, W)
    if channels_last:
        # Module output layout; wrapper-side layout plumbing only (kernel stores are
        # lane-dense channel-major).
        out = jnp.transpose(out, (0, 2, 3, 1))
    return out


def _reference_forward(x_nchw, w_full, b_full):
    """Pure-JAX mirror of the PyTorch forward (eval), used only for validation."""
    B, C, H, W = x_nchw.shape
    x = jnp.transpose(x_nchw, (0, 2, 3, 1)).astype(jnp.float32)           # NHWC
    t = jnp.sqrt(K + jnp.sum(x * x, axis=-1, keepdims=True))              # F.pad(1,0)+projx
    xh = jnp.concatenate([t, x], axis=-1)                                 # (B,H,W,C+1)
    xp = jnp.pad(xh, ((0, 0), (1, 1), (1, 1), (0, 0)))
    taps = [xp[:, i:i + H, j:j + W, :] for i in range(3) for j in range(3)]
    pt = jnp.stack([tp[..., 0] for tp in taps], axis=-1)                  # (B,H,W,9)
    ps = jnp.concatenate([tp[..., 1:] for tp in taps], axis=-1)           # tap-major/ch-minor
    pt = jnp.maximum(pt, SQRT_K)
    t_resc = jnp.sqrt(jnp.maximum(
        jnp.sum(pt * pt, axis=-1, keepdims=True) - (KK_TAPS - 1.0) / K, 1e-8))
    feats = jnp.concatenate([t_resc, ps], axis=-1)                        # (B,H,W,1+9C)
    y = jnp.einsum("bhwf,of->bhwo", feats, w_full,
                   precision=jax.lax.Precision.HIGHEST) + b_full
    y_sp = y[..., 1:]
    ssq = jnp.sum(y_sp * y_sp, axis=-1, keepdims=True)
    yt = jnp.sqrt(ssq + K)
    sp_norm = jnp.sqrt(jnp.maximum(ssq, 1e-15))
    r = jnp.log((yt + sp_norm) / SQRT_K) * BN_SCALE                       # arccosh(yt/sqrt(k))
    bn_sp = SQRT_K * jnp.sinh(r) * (y_sp / sp_norm)
    s = jnp.maximum(bn_sp, 0.0)
    ot = jnp.sqrt(jnp.sum(s * s, axis=-1, keepdims=True) + K)
    return jnp.concatenate([ot, s], axis=-1)


if __name__ == "__main__":
    # Small deterministic setup: img_dim=3 (RGB), in_channels=8, 64x64 images, batch 2.
    B, img_dim, H, W = 2, 3, 64, 64
    in_channels = 8

    in_ch = img_dim + 1                       # LorentzConv2d in_channels (space+time)
    out_ch = in_channels + 1                  # LorentzConv2d out_channels (space+time)
    lin_features = (in_ch - 1) * 9 + 1        # (in_channels-1)*k*k + 1

    key = jax.random.PRNGKey(0)
    kx, kw, kb = jax.random.split(key, 3)

    # LorentzConv2d.reset_parameters: uniform(-stdv, stdv), stdv = sqrt(2/((in_ch-1)*k*k))
    stdv = math.sqrt(2.0 / ((in_ch - 1) * 9))
    w_full = jax.random.uniform(kw, (out_ch, lin_features), jnp.float32, -stdv, stdv)
    b_full = jax.random.uniform(kb, (out_ch,), jnp.float32, -stdv, stdv)
    x = jax.random.normal(kx, (B, img_dim, H, W), jnp.float32)

    fwd = jax.jit(lorentz_input_block)
    y = jax.block_until_ready(fwd(x, w_full, b_full))
    assert y.shape == (B, H, W, out_ch), y.shape

    # Output must lie on the hyperboloid: t^2 - ||space||^2 == k
    lor = y[..., 0] ** 2 - jnp.sum(y[..., 1:] ** 2, axis=-1)
    hyp_err = float(jnp.max(jnp.abs(lor - K)))
    assert hyp_err < 1e-3, hyp_err

    # Validate against a pure-JAX mirror of the PyTorch module.
    y_ref = _reference_forward(x, w_full, b_full)
    err = float(jnp.max(jnp.abs(y - y_ref)))
    assert err < 2e-3, err

    print("KERNEL_OK")
</pallas_src>

<mosaic_0001>
module attributes {stable_mosaic.version = 11 : i64} {
  func.func @_fused_conv_bn_relu_kernel(%arg0: i32, %arg1: i32, %arg2: memref<1x27x32x128xf32, #tpu.memory_space<vmem>>, %arg3: memref<9x28xf32, #tpu.memory_space<smem>>, %arg4: memref<9xf32, #tpu.memory_space<smem>>, %arg5: memref<1x9x32x128xf32, #tpu.memory_space<vmem>>) attributes {dimension_semantics = [#tpu.dimension_semantics<parallel>, #tpu.dimension_semantics<parallel>], iteration_bounds = array<i64: 2, 1>, scalar_prefetch = 0 : i64, scratch_operands = 0 : i64, tpu.core_type = #tpu.core_type<tc>, window_params = [{transform_indices = @transform_0, window_bounds = array<i64: 1, 27, 32, 128>}, {transform_indices = @transform_1, window_bounds = array<i64: 9, 28>}, {transform_indices = @transform_2, window_bounds = array<i64: 9>}, {transform_indices = @transform_3, window_bounds = array<i64: 1, 9, 32, 128>}]} {
    %c0 = arith.constant 0 : index
    %c0_0 = arith.constant 0 : index
    %c0_1 = arith.constant 0 : index
    %c0_2 = arith.constant 0 : index
    %0 = vector.load %arg2[%c0, %c0_0, %c0_1, %c0_2] : memref<1x27x32x128xf32, #tpu.memory_space<vmem>>, vector<1x1x32x128xf32>
    %1 = vector.shape_cast %0 : vector<1x1x32x128xf32> to vector<32x128xf32>
    %2 = arith.mulf %1, %1 : vector<32x128xf32>
    %c0_3 = arith.constant 0 : index
    %c1 = arith.constant 1 : index
    %c0_4 = arith.constant 0 : index
    %c0_5 = arith.constant 0 : index
    %3 = vector.load %arg2[%c0_3, %c1, %c0_4, %c0_5] : memref<1x27x32x128xf32, #tpu.memory_space<vmem>>, vector<1x1x32x128xf32>
    %4 = vector.shape_cast %3 : vector<1x1x32x128xf32> to vector<32x128xf32>
    %5 = arith.mulf %4, %4 : vector<32x128xf32>
    %6 = arith.addf %2, %5 : vector<32x128xf32>
    %c0_6 = arith.constant 0 : index
    %c2 = arith.constant 2 : index
    %c0_7 = arith.constant 0 : index
    %c0_8 = arith.constant 0 : index
    %7 = vector.load %arg2[%c0_6, %c2, %c0_7, %c0_8] : memref<1x27x32x128xf32, #tpu.memory_space<vmem>>, vector<1x1x32x128xf32>
    %8 = vector.shape_cast %7 : vector<1x1x32x128xf32> to vector<32x128xf32>
    %9 = arith.mulf %8, %8 : vector<32x128xf32>
    %10 = arith.addf %6, %9 : vector<32x128xf32>
    %c0_9 = arith.constant 0 : index
    %c3 = arith.constant 3 : index
    %c0_10 = arith.constant 0 : index
    %c0_11 = arith.constant 0 : index
    %11 = vector.load %arg2[%c0_9, %c3, %c0_10, %c0_11] : memref<1x27x32x128xf32, #tpu.memory_space<vmem>>, vector<1x1x32x128xf32>
    %12 = vector.shape_cast %11 : vector<1x1x32x128xf32> to vector<32x128xf32>
    %13 = arith.mulf %12, %12 : vector<32x128xf32>
    %14 = arith.addf %10, %13 : vector<32x128xf32>
    %c0_12 = arith.constant 0 : index
    %c4 = arith.constant 4 : index
    %c0_13 = arith.constant 0 : index
    %c0_14 = arith.constant 0 : index
    %15 = vector.load %arg2[%c0_12, %c4, %c0_13, %c0_14] : memref<1x27x32x128xf32, #tpu.memory_space<vmem>>, vector<1x1x32x128xf32>
    %16 = vector.shape_cast %15 : vector<1x1x32x128xf32> to vector<32x128xf32>
    %17 = arith.mulf %16, %16 : vector<32x128xf32>
    %18 = arith.addf %14, %17 : vector<32x128xf32>
    %c0_15 = arith.constant 0 : index
    %c5 = arith.constant 5 : index
    %c0_16 = arith.constant 0 : index
    %c0_17 = arith.constant 0 : index
    %19 = vector.load %arg2[%c0_15, %c5, %c0_16, %c0_17] : memref<1x27x32x128xf32, #tpu.memory_space<vmem>>, vector<1x1x32x128xf32>
    %20 = vector.shape_cast %19 : vector<1x1x32x128xf32> to vector<32x128xf32>
    %21 = arith.mulf %20, %20 : vector<32x128xf32>
    %22 = arith.addf %18, %21 : vector<32x128xf32>
    %c0_18 = arith.constant 0 : index
    %c6 = arith.constant 6 : index
    %c0_19 = arith.constant 0 : index
    %c0_20 = arith.constant 0 : index
    %23 = vector.load %arg2[%c0_18, %c6, %c0_19, %c0_20] : memref<1x27x32x128xf32, #tpu.memory_space<vmem>>, vector<1x1x32x128xf32>
    %24 = vector.shape_cast %23 : vector<1x1x32x128xf32> to vector<32x128xf32>
    %25 = arith.mulf %24, %24 : vector<32x128xf32>
    %26 = arith.addf %22, %25 : vector<32x128xf32>
    %c0_21 = arith.constant 0 : index
    %c7 = arith.constant 7 : index
    %c0_22 = arith.constant 0 : index
    %c0_23 = arith.constant 0 : index
    %27 = vector.load %arg2[%c0_21, %c7, %c0_22, %c0_23] : memref<1x27x32x128xf32, #tpu.memory_space<vmem>>, vector<1x1x32x128xf32>
    %28 = vector.shape_cast %27 : vector<1x1x32x128xf32> to vector<32x128xf32>
    %29 = arith.mulf %28, %28 : vector<32x128xf32>
    %30 = arith.addf %26, %29 : vector<32x128xf32>
    %c0_24 = arith.constant 0 : index
    %c8 = arith.constant 8 : index
    %c0_25 = arith.constant 0 : index
    %c0_26 = arith.constant 0 : index
    %31 = vector.load %arg2[%c0_24, %c8, %c0_25, %c0_26] : memref<1x27x32x128xf32, #tpu.memory_space<vmem>>, vector<1x1x32x128xf32>
    %32 = vector.shape_cast %31 : vector<1x1x32x128xf32> to vector<32x128xf32>
    %33 = arith.mulf %32, %32 : vector<32x128xf32>
    %34 = arith.addf %30, %33 : vector<32x128xf32>
    %c0_27 = arith.constant 0 : index
    %c9 = arith.constant 9 : index
    %c0_28 = arith.constant 0 : index
    %c0_29 = arith.constant 0 : index
    %35 = vector.load %arg2[%c0_27, %c9, %c0_28, %c0_29] : memref<1x27x32x128xf32, #tpu.memory_space<vmem>>, vector<1x1x32x128xf32>
    %36 = vector.shape_cast %35 : vector<1x1x32x128xf32> to vector<32x128xf32>
    %37 = arith.mulf %36, %36 : vector<32x128xf32>
    %38 = arith.addf %34, %37 : vector<32x128xf32>
    %c0_30 = arith.constant 0 : index
    %c10 = arith.constant 10 : index
    %c0_31 = arith.constant 0 : index
    %c0_32 = arith.constant 0 : index
    %39 = vector.load %arg2[%c0_30, %c10, %c0_31, %c0_32] : memref<1x27x32x128xf32, #tpu.memory_space<vmem>>, vector<1x1x32x128xf32>
    %40 = vector.shape_cast %39 : vector<1x1x32x128xf32> to vector<32x128xf32>
    %41 = arith.mulf %40, %40 : vector<32x128xf32>
    %42 = arith.addf %38, %41 : vector<32x128xf32>
    %c0_33 = arith.constant 0 : index
    %c11 = arith.constant 11 : index
    %c0_34 = arith.constant 0 : index
    %c0_35 = arith.constant 0 : index
    %43 = vector.load %arg2[%c0_33, %c11, %c0_34, %c0_35] : memref<1x27x32x128xf32, #tpu.memory_space<vmem>>, vector<1x1x32x128xf32>
    %44 = vector.shape_cast %43 : vector<1x1x32x128xf32> to vector<32x128xf32>
    %45 = arith.mulf %44, %44 : vector<32x128xf32>
    %46 = arith.addf %42, %45 : vector<32x128xf32>
    %c0_36 = arith.constant 0 : index
    %c12 = arith.constant 12 : index
    %c0_37 = arith.constant 0 : index
    %c0_38 = arith.constant 0 : index
    %47 = vector.load %arg2[%c0_36, %c12, %c0_37, %c0_38] : memref<1x27x32x128xf32, #tpu.memory_space<vmem>>, vector<1x1x32x128xf32>
    %48 = vector.shape_cast %47 : vector<1x1x32x128xf32> to vector<32x128xf32>
    %49 = arith.mulf %48, %48 : vector<32x128xf32>
    %50 = arith.addf %46, %49 : vector<32x128xf32>
    %c0_39 = arith.constant 0 : index
    %c13 = arith.constant 13 : index
    %c0_40 = arith.constant 0 : index
    %c0_41 = arith.constant 0 : index
    %51 = vector.load %arg2[%c0_39, %c13, %c0_40, %c0_41] : memref<1x27x32x128xf32, #tpu.memory_space<vmem>>, vector<1x1x32x128xf32>
    %52 = vector.shape_cast %51 : vector<1x1x32x128xf32> to vector<32x128xf32>
    %53 = arith.mulf %52, %52 : vector<32x128xf32>
    %54 = arith.addf %50, %53 : vector<32x128xf32>
    %c0_42 = arith.constant 0 : index
    %c14 = arith.constant 14 : index
    %c0_43 = arith.constant 0 : index
    %c0_44 = arith.constant 0 : index
    %55 = vector.load %arg2[%c0_42, %c14, %c0_43, %c0_44] : memref<1x27x32x128xf32, #tpu.memory_space<vmem>>, vector<1x1x32x128xf32>
    %56 = vector.shape_cast %55 : vector<1x1x32x128xf32> to vector<32x128xf32>
    %57 = arith.mulf %56, %56 : vector<32x128xf32>
    %58 = arith.addf %54, %57 : vector<32x128xf32>
    %c0_45 = arith.constant 0 : index
    %c15 = arith.constant 15 : index
    %c0_46 = arith.constant 0 : index
    %c0_47 = arith.constant 0 : index
    %59 = vector.load %arg2[%c0_45, %c15, %c0_46, %c0_47] : memref<1x27x32x128xf32, #tpu.memory_space<vmem>>, vector<1x1x32x128xf32>
    %60 = vector.shape_cast %59 : vector<1x1x32x128xf32> to vector<32x128xf32>
    %61 = arith.mulf %60, %60 : vector<32x128xf32>
    %62 = arith.addf %58, %61 : vector<32x128xf32>
    %c0_48 = arith.constant 0 : index
    %c16 = arith.constant 16 : index
    %c0_49 = arith.constant 0 : index
    %c0_50 = arith.constant 0 : index
    %63 = vector.load %arg2[%c0_48, %c16, %c0_49, %c0_50] : memref<1x27x32x128xf32, #tpu.memory_space<vmem>>, vector<1x1x32x128xf32>
    %64 = vector.shape_cast %63 : vector<1x1x32x128xf32> to vector<32x128xf32>
    %65 = arith.mulf %64, %64 : vector<32x128xf32>
    %66 = arith.addf %62, %65 : vector<32x128xf32>
    %c0_51 = arith.constant 0 : index
    %c17 = arith.constant 17 : index
    %c0_52 = arith.constant 0 : index
    %c0_53 = arith.constant 0 : index
    %67 = vector.load %arg2[%c0_51, %c17, %c0_52, %c0_53] : memref<1x27x32x128xf32, #tpu.memory_space<vmem>>, vector<1x1x32x128xf32>
    %68 = vector.shape_cast %67 : vector<1x1x32x128xf32> to vector<32x128xf32>
    %69 = arith.mulf %68, %68 : vector<32x128xf32>
    %70 = arith.addf %66, %69 : vector<32x128xf32>
    %c0_54 = arith.constant 0 : index
    %c18 = arith.constant 18 : index
    %c0_55 = arith.constant 0 : index
    %c0_56 = arith.constant 0 : index
    %71 = vector.load %arg2[%c0_54, %c18, %c0_55, %c0_56] : memref<1x27x32x128xf32, #tpu.memory_space<vmem>>, vector<1x1x32x128xf32>
    %72 = vector.shape_cast %71 : vector<1x1x32x128xf32> to vector<32x128xf32>
    %73 = arith.mulf %72, %72 : vector<32x128xf32>
    %74 = arith.addf %70, %73 : vector<32x128xf32>
    %c0_57 = arith.constant 0 : index
    %c19 = arith.constant 19 : index
    %c0_58 = arith.constant 0 : index
    %c0_59 = arith.constant 0 : index
    %75 = vector.load %arg2[%c0_57, %c19, %c0_58, %c0_59] : memref<1x27x32x128xf32, #tpu.memory_space<vmem>>, vector<1x1x32x128xf32>
    %76 = vector.shape_cast %75 : vector<1x1x32x128xf32> to vector<32x128xf32>
    %77 = arith.mulf %76, %76 : vector<32x128xf32>
    %78 = arith.addf %74, %77 : vector<32x128xf32>
    %c0_60 = arith.constant 0 : index
    %c20 = arith.constant 20 : index
    %c0_61 = arith.constant 0 : index
    %c0_62 = arith.constant 0 : index
    %79 = vector.load %arg2[%c0_60, %c20, %c0_61, %c0_62] : memref<1x27x32x128xf32, #tpu.memory_space<vmem>>, vector<1x1x32x128xf32>
    %80 = vector.shape_cast %79 : vector<1x1x32x128xf32> to vector<32x128xf32>
    %81 = arith.mulf %80, %80 : vector<32x128xf32>
    %82 = arith.addf %78, %81 : vector<32x128xf32>
    %c0_63 = arith.constant 0 : index
    %c21 = arith.constant 21 : index
    %c0_64 = arith.constant 0 : index
    %c0_65 = arith.constant 0 : index
    %83 = vector.load %arg2[%c0_63, %c21, %c0_64, %c0_65] : memref<1x27x32x128xf32, #tpu.memory_space<vmem>>, vector<1x1x32x128xf32>
    %84 = vector.shape_cast %83 : vector<1x1x32x128xf32> to vector<32x128xf32>
    %85 = arith.mulf %84, %84 : vector<32x128xf32>
    %86 = arith.addf %82, %85 : vector<32x128xf32>
    %c0_66 = arith.constant 0 : index
    %c22 = arith.constant 22 : index
    %c0_67 = arith.constant 0 : index
    %c0_68 = arith.constant 0 : index
    %87 = vector.load %arg2[%c0_66, %c22, %c0_67, %c0_68] : memref<1x27x32x128xf32, #tpu.memory_space<vmem>>, vector<1x1x32x128xf32>
    %88 = vector.shape_cast %87 : vector<1x1x32x128xf32> to vector<32x128xf32>
    %89 = arith.mulf %88, %88 : vector<32x128xf32>
    %90 = arith.addf %86, %89 : vector<32x128xf32>
    %c0_69 = arith.constant 0 : index
    %c23 = arith.constant 23 : index
    %c0_70 = arith.constant 0 : index
    %c0_71 = arith.constant 0 : index
    %91 = vector.load %arg2[%c0_69, %c23, %c0_70, %c0_71] : memref<1x27x32x128xf32, #tpu.memory_space<vmem>>, vector<1x1x32x128xf32>
    %92 = vector.shape_cast %91 : vector<1x1x32x128xf32> to vector<32x128xf32>
    %93 = arith.mulf %92, %92 : vector<32x128xf32>
    %94 = arith.addf %90, %93 : vector<32x128xf32>
    %c0_72 = arith.constant 0 : index
    %c24 = arith.constant 24 : index
    %c0_73 = arith.constant 0 : index
    %c0_74 = arith.constant 0 : index
    %95 = vector.load %arg2[%c0_72, %c24, %c0_73, %c0_74] : memref<1x27x32x128xf32, #tpu.memory_space<vmem>>, vector<1x1x32x128xf32>
    %96 = vector.shape_cast %95 : vector<1x1x32x128xf32> to vector<32x128xf32>
    %97 = arith.mulf %96, %96 : vector<32x128xf32>
    %98 = arith.addf %94, %97 : vector<32x128xf32>
    %c0_75 = arith.constant 0 : index
    %c25 = arith.constant 25 : index
    %c0_76 = arith.constant 0 : index
    %c0_77 = arith.constant 0 : index
    %99 = vector.load %arg2[%c0_75, %c25, %c0_76, %c0_77] : memref<1x27x32x128xf32, #tpu.memory_space<vmem>>, vector<1x1x32x128xf32>
    %100 = vector.shape_cast %99 : vector<1x1x32x128xf32> to vector<32x128xf32>
    %101 = arith.mulf %100, %100 : vector<32x128xf32>
    %102 = arith.addf %98, %101 : vector<32x128xf32>
    %c0_78 = arith.constant 0 : index
    %c26 = arith.constant 26 : index
    %c0_79 = arith.constant 0 : index
    %c0_80 = arith.constant 0 : index
    %103 = vector.load %arg2[%c0_78, %c26, %c0_79, %c0_80] : memref<1x27x32x128xf32, #tpu.memory_space<vmem>>, vector<1x1x32x128xf32>
    %104 = vector.shape_cast %103 : vector<1x1x32x128xf32> to vector<32x128xf32>
    %105 = arith.mulf %104, %104 : vector<32x128xf32>
    %106 = arith.addf %102, %105 : vector<32x128xf32>
    %cst = arith.constant 1.000000e+00 : f32
    %107 = vector.broadcast %cst : f32 to vector<32x128xf32>
    %108 = arith.addf %107, %106 : vector<32x128xf32>
    %cst_81 = arith.constant 9.99999993E-9 : f32
    %109 = vector.broadcast %cst_81 : f32 to vector<32x128xf32>
    %110 = arith.maximumf %108, %109 : vector<32x128xf32>
    %111 = math.sqrt %110 : vector<32x128xf32>
    %c1_82 = arith.constant 1 : index
    %c0_83 = arith.constant 0 : index
    %112 = memref.load %arg3[%c1_82, %c0_83] : memref<9x28xf32, #tpu.memory_space<smem>>
    %113 = vector.broadcast %112 : f32 to vector<32x128xf32>
    %114 = arith.mulf %111, %113 : vector<32x128xf32>
    %c1_84 = arith.constant 1 : index
    %115 = memref.load %arg4[%c1_84] : memref<9xf32, #tpu.memory_space<smem>>
    %116 = vector.broadcast %115 : f32 to vector<32x128xf32>
    %117 = arith.addf %114, %116 : vector<32x128xf32>
    %c0_85 = arith.constant 0 : index
    %c0_86 = arith.constant 0 : index
    %c0_87 = arith.constant 0 : index
    %c0_88 = arith.constant 0 : index
    %118 = vector.load %arg2[%c0_85, %c0_86, %c0_87, %c0_88] : memref<1x27x32x128xf32, #tpu.memory_space<vmem>>, vector<1x1x32x128xf32>
    %119 = vector.shape_cast %118 : vector<1x1x32x128xf32> to vector<32x128xf32>
    %c1_89 = arith.constant 1 : index
    %c1_90 = arith.constant 1 : index
    %120 = memref.load %arg3[%c1_89, %c1_90] : memref<9x28xf32, #tpu.memory_space<smem>>
    %121 = vector.broadcast %120 : f32 to vector<32x128xf32>
    %122 = arith.mulf %119, %121 : vector<32x128xf32>
    %123 = arith.addf %117, %122 : vector<32x128xf32>
    %c0_91 = arith.constant 0 : index
    %c1_92 = arith.constant 1 : index
    %c0_93 = arith.constant 0 : index
    %c0_94 = arith.constant 0 : index
    %124 = vector.load %arg2[%c0_91, %c1_92, %c0_93, %c0_94] : memref<1x27x32x128xf32, #tpu.memory_space<vmem>>, vector<1x1x32x128xf32>
    %125 = vector.shape_cast %124 : vector<1x1x32x128xf32> to vector<32x128xf32>
    %c1_95 = arith.constant 1 : index
    %c2_96 = arith.constant 2 : index
    %126 = memref.load %arg3[%c1_95, %c2_96] : memref<9x28xf32, #tpu.memory_space<smem>>
    %127 = vector.broadcast %126 : f32 to vector<32x128xf32>
    %128 = arith.mulf %125, %127 : vector<32x128xf32>
    %129 = arith.addf %123, %128 : vector<32x128xf32>
    %c0_97 = arith.constant 0 : index
    %c2_98 = arith.constant 2 : index
    %c0_99 = arith.constant 0 : index
    %c0_100 = arith.constant 0 : index
    %130 = vector.load %arg2[%c0_97, %c2_98, %c0_99, %c0_100] : memref<1x27x32x128xf32, #tpu.memory_space<vmem>>, vector<1x1x32x128xf32>
    %131 = vector.shape_cast %130 : vector<1x1x32x128xf32> to vector<32x128xf32>
    %c1_101 = arith.constant 1 : index
    %c3_102 = arith.constant 3 : index
    %132 = memref.load %arg3[%c1_101, %c3_102] : memref<9x28xf32, #tpu.memory_space<smem>>
    %133 = vector.broadcast %132 : f32 to vector<32x128xf32>
    %134 = arith.mulf %131, %133 : vector<32x128xf32>
    %135 = arith.addf %129, %134 : vector<32x128xf32>
    %c0_103 = arith.constant 0 : index
    %c3_104 = arith.constant 3 : index
    %c0_105 = arith.constant 0 : index
    %c0_106 = arith.constant 0 : index
    %136 = vector.load %arg2[%c0_103, %c3_104, %c0_105, %c0_106] : memref<1x27x32x128xf32, #tpu.memory_space<vmem>>, vector<1x1x32x128xf32>
    %137 = vector.shape_cast %136 : vector<1x1x32x128xf32> to vector<32x128xf32>
    %c1_107 = arith.constant 1 : index
    %c4_108 = arith.constant 4 : index
    %138 = memref.load %arg3[%c1_107, %c4_108] : memref<9x28xf32, #tpu.memory_space<smem>>
    %139 = vector.broadcast %138 : f32 to vector<32x128xf32>
    %140 = arith.mulf %137, %139 : vector<32x128xf32>
    %141 = arith.addf %135, %140 : vector<32x128xf32>
    %c0_109 = arith.constant 0 : index
    %c4_110 = arith.constant 4 : index
    %c0_111 = arith.constant 0 : index
    %c0_112 = arith.constant 0 : index
    %142 = vector.load %arg2[%c0_109, %c4_110, %c0_111, %c0_112] : memref<1x27x32x128xf32, #tpu.memory_space<vmem>>, vector<1x1x32x128xf32>
    %143 = vector.shape_cast %142 : vector<1x1x32x128xf32> to vector<32x128xf32>
    %c1_113 = arith.constant 1 : index
    %c5_114 = arith.constant 5 : index
    %144 = memref.load %arg3[%c1_113, %c5_114] : memref<9x28xf32, #tpu.memory_space<smem>>
    %145 = vector.broadcast %144 : f32 to vector<32x128xf32>
    %146 = arith.mulf %143, %145 : vector<32x128xf32>
    %147 = arith.addf %141, %146 : vector<32x128xf32>
    %c0_115 = arith.constant 0 : index
    %c5_116 = arith.constant 5 : index
    %c0_117 = arith.constant 0 : index
    %c0_118 = arith.constant 0 : index
    %148 = vector.load %arg2[%c0_115, %c5_116, %c0_117, %c0_118] : memref<1x27x32x128xf32, #tpu.memory_space<vmem>>, vector<1x1x32x128xf32>
    %149 = vector.shape_cast %148 : vector<1x1x32x128xf32> to vector<32x128xf32>
    %c1_119 = arith.constant 1 : index
    %c6_120 = arith.constant 6 : index
    %150 = memref.load %arg3[%c1_119, %c6_120] : memref<9x28xf32, #tpu.memory_space<smem>>
    %151 = vector.broadcast %150 : f32 to vector<32x128xf32>
    %152 = arith.mulf %149, %151 : vector<32x128xf32>
    %153 = arith.addf %147, %152 : vector<32x128xf32>
    %c0_121 = arith.constant 0 : index
    %c6_122 = arith.constant 6 : index
    %c0_123 = arith.constant 0 : index
    %c0_124 = arith.constant 0 : index
    %154 = vector.load %arg2[%c0_121, %c6_122, %c0_123, %c0_124] : memref<1x27x32x128xf32, #tpu.memory_space<vmem>>, vector<1x1x32x128xf32>
    %155 = vector.shape_cast %154 : vector<1x1x32x128xf32> to vector<32x128xf32>
    %c1_125 = arith.constant 1 : index
    %c7_126 = arith.constant 7 : index
    %156 = memref.load %arg3[%c1_125, %c7_126] : memref<9x28xf32, #tpu.memory_space<smem>>
    %157 = vector.broadcast %156 : f32 to vector<32x128xf32>
    %158 = arith.mulf %155, %157 : vector<32x128xf32>
    %159 = arith.addf %153, %158 : vector<32x128xf32>
    %c0_127 = arith.constant 0 : index
    %c7_128 = arith.constant 7 : index
    %c0_129 = arith.constant 0 : index
    %c0_130 = arith.constant 0 : index
    %160 = vector.load %arg2[%c0_127, %c7_128, %c0_129, %c0_130] : memref<1x27x32x128xf32, #tpu.memory_space<vmem>>, vector<1x1x32x128xf32>
    %161 = vector.shape_cast %160 : vector<1x1x32x128xf32> to vector<32x128xf32>
    %c1_131 = arith.constant 1 : index
    %c8_132 = arith.constant 8 : index
    %162 = memref.load %arg3[%c1_131, %c8_132] : memref<9x28xf32, #tpu.memory_space<smem>>
    %163 = vector.broadcast %162 : f32 to vector<32x128xf32>
    %164 = arith.mulf %161, %163 : vector<32x128xf32>
    %165 = arith.addf %159, %164 : vector<32x128xf32>
    %c0_133 = arith.constant 0 : index
    %c8_134 = arith.constant 8 : index
    %c0_135 = arith.constant 0 : index
    %c0_136 = arith.constant 0 : index
    %166 = vector.load %arg2[%c0_133, %c8_134, %c0_135, %c0_136] : memref<1x27x32x128xf32, #tpu.memory_space<vmem>>, vector<1x1x32x128xf32>
    %167 = vector.shape_cast %166 : vector<1x1x32x128xf32> to vector<32x128xf32>
    %c1_137 = arith.constant 1 : index
    %c9_138 = arith.constant 9 : index
    %168 = memref.load %arg3[%c1_137, %c9_138] : memref<9x28xf32, #tpu.memory_space<smem>>
    %169 = vector.broadcast %168 : f32 to vector<32x128xf32>
    %170 = arith.mulf %167, %169 : vector<32x128xf32>
    %171 = arith.addf %165, %170 : vector<32x128xf32>
    %c0_139 = arith.constant 0 : index
    %c9_140 = arith.constant 9 : index
    %c0_141 = arith.constant 0 : index
    %c0_142 = arith.constant 0 : index
    %172 = vector.load %arg2[%c0_139, %c9_140, %c0_141, %c0_142] : memref<1x27x32x128xf32, #tpu.memory_space<vmem>>, vector<1x1x32x128xf32>
    %173 = vector.shape_cast %172 : vector<1x1x32x128xf32> to vector<32x128xf32>
    %c1_143 = arith.constant 1 : index
    %c10_144 = arith.constant 10 : index
    %174 = memref.load %arg3[%c1_143, %c10_144] : memref<9x28xf32, #tpu.memory_space<smem>>
    %175 = vector.broadcast %174 : f32 to vector<32x128xf32>
    %176 = arith.mulf %173, %175 : vector<32x128xf32>
    %177 = arith.addf %171, %176 : vector<32x128xf32>
    %c0_145 = arith.constant 0 : index
    %c10_146 = arith.constant 10 : index
    %c0_147 = arith.constant 0 : index
    %c0_148 = arith.constant 0 : index
    %178 = vector.load %arg2[%c0_145, %c10_146, %c0_147, %c0_148] : memref<1x27x32x128xf32, #tpu.memory_space<vmem>>, vector<1x1x32x128xf32>
    %179 = vector.shape_cast %178 : vector<1x1x32x128xf32> to vector<32x128xf32>
    %c1_149 = arith.constant 1 : index
    %c11_150 = arith.constant 11 : index
    %180 = memref.load %arg3[%c1_149, %c11_150] : memref<9x28xf32, #tpu.memory_space<smem>>
    %181 = vector.broadcast %180 : f32 to vector<32x128xf32>
    %182 = arith.mulf %179, %181 : vector<32x128xf32>
    %183 = arith.addf %177, %182 : vector<32x128xf32>
    %c0_151 = arith.constant 0 : index
    %c11_152 = arith.constant 11 : index
    %c0_153 = arith.constant 0 : index
    %c0_154 = arith.constant 0 : index
    %184 = vector.load %arg2[%c0_151, %c11_152, %c0_153, %c0_154] : memref<1x27x32x128xf32, #tpu.memory_space<vmem>>, vector<1x1x32x128xf32>
    %185 = vector.shape_cast %184 : vector<1x1x32x128xf32> to vector<32x128xf32>
    %c1_155 = arith.constant 1 : index
    %c12_156 = arith.constant 12 : index
    %186 = memref.load %arg3[%c1_155, %c12_156] : memref<9x28xf32, #tpu.memory_space<smem>>
    %187 = vector.broadcast %186 : f32 to vector<32x128xf32>
    %188 = arith.mulf %185, %187 : vector<32x128xf32>
    %189 = arith.addf %183, %188 : vector<32x128xf32>
    %c0_157 = arith.constant 0 : index
    %c12_158 = arith.constant 12 : index
    %c0_159 = arith.constant 0 : index
    %c0_160 = arith.constant 0 : index
    %190 = vector.load %arg2[%c0_157, %c12_158, %c0_159, %c0_160] : memref<1x27x32x128xf32, #tpu.memory_space<vmem>>, vector<1x1x32x128xf32>
    %191 = vector.shape_cast %190 : vector<1x1x32x128xf32> to vector<32x128xf32>
    %c1_161 = arith.constant 1 : index
    %c13_162 = arith.constant 13 : index
    %192 = memref.load %arg3[%c1_161, %c13_162] : memref<9x28xf32, #tpu.memory_space<smem>>
    %193 = vector.broadcast %192 : f32 to vector<32x128xf32>
    %194 = arith.mulf %191, %193 : vector<32x128xf32>
    %195 = arith.addf %189, %194 : vector<32x128xf32>
    %c0_163 = arith.constant 0 : index
    %c13_164 = arith.constant 13 : index
    %c0_165 = arith.constant 0 : index
    %c0_166 = arith.constant 0 : index
    %196 = vector.load %arg2[%c0_163, %c13_164, %c0_165, %c0_166] : memref<1x27x32x128xf32, #tpu.memory_space<vmem>>, vector<1x1x32x128xf32>
    %197 = vector.shape_cast %196 : vector<1x1x32x128xf32> to vector<32x128xf32>
    %c1_167 = arith.constant 1 : index
    %c14_168 = arith.constant 14 : index
    %198 = memref.load %arg3[%c1_167, %c14_168] : memref<9x28xf32, #tpu.memory_space<smem>>
    %199 = vector.broadcast %198 : f32 to vector<32x128xf32>
    %200 = arith.mulf %197, %199 : vector<32x128xf32>
    %201 = arith.addf %195, %200 : vector<32x128xf32>
    %c0_169 = arith.constant 0 : index
    %c14_170 = arith.constant 14 : index
    %c0_171 = arith.constant 0 : index
    %c0_172 = arith.constant 0 : index
    %202 = vector.load %arg2[%c0_169, %c14_170, %c0_171, %c0_172] : memref<1x27x32x128xf32, #tpu.memory_space<vmem>>, vector<1x1x32x128xf32>
    %203 = vector.shape_cast %202 : vector<1x1x32x128xf32> to vector<32x128xf32>
    %c1_173 = arith.constant 1 : index
    %c15_174 = arith.constant 15 : index
    %204 = memref.load %arg3[%c1_173, %c15_174] : memref<9x28xf32, #tpu.memory_space<smem>>
    %205 = vector.broadcast %204 : f32 to vector<32x128xf32>
    %206 = arith.mulf %203, %205 : vector<32x128xf32>
    %207 = arith.addf %201, %206 : vector<32x128xf32>
    %c0_175 = arith.constant 0 : index
    %c15_176 = arith.constant 15 : index
    %c0_177 = arith.constant 0 : index
    %c0_178 = arith.constant 0 : index
    %208 = vector.load %arg2[%c0_175, %c15_176, %c0_177, %c0_178] : memref<1x27x32x128xf32, #tpu.memory_space<vmem>>, vector<1x1x32x128xf32>
    %209 = vector.shape_cast %208 : vector<1x1x32x128xf32> to vector<32x128xf32>
    %c1_179 = arith.constant 1 : index
    %c16_180 = arith.constant 16 : index
    %210 = memref.load %arg3[%c1_179, %c16_180] : memref<9x28xf32, #tpu.memory_space<smem>>
    %211 = vector.broadcast %210 : f32 to vector<32x128xf32>
    %212 = arith.mulf %209, %211 : vector<32x128xf32>
    %213 = arith.addf %207, %212 : vector<32x128xf32>
    %c0_181 = arith.constant 0 : index
    %c16_182 = arith.constant 16 : index
    %c0_183 = arith.constant 0 : index
    %c0_184 = arith.constant 0 : index
    %214 = vector.load %arg2[%c0_181, %c16_182, %c0_183, %c0_184] : memref<1x27x32x128xf32, #tpu.memory_space<vmem>>, vector<1x1x32x128xf32>
    %215 = vector.shape_cast %214 : vector<1x1x32x128xf32> to vector<32x128xf32>
    %c1_185 = arith.constant 1 : index
    %c17_186 = arith.constant 17 : index
    %216 = memref.load %arg3[%c1_185, %c17_186] : memref<9x28xf32, #tpu.memory_space<smem>>
    %217 = vector.broadcast %216 : f32 to vector<32x128xf32>
    %218 = arith.mulf %215, %217 : vector<32x128xf32>
    %219 = arith.addf %213, %218 : vector<32x128xf32>
    %c0_187 = arith.constant 0 : index
    %c17_188 = arith.constant 17 : index
    %c0_189 = arith.constant 0 : index
    %c0_190 = arith.constant 0 : index
    %220 = vector.load %arg2[%c0_187, %c17_188, %c0_189, %c0_190] : memref<1x27x32x128xf32, #tpu.memory_space<vmem>>, vector<1x1x32x128xf32>
    %221 = vector.shape_cast %220 : vector<1x1x32x128xf32> to vector<32x128xf32>
    %c1_191 = arith.constant 1 : index
    %c18_192 = arith.constant 18 : index
    %222 = memref.load %arg3[%c1_191, %c18_192] : memref<9x28xf32, #tpu.memory_space<smem>>
    %223 = vector.broadcast %222 : f32 to vector<32x128xf32>
    %224 = arith.mulf %221, %223 : vector<32x128xf32>
    %225 = arith.addf %219, %224 : vector<32x128xf32>
    %c0_193 = arith.constant 0 : index
    %c18_194 = arith.constant 18 : index
    %c0_195 = arith.constant 0 : index
    %c0_196 = arith.constant 0 : index
    %226 = vector.load %arg2[%c0_193, %c18_194, %c0_195, %c0_196] : memref<1x27x32x128xf32, #tpu.memory_space<vmem>>, vector<1x1x32x128xf32>
    %227 = vector.shape_cast %226 : vector<1x1x32x128xf32> to vector<32x128xf32>
    %c1_197 = arith.constant 1 : index
    %c19_198 = arith.constant 19 : index
    %228 = memref.load %arg3[%c1_197, %c19_198] : memref<9x28xf32, #tpu.memory_space<smem>>
    %229 = vector.broadcast %228 : f32 to vector<32x128xf32>
    %230 = arith.mulf %227, %229 : vector<32x128xf32>
    %231 = arith.addf %225, %230 : vector<32x128xf32>
    %c0_199 = arith.constant 0 : index
    %c19_200 = arith.constant 19 : index
    %c0_201 = arith.constant 0 : index
    %c0_202 = arith.constant 0 : index
    %232 = vector.load %arg2[%c0_199, %c19_200, %c0_201, %c0_202] : memref<1x27x32x128xf32, #tpu.memory_space<vmem>>, vector<1x1x32x128xf32>
    %233 = vector.shape_cast %232 : vector<1x1x32x128xf32> to vector<32x128xf32>
    %c1_203 = arith.constant 1 : index
    %c20_204 = arith.constant 20 : index
    %234 = memref.load %arg3[%c1_203, %c20_204] : memref<9x28xf32, #tpu.memory_space<smem>>
    %235 = vector.broadcast %234 : f32 to vector<32x128xf32>
    %236 = arith.mulf %233, %235 : vector<32x128xf32>
    %237 = arith.addf %231, %236 : vector<32x128xf32>
    %c0_205 = arith.constant 0 : index
    %c20_206 = arith.constant 20 : index
    %c0_207 = arith.constant 0 : index
    %c0_208 = arith.constant 0 : index
    %238 = vector.load %arg2[%c0_205, %c20_206, %c0_207, %c0_208] : memref<1x27x32x128xf32, #tpu.memory_space<vmem>>, vector<1x1x32x128xf32>
    %239 = vector.shape_cast %238 : vector<1x1x32x128xf32> to vector<32x128xf32>
    %c1_209 = arith.constant 1 : index
    %c21_210 = arith.constant 21 : index
    %240 = memref.load %arg3[%c1_209, %c21_210] : memref<9x28xf32, #tpu.memory_space<smem>>
    %241 = vector.broadcast %240 : f32 to vector<32x128xf32>
    %242 = arith.mulf %239, %241 : vector<32x128xf32>
    %243 = arith.addf %237, %242 : vector<32x128xf32>
    %c0_211 = arith.constant 0 : index
    %c21_212 = arith.constant 21 : index
    %c0_213 = arith.constant 0 : index
    %c0_214 = arith.constant 0 : index
    %244 = vector.load %arg2[%c0_211, %c21_212, %c0_213, %c0_214] : memref<1x27x32x128xf32, #tpu.memory_space<vmem>>, vector<1x1x32x128xf32>
    %245 = vector.shape_cast %244 : vector<1x1x32x128xf32> to vector<32x128xf32>
    %c1_215 = arith.constant 1 : index
    %c22_216 = arith.constant 22 : index
    %246 = memref.load %arg3[%c1_215, %c22_216] : memref<9x28xf32, #tpu.memory_space<smem>>
    %247 = vector.broadcast %246 : f32 to vector<32x128xf32>
    %248 = arith.mulf %245, %247 : vector<32x128xf32>
    %249 = arith.addf %243, %248 : vector<32x128xf32>
    %c0_217 = arith.constant 0 : index
    %c22_218 = arith.constant 22 : index
    %c0_219 = arith.constant 0 : index
    %c0_220 = arith.constant 0 : index
    %250 = vector.load %arg2[%c0_217, %c22_218, %c0_219, %c0_220] : memref<1x27x32x128xf32, #tpu.memory_space<vmem>>, vector<1x1x32x128xf32>
    %251 = vector.shape_cast %250 : vector<1x1x32x128xf32> to vector<32x128xf32>
    %c1_221 = arith.constant 1 : index
    %c23_222 = arith.constant 23 : index
    %252 = memref.load %arg3[%c1_221, %c23_222] : memref<9x28xf32, #tpu.memory_space<smem>>
    %253 = vector.broadcast %252 : f32 to vector<32x128xf32>
    %254 = arith.mulf %251, %253 : vector<32x128xf32>
    %255 = arith.addf %249, %254 : vector<32x128xf32>
    %c0_223 = arith.constant 0 : index
    %c23_224 = arith.constant 23 : index
    %c0_225 = arith.constant 0 : index
    %c0_226 = arith.constant 0 : index
    %256 = vector.load %arg2[%c0_223, %c23_224, %c0_225, %c0_226] : memref<1x27x32x128xf32, #tpu.memory_space<vmem>>, vector<1x1x32x128xf32>
    %257 = vector.shape_cast %256 : vector<1x1x32x128xf32> to vector<32x128xf32>
    %c1_227 = arith.constant 1 : index
    %c24_228 = arith.constant 24 : index
    %258 = memref.load %arg3[%c1_227, %c24_228] : memref<9x28xf32, #tpu.memory_space<smem>>
    %259 = vector.broadcast %258 : f32 to vector<32x128xf32>
    %260 = arith.mulf %257, %259 : vector<32x128xf32>
    %261 = arith.addf %255, %260 : vector<32x128xf32>
    %c0_229 = arith.constant 0 : index
    %c24_230 = arith.constant 24 : index
    %c0_231 = arith.constant 0 : index
    %c0_232 = arith.constant 0 : index
    %262 = vector.load %arg2[%c0_229, %c24_230, %c0_231, %c0_232] : memref<1x27x32x128xf32, #tpu.memory_space<vmem>>, vector<1x1x32x128xf32>
    %263 = vector.shape_cast %262 : vector<1x1x32x128xf32> to vector<32x128xf32>
    %c1_233 = arith.constant 1 : index
    %c25_234 = arith.constant 25 : index
    %264 = memref.load %arg3[%c1_233, %c25_234] : memref<9x28xf32, #tpu.memory_space<smem>>
    %265 = vector.broadcast %264 : f32 to vector<32x128xf32>
    %266 = arith.mulf %263, %265 : vector<32x128xf32>
    %267 = arith.addf %261, %266 : vector<32x128xf32>
    %c0_235 = arith.constant 0 : index
    %c25_236 = arith.constant 25 : index
    %c0_237 = arith.constant 0 : index
    %c0_238 = arith.constant 0 : index
    %268 = vector.load %arg2[%c0_235, %c25_236, %c0_237, %c0_238] : memref<1x27x32x128xf32, #tpu.memory_space<vmem>>, vector<1x1x32x128xf32>
    %269 = vector.shape_cast %268 : vector<1x1x32x128xf32> to vector<32x128xf32>
    %c1_239 = arith.constant 1 : index
    %c26_240 = arith.constant 26 : index
    %270 = memref.load %arg3[%c1_239, %c26_240] : memref<9x28xf32, #tpu.memory_space<smem>>
    %271 = vector.broadcast %270 : f32 to vector<32x128xf32>
    %272 = arith.mulf %269, %271 : vector<32x128xf32>
    %273 = arith.addf %267, %272 : vector<32x128xf32>
    %c0_241 = arith.constant 0 : index
    %c26_242 = arith.constant 26 : index
    %c0_243 = arith.constant 0 : index
    %c0_244 = arith.constant 0 : index
    %274 = vector.load %arg2[%c0_241, %c26_242, %c0_243, %c0_244] : memref<1x27x32x128xf32, #tpu.memory_space<vmem>>, vector<1x1x32x128xf32>
    %275 = vector.shape_cast %274 : vector<1x1x32x128xf32> to vector<32x128xf32>
    %c1_245 = arith.constant 1 : index
    %c27 = arith.constant 27 : index
    %276 = memref.load %arg3[%c1_245, %c27] : memref<9x28xf32, #tpu.memory_space<smem>>
    %277 = vector.broadcast %276 : f32 to vector<32x128xf32>
    %278 = arith.mulf %275, %277 : vector<32x128xf32>
    %279 = arith.addf %273, %278 : vector<32x128xf32>
    %c0_246 = arith.constant 0 : index
    %c1_247 = arith.constant 1 : index
    %c0_248 = arith.constant 0 : index
    %c0_249 = arith.constant 0 : index
    %280 = vector.load %arg5[%c0_246, %c1_247, %c0_248, %c0_249] : memref<1x9x32x128xf32, #tpu.memory_space<vmem>>, vector<1x1x32x128xf32>
    %281 = vector.shape_cast %280 : vector<1x1x32x128xf32> to vector<32x128xf32>
    %282 = vector.shape_cast %279 : vector<32x128xf32> to vector<1x1x32x128xf32>
    tpu.vector_store %arg5[%c0_246, %c1_247, %c0_248, %c0_249], %282 {strides = array<i32>} : memref<1x9x32x128xf32, #tpu.memory_space<vmem>>, vector<1x1x32x128xf32>,
    %283 = arith.mulf %279, %279 : vector<32x128xf32>
    %c2_250 = arith.constant 2 : index
    %c0_251 = arith.constant 0 : index
    %284 = memref.load %arg3[%c2_250, %c0_251] : memref<9x28xf32, #tpu.memory_space<smem>>
    %285 = vector.broadcast %284 : f32 to vector<32x128xf32>
    %286 = arith.mulf %111, %285 : vector<32x128xf32>
    %c2_252 = arith.constant 2 : index
    %287 = memref.load %arg4[%c2_252] : memref<9xf32, #tpu.memory_space<smem>>
    %288 = vector.broadcast %287 : f32 to vector<32x128xf32>
    %289 = arith.addf %286, %288 : vector<32x128xf32>
    %c0_253 = arith.constant 0 : index
    %c0_254 = arith.constant 0 : index
    %c0_255 = arith.constant 0 : index
    %c0_256 = arith.constant 0 : index
    %290 = vector.load %arg2[%c0_253, %c0_254, %c0_255, %c0_256] : memref<1x27x32x128xf32, #tpu.memory_space<vmem>>, vector<1x1x32x128xf32>
    %291 = vector.shape_cast %290 : vector<1x1x32x128xf32> to vector<32x128xf32>
    %c2_257 = arith.constant 2 : index
    %c1_258 = arith.constant 1 : index
    %292 = memref.load %arg3[%c2_257, %c1_258] : memref<9x28xf32, #tpu.memory_space<smem>>
    %293 = vector.broadcast %292 : f32 to vector<32x128xf32>
    %294 = arith.mulf %291, %293 : vector<32x128xf32>
    %295 = arith.addf %289, %294 : vector<32x128xf32>
    %c0_259 = arith.constant 0 : index
    %c1_260 = arith.constant 1 : index
    %c0_261 = arith.constant 0 : index
    %c0_262 = arith.constant 0 : index
    %296 = vector.load %arg2[%c0_259, %c1_260, %c0_261, %c0_262] : memref<1x27x32x128xf32, #tpu.memory_space<vmem>>, vector<1x1x32x128xf32>
    %297 = vector.shape_cast %296 : vector<1x1x32x128xf32> to vector<32x128xf32>
    %c2_263 = arith.constant 2 : index
    %c2_264 = arith.constant 2 : index
    %298 = memref.load %arg3[%c2_263, %c2_264] : memref<9x28xf32, #tpu.memory_space<smem>>
    %299 = vector.broadcast %298 : f32 to vector<32x128xf32>
    %300 = arith.mulf %297, %299 : vector<32x128xf32>
    %301 = arith.addf %295, %300 : vector<32x128xf32>
    %c0_265 = arith.constant 0 : index
    %c2_266 = arith.constant 2 : index
    %c0_267 = arith.constant 0 : index
    %c0_268 = arith.constant 0 : index
    %302 = vector.load %arg2[%c0_265, %c2_266, %c0_267, %c0_268] : memref<1x27x32x128xf32, #tpu.memory_space<vmem>>, vector<1x1x32x128xf32>
    %303 = vector.shape_cast %302 : vector<1x1x32x128xf32> to vector<32x128xf32>
    %c2_269 = arith.constant 2 : index
    %c3_270 = arith.constant 3 : index
    %304 = memref.load %arg3[%c2_269, %c3_270] : memref<9x28xf32, #tpu.memory_space<smem>>
    %305 = vector.broadcast %304 : f32 to vector<32x128xf32>
    %306 = arith.mulf %303, %305 : vector<32x128xf32>
    %307 = arith.addf %301, %306 : vector<32x128xf32>
    %c0_271 = arith.constant 0 : index
    %c3_272 = arith.constant 3 : index
    %c0_273 = arith.constant 0 : index
    %c0_274 = arith.constant 0 : index
    %308 = vector.load %arg2[%c0_271, %c3_272, %c0_273, %c0_274] : memref<1x27x32x128xf32, #tpu.memory_space<vmem>>, vector<1x1x32x128xf32>
    %309 = vector.shape_cast %308 : vector<1x1x32x128xf32> to vector<32x128xf32>
    %c2_275 = arith.constant 2 : index
    %c4_276 = arith.constant 4 : index
    %310 = memref.load %arg3[%c2_275, %c4_276] : memref<9x28xf32, #tpu.memory_space<smem>>
    %311 = vector.broadcast %310 : f32 to vector<32x128xf32>
    %312 = arith.mulf %309, %311 : vector<32x128xf32>
    %313 = arith.addf %307, %312 : vector<32x128xf32>
    %c0_277 = arith.constant 0 : index
    %c4_278 = arith.constant 4 : index
    %c0_279 = arith.constant 0 : index
    %c0_280 = arith.constant 0 : index
    %314 = vector.load %arg2[%c0_277, %c4_278, %c0_279, %c0_280] : memref<1x27x32x128xf32, #tpu.memory_space<vmem>>, vector<1x1x32x128xf32>
    %315 = vector.shape_cast %314 : vector<1x1x32x128xf32> to vector<32x128xf32>
    %c2_281 = arith.constant 2 : index
    %c5_282 = arith.constant 5 : index
    %316 = memref.load %arg3[%c2_281, %c5_282] : memref<9x28xf32, #tpu.memory_space<smem>>
    %317 = vector.broadcast %316 : f32 to vector<32x128xf32>
    %318 = arith.mulf %315, %317 : vector<32x128xf32>
    %319 = arith.addf %313, %318 : vector<32x128xf32>
    %c0_283 = arith.constant 0 : index
    %c5_284 = arith.constant 5 : index
    %c0_285 = arith.constant 0 : index
    %c0_286 = arith.constant 0 : index
    %320 = vector.load %arg2[%c0_283, %c5_284, %c0_285, %c0_286] : memref<1x27x32x128xf32, #tpu.memory_space<vmem>>, vector<1x1x32x128xf32>
    %321 = vector.shape_cast %320 : vector<1x1x32x128xf32> to vector<32x128xf32>
    %c2_287 = arith.constant 2 : index
    %c6_288 = arith.constant 6 : index
    %322 = memref.load %arg3[%c2_287, %c6_288] : memref<9x28xf32, #tpu.memory_space<smem>>
    %323 = vector.broadcast %322 : f32 to vector<32x128xf32>
    %324 = arith.mulf %321, %323 : vector<32x128xf32>
    %325 = arith.addf %319, %324 : vector<32x128xf32>
    %c0_289 = arith.constant 0 : index
    %c6_290 = arith.constant 6 : index
    %c0_291 = arith.constant 0 : index
    %c0_292 = arith.constant 0 : index
    %326 = vector.load %arg2[%c0_289, %c6_290, %c0_291, %c0_292] : memref<1x27x32x128xf32, #tpu.memory_space<vmem>>, vector<1x1x32x128xf32>
    %327 = vector.shape_cast %326 : vector<1x1x32x128xf32> to vector<32x128xf32>
    %c2_293 = arith.constant 2 : index
    %c7_294 = arith.constant 7 : index
    %328 = memref.load %arg3[%c2_293, %c7_294] : memref<9x28xf32, #tpu.memory_space<smem>>
    %329 = vector.broadcast %328 : f32 to vector<32x128xf32>
    %330 = arith.mulf %327, %329 : vector<32x128xf32>
    %331 = arith.addf %325, %330 : vector<32x128xf32>
    %c0_295 = arith.constant 0 : index
    %c7_296 = arith.constant 7 : index
    %c0_297 = arith.constant 0 : index
    %c0_298 = arith.constant 0 : index
    %332 = vector.load %arg2[%c0_295, %c7_296, %c0_297, %c0_298] : memref<1x27x32x128xf32, #tpu.memory_space<vmem>>, vector<1x1x32x128xf32>
    %333 = vector.shape_cast %332 : vector<1x1x32x128xf32> to vector<32x128xf32>
    %c2_299 = arith.constant 2 : index
    %c8_300 = arith.constant 8 : index
    %334 = memref.load %arg3[%c2_299, %c8_300] : memref<9x28xf32, #tpu.memory_space<smem>>
    %335 = vector.broadcast %334 : f32 to vector<32x128xf32>
    %336 = arith.mulf %333, %335 : vector<32x128xf32>
    %337 = arith.addf %331, %336 : vector<32x128xf32>
    %c0_301 = arith.constant 0 : index
    %c8_302 = arith.constant 8 : index
    %c0_303 = arith.constant 0 : index
    %c0_304 = arith.constant 0 : index
    %338 = vector.load %arg2[%c0_301, %c8_302, %c0_303, %c0_304] : memref<1x27x32x128xf32, #tpu.memory_space<vmem>>, vector<1x1x32x128xf32>
    %339 = vector.shape_cast %338 : vector<1x1x32x128xf32> to vector<32x128xf32>
    %c2_305 = arith.constant 2 : index
    %c9_306 = arith.constant 9 : index
    %340 = memref.load %arg3[%c2_305, %c9_306] : memref<9x28xf32, #tpu.memory_space<smem>>
    %341 = vector.broadcast %340 : f32 to vector<32x128xf32>
    %342 = arith.mulf %339, %341 : vector<32x128xf32>
    %343 = arith.addf %337, %342 : vector<32x128xf32>
    %c0_307 = arith.constant 0 : index
    %c9_308 = arith.constant 9 : index
    %c0_309 = arith.constant 0 : index
    %c0_310 = arith.constant 0 : index
    %344 = vector.load %arg2[%c0_307, %c9_308, %c0_309, %c0_310] : memref<1x27x32x128xf32, #tpu.memory_space<vmem>>, vector<1x1x32x128xf32>
    %345 = vector.shape_cast %344 : vector<1x1x32x128xf32> to vector<32x128xf32>
    %c2_311 = arith.constant 2 : index
    %c10_312 = arith.constant 10 : index
    %346 = memref.load %arg3[%c2_311, %c10_312] : memref<9x28xf32, #tpu.memory_space<smem>>
    %347 = vector.broadcast %346 : f32 to vector<32x128xf32>
    %348 = arith.mulf %345, %347 : vector<32x128xf32>
    %349 = arith.addf %343, %348 : vector<32x128xf32>
    %c0_313 = arith.constant 0 : index
    %c10_314 = arith.constant 10 : index
    %c0_315 = arith.constant 0 : index
    %c0_316 = arith.constant 0 : index
    %350 = vector.load %arg2[%c0_313, %c10_314, %c0_315, %c0_316] : memref<1x27x32x128xf32, #tpu.memory_space<vmem>>, vector<1x1x32x128xf32>
    %351 = vector.shape_cast %350 : vector<1x1x32x128xf32> to vector<32x128xf32>
    %c2_317 = arith.constant 2 : index
    %c11_318 = arith.constant 11 : index
    %352 = memref.load %arg3[%c2_317, %c11_318] : memref<9x28xf32, #tpu.memory_space<smem>>
    %353 = vector.broadcast %352 : f32 to vector<32x128xf32>
    %354 = arith.mulf %351, %353 : vector<32x128xf32>
    %355 = arith.addf %349, %354 : vector<32x128xf32>
    %c0_319 = arith.constant 0 : index
    %c11_320 = arith.constant 11 : index
    %c0_321 = arith.constant 0 : index
    %c0_322 = arith.constant 0 : index
    %356 = vector.load %arg2[%c0_319, %c11_320, %c0_321, %c0_322] : memref<1x27x32x128xf32, #tpu.memory_space<vmem>>, vector<1x1x32x128xf32>
    %357 = vector.shape_cast %356 : vector<1x1x32x128xf32> to vector<32x128xf32>
    %c2_323 = arith.constant 2 : index
    %c12_324 = arith.constant 12 : index
    %358 = memref.load %arg3[%c2_323, %c12_324] : memref<9x28xf32, #tpu.memory_space<smem>>
    %359 = vector.broadcast %358 : f32 to vector<32x128xf32>
    %360 = arith.mulf %357, %359 : vector<32x128xf32>
    %361 = arith.addf %355, %360 : vector<32x128xf32>
    %c0_325 = arith.constant 0 : index
    %c12_326 = arith.constant 12 : index
    %c0_327 = arith.constant 0 : index
    %c0_328 = arith.constant 0 : index
    %362 = vector.load %arg2[%c0_325, %c12_326, %c0_327, %c0_328] : memref<1x27x32x128xf32, #tpu.memory_space<vmem>>, vector<1x1x32x128xf32>
    %363 = vector.shape_cast %362 : vector<1x1x32x128xf32> to vector<32x128xf32>
    %c2_329 = arith.constant 2 : index
    %c13_330 = arith.constant 13 : index
    %364 = memref.load %arg3[%c2_329, %c13_330] : memref<9x28xf32, #tpu.memory_space<smem>>
    %365 = vector.broadcast %364 : f32 to vector<32x128xf32>
    %366 = arith.mulf %363, %365 : vector<32x128xf32>
    %367 = arith.addf %361, %366 : vector<32x128xf32>
    %c0_331 = arith.constant 0 : index
    %c13_332 = arith.constant 13 : index
    %c0_333 = arith.constant 0 : index
    %c0_334 = arith.constant 0 : index
    %368 = vector.load %arg2[%c0_331, %c13_332, %c0_333, %c0_334] : memref<1x27x32x128xf32, #tpu.memory_space<vmem>>, vector<1x1x32x128xf32>
    %369 = vector.shape_cast %368 : vector<1x1x32x128xf32> to vector<32x128xf32>
    %c2_335 = arith.constant 2 : index
    %c14_336 = arith.constant 14 : index
    %370 = memref.load %arg3[%c2_335, %c14_336] : memref<9x28xf32, #tpu.memory_space<smem>>
    %371 = vector.broadcast %370 : f32 to vector<32x128xf32>
    %372 = arith.mulf %369, %371 : vector<32x128xf32>
    %373 = arith.addf %367, %372 : vector<32x128xf32>
    %c0_337 = arith.constant 0 : index
    %c14_338 = arith.constant 14 : index
    %c0_339 = arith.constant 0 : index
    %c0_340 = arith.constant 0 : index
    %374 = vector.load %arg2[%c0_337, %c14_338, %c0_339, %c0_340] : memref<1x27x32x128xf32, #tpu.memory_space<vmem>>, vector<1x1x32x128xf32>
    %375 = vector.shape_cast %374 : vector<1x1x32x128xf32> to vector<32x128xf32>
    %c2_341 = arith.constant 2 : index
    %c15_342 = arith.constant 15 : index
    %376 = memref.load %arg3[%c2_341, %c15_342] : memref<9x28xf32, #tpu.memory_space<smem>>
    %377 = vector.broadcast %376 : f32 to vector<32x128xf32>
    %378 = arith.mulf %375, %377 : vector<32x128xf32>
    %379 = arith.addf %373, %378 : vector<32x128xf32>
    %c0_343 = arith.constant 0 : index
    %c15_344 = arith.constant 15 : index
    %c0_345 = arith.constant 0 : index
    %c0_346 = arith.constant 0 : index
    %380 = vector.load %arg2[%c0_343, %c15_344, %c0_345, %c0_346] : memref<1x27x32x128xf32, #tpu.memory_space<vmem>>, vector<1x1x32x128xf32>
    %381 = vector.shape_cast %380 : vector<1x1x32x128xf32> to vector<32x128xf32>
    %c2_347 = arith.constant 2 : index
    %c16_348 = arith.constant 16 : index
    %382 = memref.load %arg3[%c2_347, %c16_348] : memref<9x28xf32, #tpu.memory_space<smem>>
    %383 = vector.broadcast %382 : f32 to vector<32x128xf32>
    %384 = arith.mulf %381, %383 : vector<32x128xf32>
    %385 = arith.addf %379, %384 : vector<32x128xf32>
    %c0_349 = arith.constant 0 : index
    %c16_350 = arith.constant 16 : index
    %c0_351 = arith.constant 0 : index
    %c0_352 = arith.constant 0 : index
    %386 = vector.load %arg2[%c0_349, %c16_350, %c0_351, %c0_352] : memref<1x27x32x128xf32, #tpu.memory_space<vmem>>, vector<1x1x32x128xf32>
    %387 = vector.shape_cast %386 : vector<1x1x32x128xf32> to vector<32x128xf32>
    %c2_353 = arith.constant 2 : index
    %c17_354 = arith.constant 17 : index
    %388 = memref.load %arg3[%c2_353, %c17_354] : memref<9x28xf32, #tpu.memory_space<smem>>
    %389 = vector.broadcast %388 : f32 to vector<32x128xf32>
    %390 = arith.mulf %387, %389 : vector<32x128xf32>
    %391 = arith.addf %385, %390 : vector<32x128xf32>
    %c0_355 = arith.constant 0 : index
    %c17_356 = arith.constant 17 : index
    %c0_357 = arith.constant 0 : index
    %c0_358 = arith.constant 0 : index
    %392 = vector.load %arg2[%c0_355, %c17_356, %c0_357, %c0_358] : memref<1x27x32x128xf32, #tpu.memory_space<vmem>>, vector<1x1x32x128xf32>
    %393 = vector.shape_cast %392 : vector<1x1x32x128xf32> to vector<32x128xf32>
    %c2_359 = arith.constant 2 : index
    %c18_360 = arith.constant 18 : index
    %394 = memref.load %arg3[%c2_359, %c18_360] : memref<9x28xf32, #tpu.memory_space<smem>>
    %395 = vector.broadcast %394 : f32 to vector<32x128xf32>
    %396 = arith.mulf %393, %395 : vector<32x128xf32>
    %397 = arith.addf %391, %396 : vector<32x128xf32>
    %c0_361 = arith.constant 0 : index
    %c18_362 = arith.constant 18 : index
    %c0_363 = arith.constant 0 : index
    %c0_364 = arith.constant 0 : index
    %398 = vector.load %arg2[%c0_361, %c18_362, %c0_363, %c0_364] : memref<1x27x32x128xf32, #tpu.memory_space<vmem>>, vector<1x1x32x128xf32>
    %399 = vector.shape_cast %398 : vector<1x1x32x128xf32> to vector<32x128xf32>
    %c2_365 = arith.constant 2 : index
    %c19_366 = arith.constant 19 : index
    %400 = memref.load %arg3[%c2_365, %c19_366] : memref<9x28xf32, #tpu.memory_space<smem>>
    %401 = vector.broadcast %400 : f32 to vector<32x128xf32>
    %402 = arith.mulf %399, %401 : vector<32x128xf32>
    %403 = arith.addf %397, %402 : vector<32x128xf32>
    %c0_367 = arith.constant 0 : index
    %c19_368 = arith.constant 19 : index
    %c0_369 = arith.constant 0 : index
    %c0_370 = arith.constant 0 : index
    %404 = vector.load %arg2[%c0_367, %c19_368, %c0_369, %c0_370] : memref<1x27x32x128xf32, #tpu.memory_space<vmem>>, vector<1x1x32x128xf32>
    %405 = vector.shape_cast %404 : vector<1x1x32x128xf32> to vector<32x128xf32>
    %c2_371 = arith.constant 2 : index
    %c20_372 = arith.constant 20 : index
    %406 = memref.load %arg3[%c2_371, %c20_372] : memref<9x28xf32, #tpu.memory_space<smem>>
    %407 = vector.broadcast %406 : f32 to vector<32x128xf32>
    %408 = arith.mulf %405, %407 : vector<32x128xf32>
    %409 = arith.addf %403, %408 : vector<32x128xf32>
    %c0_373 = arith.constant 0 : index
    %c20_374 = arith.constant 20 : index
    %c0_375 = arith.constant 0 : index
    %c0_376 = arith.constant 0 : index
    %410 = vector.load %arg2[%c0_373, %c20_374, %c0_375, %c0_376] : memref<1x27x32x128xf32, #tpu.memory_space<vmem>>, vector<1x1x32x128xf32>
    %411 = vector.shape_cast %410 : vector<1x1x32x128xf32> to vector<32x128xf32>
    %c2_377 = arith.constant 2 : index
    %c21_378 = arith.constant 21 : index
    %412 = memref.load %arg3[%c2_377, %c21_378] : memref<9x28xf32, #tpu.memory_space<smem>>
    %413 = vector.broadcast %412 : f32 to vector<32x128xf32>
    %414 = arith.mulf %411, %413 : vector<32x128xf32>
    %415 = arith.addf %409, %414 : vector<32x128xf32>
    %c0_379 = arith.constant 0 : index
    %c21_380 = arith.constant 21 : index
    %c0_381 = arith.constant 0 : index
    %c0_382 = arith.constant 0 : index
    %416 = vector.load %arg2[%c0_379, %c21_380, %c0_381, %c0_382] : memref<1x27x32x128xf32, #tpu.memory_space<vmem>>, vector<1x1x32x128xf32>
    %417 = vector.shape_cast %416 : vector<1x1x32x128xf32> to vector<32x128xf32>
    %c2_383 = arith.constant 2 : index
    %c22_384 = arith.constant 22 : index
    %418 = memref.load %arg3[%c2_383, %c22_384] : memref<9x28xf32, #tpu.memory_space<smem>>
    %419 = vector.broadcast %418 : f32 to vector<32x128xf32>
    %420 = arith.mulf %417, %419 : vector<32x128xf32>
    %421 = arith.addf %415, %420 : vector<32x128xf32>
    %c0_385 = arith.constant 0 : index
    %c22_386 = arith.constant 22 : index
    %c0_387 = arith.constant 0 : index
    %c0_388 = arith.constant 0 : index
    %422 = vector.load %arg2[%c0_385, %c22_386, %c0_387, %c0_388] : memref<1x27x32x128xf32, #tpu.memory_space<vmem>>, vector<1x1x32x128xf32>
    %423 = vector.shape_cast %422 : vector<1x1x32x128xf32> to vector<32x128xf32>
    %c2_389 = arith.constant 2 : index
    %c23_390 = arith.constant 23 : index
    %424 = memref.load %arg3[%c2_389, %c23_390] : memref<9x28xf32, #tpu.memory_space<smem>>
    %425 = vector.broadcast %424 : f32 to vector<32x128xf32>
    %426 = arith.mulf %423, %425 : vector<32x128xf32>
    %427 = arith.addf %421, %426 : vector<32x128xf32>
    %c0_391 = arith.constant 0 : index
    %c23_392 = arith.constant 23 : index
    %c0_393 = arith.constant 0 : index
    %c0_394 = arith.constant 0 : index
    %428 = vector.load %arg2[%c0_391, %c23_392, %c0_393, %c0_394] : memref<1x27x32x128xf32, #tpu.memory_space<vmem>>, vector<1x1x32x128xf32>
    %429 = vector.shape_cast %428 : vector<1x1x32x128xf32> to vector<32x128xf32>
    %c2_395 = arith.constant 2 : index
    %c24_396 = arith.constant 24 : index
    %430 = memref.load %arg3[%c2_395, %c24_396] : memref<9x28xf32, #tpu.memory_space<smem>>
    %431 = vector.broadcast %430 : f32 to vector<32x128xf32>
    %432 = arith.mulf %429, %431 : vector<32x128xf32>
    %433 = arith.addf %427, %432 : vector<32x128xf32>
    %c0_397 = arith.constant 0 : index
    %c24_398 = arith.constant 24 : index
    %c0_399 = arith.constant 0 : index
    %c0_400 = arith.constant 0 : index
    %434 = vector.load %arg2[%c0_397, %c24_398, %c0_399, %c0_400] : memref<1x27x32x128xf32, #tpu.memory_space<vmem>>, vector<1x1x32x128xf32>
    %435 = vector.shape_cast %434 : vector<1x1x32x128xf32> to vector<32x128xf32>
    %c2_401 = arith.constant 2 : index
    %c25_402 = arith.constant 25 : index
    %436 = memref.load %arg3[%c2_401, %c25_402] : memref<9x28xf32, #tpu.memory_space<smem>>
    %437 = vector.broadcast %436 : f32 to vector<32x128xf32>
    %438 = arith.mulf %435, %437 : vector<32x128xf32>
    %439 = arith.addf %433, %438 : vector<32x128xf32>
    %c0_403 = arith.constant 0 : index
    %c25_404 = arith.constant 25 : index
    %c0_405 = arith.constant 0 : index
    %c0_406 = arith.constant 0 : index
    %440 = vector.load %arg2[%c0_403, %c25_404, %c0_405, %c0_406] : memref<1x27x32x128xf32, #tpu.memory_space<vmem>>, vector<1x1x32x128xf32>
    %441 = vector.shape_cast %440 : vector<1x1x32x128xf32> to vector<32x128xf32>
    %c2_407 = arith.constant 2 : index
    %c26_408 = arith.constant 26 : index
    %442 = memref.load %arg3[%c2_407, %c26_408] : memref<9x28xf32, #tpu.memory_space<smem>>
    %443 = vector.broadcast %442 : f32 to vector<32x128xf32>
    %444 = arith.mulf %441, %443 : vector<32x128xf32>
    %445 = arith.addf %439, %444 : vector<32x128xf32>
    %c0_409 = arith.constant 0 : index
    %c26_410 = arith.constant 26 : index
    %c0_411 = arith.constant 0 : index
    %c0_412 = arith.constant 0 : index
    %446 = vector.load %arg2[%c0_409, %c26_410, %c0_411, %c0_412] : memref<1x27x32x128xf32, #tpu.memory_space<vmem>>, vector<1x1x32x128xf32>
    %447 = vector.shape_cast %446 : vector<1x1x32x128xf32> to vector<32x128xf32>
    %c2_413 = arith.constant 2 : index
    %c27_414 = arith.constant 27 : index
    %448 = memref.load %arg3[%c2_413, %c27_414] : memref<9x28xf32, #tpu.memory_space<smem>>
    %449 = vector.broadcast %448 : f32 to vector<32x128xf32>
    %450 = arith.mulf %447, %449 : vector<32x128xf32>
    %451 = arith.addf %445, %450 : vector<32x128xf32>
    %c0_415 = arith.constant 0 : index
    %c2_416 = arith.constant 2 : index
    %c0_417 = arith.constant 0 : index
    %c0_418 = arith.constant 0 : index
    %452 = vector.load %arg5[%c0_415, %c2_416, %c0_417, %c0_418] : memref<1x9x32x128xf32, #tpu.memory_space<vmem>>, vector<1x1x32x128xf32>
    %453 = vector.shape_cast %452 : vector<1x1x32x128xf32> to vector<32x128xf32>
    %454 = vector.shape_cast %451 : vector<32x128xf32> to vector<1x1x32x128xf32>
    tpu.vector_store %arg5[%c0_415, %c2_416, %c0_417, %c0_418], %454 {strides = array<i32>} : memref<1x9x32x128xf32, #tpu.memory_space<vmem>>, vector<1x1x32x128xf32>,
    %455 = arith.mulf %451, %451 : vector<32x128xf32>
    %456 = arith.addf %283, %455 : vector<32x128xf32>
    %c3_419 = arith.constant 3 : index
    %c0_420 = arith.constant 0 : index
    %457 = memref.load %arg3[%c3_419, %c0_420] : memref<9x28xf32, #tpu.memory_space<smem>>
    %458 = vector.broadcast %457 : f32 to vector<32x128xf32>
    %459 = arith.mulf %111, %458 : vector<32x128xf32>
    %c3_421 = arith.constant 3 : index
    %460 = memref.load %arg4[%c3_421] : memref<9xf32, #tpu.memory_space<smem>>
    %461 = vector.broadcast %460 : f32 to vector<32x128xf32>
    %462 = arith.addf %459, %461 : vector<32x128xf32>
    %c0_422 = arith.constant 0 : index
    %c0_423 = arith.constant 0 : index
    %c0_424 = arith.constant 0 : index
    %c0_425 = arith.constant 0 : index
    %463 = vector.load %arg2[%c0_422, %c0_423, %c0_424, %c0_425] : memref<1x27x32x128xf32, #tpu.memory_space<vmem>>, vector<1x1x32x128xf32>
    %464 = vector.shape_cast %463 : vector<1x1x32x128xf32> to vector<32x128xf32>
    %c3_426 = arith.constant 3 : index
    %c1_427 = arith.constant 1 : index
    %465 = memref.load %arg3[%c3_426, %c1_427] : memref<9x28xf32, #tpu.memory_space<smem>>
    %466 = vector.broadcast %465 : f32 to vector<32x128xf32>
    %467 = arith.mulf %464, %466 : vector<32x128xf32>
    %468 = arith.addf %462, %467 : vector<32x128xf32>
    %c0_428 = arith.constant 0 : index
    %c1_429 = arith.constant 1 : index
    %c0_430 = arith.constant 0 : index
    %c0_431 = arith.constant 0 : index
    %469 = vector.load %arg2[%c0_428, %c1_429, %c0_430, %c0_431] : memref<1x27x32x128xf32, #tpu.memory_space<vmem>>, vector<1x1x32x128xf32>
    %470 = vector.shape_cast %469 : vector<1x1x32x128xf32> to vector<32x128xf32>
    %c3_432 = arith.constant 3 : index
    %c2_433 = arith.constant 2 : index
    %471 = memref.load %arg3[%c3_432, %c2_433] : memref<9x28xf32, #tpu.memory_space<smem>>
    %472 = vector.broadcast %471 : f32 to vector<32x128xf32>
    %473 = arith.mulf %470, %472 : vector<32x128xf32>
    %474 = arith.addf %468, %473 : vector<32x128xf32>
    %c0_434 = arith.constant 0 : index
    %c2_435 = arith.constant 2 : index
    %c0_436 = arith.constant 0 : index
    %c0_437 = arith.constant 0 : index
    %475 = vector.load %arg2[%c0_434, %c2_435, %c0_436, %c0_437] : memref<1x27x32x128xf32, #tpu.memory_space<vmem>>, vector<1x1x32x128xf32>
    %476 = vector.shape_cast %475 : vector<1x1x32x128xf32> to vector<32x128xf32>
    %c3_438 = arith.constant 3 : index
    %c3_439 = arith.constant 3 : index
    %477 = memref.load %arg3[%c3_438, %c3_439] : memref<9x28xf32, #tpu.memory_space<smem>>
    %478 = vector.broadcast %477 : f32 to vector<32x128xf32>
    %479 = arith.mulf %476, %478 : vector<32x128xf32>
    %480 = arith.addf %474, %479 : vector<32x128xf32>
    %c0_440 = arith.constant 0 : index
    %c3_441 = arith.constant 3 : index
    %c0_442 = arith.constant 0 : index
    %c0_443 = arith.constant 0 : index
    %481 = vector.load %arg2[%c0_440, %c3_441, %c0_442, %c0_443] : memref<1x27x32x128xf32, #tpu.memory_space<vmem>>, vector<1x1x32x128xf32>
    %482 = vector.shape_cast %481 : vector<1x1x32x128xf32> to vector<32x128xf32>
    %c3_444 = arith.constant 3 : index
    %c4_445 = arith.constant 4 : index
    %483 = memref.load %arg3[%c3_444, %c4_445] : memref<9x28xf32, #tpu.memory_space<smem>>
    %484 = vector.broadcast %483 : f32 to vector<32x128xf32>
    %485 = arith.mulf %482, %484 : vector<32x128xf32>
    %486 = arith.addf %480, %485 : vector<32x128xf32>
    %c0_446 = arith.constant 0 : index
    %c4_447 = arith.constant 4 : index
    %c0_448 = arith.constant 0 : index
    %c0_449 = arith.constant 0 : index
    %487 = vector.load %arg2[%c0_446, %c4_447, %c0_448, %c0_449] : memref<1x27x32x128xf32, #tpu.memory_space<vmem>>, vector<1x1x32x128xf32>
    %488 = vector.shape_cast %487 : vector<1x1x32x128xf32> to vector<32x128xf32>
    %c3_450 = arith.constant 3 : index
    %c5_451 = arith.constant 5 : index
    %489 = memref.load %arg3[%c3_450, %c5_451] : memref<9x28xf32, #tpu.memory_space<smem>>
    %490 = vector.broadcast %489 : f32 to vector<32x128xf32>
    %491 = arith.mulf %488, %490 : vector<32x128xf32>
    %492 = arith.addf %486, %491 : vector<32x128xf32>
    %c0_452 = arith.constant 0 : index
    %c5_453 = arith.constant 5 : index
    %c0_454 = arith.constant 0 : index
    %c0_455 = arith.constant 0 : index
    %493 = vector.load %arg2[%c0_452, %c5_453, %c0_454, %c0_455] : memref<1x27x32x128xf32, #tpu.memory_space<vmem>>, vector<1x1x32x128xf32>
    %494 = vector.shape_cast %493 : vector<1x1x32x128xf32> to vector<32x128xf32>
    %c3_456 = arith.constant 3 : index
    %c6_457 = arith.constant 6 : index
    %495 = memref.load %arg3[%c3_456, %c6_457] : memref<9x28xf32, #tpu.memory_space<smem>>
    %496 = vector.broadcast %495 : f32 to vector<32x128xf32>
    %497 = arith.mulf %494, %496 : vector<32x128xf32>
    %498 = arith.addf %492, %497 : vector<32x128xf32>
    %c0_458 = arith.constant 0 : index
    %c6_459 = arith.constant 6 : index
    %c0_460 = arith.constant 0 : index
    %c0_461 = arith.constant 0 : index
    %499 = vector.load %arg2[%c0_458, %c6_459, %c0_460, %c0_461] : memref<1x27x32x128xf32, #tpu.memory_space<vmem>>, vector<1x1x32x128xf32>
    %500 = vector.shape_cast %499 : vector<1x1x32x128xf32> to vector<32x128xf32>
    %c3_462 = arith.constant 3 : index
    %c7_463 = arith.constant 7 : index
    %501 = memref.load %arg3[%c3_462, %c7_463] : memref<9x28xf32, #tpu.memory_space<smem>>
    %502 = vector.broadcast %501 : f32 to vector<32x128xf32>
    %503 = arith.mulf %500, %502 : vector<32x128xf32>
    %504 = arith.addf %498, %503 : vector<32x128xf32>
    %c0_464 = arith.constant 0 : index
    %c7_465 = arith.constant 7 : index
    %c0_466 = arith.constant 0 : index
    %c0_467 = arith.constant 0 : index
    %505 = vector.load %arg2[%c0_464, %c7_465, %c0_466, %c0_467] : memref<1x27x32x128xf32, #tpu.memory_space<vmem>>, vector<1x1x32x128xf32>
    %506 = vector.shape_cast %505 : vector<1x1x32x128xf32> to vector<32x128xf32>
    %c3_468 = arith.constant 3 : index
    %c8_469 = arith.constant 8 : index
    %507 = memref.load %arg3[%c3_468, %c8_469] : memref<9x28xf32, #tpu.memory_space<smem>>
    %508 = vector.broadcast %507 : f32 to vector<32x128xf32>
    %509 = arith.mulf %506, %508 : vector<32x128xf32>
    %510 = arith.addf %504, %509 : vector<32x128xf32>
    %c0_470 = arith.constant 0 : index
    %c8_471 = arith.constant 8 : index
    %c0_472 = arith.constant 0 : index
    %c0_473 = arith.constant 0 : index
    %511 = vector.load %arg2[%c0_470, %c8_471, %c0_472, %c0_473] : memref<1x27x32x128xf32, #tpu.memory_space<vmem>>, vector<1x1x32x128xf32>
    %512 = vector.shape_cast %511 : vector<1x1x32x128xf32> to vector<32x128xf32>
    %c3_474 = arith.constant 3 : index
    %c9_475 = arith.constant 9 : index
    %513 = memref.load %arg3[%c3_474, %c9_475] : memref<9x28xf32, #tpu.memory_space<smem>>
    %514 = vector.broadcast %513 : f32 to vector<32x128xf32>
    %515 = arith.mulf %512, %514 : vector<32x128xf32>
    %516 = arith.addf %510, %515 : vector<32x128xf32>
    %c0_476 = arith.constant 0 : index
    %c9_477 = arith.constant 9 : index
    %c0_478 = arith.constant 0 : index
    %c0_479 = arith.constant 0 : index
    %517 = vector.load %arg2[%c0_476, %c9_477, %c0_478, %c0_479] : memref<1x27x32x128xf32, #tpu.memory_space<vmem>>, vector<1x1x32x128xf32>
    %518 = vector.shape_cast %517 : vector<1x1x32x128xf32> to vector<32x128xf32>
    %c3_480 = arith.constant 3 : index
    %c10_481 = arith.constant 10 : index
    %519 = memref.load %arg3[%c3_480, %c10_481] : memref<9x28xf32, #tpu.memory_space<smem>>
    %520 = vector.broadcast %519 : f32 to vector<32x128xf32>
    %521 = arith.mulf %518, %520 : vector<32x128xf32>
    %522 = arith.addf %516, %521 : vector<32x128xf32>
    %c0_482 = arith.constant 0 : index
    %c10_483 = arith.constant 10 : index
    %c0_484 = arith.constant 0 : index
    %c0_485 = arith.constant 0 : index
    %523 = vector.load %arg2[%c0_482, %c10_483, %c0_484, %c0_485] : memref<1x27x32x128xf32, #tpu.memory_space<vmem>>, vector<1x1x32x128xf32>
    %524 = vector.shape_cast %523 : vector<1x1x32x128xf32> to vector<32x128xf32>
    %c3_486 = arith.constant 3 : index
    %c11_487 = arith.constant 11 : index
    %525 = memref.load %arg3[%c3_486, %c11_487] : memref<9x28xf32, #tpu.memory_space<smem>>
    %526 = vector.broadcast %525 : f32 to vector<32x128xf32>
    %527 = arith.mulf %524, %526 : vector<32x128xf32>
    %528 = arith.addf %522, %527 : vector<32x128xf32>
    %c0_488 = arith.constant 0 : index
    %c11_489 = arith.constant 11 : index
    %c0_490 = arith.constant 0 : index
    %c0_491 = arith.constant 0 : index
    %529 = vector.load %arg2[%c0_488, %c11_489, %c0_490, %c0_491] : memref<1x27x32x128xf32, #tpu.memory_space<vmem>>, vector<1x1x32x128xf32>
    %530 = vector.shape_cast %529 : vector<1x1x32x128xf32> to vector<32x128xf32>
    %c3_492 = arith.constant 3 : index
    %c12_493 = arith.constant 12 : index
    %531 = memref.load %arg3[%c3_492, %c12_493] : memref<9x28xf32, #tpu.memory_space<smem>>
    %532 = vector.broadcast %531 : f32 to vector<32x128xf32>
    %533 = arith.mulf %530, %532 : vector<32x128xf32>
    %534 = arith.addf %528, %533 : vector<32x128xf32>
    %c0_494 = arith.constant 0 : index
    %c12_495 = arith.constant 12 : index
    %c0_496 = arith.constant 0 : index
    %c0_497 = arith.constant 0 : index
    %535 = vector.load %arg2[%c0_494, %c12_495, %c0_496, %c0_497] : memref<1x27x32x128xf32, #tpu.memory_space<vmem>>, vector<1x1x32x128xf32>
    %536 = vector.shape_cast %535 : vector<1x1x32x128xf32> to vector<32x128xf32>
    %c3_498 = arith.constant 3 : index
    %c13_499 = arith.constant 13 : index
    %537 = memref.load %arg3[%c3_498, %c13_499] : memref<9x28xf32, #tpu.memory_space<smem>>
    %538 = vector.broadcast %537 : f32 to vector<32x128xf32>
    %539 = arith.mulf %536, %538 : vector<32x128xf32>
    %540 = arith.addf %534, %539 : vector<32x128xf32>
    %c0_500 = arith.constant 0 : index
    %c13_501 = arith.constant 13 : index
    %c0_502 = arith.constant 0 : index
    %c0_503 = arith.constant 0 : index
    %541 = vector.load %arg2[%c0_500, %c13_501, %c0_502, %c0_503] : memref<1x27x32x128xf32, #tpu.memory_space<vmem>>, vector<1x1x32x128xf32>
    %542 = vector.shape_cast %541 : vector<1x1x32x128xf32> to vector<32x128xf32>
    %c3_504 = arith.constant 3 : index
    %c14_505 = arith.constant 14 : index
    %543 = memref.load %arg3[%c3_504, %c14_505] : memref<9x28xf32, #tpu.memory_space<smem>>
    %544 = vector.broadcast %543 : f32 to vector<32x128xf32>
    %545 = arith.mulf %542, %544 : vector<32x128xf32>
    %546 = arith.addf %540, %545 : vector<32x128xf32>
    %c0_506 = arith.constant 0 : index
    %c14_507 = arith.constant 14 : index
    %c0_508 = arith.constant 0 : index
    %c0_509 = arith.constant 0 : index
    %547 = vector.load %arg2[%c0_506, %c14_507, %c0_508, %c0_509] : memref<1x27x32x128xf32, #tpu.memory_space<vmem>>, vector<1x1x32x128xf32>
    %548 = vector.shape_cast %547 : vector<1x1x32x128xf32> to vector<32x128xf32>
    %c3_510 = arith.constant 3 : index
    %c15_511 = arith.constant 15 : index
    %549 = memref.load %arg3[%c3_510, %c15_511] : memref<9x28xf32, #tpu.memory_space<smem>>
    %550 = vector.broadcast %549 : f32 to vector<32x128xf32>
    %551 = arith.mulf %548, %550 : vector<32x128xf32>
    %552 = arith.addf %546, %551 : vector<32x128xf32>
    %c0_512 = arith.constant 0 : index
    %c15_513 = arith.constant 15 : index
    %c0_514 = arith.constant 0 : index
    %c0_515 = arith.constant 0 : index
    %553 = vector.load %arg2[%c0_512, %c15_513, %c0_514, %c0_515] : memref<1x27x32x128xf32, #tpu.memory_space<vmem>>, vector<1x1x32x128xf32>
    %554 = vector.shape_cast %553 : vector<1x1x32x128xf32> to vector<32x128xf32>
    %c3_516 = arith.constant 3 : index
    %c16_517 = arith.constant 16 : index
    %555 = memref.load %arg3[%c3_516, %c16_517] : memref<9x28xf32, #tpu.memory_space<smem>>
    %556 = vector.broadcast %555 : f32 to vector<32x128xf32>
    %557 = arith.mulf %554, %556 : vector<32x128xf32>
    %558 = arith.addf %552, %557 : vector<32x128xf32>
    %c0_518 = arith.constant 0 : index
    %c16_519 = arith.constant 16 : index
    %c0_520 = arith.constant 0 : index
    %c0_521 = arith.constant 0 : index
    %559 = vector.load %arg2[%c0_518, %c16_519, %c0_520, %c0_521] : memref<1x27x32x128xf32, #tpu.memory_space<vmem>>, vector<1x1x32x128xf32>
    %560 = vector.shape_cast %559 : vector<1x1x32x128xf32> to vector<32x128xf32>
    %c3_522 = arith.constant 3 : index
    %c17_523 = arith.constant 17 : index
    %561 = memref.load %arg3[%c3_522, %c17_523] : memref<9x28xf32, #tpu.memory_space<smem>>
    %562 = vector.broadcast %561 : f32 to vector<32x128xf32>
    %563 = arith.mulf %560, %562 : vector<32x128xf32>
    %564 = arith.addf %558, %563 : vector<32x128xf32>
    %c0_524 = arith.constant 0 : index
    %c17_525 = arith.constant 17 : index
    %c0_526 = arith.constant 0 : index
    %c0_527 = arith.constant 0 : index
    %565 = vector.load %arg2[%c0_524, %c17_525, %c0_526, %c0_527] : memref<1x27x32x128xf32, #tpu.memory_space<vmem>>, vector<1x1x32x128xf32>
    %566 = vector.shape_cast %565 : vector<1x1x32x128xf32> to vector<32x128xf32>
    %c3_528 = arith.constant 3 : index
    %c18_529 = arith.constant 18 : index
    %567 = memref.load %arg3[%c3_528, %c18_529] : memref<9x28xf32, #tpu.memory_space<smem>>
    %568 = vector.broadcast %567 : f32 to vector<32x128xf32>
    %569 = arith.mulf %566, %568 : vector<32x128xf32>
    %570 = arith.addf %564, %569 : vector<32x128xf32>
    %c0_530 = arith.constant 0 : index
    %c18_531 = arith.constant 18 : index
    %c0_532 = arith.constant 0 : index
    %c0_533 = arith.constant 0 : index
    %571 = vector.load %arg2[%c0_530, %c18_531, %c0_532, %c0_533] : memref<1x27x32x128xf32, #tpu.memory_space<vmem>>, vector<1x1x32x128xf32>
    %572 = vector.shape_cast %571 : vector<1x1x32x128xf32> to vector<32x128xf32>
    %c3_534 = arith.constant 3 : index
    %c19_535 = arith.constant 19 : index
    %573 = memref.load %arg3[%c3_534, %c19_535] : memref<9x28xf32, #tpu.memory_space<smem>>
    %574 = vector.broadcast %573 : f32 to vector<32x128xf32>
    %575 = arith.mulf %572, %574 : vector<32x128xf32>
    %576 = arith.addf %570, %575 : vector<32x128xf32>
    %c0_536 = arith.constant 0 : index
    %c19_537 = arith.constant 19 : index
    %c0_538 = arith.constant 0 : index
    %c0_539 = arith.constant 0 : index
    %577 = vector.load %arg2[%c0_536, %c19_537, %c0_538, %c0_539] : memref<1x27x32x128xf32, #tpu.memory_space<vmem>>, vector<1x1x32x128xf32>
    %578 = vector.shape_cast %577 : vector<1x1x32x128xf32> to vector<32x128xf32>
    %c3_540 = arith.constant 3 : index
    %c20_541 = arith.constant 20 : index
    %579 = memref.load %arg3[%c3_540, %c20_541] : memref<9x28xf32, #tpu.memory_space<smem>>
    %580 = vector.broadcast %579 : f32 to vector<32x128xf32>
    %581 = arith.mulf %578, %580 : vector<32x128xf32>
    %582 = arith.addf %576, %581 : vector<32x128xf32>
    %c0_542 = arith.constant 0 : index
    %c20_543 = arith.constant 20 : index
    %c0_544 = arith.constant 0 : index
    %c0_545 = arith.constant 0 : index
    %583 = vector.load %arg2[%c0_542, %c20_543, %c0_544, %c0_545] : memref<1x27x32x128xf32, #tpu.memory_space<vmem>>, vector<1x1x32x128xf32>
    %584 = vector.shape_cast %583 : vector<1x1x32x128xf32> to vector<32x128xf32>
    %c3_546 = arith.constant 3 : index
    %c21_547 = arith.constant 21 : index
    %585 = memref.load %arg3[%c3_546, %c21_547] : memref<9x28xf32, #tpu.memory_space<smem>>
    %586 = vector.broadcast %585 : f32 to vector<32x128xf32>
    %587 = arith.mulf %584, %586 : vector<32x128xf32>
    %588 = arith.addf %582, %587 : vector<32x128xf32>
    %c0_548 = arith.constant 0 : index
    %c21_549 = arith.constant 21 : index
    %c0_550 = arith.constant 0 : index
    %c0_551 = arith.constant 0 : index
    %589 = vector.load %arg2[%c0_548, %c21_549, %c0_550, %c0_551] : memref<1x27x32x128xf32, #tpu.memory_space<vmem>>, vector<1x1x32x128xf32>
    %590 = vector.shape_cast %589 : vector<1x1x32x128xf32> to vector<32x128xf32>
    %c3_552 = arith.constant 3 : index
    %c22_553 = arith.constant 22 : index
    %591 = memref.load %arg3[%c3_552, %c22_553] : memref<9x28xf32, #tpu.memory_space<smem>>
    %592 = vector.broadcast %591 : f32 to vector<32x128xf32>
    %593 = arith.mulf %590, %592 : vector<32x128xf32>
    %594 = arith.addf %588, %593 : vector<32x128xf32>
    %c0_554 = arith.constant 0 : index
    %c22_555 = arith.constant 22 : index
    %c0_556 = arith.constant 0 : index
    %c0_557 = arith.constant 0 : index
    %595 = vector.load %arg2[%c0_554, %c22_555, %c0_556, %c0_557] : memref<1x27x32x128xf32, #tpu.memory_space<vmem>>, vector<1x1x32x128xf32>
    %596 = vector.shape_cast %595 : vector<1x1x32x128xf32> to vector<32x128xf32>
    %c3_558 = arith.constant 3 : index
    %c23_559 = arith.constant 23 : index
    %597 = memref.load %arg3[%c3_558, %c23_559] : memref<9x28xf32, #tpu.memory_space<smem>>
    %598 = vector.broadcast %597 : f32 to vector<32x128xf32>
    %599 = arith.mulf %596, %598 : vector<32x128xf32>
    %600 = arith.addf %594, %599 : vector<32x128xf32>
    %c0_560 = arith.constant 0 : index
    %c23_561 = arith.constant 23 : index
    %c0_562 = arith.constant 0 : index
    %c0_563 = arith.constant 0 : index
    %601 = vector.load %arg2[%c0_560, %c23_561, %c0_562, %c0_563] : memref<1x27x32x128xf32, #tpu.memory_space<vmem>>, vector<1x1x32x128xf32>
    %602 = vector.shape_cast %601 : vector<1x1x32x128xf32> to vector<32x128xf32>
    %c3_564 = arith.constant 3 : index
    %c24_565 = arith.constant 24 : index
    %603 = memref.load %arg3[%c3_564, %c24_565] : memref<9x28xf32, #tpu.memory_space<smem>>
    %604 = vector.broadcast %603 : f32 to vector<32x128xf32>
    %605 = arith.mulf %602, %604 : vector<32x128xf32>
    %606 = arith.addf %600, %605 : vector<32x128xf32>
    %c0_566 = arith.constant 0 : index
    %c24_567 = arith.constant 24 : index
    %c0_568 = arith.constant 0 : index
    %c0_569 = arith.constant 0 : index
    %607 = vector.load %arg2[%c0_566, %c24_567, %c0_568, %c0_569] : memref<1x27x32x128xf32, #tpu.memory_space<vmem>>, vector<1x1x32x128xf32>
    %608 = vector.shape_cast %607 : vector<1x1x32x128xf32> to vector<32x128xf32>
    %c3_570 = arith.constant 3 : index
    %c25_571 = arith.constant 25 : index
    %609 = memref.load %arg3[%c3_570, %c25_571] : memref<9x28xf32, #tpu.memory_space<smem>>
    %610 = vector.broadcast %609 : f32 to vector<32x128xf32>
    %611 = arith.mulf %608, %610 : vector<32x128xf32>
    %612 = arith.addf %606, %611 : vector<32x128xf32>
    %c0_572 = arith.constant 0 : index
    %c25_573 = arith.constant 25 : index
    %c0_574 = arith.constant 0 : index
    %c0_575 = arith.constant 0 : index
    %613 = vector.load %arg2[%c0_572, %c25_573, %c0_574, %c0_575] : memref<1x27x32x128xf32, #tpu.memory_space<vmem>>, vector<1x1x32x128xf32>
    %614 = vector.shape_cast %613 : vector<1x1x32x128xf32> to vector<32x128xf32>
    %c3_576 = arith.constant 3 : index
    %c26_577 = arith.constant 26 : index
    %615 = memref.load %arg3[%c3_576, %c26_577] : memref<9x28xf32, #tpu.memory_space<smem>>
    %616 = vector.broadcast %615 : f32 to vector<32x128xf32>
    %617 = arith.mulf %614, %616 : vector<32x128xf32>
    %618 = arith.addf %612, %617 : vector<32x128xf32>
    %c0_578 = arith.constant 0 : index
    %c26_579 = arith.constant 26 : index
    %c0_580 = arith.constant 0 : index
    %c0_581 = arith.constant 0 : index
    %619 = vector.load %arg2[%c0_578, %c26_579, %c0_580, %c0_581] : memref<1x27x32x128xf32, #tpu.memory_space<vmem>>, vector<1x1x32x128xf32>
    %620 = vector.shape_cast %619 : vector<1x1x32x128xf32> to vector<32x128xf32>
    %c3_582 = arith.constant 3 : index
    %c27_583 = arith.constant 27 : index
    %621 = memref.load %arg3[%c3_582, %c27_583] : memref<9x28xf32, #tpu.memory_space<smem>>
    %622 = vector.broadcast %621 : f32 to vector<32x128xf32>
    %623 = arith.mulf %620, %622 : vector<32x128xf32>
    %624 = arith.addf %618, %623 : vector<32x128xf32>
    %c0_584 = arith.constant 0 : index
    %c3_585 = arith.constant 3 : index
    %c0_586 = arith.constant 0 : index
    %c0_587 = arith.constant 0 : index
    %625 = vector.load %arg5[%c0_584, %c3_585, %c0_586, %c0_587] : memref<1x9x32x128xf32, #tpu.memory_space<vmem>>, vector<1x1x32x128xf32>
    %626 = vector.shape_cast %625 : vector<1x1x32x128xf32> to vector<32x128xf32>
    %627 = vector.shape_cast %624 : vector<32x128xf32> to vector<1x1x32x128xf32>
    tpu.vector_store %arg5[%c0_584, %c3_585, %c0_586, %c0_587], %627 {strides = array<i32>} : memref<1x9x32x128xf32, #tpu.memory_space<vmem>>, vector<1x1x32x128xf32>,
    %628 = arith.mulf %624, %624 : vector<32x128xf32>
    %629 = arith.addf %456, %628 : vector<32x128xf32>
    %c4_588 = arith.constant 4 : index
    %c0_589 = arith.constant 0 : index
    %630 = memref.load %arg3[%c4_588, %c0_589] : memref<9x28xf32, #tpu.memory_space<smem>>
    %631 = vector.broadcast %630 : f32 to vector<32x128xf32>
    %632 = arith.mulf %111, %631 : vector<32x128xf32>
    %c4_590 = arith.constant 4 : index
    %633 = memref.load %arg4[%c4_590] : memref<9xf32, #tpu.memory_space<smem>>
    %634 = vector.broadcast %633 : f32 to vector<32x128xf32>
    %635 = arith.addf %632, %634 : vector<32x128xf32>
    %c0_591 = arith.constant 0 : index
    %c0_592 = arith.constant 0 : index
    %c0_593 = arith.constant 0 : index
    %c0_594 = arith.constant 0 : index
    %636 = vector.load %arg2[%c0_591, %c0_592, %c0_593, %c0_594] : memref<1x27x32x128xf32, #tpu.memory_space<vmem>>, vector<1x1x32x128xf32>
    %637 = vector.shape_cast %636 : vector<1x1x32x128xf32> to vector<32x128xf32>
    %c4_595 = arith.constant 4 : index
    %c1_596 = arith.constant 1 : index
    %638 = memref.load %arg3[%c4_595, %c1_596] : memref<9x28xf32, #tpu.memory_space<smem>>
    %639 = vector.broadcast %638 : f32 to vector<32x128xf32>
    %640 = arith.mulf %637, %639 : vector<32x128xf32>
    %641 = arith.addf %635, %640 : vector<32x128xf32>
    %c0_597 = arith.constant 0 : index
    %c1_598 = arith.constant 1 : index
    %c0_599 = arith.constant 0 : index
    %c0_600 = arith.constant 0 : index
    %642 = vector.load %arg2[%c0_597, %c1_598, %c0_599, %c0_600] : memref<1x27x32x128xf32, #tpu.memory_space<vmem>>, vector<1x1x32x128xf32>
    %643 = vector.shape_cast %642 : vector<1x1x32x128xf32> to vector<32x128xf32>
    %c4_601 = arith.constant 4 : index
    %c2_602 = arith.constant 2 : index
    %644 = memref.load %arg3[%c4_601, %c2_602] : memref<9x28xf32, #tpu.memory_space<smem>>
    %645 = vector.broadcast %644 : f32 to vector<32x128xf32>
    %646 = arith.mulf %643, %645 : vector<32x128xf32>
    %647 = arith.addf %641, %646 : vector<32x128xf32>
    %c0_603 = arith.constant 0 : index
    %c2_604 = arith.constant 2 : index
    %c0_605 = arith.constant 0 : index
    %c0_606 = arith.constant 0 : index
    %648 = vector.load %arg2[%c0_603, %c2_604, %c0_605, %c0_606] : memref<1x27x32x128xf32, #tpu.memory_space<vmem>>, vector<1x1x32x128xf32>
    %649 = vector.shape_cast %648 : vector<1x1x32x128xf32> to vector<32x128xf32>
    %c4_607 = arith.constant 4 : index
    %c3_608 = arith.constant 3 : index
    %650 = memref.load %arg3[%c4_607, %c3_608] : memref<9x28xf32, #tpu.memory_space<smem>>
    %651 = vector.broadcast %650 : f32 to vector<32x128xf32>
    %652 = arith.mulf %649, %651 : vector<32x128xf32>
    %653 = arith.addf %647, %652 : vector<32x128xf32>
    %c0_609 = arith.constant 0 : index
    %c3_610 = arith.constant 3 : index
    %c0_611 = arith.constant 0 : index
    %c0_612 = arith.constant 0 : index
    %654 = vector.load %arg2[%c0_609, %c3_610, %c0_611, %c0_612] : memref<1x27x32x128xf32, #tpu.memory_space<vmem>>, vector<1x1x32x128xf32>
    %655 = vector.shape_cast %654 : vector<1x1x32x128xf32> to vector<32x128xf32>
    %c4_613 = arith.constant 4 : index
    %c4_614 = arith.constant 4 : index
    %656 = memref.load %arg3[%c4_613, %c4_614] : memref<9x28xf32, #tpu.memory_space<smem>>
    %657 = vector.broadcast %656 : f32 to vector<32x128xf32>
    %658 = arith.mulf %655, %657 : vector<32x128xf32>
    %659 = arith.addf %653, %658 : vector<32x128xf32>
    %c0_615 = arith.constant 0 : index
    %c4_616 = arith.constant 4 : index
    %c0_617 = arith.constant 0 : index
    %c0_618 = arith.constant 0 : index
    %660 = vector.load %arg2[%c0_615, %c4_616, %c0_617, %c0_618] : memref<1x27x32x128xf32, #tpu.memory_space<vmem>>, vector<1x1x32x128xf32>
    %661 = vector.shape_cast %660 : vector<1x1x32x128xf32> to vector<32x128xf32>
    %c4_619 = arith.constant 4 : index
    %c5_620 = arith.constant 5 : index
    %662 = memref.load %arg3[%c4_619, %c5_620] : memref<9x28xf32, #tpu.memory_space<smem>>
    %663 = vector.broadcast %662 : f32 to vector<32x128xf32>
    %664 = arith.mulf %661, %663 : vector<32x128xf32>
    %665 = arith.addf %659, %664 : vector<32x128xf32>
    %c0_621 = arith.constant 0 : index
    %c5_622 = arith.constant 5 : index
    %c0_623 = arith.constant 0 : index
    %c0_624 = arith.constant 0 : index
    %666 = vector.load %arg2[%c0_621, %c5_622, %c0_623, %c0_624] : memref<1x27x32x128xf32, #tpu.memory_space<vmem>>, vector<1x1x32x128xf32>
    %667 = vector.shape_cast %666 : vector<1x1x32x128xf32> to vector<32x128xf32>
    %c4_625 = arith.constant 4 : index
    %c6_626 = arith.constant 6 : index
    %668 = memref.load %arg3[%c4_625, %c6_626] : memref<9x28xf32, #tpu.memory_space<smem>>
    %669 = vector.broadcast %668 : f32 to vector<32x128xf32>
    %670 = arith.mulf %667, %669 : vector<32x128xf32>
    %671 = arith.addf %665, %670 : vector<32x128xf32>
    %c0_627 = arith.constant 0 : index
    %c6_628 = arith.constant 6 : index
    %c0_629 = arith.constant 0 : index
    %c0_630 = arith.constant 0 : index
    %672 = vector.load %arg2[%c0_627, %c6_628, %c0_629, %c0_630] : memref<1x27x32x128xf32, #tpu.memory_space<vmem>>, vector<1x1x32x128xf32>
    %673 = vector.shape_cast %672 : vector<1x1x32x128xf32> to vector<32x128xf32>
    %c4_631 = arith.constant 4 : index
    %c7_632 = arith.constant 7 : index
    %674 = memref.load %arg3[%c4_631, %c7_632] : memref<9x28xf32, #tpu.memory_space<smem>>
    %675 = vector.broadcast %674 : f32 to vector<32x128xf32>
    %676 = arith.mulf %673, %675 : vector<32x128xf32>
    %677 = arith.addf %671, %676 : vector<32x128xf32>
    %c0_633 = arith.constant 0 : index
    %c7_634 = arith.constant 7 : index
    %c0_635 = arith.constant 0 : index
    %c0_636 = arith.constant 0 : index
    %678 = vector.load %arg2[%c0_633, %c7_634, %c0_635, %c0_636] : memref<1x27x32x128xf32, #tpu.memory_space<vmem>>, vector<1x1x32x128xf32>
    %679 = vector.shape_cast %678 : vector<1x1x32x128xf32> to vector<32x128xf32>
    %c4_637 = arith.constant 4 : index
    %c8_638 = arith.constant 8 : index
    %680 = memref.load %arg3[%c4_637, %c8_638] : memref<9x28xf32, #tpu.memory_space<smem>>
    %681 = vector.broadcast %680 : f32 to vector<32x128xf32>
    %682 = arith.mulf %679, %681 : vector<32x128xf32>
    %683 = arith.addf %677, %682 : vector<32x128xf32>
    %c0_639 = arith.constant 0 : index
    %c8_640 = arith.constant 8 : index
    %c0_641 = arith.constant 0 : index
    %c0_642 = arith.constant 0 : index
    %684 = vector.load %arg2[%c0_639, %c8_640, %c0_641, %c0_642] : memref<1x27x32x128xf32, #tpu.memory_space<vmem>>, vector<1x1x32x128xf32>
    %685 = vector.shape_cast %684 : vector<1x1x32x128xf32> to vector<32x128xf32>
    %c4_643 = arith.constant 4 : index
    %c9_644 = arith.constant 9 : index
    %686 = memref.load %arg3[%c4_643, %c9_644] : memref<9x28xf32, #tpu.memory_space<smem>>
    %687 = vector.broadcast %686 : f32 to vector<32x128xf32>
    %688 = arith.mulf %685, %687 : vector<32x128xf32>
    %689 = arith.addf %683, %688 : vector<32x128xf32>
    %c0_645 = arith.constant 0 : index
    %c9_646 = arith.constant 9 : index
    %c0_647 = arith.constant 0 : index
    %c0_648 = arith.constant 0 : index
    %690 = vector.load %arg2[%c0_645, %c9_646, %c0_647, %c0_648] : memref<1x27x32x128xf32, #tpu.memory_space<vmem>>, vector<1x1x32x128xf32>
    %691 = vector.shape_cast %690 : vector<1x1x32x128xf32> to vector<32x128xf32>
    %c4_649 = arith.constant 4 : index
    %c10_650 = arith.constant 10 : index
    %692 = memref.load %arg3[%c4_649, %c10_650] : memref<9x28xf32, #tpu.memory_space<smem>>
    %693 = vector.broadcast %692 : f32 to vector<32x128xf32>
    %694 = arith.mulf %691, %693 : vector<32x128xf32>
    %695 = arith.addf %689, %694 : vector<32x128xf32>
    %c0_651 = arith.constant 0 : index
    %c10_652 = arith.constant 10 : index
    %c0_653 = arith.constant 0 : index
    %c0_654 = arith.constant 0 : index
    %696 = vector.load %arg2[%c0_651, %c10_652, %c0_653, %c0_654] : memref<1x27x32x128xf32, #tpu.memory_space<vmem>>, vector<1x1x32x128xf32>
    %697 = vector.shape_cast %696 : vector<1x1x32x128xf32> to vector<32x128xf32>
    %c4_655 = arith.constant 4 : index
    %c11_656 = arith.constant 11 : index
    %698 = memref.load %arg3[%c4_655, %c11_656] : memref<9x28xf32, #tpu.memory_space<smem>>
    %699 = vector.broadcast %698 : f32 to vector<32x128xf32>
    %700 = arith.mulf %697, %699 : vector<32x128xf32>
    %701 = arith.addf %695, %700 : vector<32x128xf32>
    %c0_657 = arith.constant 0 : index
    %c11_658 = arith.constant 11 : index
    %c0_659 = arith.constant 0 : index
    %c0_660 = arith.constant 0 : index
    %702 = vector.load %arg2[%c0_657, %c11_658, %c0_659, %c0_660] : memref<1x27x32x128xf32, #tpu.memory_space<vmem>>, vector<1x1x32x128xf32>
    %703 = vector.shape_cast %702 : vector<1x1x32x128xf32> to vector<32x128xf32>
    %c4_661 = arith.constant 4 : index
    %c12_662 = arith.constant 12 : index
    %704 = memref.load %arg3[%c4_661, %c12_662] : memref<9x28xf32, #tpu.memory_space<smem>>
    %705 = vector.broadcast %704 : f32 to vector<32x128xf32>
    %706 = arith.mulf %703, %705 : vector<32x128xf32>
    %707 = arith.addf %701, %706 : vector<32x128xf32>
    %c0_663 = arith.constant 0 : index
    %c12_664 = arith.constant 12 : index
    %c0_665 = arith.constant 0 : index
    %c0_666 = arith.constant 0 : index
    %708 = vector.load %arg2[%c0_663, %c12_664, %c0_665, %c0_666] : memref<1x27x32x128xf32, #tpu.memory_space<vmem>>, vector<1x1x32x128xf32>
    %709 = vector.shape_cast %708 : vector<1x1x32x128xf32> to vector<32x128xf32>
    %c4_667 = arith.constant 4 : index
    %c13_668 = arith.constant 13 : index
    %710 = memref.load %arg3[%c4_667, %c13_668] : memref<9x28xf32, #tpu.memory_space<smem>>
    %711 = vector.broadcast %710 : f32 to vector<32x128xf32>
    %712 = arith.mulf %709, %711 : vector<32x128xf32>
    %713 = arith.addf %707, %712 : vector<32x128xf32>
    %c0_669 = arith.constant 0 : index
    %c13_670 = arith.constant 13 : index
    %c0_671 = arith.constant 0 : index
    %c0_672 = arith.constant 0 : index
    %714 = vector.load %arg2[%c0_669, %c13_670, %c0_671, %c0_672] : memref<1x27x32x128xf32, #tpu.memory_space<vmem>>, vector<1x1x32x128xf32>
    %715 = vector.shape_cast %714 : vector<1x1x32x128xf32> to vector<32x128xf32>
    %c4_673 = arith.constant 4 : index
    %c14_674 = arith.constant 14 : index
    %716 = memref.load %arg3[%c4_673, %c14_674] : memref<9x28xf32, #tpu.memory_space<smem>>
    %717 = vector.broadcast %716 : f32 to vector<32x128xf32>
    %718 = arith.mulf %715, %717 : vector<32x128xf32>
    %719 = arith.addf %713, %718 : vector<32x128xf32>
    %c0_675 = arith.constant 0 : index
    %c14_676 = arith.constant 14 : index
    %c0_677 = arith.constant 0 : index
    %c0_678 = arith.constant 0 : index
    %720 = vector.load %arg2[%c0_675, %c14_676, %c0_677, %c0_678] : memref<1x27x32x128xf32, #tpu.memory_space<vmem>>, vector<1x1x32x128xf32>
    %721 = vector.shape_cast %720 : vector<1x1x32x128xf32> to vector<32x128xf32>
    %c4_679 = arith.constant 4 : index
    %c15_680 = arith.constant 15 : index
    %722 = memref.load %arg3[%c4_679, %c15_680] : memref<9x28xf32, #tpu.memory_space<smem>>
    %723 = vector.broadcast %722 : f32 to vector<32x128xf32>
    %724 = arith.mulf %721, %723 : vector<32x128xf32>
    %725 = arith.addf %719, %724 : vector<32x128xf32>
    %c0_681 = arith.constant 0 : index
    %c15_682 = arith.constant 15 : index
    %c0_683 = arith.constant 0 : index
    %c0_684 = arith.constant 0 : index
    %726 = vector.load %arg2[%c0_681, %c15_682, %c0_683, %c0_684] : memref<1x27x32x128xf32, #tpu.memory_space<vmem>>, vector<1x1x32x128xf32>
    %727 = vector.shape_cast %726 : vector<1x1x32x128xf32> to vector<32x128xf32>
    %c4_685 = arith.constant 4 : index
    %c16_686 = arith.constant 16 : index
    %728 = memref.load %arg3[%c4_685, %c16_686] : memref<9x28xf32, #tpu.memory_space<smem>>
    %729 = vector.broadcast %728 : f32 to vector<32x128xf32>
    %730 = arith.mulf %727, %729 : vector<32x128xf32>
    %731 = arith.addf %725, %730 : vector<32x128xf32>
    %c0_687 = arith.constant 0 : index
    %c16_688 = arith.constant 16 : index
    %c0_689 = arith.constant 0 : index
    %c0_690 = arith.constant 0 : index
    %732 = vector.load %arg2[%c0_687, %c16_688, %c0_689, %c0_690] : memref<1x27x32x128xf32, #tpu.memory_space<vmem>>, vector<1x1x32x128xf32>
    %733 = vector.shape_cast %732 : vector<1x1x32x128xf32> to vector<32x128xf32>
    %c4_691 = arith.constant 4 : index
    %c17_692 = arith.constant 17 : index
    %734 = memref.load %arg3[%c4_691, %c17_692] : memref<9x28xf32, #tpu.memory_space<smem>>
    %735 = vector.broadcast %734 : f32 to vector<32x128xf32>
    %736 = arith.mulf %733, %735 : vector<32x128xf32>
    %737 = arith.addf %731, %736 : vector<32x128xf32>
    %c0_693 = arith.constant 0 : index
    %c17_694 = arith.constant 17 : index
    %c0_695 = arith.constant 0 : index
    %c0_696 = arith.constant 0 : index
    %738 = vector.load %arg2[%c0_693, %c17_694, %c0_695, %c0_696] : memref<1x27x32x128xf32, #tpu.memory_space<vmem>>, vector<1x1x32x128xf32>
    %739 = vector.shape_cast %738 : vector<1x1x32x128xf32> to vector<32x128xf32>
    %c4_697 = arith.constant 4 : index
    %c18_698 = arith.constant 18 : index
    %740 = memref.load %arg3[%c4_697, %c18_698] : memref<9x28xf32, #tpu.memory_space<smem>>
    %741 = vector.broadcast %740 : f32 to vector<32x128xf32>
    %742 = arith.mulf %739, %741 : vector<32x128xf32>
    %743 = arith.addf %737, %742 : vector<32x128xf32>
    %c0_699 = arith.constant 0 : index
    %c18_700 = arith.constant 18 : index
    %c0_701 = arith.constant 0 : index
    %c0_702 = arith.constant 0 : index
    %744 = vector.load %arg2[%c0_699, %c18_700, %c0_701, %c0_702] : memref<1x27x32x128xf32, #tpu.memory_space<vmem>>, vector<1x1x32x128xf32>
    %745 = vector.shape_cast %744 : vector<1x1x32x128xf32> to vector<32x128xf32>
    %c4_703 = arith.constant 4 : index
    %c19_704 = arith.constant 19 : index
    %746 = memref.load %arg3[%c4_703, %c19_704] : memref<9x28xf32, #tpu.memory_space<smem>>
    %747 = vector.broadcast %746 : f32 to vector<32x128xf32>
    %748 = arith.mulf %745, %747 : vector<32x128xf32>
    %749 = arith.addf %743, %748 : vector<32x128xf32>
    %c0_705 = arith.constant 0 : index
    %c19_706 = arith.constant 19 : index
    %c0_707 = arith.constant 0 : index
    %c0_708 = arith.constant 0 : index
    %750 = vector.load %arg2[%c0_705, %c19_706, %c0_707, %c0_708] : memref<1x27x32x128xf32, #tpu.memory_space<vmem>>, vector<1x1x32x128xf32>
    %751 = vector.shape_cast %750 : vector<1x1x32x128xf32> to vector<32x128xf32>
    %c4_709 = arith.constant 4 : index
    %c20_710 = arith.constant 20 : index
    %752 = memref.load %arg3[%c4_709, %c20_710] : memref<9x28xf32, #tpu.memory_space<smem>>
    %753 = vector.broadcast %752 : f32 to vector<32x128xf32>
    %754 = arith.mulf %751, %753 : vector<32x128xf32>
    %755 = arith.addf %749, %754 : vector<32x128xf32>
    %c0_711 = arith.constant 0 : index
    %c20_712 = arith.constant 20 : index
    %c0_713 = arith.constant 0 : index
    %c0_714 = arith.constant 0 : index
    %756 = vector.load %arg2[%c0_711, %c20_712, %c0_713, %c0_714] : memref<1x27x32x128xf32, #tpu.memory_space<vmem>>, vector<1x1x32x128xf32>
    %757 = vector.shape_cast %756 : vector<1x1x32x128xf32> to vector<32x128xf32>
    %c4_715 = arith.constant 4 : index
    %c21_716 = arith.constant 21 : index
    %758 = memref.load %arg3[%c4_715, %c21_716] : memref<9x28xf32, #tpu.memory_space<smem>>
    %759 = vector.broadcast %758 : f32 to vector<32x128xf32>
    %760 = arith.mulf %757, %759 : vector<32x128xf32>
    %761 = arith.addf %755, %760 : vector<32x128xf32>
    %c0_717 = arith.constant 0 : index
    %c21_718 = arith.constant 21 : index
    %c0_719 = arith.constant 0 : index
    %c0_720 = arith.constant 0 : index
    %762 = vector.load %arg2[%c0_717, %c21_718, %c0_719, %c0_720] : memref<1x27x32x128xf32, #tpu.memory_space<vmem>>, vector<1x1x32x128xf32>
    %763 = vector.shape_cast %762 : vector<1x1x32x128xf32> to vector<32x128xf32>
    %c4_721 = arith.constant 4 : index
    %c22_722 = arith.constant 22 : index
    %764 = memref.load %arg3[%c4_721, %c22_722] : memref<9x28xf32, #tpu.memory_space<smem>>
    %765 = vector.broadcast %764 : f32 to vector<32x128xf32>
    %766 = arith.mulf %763, %765 : vector<32x128xf32>
    %767 = arith.addf %761, %766 : vector<32x128xf32>
    %c0_723 = arith.constant 0 : index
    %c22_724 = arith.constant 22 : index
    %c0_725 = arith.constant 0 : index
    %c0_726 = arith.constant 0 : index
    %768 = vector.load %arg2[%c0_723, %c22_724, %c0_725, %c0_726] : memref<1x27x32x128xf32, #tpu.memory_space<vmem>>, vector<1x1x32x128xf32>
    %769 = vector.shape_cast %768 : vector<1x1x32x128xf32> to vector<32x128xf32>
    %c4_727 = arith.constant 4 : index
    %c23_728 = arith.constant 23 : index
    %770 = memref.load %arg3[%c4_727, %c23_728] : memref<9x28xf32, #tpu.memory_space<smem>>
    %771 = vector.broadcast %770 : f32 to vector<32x128xf32>
    %772 = arith.mulf %769, %771 : vector<32x128xf32>
    %773 = arith.addf %767, %772 : vector<32x128xf32>
    %c0_729 = arith.constant 0 : index
    %c23_730 = arith.constant 23 : index
    %c0_731 = arith.constant 0 : index
    %c0_732 = arith.constant 0 : index
    %774 = vector.load %arg2[%c0_729, %c23_730, %c0_731, %c0_732] : memref<1x27x32x128xf32, #tpu.memory_space<vmem>>, vector<1x1x32x128xf32>
    %775 = vector.shape_cast %774 : vector<1x1x32x128xf32> to vector<32x128xf32>
    %c4_733 = arith.constant 4 : index
    %c24_734 = arith.constant 24 : index
    %776 = memref.load %arg3[%c4_733, %c24_734] : memref<9x28xf32, #tpu.memory_space<smem>>
    %777 = vector.broadcast %776 : f32 to vector<32x128xf32>
    %778 = arith.mulf %775, %777 : vector<32x128xf32>
    %779 = arith.addf %773, %778 : vector<32x128xf32>
    %c0_735 = arith.constant 0 : index
    %c24_736 = arith.constant 24 : index
    %c0_737 = arith.constant 0 : index
    %c0_738 = arith.constant 0 : index
    %780 = vector.load %arg2[%c0_735, %c24_736, %c0_737, %c0_738] : memref<1x27x32x128xf32, #tpu.memory_space<vmem>>, vector<1x1x32x128xf32>
    %781 = vector.shape_cast %780 : vector<1x1x32x128xf32> to vector<32x128xf32>
    %c4_739 = arith.constant 4 : index
    %c25_740 = arith.constant 25 : index
    %782 = memref.load %arg3[%c4_739, %c25_740] : memref<9x28xf32, #tpu.memory_space<smem>>
    %783 = vector.broadcast %782 : f32 to vector<32x128xf32>
    %784 = arith.mulf %781, %783 : vector<32x128xf32>
    %785 = arith.addf %779, %784 : vector<32x128xf32>
    %c0_741 = arith.constant 0 : index
    %c25_742 = arith.constant 25 : index
    %c0_743 = arith.constant 0 : index
    %c0_744 = arith.constant 0 : index
    %786 = vector.load %arg2[%c0_741, %c25_742, %c0_743, %c0_744] : memref<1x27x32x128xf32, #tpu.memory_space<vmem>>, vector<1x1x32x128xf32>
    %787 = vector.shape_cast %786 : vector<1x1x32x128xf32> to vector<32x128xf32>
    %c4_745 = arith.constant 4 : index
    %c26_746 = arith.constant 26 : index
    %788 = memref.load %arg3[%c4_745, %c26_746] : memref<9x28xf32, #tpu.memory_space<smem>>
    %789 = vector.broadcast %788 : f32 to vector<32x128xf32>
    %790 = arith.mulf %787, %789 : vector<32x128xf32>
    %791 = arith.addf %785, %790 : vector<32x128xf32>
    %c0_747 = arith.constant 0 : index
    %c26_748 = arith.constant 26 : index
    %c0_749 = arith.constant 0 : index
    %c0_750 = arith.constant 0 : index
    %792 = vector.load %arg2[%c0_747, %c26_748, %c0_749, %c0_750] : memref<1x27x32x128xf32, #tpu.memory_space<vmem>>, vector<1x1x32x128xf32>
    %793 = vector.shape_cast %792 : vector<1x1x32x128xf32> to vector<32x128xf32>
    %c4_751 = arith.constant 4 : index
    %c27_752 = arith.constant 27 : index
    %794 = memref.load %arg3[%c4_751, %c27_752] : memref<9x28xf32, #tpu.memory_space<smem>>
    %795 = vector.broadcast %794 : f32 to vector<32x128xf32>
    %796 = arith.mulf %793, %795 : vector<32x128xf32>
    %797 = arith.addf %791, %796 : vector<32x128xf32>
    %c0_753 = arith.constant 0 : index
    %c4_754 = arith.constant 4 : index
    %c0_755 = arith.constant 0 : index
    %c0_756 = arith.constant 0 : index
    %798 = vector.load %arg5[%c0_753, %c4_754, %c0_755, %c0_756] : memref<1x9x32x128xf32, #tpu.memory_space<vmem>>, vector<1x1x32x128xf32>
    %799 = vector.shape_cast %798 : vector<1x1x32x128xf32> to vector<32x128xf32>
    %800 = vector.shape_cast %797 : vector<32x128xf32> to vector<1x1x32x128xf32>
    tpu.vector_store %arg5[%c0_753, %c4_754, %c0_755, %c0_756], %800 {strides = array<i32>} : memref<1x9x32x128xf32, #tpu.memory_space<vmem>>, vector<1x1x32x128xf32>,
    %801 = arith.mulf %797, %797 : vector<32x128xf32>
    %802 = arith.addf %629, %801 : vector<32x128xf32>
    %c5_757 = arith.constant 5 : index
    %c0_758 = arith.constant 0 : index
    %803 = memref.load %arg3[%c5_757, %c0_758] : memref<9x28xf32, #tpu.memory_space<smem>>
    %804 = vector.broadcast %803 : f32 to vector<32x128xf32>
    %805 = arith.mulf %111, %804 : vector<32x128xf32>
    %c5_759 = arith.constant 5 : index
    %806 = memref.load %arg4[%c5_759] : memref<9xf32, #tpu.memory_space<smem>>
    %807 = vector.broadcast %806 : f32 to vector<32x128xf32>
    %808 = arith.addf %805, %807 : vector<32x128xf32>
    %c0_760 = arith.constant 0 : index
    %c0_761 = arith.constant 0 : index
    %c0_762 = arith.constant 0 : index
    %c0_763 = arith.constant 0 : index
    %809 = vector.load %arg2[%c0_760, %c0_761, %c0_762, %c0_763] : memref<1x27x32x128xf32, #tpu.memory_space<vmem>>, vector<1x1x32x128xf32>
    %810 = vector.shape_cast %809 : vector<1x1x32x128xf32> to vector<32x128xf32>
    %c5_764 = arith.constant 5 : index
    %c1_765 = arith.constant 1 : index
    %811 = memref.load %arg3[%c5_764, %c1_765] : memref<9x28xf32, #tpu.memory_space<smem>>
    %812 = vector.broadcast %811 : f32 to vector<32x128xf32>
    %813 = arith.mulf %810, %812 : vector<32x128xf32>
    %814 = arith.addf %808, %813 : vector<32x128xf32>
    %c0_766 = arith.constant 0 : index
    %c1_767 = arith.constant 1 : index
    %c0_768 = arith.constant 0 : index
    %c0_769 = arith.constant 0 : index
    %815 = vector.load %arg2[%c0_766, %c1_767, %c0_768, %c0_769] : memref<1x27x32x128xf32, #tpu.memory_space<vmem>>, vector<1x1x32x128xf32>
    %816 = vector.shape_cast %815 : vector<1x1x32x128xf32> to vector<32x128xf32>
    %c5_770 = arith.constant 5 : index
    %c2_771 = arith.constant 2 : index
    %817 = memref.load %arg3[%c5_770, %c2_771] : memref<9x28xf32, #tpu.memory_space<smem>>
    %818 = vector.broadcast %817 : f32 to vector<32x128xf32>
    %819 = arith.mulf %816, %818 : vector<32x128xf32>
    %820 = arith.addf %814, %819 : vector<32x128xf32>
    %c0_772 = arith.constant 0 : index
    %c2_773 = arith.constant 2 : index
    %c0_774 = arith.constant 0 : index
    %c0_775 = arith.constant 0 : index
    %821 = vector.load %arg2[%c0_772, %c2_773, %c0_774, %c0_775] : memref<1x27x32x128xf32, #tpu.memory_space<vmem>>, vector<1x1x32x128xf32>
    %822 = vector.shape_cast %821 : vector<1x1x32x128xf32> to vector<32x128xf32>
    %c5_776 = arith.constant 5 : index
    %c3_777 = arith.constant 3 : index
    %823 = memref.load %arg3[%c5_776, %c3_777] : memref<9x28xf32, #tpu.memory_space<smem>>
    %824 = vector.broadcast %823 : f32 to vector<32x128xf32>
    %825 = arith.mulf %822, %824 : vector<32x128xf32>
    %826 = arith.addf %820, %825 : vector<32x128xf32>
    %c0_778 = arith.constant 0 : index
    %c3_779 = arith.constant 3 : index
    %c0_780 = arith.constant 0 : index
    %c0_781 = arith.constant 0 : index
    %827 = vector.load %arg2[%c0_778, %c3_779, %c0_780, %c0_781] : memref<1x27x32x128xf32, #tpu.memory_space<vmem>>, vector<1x1x32x128xf32>
    %828 = vector.shape_cast %827 : vector<1x1x32x128xf32> to vector<32x128xf32>
    %c5_782 = arith.constant 5 : index
    %c4_783 = arith.constant 4 : index
    %829 = memref.load %arg3[%c5_782, %c4_783] : memref<9x28xf32, #tpu.memory_space<smem>>
    %830 = vector.broadcast %829 : f32 to vector<32x128xf32>
    %831 = arith.mulf %828, %830 : vector<32x128xf32>
    %832 = arith.addf %826, %831 : vector<32x128xf32>
    %c0_784 = arith.constant 0 : index
    %c4_785 = arith.constant 4 : index
    %c0_786 = arith.constant 0 : index
    %c0_787 = arith.constant 0 : index
    %833 = vector.load %arg2[%c0_784, %c4_785, %c0_786, %c0_787] : memref<1x27x32x128xf32, #tpu.memory_space<vmem>>, vector<1x1x32x128xf32>
    %834 = vector.shape_cast %833 : vector<1x1x32x128xf32> to vector<32x128xf32>
    %c5_788 = arith.constant 5 : index
    %c5_789 = arith.constant 5 : index
    %835 = memref.load %arg3[%c5_788, %c5_789] : memref<9x28xf32, #tpu.memory_space<smem>>
    %836 = vector.broadcast %835 : f32 to vector<32x128xf32>
    %837 = arith.mulf %834, %836 : vector<32x128xf32>
    %838 = arith.addf %832, %837 : vector<32x128xf32>
    %c0_790 = arith.constant 0 : index
    %c5_791 = arith.constant 5 : index
    %c0_792 = arith.constant 0 : index
    %c0_793 = arith.constant 0 : index
    %839 = vector.load %arg2[%c0_790, %c5_791, %c0_792, %c0_793] : memref<1x27x32x128xf32, #tpu.memory_space<vmem>>, vector<1x1x32x128xf32>
    %840 = vector.shape_cast %839 : vector<1x1x32x128xf32> to vector<32x128xf32>
    %c5_794 = arith.constant 5 : index
    %c6_795 = arith.constant 6 : index
    %841 = memref.load %arg3[%c5_794, %c6_795] : memref<9x28xf32, #tpu.memory_space<smem>>
    %842 = vector.broadcast %841 : f32 to vector<32x128xf32>
    %843 = arith.mulf %840, %842 : vector<32x128xf32>
    %844 = arith.addf %838, %843 : vector<32x128xf32>
    %c0_796 = arith.constant 0 : index
    %c6_797 = arith.constant 6 : index
    %c0_798 = arith.constant 0 : index
    %c0_799 = arith.constant 0 : index
    %845 = vector.load %arg2[%c0_796, %c6_797, %c0_798, %c0_799] : memref<1x27x32x128xf32, #tpu.memory_space<vmem>>, vector<1x1x32x128xf32>
    %846 = vector.shape_cast %845 : vector<1x1x32x128xf32> to vector<32x128xf32>
    %c5_800 = arith.constant 5 : index
    %c7_801 = arith.constant 7 : index
    %847 = memref.load %arg3[%c5_800, %c7_801] : memref<9x28xf32, #tpu.memory_space<smem>>
    %848 = vector.broadcast %847 : f32 to vector<32x128xf32>
    %849 = arith.mulf %846, %848 : vector<32x128xf32>
    %850 = arith.addf %844, %849 : vector<32x128xf32>
    %c0_802 = arith.constant 0 : index
    %c7_803 = arith.constant 7 : index
    %c0_804 = arith.constant 0 : index
    %c0_805 = arith.constant 0 : index
    %851 = vector.load %arg2[%c0_802, %c7_803, %c0_804, %c0_805] : memref<1x27x32x128xf32, #tpu.memory_space<vmem>>, vector<1x1x32x128xf32>
    %852 = vector.shape_cast %851 : vector<1x1x32x128xf32> to vector<32x128xf32>
    %c5_806 = arith.constant 5 : index
    %c8_807 = arith.constant 8 : index
    %853 = memref.load %arg3[%c5_806, %c8_807] : memref<9x28xf32, #tpu.memory_space<smem>>
    %854 = vector.broadcast %853 : f32 to vector<32x128xf32>
    %855 = arith.mulf %852, %854 : vector<32x128xf32>
    %856 = arith.addf %850, %855 : vector<32x128xf32>
    %c0_808 = arith.constant 0 : index
    %c8_809 = arith.constant 8 : index
    %c0_810 = arith.constant 0 : index
    %c0_811 = arith.constant 0 : index
    %857 = vector.load %arg2[%c0_808, %c8_809, %c0_810, %c0_811] : memref<1x27x32x128xf32, #tpu.memory_space<vmem>>, vector<1x1x32x128xf32>
    %858 = vector.shape_cast %857 : vector<1x1x32x128xf32> to vector<32x128xf32>
    %c5_812 = arith.constant 5 : index
    %c9_813 = arith.constant 9 : index
    %859 = memref.load %arg3[%c5_812, %c9_813] : memref<9x28xf32, #tpu.memory_space<smem>>
    %860 = vector.broadcast %859 : f32 to vector<32x128xf32>
    %861 = arith.mulf %858, %860 : vector<32x128xf32>
    %862 = arith.addf %856, %861 : vector<32x128xf32>
    %c0_814 = arith.constant 0 : index
    %c9_815 = arith.constant 9 : index
    %c0_816 = arith.constant 0 : index
    %c0_817 = arith.constant 0 : index
    %863 = vector.load %arg2[%c0_814, %c9_815, %c0_816, %c0_817] : memref<1x27x32x128xf32, #tpu.memory_space<vmem>>, vector<1x1x32x128xf32>
    %864 = vector.shape_cast %863 : vector<1x1x32x128xf32> to vector<32x128xf32>
    %c5_818 = arith.constant 5 : index
    %c10_819 = arith.constant 10 : index
    %865 = memref.load %arg3[%c5_818, %c10_819] : memref<9x28xf32, #tpu.memory_space<smem>>
    %866 = vector.broadcast %865 : f32 to vector<32x128xf32>
    %867 = arith.mulf %864, %866 : vector<32x128xf32>
    %868 = arith.addf %862, %867 : vector<32x128xf32>
    %c0_820 = arith.constant 0 : index
    %c10_821 = arith.constant 10 : index
    %c0_822 = arith.constant 0 : index
    %c0_823 = arith.constant 0 : index
    %869 = vector.load %arg2[%c0_820, %c10_821, %c0_822, %c0_823] : memref<1x27x32x128xf32, #tpu.memory_space<vmem>>, vector<1x1x32x128xf32>
    %870 = vector.shape_cast %869 : vector<1x1x32x128xf32> to vector<32x128xf32>
    %c5_824 = arith.constant 5 : index
    %c11_825 = arith.constant 11 : index
    %871 = memref.load %arg3[%c5_824, %c11_825] : memref<9x28xf32, #tpu.memory_space<smem>>
    %872 = vector.broadcast %871 : f32 to vector<32x128xf32>
    %873 = arith.mulf %870, %872 : vector<32x128xf32>
    %874 = arith.addf %868, %873 : vector<32x128xf32>
    %c0_826 = arith.constant 0 : index
    %c11_827 = arith.constant 11 : index
    %c0_828 = arith.constant 0 : index
    %c0_829 = arith.constant 0 : index
    %875 = vector.load %arg2[%c0_826, %c11_827, %c0_828, %c0_829] : memref<1x27x32x128xf32, #tpu.memory_space<vmem>>, vector<1x1x32x128xf32>
    %876 = vector.shape_cast %875 : vector<1x1x32x128xf32> to vector<32x128xf32>
    %c5_830 = arith.constant 5 : index
    %c12_831 = arith.constant 12 : index
    %877 = memref.load %arg3[%c5_830, %c12_831] : memref<9x28xf32, #tpu.memory_space<smem>>
    %878 = vector.broadcast %877 : f32 to vector<32x128xf32>
    %879 = arith.mulf %876, %878 : vector<32x128xf32>
    %880 = arith.addf %874, %879 : vector<32x128xf32>
    %c0_832 = arith.constant 0 : index
    %c12_833 = arith.constant 12 : index
    %c0_834 = arith.constant 0 : index
    %c0_835 = arith.constant 0 : index
    %881 = vector.load %arg2[%c0_832, %c12_833, %c0_834, %c0_835] : memref<1x27x32x128xf32, #tpu.memory_space<vmem>>, vector<1x1x32x128xf32>
    %882 = vector.shape_cast %881 : vector<1x1x32x128xf32> to vector<32x128xf32>
    %c5_836 = arith.constant 5 : index
    %c13_837 = arith.constant 13 : index
    %883 = memref.load %arg3[%c5_836, %c13_837] : memref<9x28xf32, #tpu.memory_space<smem>>
    %884 = vector.broadcast %883 : f32 to vector<32x128xf32>
    %885 = arith.mulf %882, %884 : vector<32x128xf32>
    %886 = arith.addf %880, %885 : vector<32x128xf32>
    %c0_838 = arith.constant 0 : index
    %c13_839 = arith.constant 13 : index
    %c0_840 = arith.constant 0 : index
    %c0_841 = arith.constant 0 : index
    %887 = vector.load %arg2[%c0_838, %c13_839, %c0_840, %c0_841] : memref<1x27x32x128xf32, #tpu.memory_space<vmem>>, vector<1x1x32x128xf32>
    %888 = vector.shape_cast %887 : vector<1x1x32x128xf32> to vector<32x128xf32>
    %c5_842 = arith.constant 5 : index
    %c14_843 = arith.constant 14 : index
    %889 = memref.load %arg3[%c5_842, %c14_843] : memref<9x28xf32, #tpu.memory_space<smem>>
    %890 = vector.broadcast %889 : f32 to vector<32x128xf32>
    %891 = arith.mulf %888, %890 : vector<32x128xf32>
    %892 = arith.addf %886, %891 : vector<32x128xf32>
    %c0_844 = arith.constant 0 : index
    %c14_845 = arith.constant 14 : index
    %c0_846 = arith.constant 0 : index
    %c0_847 = arith.constant 0 : index
    %893 = vector.load %arg2[%c0_844, %c14_845, %c0_846, %c0_847] : memref<1x27x32x128xf32, #tpu.memory_space<vmem>>, vector<1x1x32x128xf32>
    %894 = vector.shape_cast %893 : vector<1x1x32x128xf32> to vector<32x128xf32>
    %c5_848 = arith.constant 5 : index
    %c15_849 = arith.constant 15 : index
    %895 = memref.load %arg3[%c5_848, %c15_849] : memref<9x28xf32, #tpu.memory_space<smem>>
    %896 = vector.broadcast %895 : f32 to vector<32x128xf32>
    %897 = arith.mulf %894, %896 : vector<32x128xf32>
    %898 = arith.addf %892, %897 : vector<32x128xf32>
    %c0_850 = arith.constant 0 : index
    %c15_851 = arith.constant 15 : index
    %c0_852 = arith.constant 0 : index
    %c0_853 = arith.constant 0 : index
    %899 = vector.load %arg2[%c0_850, %c15_851, %c0_852, %c0_853] : memref<1x27x32x128xf32, #tpu.memory_space<vmem>>, vector<1x1x32x128xf32>
    %900 = vector.shape_cast %899 : vector<1x1x32x128xf32> to vector<32x128xf32>
    %c5_854 = arith.constant 5 : index
    %c16_855 = arith.constant 16 : index
    %901 = memref.load %arg3[%c5_854, %c16_855] : memref<9x28xf32, #tpu.memory_space<smem>>
    %902 = vector.broadcast %901 : f32 to vector<32x128xf32>
    %903 = arith.mulf %900, %902 : vector<32x128xf32>
    %904 = arith.addf %898, %903 : vector<32x128xf32>
    %c0_856 = arith.constant 0 : index
    %c16_857 = arith.constant 16 : index
    %c0_858 = arith.constant 0 : index
    %c0_859 = arith.constant 0 : index
    %905 = vector.load %arg2[%c0_856, %c16_857, %c0_858, %c0_859] : memref<1x27x32x128xf32, #tpu.memory_space<vmem>>, vector<1x1x32x128xf32>
    %906 = vector.shape_cast %905 : vector<1x1x32x128xf32> to vector<32x128xf32>
    %c5_860 = arith.constant 5 : index
    %c17_861 = arith.constant 17 : index
    %907 = memref.load %arg3[%c5_860, %c17_861] : memref<9x28xf32, #tpu.memory_space<smem>>
    %908 = vector.broadcast %907 : f32 to vector<32x128xf32>
    %909 = arith.mulf %906, %908 : vector<32x128xf32>
    %910 = arith.addf %904, %909 : vector<32x128xf32>
    %c0_862 = arith.constant 0 : index
    %c17_863 = arith.constant 17 : index
    %c0_864 = arith.constant 0 : index
    %c0_865 = arith.constant 0 : index
    %911 = vector.load %arg2[%c0_862, %c17_863, %c0_864, %c0_865] : memref<1x27x32x128xf32, #tpu.memory_space<vmem>>, vector<1x1x32x128xf32>
    %912 = vector.shape_cast %911 : vector<1x1x32x128xf32> to vector<32x128xf32>
    %c5_866 = arith.constant 5 : index
    %c18_867 = arith.constant 18 : index
    %913 = memref.load %arg3[%c5_866, %c18_867] : memref<9x28xf32, #tpu.memory_space<smem>>
    %914 = vector.broadcast %913 : f32 to vector<32x128xf32>
    %915 = arith.mulf %912, %914 : vector<32x128xf32>
    %916 = arith.addf %910, %915 : vector<32x128xf32>
    %c0_868 = arith.constant 0 : index
    %c18_869 = arith.constant 18 : index
    %c0_870 = arith.constant 0 : index
    %c0_871 = arith.constant 0 : index
    %917 = vector.load %arg2[%c0_868, %c18_869, %c0_870, %c0_871] : memref<1x27x32x128xf32, #tpu.memory_space<vmem>>, vector<1x1x32x128xf32>
    %918 = vector.shape_cast %917 : vector<1x1x32x128xf32> to vector<32x128xf32>
    %c5_872 = arith.constant 5 : index
    %c19_873 = arith.constant 19 : index
    %919 = memref.load %arg3[%c5_872, %c19_873] : memref<9x28xf32, #tpu.memory_space<smem>>
    %920 = vector.broadcast %919 : f32 to vector<32x128xf32>
    %921 = arith.mulf %918, %920 : vector<32x128xf32>
    %922 = arith.addf %916, %921 : vector<32x128xf32>
    %c0_874 = arith.constant 0 : index
    %c19_875 = arith.constant 19 : index
    %c0_876 = arith.constant 0 : index
    %c0_877 = arith.constant 0 : index
    %923 = vector.load %arg2[%c0_874, %c19_875, %c0_876, %c0_877] : memref<1x27x32x128xf32, #tpu.memory_space<vmem>>, vector<1x1x32x128xf32>
    %924 = vector.shape_cast %923 : vector<1x1x32x128xf32> to vector<32x128xf32>
    %c5_878 = arith.constant 5 : index
    %c20_879 = arith.constant 20 : index
    %925 = memref.load %arg3[%c5_878, %c20_879] : memref<9x28xf32, #tpu.memory_space<smem>>
    %926 = vector.broadcast %925 : f32 to vector<32x128xf32>
    %927 = arith.mulf %924, %926 : vector<32x128xf32>
    %928 = arith.addf %922, %927 : vector<32x128xf32>
    %c0_880 = arith.constant 0 : index
    %c20_881 = arith.constant 20 : index
    %c0_882 = arith.constant 0 : index
    %c0_883 = arith.constant 0 : index
    %929 = vector.load %arg2[%c0_880, %c20_881, %c0_882, %c0_883] : memref<1x27x32x128xf32, #tpu.memory_space<vmem>>, vector<1x1x32x128xf32>
    %930 = vector.shape_cast %929 : vector<1x1x32x128xf32> to vector<32x128xf32>
    %c5_884 = arith.constant 5 : index
    %c21_885 = arith.constant 21 : index
    %931 = memref.load %arg3[%c5_884, %c21_885] : memref<9x28xf32, #tpu.memory_space<smem>>
    %932 = vector.broadcast %931 : f32 to vector<32x128xf32>
    %933 = arith.mulf %930, %932 : vector<32x128xf32>
    %934 = arith.addf %928, %933 : vector<32x128xf32>
    %c0_886 = arith.constant 0 : index
    %c21_887 = arith.constant 21 : index
    %c0_888 = arith.constant 0 : index
    %c0_889 = arith.constant 0 : index
    %935 = vector.load %arg2[%c0_886, %c21_887, %c0_888, %c0_889] : memref<1x27x32x128xf32, #tpu.memory_space<vmem>>, vector<1x1x32x128xf32>
    %936 = vector.shape_cast %935 : vector<1x1x32x128xf32> to vector<32x128xf32>
    %c5_890 = arith.constant 5 : index
    %c22_891 = arith.constant 22 : index
    %937 = memref.load %arg3[%c5_890, %c22_891] : memref<9x28xf32, #tpu.memory_space<smem>>
    %938 = vector.broadcast %937 : f32 to vector<32x128xf32>
    %939 = arith.mulf %936, %938 : vector<32x128xf32>
    %940 = arith.addf %934, %939 : vector<32x128xf32>
    %c0_892 = arith.constant 0 : index
    %c22_893 = arith.constant 22 : index
    %c0_894 = arith.constant 0 : index
    %c0_895 = arith.constant 0 : index
    %941 = vector.load %arg2[%c0_892, %c22_893, %c0_894, %c0_895] : memref<1x27x32x128xf32, #tpu.memory_space<vmem>>, vector<1x1x32x128xf32>
    %942 = vector.shape_cast %941 : vector<1x1x32x128xf32> to vector<32x128xf32>
    %c5_896 = arith.constant 5 : index
    %c23_897 = arith.constant 23 : index
    %943 = memref.load %arg3[%c5_896, %c23_897] : memref<9x28xf32, #tpu.memory_space<smem>>
    %944 = vector.broadcast %943 : f32 to vector<32x128xf32>
    %945 = arith.mulf %942, %944 : vector<32x128xf32>
    %946 = arith.addf %940, %945 : vector<32x128xf32>
    %c0_898 = arith.constant 0 : index
    %c23_899 = arith.constant 23 : index
    %c0_900 = arith.constant 0 : index
    %c0_901 = arith.constant 0 : index
    %947 = vector.load %arg2[%c0_898, %c23_899, %c0_900, %c0_901] : memref<1x27x32x128xf32, #tpu.memory_space<vmem>>, vector<1x1x32x128xf32>
    %948 = vector.shape_cast %947 : vector<1x1x32x128xf32> to vector<32x128xf32>
    %c5_902 = arith.constant 5 : index
    %c24_903 = arith.constant 24 : index
    %949 = memref.load %arg3[%c5_902, %c24_903] : memref<9x28xf32, #tpu.memory_space<smem>>
    %950 = vector.broadcast %949 : f32 to vector<32x128xf32>
    %951 = arith.mulf %948, %950 : vector<32x128xf32>
    %952 = arith.addf %946, %951 : vector<32x128xf32>
    %c0_904 = arith.constant 0 : index
    %c24_905 = arith.constant 24 : index
    %c0_906 = arith.constant 0 : index
    %c0_907 = arith.constant 0 : index
    %953 = vector.load %arg2[%c0_904, %c24_905, %c0_906, %c0_907] : memref<1x27x32x128xf32, #tpu.memory_space<vmem>>, vector<1x1x32x128xf32>
    %954 = vector.shape_cast %953 : vector<1x1x32x128xf32> to vector<32x128xf32>
    %c5_908 = arith.constant 5 : index
    %c25_909 = arith.constant 25 : index
    %955 = memref.load %arg3[%c5_908, %c25_909] : memref<9x28xf32, #tpu.memory_space<smem>>
    %956 = vector.broadcast %955 : f32 to vector<32x128xf32>
    %957 = arith.mulf %954, %956 : vector<32x128xf32>
    %958 = arith.addf %952, %957 : vector<32x128xf32>
    %c0_910 = arith.constant 0 : index
    %c25_911 = arith.constant 25 : index
    %c0_912 = arith.constant 0 : index
    %c0_913 = arith.constant 0 : index
    %959 = vector.load %arg2[%c0_910, %c25_911, %c0_912, %c0_913] : memref<1x27x32x128xf32, #tpu.memory_space<vmem>>, vector<1x1x32x128xf32>
    %960 = vector.shape_cast %959 : vector<1x1x32x128xf32> to vector<32x128xf32>
    %c5_914 = arith.constant 5 : index
    %c26_915 = arith.constant 26 : index
    %961 = memref.load %arg3[%c5_914, %c26_915] : memref<9x28xf32, #tpu.memory_space<smem>>
    %962 = vector.broadcast %961 : f32 to vector<32x128xf32>
    %963 = arith.mulf %960, %962 : vector<32x128xf32>
    %964 = arith.addf %958, %963 : vector<32x128xf32>
    %c0_916 = arith.constant 0 : index
    %c26_917 = arith.constant 26 : index
    %c0_918 = arith.constant 0 : index
    %c0_919 = arith.constant 0 : index
    %965 = vector.load %arg2[%c0_916, %c26_917, %c0_918, %c0_919] : memref<1x27x32x128xf32, #tpu.memory_space<vmem>>, vector<1x1x32x128xf32>
    %966 = vector.shape_cast %965 : vector<1x1x32x128xf32> to vector<32x128xf32>
    %c5_920 = arith.constant 5 : index
    %c27_921 = arith.constant 27 : index
    %967 = memref.load %arg3[%c5_920, %c27_921] : memref<9x28xf32, #tpu.memory_space<smem>>
    %968 = vector.broadcast %967 : f32 to vector<32x128xf32>
    %969 = arith.mulf %966, %968 : vector<32x128xf32>
    %970 = arith.addf %964, %969 : vector<32x128xf32>
    %c0_922 = arith.constant 0 : index
    %c5_923 = arith.constant 5 : index
    %c0_924 = arith.constant 0 : index
    %c0_925 = arith.constant 0 : index
    %971 = vector.load %arg5[%c0_922, %c5_923, %c0_924, %c0_925] : memref<1x9x32x128xf32, #tpu.memory_space<vmem>>, vector<1x1x32x128xf32>
    %972 = vector.shape_cast %971 : vector<1x1x32x128xf32> to vector<32x128xf32>
    %973 = vector.shape_cast %970 : vector<32x128xf32> to vector<1x1x32x128xf32>
    tpu.vector_store %arg5[%c0_922, %c5_923, %c0_924, %c0_925], %973 {strides = array<i32>} : memref<1x9x32x128xf32, #tpu.memory_space<vmem>>, vector<1x1x32x128xf32>,
    %974 = arith.mulf %970, %970 : vector<32x128xf32>
    %975 = arith.addf %802, %974 : vector<32x128xf32>
    %c6_926 = arith.constant 6 : index
    %c0_927 = arith.constant 0 : index
    %976 = memref.load %arg3[%c6_926, %c0_927] : memref<9x28xf32, #tpu.memory_space<smem>>
    %977 = vector.broadcast %976 : f32 to vector<32x128xf32>
    %978 = arith.mulf %111, %977 : vector<32x128xf32>
    %c6_928 = arith.constant 6 : index
    %979 = memref.load %arg4[%c6_928] : memref<9xf32, #tpu.memory_space<smem>>
    %980 = vector.broadcast %979 : f32 to vector<32x128xf32>
    %981 = arith.addf %978, %980 : vector<32x128xf32>
    %c0_929 = arith.constant 0 : index
    %c0_930 = arith.constant 0 : index
    %c0_931 = arith.constant 0 : index
    %c0_932 = arith.constant 0 : index
    %982 = vector.load %arg2[%c0_929, %c0_930, %c0_931, %c0_932] : memref<1x27x32x128xf32, #tpu.memory_space<vmem>>, vector<1x1x32x128xf32>
    %983 = vector.shape_cast %982 : vector<1x1x32x128xf32> to vector<32x128xf32>
    %c6_933 = arith.constant 6 : index
    %c1_934 = arith.constant 1 : index
    %984 = memref.load %arg3[%c6_933, %c1_934] : memref<9x28xf32, #tpu.memory_space<smem>>
    %985 = vector.broadcast %984 : f32 to vector<32x128xf32>
    %986 = arith.mulf %983, %985 : vector<32x128xf32>
    %987 = arith.addf %981, %986 : vector<32x128xf32>
    %c0_935 = arith.constant 0 : index
    %c1_936 = arith.constant 1 : index
    %c0_937 = arith.constant 0 : index
    %c0_938 = arith.constant 0 : index
    %988 = vector.load %arg2[%c0_935, %c1_936, %c0_937, %c0_938] : memref<1x27x32x128xf32, #tpu.memory_space<vmem>>, vector<1x1x32x128xf32>
    %989 = vector.shape_cast %988 : vector<1x1x32x128xf32> to vector<32x128xf32>
    %c6_939 = arith.constant 6 : index
    %c2_940 = arith.constant 2 : index
    %990 = memref.load %arg3[%c6_939, %c2_940] : memref<9x28xf32, #tpu.memory_space<smem>>
    %991 = vector.broadcast %990 : f32 to vector<32x128xf32>
    %992 = arith.mulf %989, %991 : vector<32x128xf32>
    %993 = arith.addf %987, %992 : vector<32x128xf32>
    %c0_941 = arith.constant 0 : index
    %c2_942 = arith.constant 2 : index
    %c0_943 = arith.constant 0 : index
    %c0_944 = arith.constant 0 : index
    %994 = vector.load %arg2[%c0_941, %c2_942, %c0_943, %c0_944] : memref<1x27x32x128xf32, #tpu.memory_space<vmem>>, vector<1x1x32x128xf32>
    %995 = vector.shape_cast %994 : vector<1x1x32x128xf32> to vector<32x128xf32>
    %c6_945 = arith.constant 6 : index
    %c3_946 = arith.constant 3 : index
    %996 = memref.load %arg3[%c6_945, %c3_946] : memref<9x28xf32, #tpu.memory_space<smem>>
    %997 = vector.broadcast %996 : f32 to vector<32x128xf32>
    %998 = arith.mulf %995, %997 : vector<32x128xf32>
    %999 = arith.addf %993, %998 : vector<32x128xf32>
    %c0_947 = arith.constant 0 : index
    %c3_948 = arith.constant 3 : index
    %c0_949 = arith.constant 0 : index
    %c0_950 = arith.constant 0 : index
    %1000 = vector.load %arg2[%c0_947, %c3_948, %c0_949, %c0_950] : memref<1x27x32x128xf32, #tpu.memory_space<vmem>>, vector<1x1x32x128xf32>
    %1001 = vector.shape_cast %1000 : vector<1x1x32x128xf32> to vector<32x128xf32>
    %c6_951 = arith.constant 6 : index
    %c4_952 = arith.constant 4 : index
    %1002 = memref.load %arg3[%c6_951, %c4_952] : memref<9x28xf32, #tpu.memory_space<smem>>
    %1003 = vector.broadcast %1002 : f32 to vector<32x128xf32>
    %1004 = arith.mulf %1001, %1003 : vector<32x128xf32>
    %1005 = arith.addf %999, %1004 : vector<32x128xf32>
    %c0_953 = arith.constant 0 : index
    %c4_954 = arith.constant 4 : index
    %c0_955 = arith.constant 0 : index
    %c0_956 = arith.constant 0 : index
    %1006 = vector.load %arg2[%c0_953, %c4_954, %c0_955, %c0_956] : memref<1x27x32x128xf32, #tpu.memory_space<vmem>>, vector<1x1x32x128xf32>
    %1007 = vector.shape_cast %1006 : vector<1x1x32x128xf32> to vector<32x128xf32>
    %c6_957 = arith.constant 6 : index
    %c5_958 = arith.constant 5 : index
    %1008 = memref.load %arg3[%c6_957, %c5_958] : memref<9x28xf32, #tpu.memory_space<smem>>
    %1009 = vector.broadcast %1008 : f32 to vector<32x128xf32>
    %1010 = arith.mulf %1007, %1009 : vector<32x128xf32>
    %1011 = arith.addf %1005, %1010 : vector<32x128xf32>
    %c0_959 = arith.constant 0 : index
    %c5_960 = arith.constant 5 : index
    %c0_961 = arith.constant 0 : index
    %c0_962 = arith.constant 0 : index
    %1012 = vector.load %arg2[%c0_959, %c5_960, %c0_961, %c0_962] : memref<1x27x32x128xf32, #tpu.memory_space<vmem>>, vector<1x1x32x128xf32>
    %1013 = vector.shape_cast %1012 : vector<1x1x32x128xf32> to vector<32x128xf32>
    %c6_963 = arith.constant 6 : index
    %c6_964 = arith.constant 6 : index
    %1014 = memref.load %arg3[%c6_963, %c6_964] : memref<9x28xf32, #tpu.memory_space<smem>>
    %1015 = vector.broadcast %1014 : f32 to vector<32x128xf32>
    %1016 = arith.mulf %1013, %1015 : vector<32x128xf32>
    %1017 = arith.addf %1011, %1016 : vector<32x128xf32>
    %c0_965 = arith.constant 0 : index
    %c6_966 = arith.constant 6 : index
    %c0_967 = arith.constant 0 : index
    %c0_968 = arith.constant 0 : index
    %1018 = vector.load %arg2[%c0_965, %c6_966, %c0_967, %c0_968] : memref<1x27x32x128xf32, #tpu.memory_space<vmem>>, vector<1x1x32x128xf32>
    %1019 = vector.shape_cast %1018 : vector<1x1x32x128xf32> to vector<32x128xf32>
    %c6_969 = arith.constant 6 : index
    %c7_970 = arith.constant 7 : index
    %1020 = memref.load %arg3[%c6_969, %c7_970] : memref<9x28xf32, #tpu.memory_space<smem>>
    %1021 = vector.broadcast %1020 : f32 to vector<32x128xf32>
    %1022 = arith.mulf %1019, %1021 : vector<32x128xf32>
    %1023 = arith.addf %1017, %1022 : vector<32x128xf32>
    %c0_971 = arith.constant 0 : index
    %c7_972 = arith.constant 7 : index
    %c0_973 = arith.constant 0 : index
    %c0_974 = arith.constant 0 : index
    %1024 = vector.load %arg2[%c0_971, %c7_972, %c0_973, %c0_974] : memref<1x27x32x128xf32, #tpu.memory_space<vmem>>, vector<1x1x32x128xf32>
    %1025 = vector.shape_cast %1024 : vector<1x1x32x128xf32> to vector<32x128xf32>
    %c6_975 = arith.constant 6 : index
    %c8_976 = arith.constant 8 : index
    %1026 = memref.load %arg3[%c6_975, %c8_976] : memref<9x28xf32, #tpu.memory_space<smem>>
    %1027 = vector.broadcast %1026 : f32 to vector<32x128xf32>
    %1028 = arith.mulf %1025, %1027 : vector<32x128xf32>
    %1029 = arith.addf %1023, %1028 : vector<32x128xf32>
    %c0_977 = arith.constant 0 : index
    %c8_978 = arith.constant 8 : index
    %c0_979 = arith.constant 0 : index
    %c0_980 = arith.constant 0 : index
    %1030 = vector.load %arg2[%c0_977, %c8_978, %c0_979, %c0_980] : memref<1x27x32x128xf32, #tpu.memory_space<vmem>>, vector<1x1x32x128xf32>
    %1031 = vector.shape_cast %1030 : vector<1x1x32x128xf32> to vector<32x128xf32>
    %c6_981 = arith.constant 6 : index
    %c9_982 = arith.constant 9 : index
    %1032 = memref.load %arg3[%c6_981, %c9_982] : memref<9x28xf32, #tpu.memory_space<smem>>
    %1033 = vector.broadcast %1032 : f32 to vector<32x128xf32>
    %1034 = arith.mulf %1031, %1033 : vector<32x128xf32>
    %1035 = arith.addf %1029, %1034 : vector<32x128xf32>
    %c0_983 = arith.constant 0 : index
    %c9_984 = arith.constant 9 : index
    %c0_985 = arith.constant 0 : index
    %c0_986 = arith.constant 0 : index
    %1036 = vector.load %arg2[%c0_983, %c9_984, %c0_985, %c0_986] : memref<1x27x32x128xf32, #tpu.memory_space<vmem>>, vector<1x1x32x128xf32>
    %1037 = vector.shape_cast %1036 : vector<1x1x32x128xf32> to vector<32x128xf32>
    %c6_987 = arith.constant 6 : index
    %c10_988 = arith.constant 10 : index
    %1038 = memref.load %arg3[%c6_987, %c10_988] : memref<9x28xf32, #tpu.memory_space<smem>>
    %1039 = vector.broadcast %1038 : f32 to vector<32x128xf32>
    %1040 = arith.mulf %1037, %1039 : vector<32x128xf32>
    %1041 = arith.addf %1035, %1040 : vector<32x128xf32>
    %c0_989 = arith.constant 0 : index
    %c10_990 = arith.constant 10 : index
    %c0_991 = arith.constant 0 : index
    %c0_992 = arith.constant 0 : index
    %1042 = vector.load %arg2[%c0_989, %c10_990, %c0_991, %c0_992] : memref<1x27x32x128xf32, #tpu.memory_space<vmem>>, vector<1x1x32x128xf32>
    %1043 = vector.shape_cast %1042 : vector<1x1x32x128xf32> to vector<32x128xf32>
    %c6_993 = arith.constant 6 : index
    %c11_994 = arith.constant 11 : index
    %1044 = memref.load %arg3[%c6_993, %c11_994] : memref<9x28xf32, #tpu.memory_space<smem>>
    %1045 = vector.broadcast %1044 : f32 to vector<32x128xf32>
    %1046 = arith.mulf %1043, %1045 : vector<32x128xf32>
    %1047 = arith.addf %1041, %1046 : vector<32x128xf32>
    %c0_995 = arith.constant 0 : index
    %c11_996 = arith.constant 11 : index
    %c0_997 = arith.constant 0 : index
    %c0_998 = arith.constant 0 : index
    %1048 = vector.load %arg2[%c0_995, %c11_996, %c0_997, %c0_998] : memref<1x27x32x128xf32, #tpu.memory_space<vmem>>, vector<1x1x32x128xf32>
    %1049 = vector.shape_cast %1048 : vector<1x1x32x128xf32> to vector<32x128xf32>
    %c6_999 = arith.constant 6 : index
    %c12_1000 = arith.constant 12 : index
    %1050 = memref.load %arg3[%c6_999, %c12_1000] : memref<9x28xf32, #tpu.memory_space<smem>>
    %1051 = vector.broadcast %1050 : f32 to vector<32x128xf32>
    %1052 = arith.mulf %1049, %1051 : vector<32x128xf32>
    %1053 = arith.addf %1047, %1052 : vector<32x128xf32>
    %c0_1001 = arith.constant 0 : index
    %c12_1002 = arith.constant 12 : index
    %c0_1003 = arith.constant 0 : index
    %c0_1004 = arith.constant 0 : index
    %1054 = vector.load %arg2[%c0_1001, %c12_1002, %c0_1003, %c0_1004] : memref<1x27x32x128xf32, #tpu.memory_space<vmem>>, vector<1x1x32x128xf32>
    %1055 = vector.shape_cast %1054 : vector<1x1x32x128xf32> to vector<32x128xf32>
    %c6_1005 = arith.constant 6 : index
    %c13_1006 = arith.constant 13 : index
    %1056 = memref.load %arg3[%c6_1005, %c13_1006] : memref<9x28xf32, #tpu.memory_space<smem>>
    %1057 = vector.broadcast %1056 : f32 to vector<32x128xf32>
    %1058 = arith.mulf %1055, %1057 : vector<32x128xf32>
    %1059 = arith.addf %1053, %1058 : vector<32x128xf32>
    %c0_1007 = arith.constant 0 : index
    %c13_1008 = arith.constant 13 : index
    %c0_1009 = arith.constant 0 : index
    %c0_1010 = arith.constant 0 : index
    %1060 = vector.load %arg2[%c0_1007, %c13_1008, %c0_1009, %c0_1010] : memref<1x27x32x128xf32, #tpu.memory_space<vmem>>, vector<1x1x32x128xf32>
    %1061 = vector.shape_cast %1060 : vector<1x1x32x128xf32> to vector<32x128xf32>
    %c6_1011 = arith.constant 6 : index
    %c14_1012 = arith.constant 14 : index
    %1062 = memref.load %arg3[%c6_1011, %c14_1012] : memref<9x28xf32, #tpu.memory_space<smem>>
    %1063 = vector.broadcast %1062 : f32 to vector<32x128xf32>
    %1064 = arith.mulf %1061, %1063 : vector<32x128xf32>
    %1065 = arith.addf %1059, %1064 : vector<32x128xf32>
    %c0_1013 = arith.constant 0 : index
    %c14_1014 = arith.constant 14 : index
    %c0_1015 = arith.constant 0 : index
    %c0_1016 = arith.constant 0 : index
    %1066 = vector.load %arg2[%c0_1013, %c14_1014, %c0_1015, %c0_1016] : memref<1x27x32x128xf32, #tpu.memory_space<vmem>>, vector<1x1x32x128xf32>
    %1067 = vector.shape_cast %1066 : vector<1x1x32x128xf32> to vector<32x128xf32>
    %c6_1017 = arith.constant 6 : index
    %c15_1018 = arith.constant 15 : index
    %1068 = memref.load %arg3[%c6_1017, %c15_1018] : memref<9x28xf32, #tpu.memory_space<smem>>
    %1069 = vector.broadcast %1068 : f32 to vector<32x128xf32>
    %1070 = arith.mulf %1067, %1069 : vector<32x128xf32>
    %1071 = arith.addf %1065, %1070 : vector<32x128xf32>
    %c0_1019 = arith.constant 0 : index
    %c15_1020 = arith.constant 15 : index
    %c0_1021 = arith.constant 0 : index
    %c0_1022 = arith.constant 0 : index
    %1072 = vector.load %arg2[%c0_1019, %c15_1020, %c0_1021, %c0_1022] : memref<1x27x32x128xf32, #tpu.memory_space<vmem>>, vector<1x1x32x128xf32>
    %1073 = vector.shape_cast %1072 : vector<1x1x32x128xf32> to vector<32x128xf32>
    %c6_1023 = arith.constant 6 : index
    %c16_1024 = arith.constant 16 : index
    %1074 = memref.load %arg3[%c6_1023, %c16_1024] : memref<9x28xf32, #tpu.memory_space<smem>>
    %1075 = vector.broadcast %1074 : f32 to vector<32x128xf32>
    %1076 = arith.mulf %1073, %1075 : vector<32x128xf32>
    %1077 = arith.addf %1071, %1076 : vector<32x128xf32>
    %c0_1025 = arith.constant 0 : index
    %c16_1026 = arith.constant 16 : index
    %c0_1027 = arith.constant 0 : index
    %c0_1028 = arith.constant 0 : index
    %1078 = vector.load %arg2[%c0_1025, %c16_1026, %c0_1027, %c0_1028] : memref<1x27x32x128xf32, #tpu.memory_space<vmem>>, vector<1x1x32x128xf32>
    %1079 = vector.shape_cast %1078 : vector<1x1x32x128xf32> to vector<32x128xf32>
    %c6_1029 = arith.constant 6 : index
    %c17_1030 = arith.constant 17 : index
    %1080 = memref.load %arg3[%c6_1029, %c17_1030] : memref<9x28xf32, #tpu.memory_space<smem>>
    %1081 = vector.broadcast %1080 : f32 to vector<32x128xf32>
    %1082 = arith.mulf %1079, %1081 : vector<32x128xf32>
    %1083 = arith.addf %1077, %1082 : vector<32x128xf32>
    %c0_1031 = arith.constant 0 : index
    %c17_1032 = arith.constant 17 : index
    %c0_1033 = arith.constant 0 : index
    %c0_1034 = arith.constant 0 : index
    %1084 = vector.load %arg2[%c0_1031, %c17_1032, %c0_1033, %c0_1034] : memref<1x27x32x128xf32, #tpu.memory_space<vmem>>, vector<1x1x32x128xf32>
    %1085 = vector.shape_cast %1084 : vector<1x1x32x128xf32> to vector<32x128xf32>
    %c6_1035 = arith.constant 6 : index
    %c18_1036 = arith.constant 18 : index
    %1086 = memref.load %arg3[%c6_1035, %c18_1036] : memref<9x28xf32, #tpu.memory_space<smem>>
    %1087 = vector.broadcast %1086 : f32 to vector<32x128xf32>
    %1088 = arith.mulf %1085, %1087 : vector<32x128xf32>
    %1089 = arith.addf %1083, %1088 : vector<32x128xf32>
    %c0_1037 = arith.constant 0 : index
    %c18_1038 = arith.constant 18 : index
    %c0_1039 = arith.constant 0 : index
    %c0_1040 = arith.constant 0 : index
    %1090 = vector.load %arg2[%c0_1037, %c18_1038, %c0_1039, %c0_1040] : memref<1x27x32x128xf32, #tpu.memory_space<vmem>>, vector<1x1x32x128xf32>
    %1091 = vector.shape_cast %1090 : vector<1x1x32x128xf32> to vector<32x128xf32>
    %c6_1041 = arith.constant 6 : index
    %c19_1042 = arith.constant 19 : index
    %1092 = memref.load %arg3[%c6_1041, %c19_1042] : memref<9x28xf32, #tpu.memory_space<smem>>
    %1093 = vector.broadcast %1092 : f32 to vector<32x128xf32>
    %1094 = arith.mulf %1091, %1093 : vector<32x128xf32>
    %1095 = arith.addf %1089, %1094 : vector<32x128xf32>
    %c0_1043 = arith.constant 0 : index
    %c19_1044 = arith.constant 19 : index
    %c0_1045 = arith.constant 0 : index
    %c0_1046 = arith.constant 0 : index
    %1096 = vector.load %arg2[%c0_1043, %c19_1044, %c0_1045, %c0_1046] : memref<1x27x32x128xf32, #tpu.memory_space<vmem>>, vector<1x1x32x128xf32>
    %1097 = vector.shape_cast %1096 : vector<1x1x32x128xf32> to vector<32x128xf32>
    %c6_1047 = arith.constant 6 : index
    %c20_1048 = arith.constant 20 : index
    %1098 = memref.load %arg3[%c6_1047, %c20_1048] : memref<9x28xf32, #tpu.memory_space<smem>>
    %1099 = vector.broadcast %1098 : f32 to vector<32x128xf32>
    %1100 = arith.mulf %1097, %1099 : vector<32x128xf32>
    %1101 = arith.addf %1095, %1100 : vector<32x128xf32>
    %c0_1049 = arith.constant 0 : index
    %c20_1050 = arith.constant 20 : index
    %c0_1051 = arith.constant 0 : index
    %c0_1052 = arith.constant 0 : index
    %1102 = vector.load %arg2[%c0_1049, %c20_1050, %c0_1051, %c0_1052] : memref<1x27x32x128xf32, #tpu.memory_space<vmem>>, vector<1x1x32x128xf32>
    %1103 = vector.shape_cast %1102 : vector<1x1x32x128xf32> to vector<32x128xf32>
    %c6_1053 = arith.constant 6 : index
    %c21_1054 = arith.constant 21 : index
    %1104 = memref.load %arg3[%c6_1053, %c21_1054] : memref<9x28xf32, #tpu.memory_space<smem>>
    %1105 = vector.broadcast %1104 : f32 to vector<32x128xf32>
    %1106 = arith.mulf %1103, %1105 : vector<32x128xf32>
    %1107 = arith.addf %1101, %1106 : vector<32x128xf32>
    %c0_1055 = arith.constant 0 : index
    %c21_1056 = arith.constant 21 : index
    %c0_1057 = arith.constant 0 : index
    %c0_1058 = arith.constant 0 : index
    %1108 = vector.load %arg2[%c0_1055, %c21_1056, %c0_1057, %c0_1058] : memref<1x27x32x128xf32, #tpu.memory_space<vmem>>, vector<1x1x32x128xf32>
    %1109 = vector.shape_cast %1108 : vector<1x1x32x128xf32> to vector<32x128xf32>
    %c6_1059 = arith.constant 6 : index
    %c22_1060 = arith.constant 22 : index
    %1110 = memref.load %arg3[%c6_1059, %c22_1060] : memref<9x28xf32, #tpu.memory_space<smem>>
    %1111 = vector.broadcast %1110 : f32 to vector<32x128xf32>
    %1112 = arith.mulf %1109, %1111 : vector<32x128xf32>
    %1113 = arith.addf %1107, %1112 : vector<32x128xf32>
    %c0_1061 = arith.constant 0 : index
    %c22_1062 = arith.constant 22 : index
    %c0_1063 = arith.constant 0 : index
    %c0_1064 = arith.constant 0 : index
    %1114 = vector.load %arg2[%c0_1061, %c22_1062, %c0_1063, %c0_1064] : memref<1x27x32x128xf32, #tpu.memory_space<vmem>>, vector<1x1x32x128xf32>
    %1115 = vector.shape_cast %1114 : vector<1x1x32x128xf32> to vector<32x128xf32>
    %c6_1065 = arith.constant 6 : index
    %c23_1066 = arith.constant 23 : index
    %1116 = memref.load %arg3[%c6_1065, %c23_1066] : memref<9x28xf32, #tpu.memory_space<smem>>
    %1117 = vector.broadcast %1116 : f32 to vector<32x128xf32>
    %1118 = arith.mulf %1115, %1117 : vector<32x128xf32>
    %1119 = arith.addf %1113, %1118 : vector<32x128xf32>
    %c0_1067 = arith.constant 0 : index
    %c23_1068 = arith.constant 23 : index
    %c0_1069 = arith.constant 0 : index
    %c0_1070 = arith.constant 0 : index
    %1120 = vector.load %arg2[%c0_1067, %c23_1068, %c0_1069, %c0_1070] : memref<1x27x32x128xf32, #tpu.memory_space<vmem>>, vector<1x1x32x128xf32>
    %1121 = vector.shape_cast %1120 : vector<1x1x32x128xf32> to vector<32x128xf32>
    %c6_1071 = arith.constant 6 : index
    %c24_1072 = arith.constant 24 : index
    %1122 = memref.load %arg3[%c6_1071, %c24_1072] : memref<9x28xf32, #tpu.memory_space<smem>>
    %1123 = vector.broadcast %1122 : f32 to vector<32x128xf32>
    %1124 = arith.mulf %1121, %1123 : vector<32x128xf32>
    %1125 = arith.addf %1119, %1124 : vector<32x128xf32>
    %c0_1073 = arith.constant 0 : index
    %c24_1074 = arith.constant 24 : index
    %c0_1075 = arith.constant 0 : index
    %c0_1076 = arith.constant 0 : index
    %1126 = vector.load %arg2[%c0_1073, %c24_1074, %c0_1075, %c0_1076] : memref<1x27x32x128xf32, #tpu.memory_space<vmem>>, vector<1x1x32x128xf32>
    %1127 = vector.shape_cast %1126 : vector<1x1x32x128xf32> to vector<32x128xf32>
    %c6_1077 = arith.constant 6 : index
    %c25_1078 = arith.constant 25 : index
    %1128 = memref.load %arg3[%c6_1077, %c25_1078] : memref<9x28xf32, #tpu.memory_space<smem>>
    %1129 = vector.broadcast %1128 : f32 to vector<32x128xf32>
    %1130 = arith.mulf %1127, %1129 : vector<32x128xf32>
    %1131 = arith.addf %1125, %1130 : vector<32x128xf32>
    %c0_1079 = arith.constant 0 : index
    %c25_1080 = arith.constant 25 : index
    %c0_1081 = arith.constant 0 : index
    %c0_1082 = arith.constant 0 : index
    %1132 = vector.load %arg2[%c0_1079, %c25_1080, %c0_1081, %c0_1082] : memref<1x27x32x128xf32, #tpu.memory_space<vmem>>, vector<1x1x32x128xf32>
    %1133 = vector.shape_cast %1132 : vector<1x1x32x128xf32> to vector<32x128xf32>
    %c6_1083 = arith.constant 6 : index
    %c26_1084 = arith.constant 26 : index
    %1134 = memref.load %arg3[%c6_1083, %c26_1084] : memref<9x28xf32, #tpu.memory_space<smem>>
    %1135 = vector.broadcast %1134 : f32 to vector<32x128xf32>
    %1136 = arith.mulf %1133, %1135 : vector<32x128xf32>
    %1137 = arith.addf %1131, %1136 : vector<32x128xf32>
    %c0_1085 = arith.constant 0 : index
    %c26_1086 = arith.constant 26 : index
    %c0_1087 = arith.constant 0 : index
    %c0_1088 = arith.constant 0 : index
    %1138 = vector.load %arg2[%c0_1085, %c26_1086, %c0_1087, %c0_1088] : memref<1x27x32x128xf32, #tpu.memory_space<vmem>>, vector<1x1x32x128xf32>
    %1139 = vector.shape_cast %1138 : vector<1x1x32x128xf32> to vector<32x128xf32>
    %c6_1089 = arith.constant 6 : index
    %c27_1090 = arith.constant 27 : index
    %1140 = memref.load %arg3[%c6_1089, %c27_1090] : memref<9x28xf32, #tpu.memory_space<smem>>
    %1141 = vector.broadcast %1140 : f32 to vector<32x128xf32>
    %1142 = arith.mulf %1139, %1141 : vector<32x128xf32>
    %1143 = arith.addf %1137, %1142 : vector<32x128xf32>
    %c0_1091 = arith.constant 0 : index
    %c6_1092 = arith.constant 6 : index
    %c0_1093 = arith.constant 0 : index
    %c0_1094 = arith.constant 0 : index
    %1144 = vector.load %arg5[%c0_1091, %c6_1092, %c0_1093, %c0_1094] : memref<1x9x32x128xf32, #tpu.memory_space<vmem>>, vector<1x1x32x128xf32>
    %1145 = vector.shape_cast %1144 : vector<1x1x32x128xf32> to vector<32x128xf32>
    %1146 = vector.shape_cast %1143 : vector<32x128xf32> to vector<1x1x32x128xf32>
    tpu.vector_store %arg5[%c0_1091, %c6_1092, %c0_1093, %c0_1094], %1146 {strides = array<i32>} : memref<1x9x32x128xf32, #tpu.memory_space<vmem>>, vector<1x1x32x128xf32>,
    %1147 = arith.mulf %1143, %1143 : vector<32x128xf32>
    %1148 = arith.addf %975, %1147 : vector<32x128xf32>
    %c7_1095 = arith.constant 7 : index
    %c0_1096 = arith.constant 0 : index
    %1149 = memref.load %arg3[%c7_1095, %c0_1096] : memref<9x28xf32, #tpu.memory_space<smem>>
    %1150 = vector.broadcast %1149 : f32 to vector<32x128xf32>
    %1151 = arith.mulf %111, %1150 : vector<32x128xf32>
    %c7_1097 = arith.constant 7 : index
    %1152 = memref.load %arg4[%c7_1097] : memref<9xf32, #tpu.memory_space<smem>>
    %1153 = vector.broadcast %1152 : f32 to vector<32x128xf32>
    %1154 = arith.addf %1151, %1153 : vector<32x128xf32>
    %c0_1098 = arith.constant 0 : index
    %c0_1099 = arith.constant 0 : index
    %c0_1100 = arith.constant 0 : index
    %c0_1101 = arith.constant 0 : index
    %1155 = vector.load %arg2[%c0_1098, %c0_1099, %c0_1100, %c0_1101] : memref<1x27x32x128xf32, #tpu.memory_space<vmem>>, vector<1x1x32x128xf32>
    %1156 = vector.shape_cast %1155 : vector<1x1x32x128xf32> to vector<32x128xf32>
    %c7_1102 = arith.constant 7 : index
    %c1_1103 = arith.constant 1 : index
    %1157 = memref.load %arg3[%c7_1102, %c1_1103] : memref<9x28xf32, #tpu.memory_space<smem>>
    %1158 = vector.broadcast %1157 : f32 to vector<32x128xf32>
    %1159 = arith.mulf %1156, %1158 : vector<32x128xf32>
    %1160 = arith.addf %1154, %1159 : vector<32x128xf32>
    %c0_1104 = arith.constant 0 : index
    %c1_1105 = arith.constant 1 : index
    %c0_1106 = arith.constant 0 : index
    %c0_1107 = arith.constant 0 : index
    %1161 = vector.load %arg2[%c0_1104, %c1_1105, %c0_1106, %c0_1107] : memref<1x27x32x128xf32, #tpu.memory_space<vmem>>, vector<1x1x32x128xf32>
    %1162 = vector.shape_cast %1161 : vector<1x1x32x128xf32> to vector<32x128xf32>
    %c7_1108 = arith.constant 7 : index
    %c2_1109 = arith.constant 2 : index
    %1163 = memref.load %arg3[%c7_1108, %c2_1109] : memref<9x28xf32, #tpu.memory_space<smem>>
    %1164 = vector.broadcast %1163 : f32 to vector<32x128xf32>
    %1165 = arith.mulf %1162, %1164 : vector<32x128xf32>
    %1166 = arith.addf %1160, %1165 : vector<32x128xf32>
    %c0_1110 = arith.constant 0 : index
    %c2_1111 = arith.constant 2 : index
    %c0_1112 = arith.constant 0 : index
    %c0_1113 = arith.constant 0 : index
    %1167 = vector.load %arg2[%c0_1110, %c2_1111, %c0_1112, %c0_1113] : memref<1x27x32x128xf32, #tpu.memory_space<vmem>>, vector<1x1x32x128xf32>
    %1168 = vector.shape_cast %1167 : vector<1x1x32x128xf32> to vector<32x128xf32>
    %c7_1114 = arith.constant 7 : index
    %c3_1115 = arith.constant 3 : index
    %1169 = memref.load %arg3[%c7_1114, %c3_1115] : memref<9x28xf32, #tpu.memory_space<smem>>
    %1170 = vector.broadcast %1169 : f32 to vector<32x128xf32>
    %1171 = arith.mulf %1168, %1170 : vector<32x128xf32>
    %1172 = arith.addf %1166, %1171 : vector<32x128xf32>
    %c0_1116 = arith.constant 0 : index
    %c3_1117 = arith.constant 3 : index
    %c0_1118 = arith.constant 0 : index
    %c0_1119 = arith.constant 0 : index
    %1173 = vector.load %arg2[%c0_1116, %c3_1117, %c0_1118, %c0_1119] : memref<1x27x32x128xf32, #tpu.memory_space<vmem>>, vector<1x1x32x128xf32>
    %1174 = vector.shape_cast %1173 : vector<1x1x32x128xf32> to vector<32x128xf32>
    %c7_1120 = arith.constant 7 : index
    %c4_1121 = arith.constant 4 : index
    %1175 = memref.load %arg3[%c7_1120, %c4_1121] : memref<9x28xf32, #tpu.memory_space<smem>>
    %1176 = vector.broadcast %1175 : f32 to vector<32x128xf32>
    %1177 = arith.mulf %1174, %1176 : vector<32x128xf32>
    %1178 = arith.addf %1172, %1177 : vector<32x128xf32>
    %c0_1122 = arith.constant 0 : index
    %c4_1123 = arith.constant 4 : index
    %c0_1124 = arith.constant 0 : index
    %c0_1125 = arith.constant 0 : index
    %1179 = vector.load %arg2[%c0_1122, %c4_1123, %c0_1124, %c0_1125] : memref<1x27x32x128xf32, #tpu.memory_space<vmem>>, vector<1x1x32x128xf32>
    %1180 = vector.shape_cast %1179 : vector<1x1x32x128xf32> to vector<32x128xf32>
    %c7_1126 = arith.constant 7 : index
    %c5_1127 = arith.constant 5 : index
    %1181 = memref.load %arg3[%c7_1126, %c5_1127] : memref<9x28xf32, #tpu.memory_space<smem>>
    %1182 = vector.broadcast %1181 : f32 to vector<32x128xf32>
    %1183 = arith.mulf %1180, %1182 : vector<32x128xf32>
    %1184 = arith.addf %1178, %1183 : vector<32x128xf32>
    %c0_1128 = arith.constant 0 : index
    %c5_1129 = arith.constant 5 : index
    %c0_1130 = arith.constant 0 : index
    %c0_1131 = arith.constant 0 : index
    %1185 = vector.load %arg2[%c0_1128, %c5_1129, %c0_1130, %c0_1131] : memref<1x27x32x128xf32, #tpu.memory_space<vmem>>, vector<1x1x32x128xf32>
    %1186 = vector.shape_cast %1185 : vector<1x1x32x128xf32> to vector<32x128xf32>
    %c7_1132 = arith.constant 7 : index
    %c6_1133 = arith.constant 6 : index
    %1187 = memref.load %arg3[%c7_1132, %c6_1133] : memref<9x28xf32, #tpu.memory_space<smem>>
    %1188 = vector.broadcast %1187 : f32 to vector<32x128xf32>
    %1189 = arith.mulf %1186, %1188 : vector<32x128xf32>
    %1190 = arith.addf %1184, %1189 : vector<32x128xf32>
    %c0_1134 = arith.constant 0 : index
    %c6_1135 = arith.constant 6 : index
    %c0_1136 = arith.constant 0 : index
    %c0_1137 = arith.constant 0 : index
    %1191 = vector.load %arg2[%c0_1134, %c6_1135, %c0_1136, %c0_1137] : memref<1x27x32x128xf32, #tpu.memory_space<vmem>>, vector<1x1x32x128xf32>
    %1192 = vector.shape_cast %1191 : vector<1x1x32x128xf32> to vector<32x128xf32>
    %c7_1138 = arith.constant 7 : index
    %c7_1139 = arith.constant 7 : index
    %1193 = memref.load %arg3[%c7_1138, %c7_1139] : memref<9x28xf32, #tpu.memory_space<smem>>
    %1194 = vector.broadcast %1193 : f32 to vector<32x128xf32>
    %1195 = arith.mulf %1192, %1194 : vector<32x128xf32>
    %1196 = arith.addf %1190, %1195 : vector<32x128xf32>
    %c0_1140 = arith.constant 0 : index
    %c7_1141 = arith.constant 7 : index
    %c0_1142 = arith.constant 0 : index
    %c0_1143 = arith.constant 0 : index
    %1197 = vector.load %arg2[%c0_1140, %c7_1141, %c0_1142, %c0_1143] : memref<1x27x32x128xf32, #tpu.memory_space<vmem>>, vector<1x1x32x128xf32>
    %1198 = vector.shape_cast %1197 : vector<1x1x32x128xf32> to vector<32x128xf32>
    %c7_1144 = arith.constant 7 : index
    %c8_1145 = arith.constant 8 : index
    %1199 = memref.load %arg3[%c7_1144, %c8_1145] : memref<9x28xf32, #tpu.memory_space<smem>>
    %1200 = vector.broadcast %1199 : f32 to vector<32x128xf32>
    %1201 = arith.mulf %1198, %1200 : vector<32x128xf32>
    %1202 = arith.addf %1196, %1201 : vector<32x128xf32>
    %c0_1146 = arith.constant 0 : index
    %c8_1147 = arith.constant 8 : index
    %c0_1148 = arith.constant 0 : index
    %c0_1149 = arith.constant 0 : index
    %1203 = vector.load %arg2[%c0_1146, %c8_1147, %c0_1148, %c0_1149] : memref<1x27x32x128xf32, #tpu.memory_space<vmem>>, vector<1x1x32x128xf32>
    %1204 = vector.shape_cast %1203 : vector<1x1x32x128xf32> to vector<32x128xf32>
    %c7_1150 = arith.constant 7 : index
    %c9_1151 = arith.constant 9 : index
    %1205 = memref.load %arg3[%c7_1150, %c9_1151] : memref<9x28xf32, #tpu.memory_space<smem>>
    %1206 = vector.broadcast %1205 : f32 to vector<32x128xf32>
    %1207 = arith.mulf %1204, %1206 : vector<32x128xf32>
    %1208 = arith.addf %1202, %1207 : vector<32x128xf32>
    %c0_1152 = arith.constant 0 : index
    %c9_1153 = arith.constant 9 : index
    %c0_1154 = arith.constant 0 : index
    %c0_1155 = arith.constant 0 : index
    %1209 = vector.load %arg2[%c0_1152, %c9_1153, %c0_1154, %c0_1155] : memref<1x27x32x128xf32, #tpu.memory_space<vmem>>, vector<1x1x32x128xf32>
    %1210 = vector.shape_cast %1209 : vector<1x1x32x128xf32> to vector<32x128xf32>
    %c7_1156 = arith.constant 7 : index
    %c10_1157 = arith.constant 10 : index
    %1211 = memref.load %arg3[%c7_1156, %c10_1157] : memref<9x28xf32, #tpu.memory_space<smem>>
    %1212 = vector.broadcast %1211 : f32 to vector<32x128xf32>
    %1213 = arith.mulf %1210, %1212 : vector<32x128xf32>
    %1214 = arith.addf %1208, %1213 : vector<32x128xf32>
    %c0_1158 = arith.constant 0 : index
    %c10_1159 = arith.constant 10 : index
    %c0_1160 = arith.constant 0 : index
    %c0_1161 = arith.constant 0 : index
    %1215 = vector.load %arg2[%c0_1158, %c10_1159, %c0_1160, %c0_1161] : memref<1x27x32x128xf32, #tpu.memory_space<vmem>>, vector<1x1x32x128xf32>
    %1216 = vector.shape_cast %1215 : vector<1x1x32x128xf32> to vector<32x128xf32>
    %c7_1162 = arith.constant 7 : index
    %c11_1163 = arith.constant 11 : index
    %1217 = memref.load %arg3[%c7_1162, %c11_1163] : memref<9x28xf32, #tpu.memory_space<smem>>
    %1218 = vector.broadcast %1217 : f32 to vector<32x128xf32>
    %1219 = arith.mulf %1216, %1218 : vector<32x128xf32>
    %1220 = arith.addf %1214, %1219 : vector<32x128xf32>
    %c0_1164 = arith.constant 0 : index
    %c11_1165 = arith.constant 11 : index
    %c0_1166 = arith.constant 0 : index
    %c0_1167 = arith.constant 0 : index
    %1221 = vector.load %arg2[%c0_1164, %c11_1165, %c0_1166, %c0_1167] : memref<1x27x32x128xf32, #tpu.memory_space<vmem>>, vector<1x1x32x128xf32>
    %1222 = vector.shape_cast %1221 : vector<1x1x32x128xf32> to vector<32x128xf32>
    %c7_1168 = arith.constant 7 : index
    %c12_1169 = arith.constant 12 : index
    %1223 = memref.load %arg3[%c7_1168, %c12_1169] : memref<9x28xf32, #tpu.memory_space<smem>>
    %1224 = vector.broadcast %1223 : f32 to vector<32x128xf32>
    %1225 = arith.mulf %1222, %1224 : vector<32x128xf32>
    %1226 = arith.addf %1220, %1225 : vector<32x128xf32>
    %c0_1170 = arith.constant 0 : index
    %c12_1171 = arith.constant 12 : index
    %c0_1172 = arith.constant 0 : index
    %c0_1173 = arith.constant 0 : index
    %1227 = vector.load %arg2[%c0_1170, %c12_1171, %c0_1172, %c0_1173] : memref<1x27x32x128xf32, #tpu.memory_space<vmem>>, vector<1x1x32x128xf32>
    %1228 = vector.shape_cast %1227 : vector<1x1x32x128xf32> to vector<32x128xf32>
    %c7_1174 = arith.constant 7 : index
    %c13_1175 = arith.constant 13 : index
    %1229 = memref.load %arg3[%c7_1174, %c13_1175] : memref<9x28xf32, #tpu.memory_space<smem>>
    %1230 = vector.broadcast %1229 : f32 to vector<32x128xf32>
    %1231 = arith.mulf %1228, %1230 : vector<32x128xf32>
    %1232 = arith.addf %1226, %1231 : vector<32x128xf32>
    %c0_1176 = arith.constant 0 : index
    %c13_1177 = arith.constant 13 : index
    %c0_1178 = arith.constant 0 : index
    %c0_1179 = arith.constant 0 : index
    %1233 = vector.load %arg2[%c0_1176, %c13_1177, %c0_1178, %c0_1179] : memref<1x27x32x128xf32, #tpu.memory_space<vmem>>, vector<1x1x32x128xf32>
    %1234 = vector.shape_cast %1233 : vector<1x1x32x128xf32> to vector<32x128xf32>
    %c7_1180 = arith.constant 7 : index
    %c14_1181 = arith.constant 14 : index
    %1235 = memref.load %arg3[%c7_1180, %c14_1181] : memref<9x28xf32, #tpu.memory_space<smem>>
    %1236 = vector.broadcast %1235 : f32 to vector<32x128xf32>
    %1237 = arith.mulf %1234, %1236 : vector<32x128xf32>
    %1238 = arith.addf %1232, %1237 : vector<32x128xf32>
    %c0_1182 = arith.constant 0 : index
    %c14_1183 = arith.constant 14 : index
    %c0_1184 = arith.constant 0 : index
    %c0_1185 = arith.constant 0 : index
    %1239 = vector.load %arg2[%c0_1182, %c14_1183, %c0_1184, %c0_1185] : memref<1x27x32x128xf32, #tpu.memory_space<vmem>>, vector<1x1x32x128xf32>
    %1240 = vector.shape_cast %1239 : vector<1x1x32x128xf32> to vector<32x128xf32>
    %c7_1186 = arith.constant 7 : index
    %c15_1187 = arith.constant 15 : index
    %1241 = memref.load %arg3[%c7_1186, %c15_1187] : memref<9x28xf32, #tpu.memory_space<smem>>
    %1242 = vector.broadcast %1241 : f32 to vector<32x128xf32>
    %1243 = arith.mulf %1240, %1242 : vector<32x128xf32>
    %1244 = arith.addf %1238, %1243 : vector<32x128xf32>
    %c0_1188 = arith.constant 0 : index
    %c15_1189 = arith.constant 15 : index
    %c0_1190 = arith.constant 0 : index
    %c0_1191 = arith.constant 0 : index
    %1245 = vector.load %arg2[%c0_1188, %c15_1189, %c0_1190, %c0_1191] : memref<1x27x32x128xf32, #tpu.memory_space<vmem>>, vector<1x1x32x128xf32>
    %1246 = vector.shape_cast %1245 : vector<1x1x32x128xf32> to vector<32x128xf32>
    %c7_1192 = arith.constant 7 : index
    %c16_1193 = arith.constant 16 : index
    %1247 = memref.load %arg3[%c7_1192, %c16_1193] : memref<9x28xf32, #tpu.memory_space<smem>>
    %1248 = vector.broadcast %1247 : f32 to vector<32x128xf32>
    %1249 = arith.mulf %1246, %1248 : vector<32x128xf32>
    %1250 = arith.addf %1244, %1249 : vector<32x128xf32>
    %c0_1194 = arith.constant 0 : index
    %c16_1195 = arith.constant 16 : index
    %c0_1196 = arith.constant 0 : index
    %c0_1197 = arith.constant 0 : index
    %1251 = vector.load %arg2[%c0_1194, %c16_1195, %c0_1196, %c0_1197] : memref<1x27x32x128xf32, #tpu.memory_space<vmem>>, vector<1x1x32x128xf32>
    %1252 = vector.shape_cast %1251 : vector<1x1x32x128xf32> to vector<32x128xf32>
    %c7_1198 = arith.constant 7 : index
    %c17_1199 = arith.constant 17 : index
    %1253 = memref.load %arg3[%c7_1198, %c17_1199] : memref<9x28xf32, #tpu.memory_space<smem>>
    %1254 = vector.broadcast %1253 : f32 to vector<32x128xf32>
    %1255 = arith.mulf %1252, %1254 : vector<32x128xf32>
    %1256 = arith.addf %1250, %1255 : vector<32x128xf32>
    %c0_1200 = arith.constant 0 : index
    %c17_1201 = arith.constant 17 : index
    %c0_1202 = arith.constant 0 : index
    %c0_1203 = arith.constant 0 : index
    %1257 = vector.load %arg2[%c0_1200, %c17_1201, %c0_1202, %c0_1203] : memref<1x27x32x128xf32, #tpu.memory_space<vmem>>, vector<1x1x32x128xf32>
    %1258 = vector.shape_cast %1257 : vector<1x1x32x128xf32> to vector<32x128xf32>
    %c7_1204 = arith.constant 7 : index
    %c18_1205 = arith.constant 18 : index
    %1259 = memref.load %arg3[%c7_1204, %c18_1205] : memref<9x28xf32, #tpu.memory_space<smem>>
    %1260 = vector.broadcast %1259 : f32 to vector<32x128xf32>
    %1261 = arith.mulf %1258, %1260 : vector<32x128xf32>
    %1262 = arith.addf %1256, %1261 : vector<32x128xf32>
    %c0_1206 = arith.constant 0 : index
    %c18_1207 = arith.constant 18 : index
    %c0_1208 = arith.constant 0 : index
    %c0_1209 = arith.constant 0 : index
    %1263 = vector.load %arg2[%c0_1206, %c18_1207, %c0_1208, %c0_1209] : memref<1x27x32x128xf32, #tpu.memory_space<vmem>>, vector<1x1x32x128xf32>
    %1264 = vector.shape_cast %1263 : vector<1x1x32x128xf32> to vector<32x128xf32>
    %c7_1210 = arith.constant 7 : index
    %c19_1211 = arith.constant 19 : index
    %1265 = memref.load %arg3[%c7_1210, %c19_1211] : memref<9x28xf32, #tpu.memory_space<smem>>
    %1266 = vector.broadcast %1265 : f32 to vector<32x128xf32>
    %1267 = arith.mulf %1264, %1266 : vector<32x128xf32>
    %1268 = arith.addf %1262, %1267 : vector<32x128xf32>
    %c0_1212 = arith.constant 0 : index
    %c19_1213 = arith.constant 19 : index
    %c0_1214 = arith.constant 0 : index
    %c0_1215 = arith.constant 0 : index
    %1269 = vector.load %arg2[%c0_1212, %c19_1213, %c0_1214, %c0_1215] : memref<1x27x32x128xf32, #tpu.memory_space<vmem>>, vector<1x1x32x128xf32>
    %1270 = vector.shape_cast %1269 : vector<1x1x32x128xf32> to vector<32x128xf32>
    %c7_1216 = arith.constant 7 : index
    %c20_1217 = arith.constant 20 : index
    %1271 = memref.load %arg3[%c7_1216, %c20_1217] : memref<9x28xf32, #tpu.memory_space<smem>>
    %1272 = vector.broadcast %1271 : f32 to vector<32x128xf32>
    %1273 = arith.mulf %1270, %1272 : vector<32x128xf32>
    %1274 = arith.addf %1268, %1273 : vector<32x128xf32>
    %c0_1218 = arith.constant 0 : index
    %c20_1219 = arith.constant 20 : index
    %c0_1220 = arith.constant 0 : index
    %c0_1221 = arith.constant 0 : index
    %1275 = vector.load %arg2[%c0_1218, %c20_1219, %c0_1220, %c0_1221] : memref<1x27x32x128xf32, #tpu.memory_space<vmem>>, vector<1x1x32x128xf32>
    %1276 = vector.shape_cast %1275 : vector<1x1x32x128xf32> to vector<32x128xf32>
    %c7_1222 = arith.constant 7 : index
    %c21_1223 = arith.constant 21 : index
    %1277 = memref.load %arg3[%c7_1222, %c21_1223] : memref<9x28xf32, #tpu.memory_space<smem>>
    %1278 = vector.broadcast %1277 : f32 to vector<32x128xf32>
    %1279 = arith.mulf %1276, %1278 : vector<32x128xf32>
    %1280 = arith.addf %1274, %1279 : vector<32x128xf32>
    %c0_1224 = arith.constant 0 : index
    %c21_1225 = arith.constant 21 : index
    %c0_1226 = arith.constant 0 : index
    %c0_1227 = arith.constant 0 : index
    %1281 = vector.load %arg2[%c0_1224, %c21_1225, %c0_1226, %c0_1227] : memref<1x27x32x128xf32, #tpu.memory_space<vmem>>, vector<1x1x32x128xf32>
    %1282 = vector.shape_cast %1281 : vector<1x1x32x128xf32> to vector<32x128xf32>
    %c7_1228 = arith.constant 7 : index
    %c22_1229 = arith.constant 22 : index
    %1283 = memref.load %arg3[%c7_1228, %c22_1229] : memref<9x28xf32, #tpu.memory_space<smem>>
    %1284 = vector.broadcast %1283 : f32 to vector<32x128xf32>
    %1285 = arith.mulf %1282, %1284 : vector<32x128xf32>
    %1286 = arith.addf %1280, %1285 : vector<32x128xf32>
    %c0_1230 = arith.constant 0 : index
    %c22_1231 = arith.constant 22 : index
    %c0_1232 = arith.constant 0 : index
    %c0_1233 = arith.constant 0 : index
    %1287 = vector.load %arg2[%c0_1230, %c22_1231, %c0_1232, %c0_1233] : memref<1x27x32x128xf32, #tpu.memory_space<vmem>>, vector<1x1x32x128xf32>
    %1288 = vector.shape_cast %1287 : vector<1x1x32x128xf32> to vector<32x128xf32>
    %c7_1234 = arith.constant 7 : index
    %c23_1235 = arith.constant 23 : index
    %1289 = memref.load %arg3[%c7_1234, %c23_1235] : memref<9x28xf32, #tpu.memory_space<smem>>
    %1290 = vector.broadcast %1289 : f32 to vector<32x128xf32>
    %1291 = arith.mulf %1288, %1290 : vector<32x128xf32>
    %1292 = arith.addf %1286, %1291 : vector<32x128xf32>
    %c0_1236 = arith.constant 0 : index
    %c23_1237 = arith.constant 23 : index
    %c0_1238 = arith.constant 0 : index
    %c0_1239 = arith.constant 0 : index
    %1293 = vector.load %arg2[%c0_1236, %c23_1237, %c0_1238, %c0_1239] : memref<1x27x32x128xf32, #tpu.memory_space<vmem>>, vector<1x1x32x128xf32>
    %1294 = vector.shape_cast %1293 : vector<1x1x32x128xf32> to vector<32x128xf32>
    %c7_1240 = arith.constant 7 : index
    %c24_1241 = arith.constant 24 : index
    %1295 = memref.load %arg3[%c7_1240, %c24_1241] : memref<9x28xf32, #tpu.memory_space<smem>>
    %1296 = vector.broadcast %1295 : f32 to vector<32x128xf32>
    %1297 = arith.mulf %1294, %1296 : vector<32x128xf32>
    %1298 = arith.addf %1292, %1297 : vector<32x128xf32>
    %c0_1242 = arith.constant 0 : index
    %c24_1243 = arith.constant 24 : index
    %c0_1244 = arith.constant 0 : index
    %c0_1245 = arith.constant 0 : index
    %1299 = vector.load %arg2[%c0_1242, %c24_1243, %c0_1244, %c0_1245] : memref<1x27x32x128xf32, #tpu.memory_space<vmem>>, vector<1x1x32x128xf32>
    %1300 = vector.shape_cast %1299 : vector<1x1x32x128xf32> to vector<32x128xf32>
    %c7_1246 = arith.constant 7 : index
    %c25_1247 = arith.constant 25 : index
    %1301 = memref.load %arg3[%c7_1246, %c25_1247] : memref<9x28xf32, #tpu.memory_space<smem>>
    %1302 = vector.broadcast %1301 : f32 to vector<32x128xf32>
    %1303 = arith.mulf %1300, %1302 : vector<32x128xf32>
    %1304 = arith.addf %1298, %1303 : vector<32x128xf32>
    %c0_1248 = arith.constant 0 : index
    %c25_1249 = arith.constant 25 : index
    %c0_1250 = arith.constant 0 : index
    %c0_1251 = arith.constant 0 : index
    %1305 = vector.load %arg2[%c0_1248, %c25_1249, %c0_1250, %c0_1251] : memref<1x27x32x128xf32, #tpu.memory_space<vmem>>, vector<1x1x32x128xf32>
    %1306 = vector.shape_cast %1305 : vector<1x1x32x128xf32> to vector<32x128xf32>
    %c7_1252 = arith.constant 7 : index
    %c26_1253 = arith.constant 26 : index
    %1307 = memref.load %arg3[%c7_1252, %c26_1253] : memref<9x28xf32, #tpu.memory_space<smem>>
    %1308 = vector.broadcast %1307 : f32 to vector<32x128xf32>
    %1309 = arith.mulf %1306, %1308 : vector<32x128xf32>
    %1310 = arith.addf %1304, %1309 : vector<32x128xf32>
    %c0_1254 = arith.constant 0 : index
    %c26_1255 = arith.constant 26 : index
    %c0_1256 = arith.constant 0 : index
    %c0_1257 = arith.constant 0 : index
    %1311 = vector.load %arg2[%c0_1254, %c26_1255, %c0_1256, %c0_1257] : memref<1x27x32x128xf32, #tpu.memory_space<vmem>>, vector<1x1x32x128xf32>
    %1312 = vector.shape_cast %1311 : vector<1x1x32x128xf32> to vector<32x128xf32>
    %c7_1258 = arith.constant 7 : index
    %c27_1259 = arith.constant 27 : index
    %1313 = memref.load %arg3[%c7_1258, %c27_1259] : memref<9x28xf32, #tpu.memory_space<smem>>
    %1314 = vector.broadcast %1313 : f32 to vector<32x128xf32>
    %1315 = arith.mulf %1312, %1314 : vector<32x128xf32>
    %1316 = arith.addf %1310, %1315 : vector<32x128xf32>
    %c0_1260 = arith.constant 0 : index
    %c7_1261 = arith.constant 7 : index
    %c0_1262 = arith.constant 0 : index
    %c0_1263 = arith.constant 0 : index
    %1317 = vector.load %arg5[%c0_1260, %c7_1261, %c0_1262, %c0_1263] : memref<1x9x32x128xf32, #tpu.memory_space<vmem>>, vector<1x1x32x128xf32>
    %1318 = vector.shape_cast %1317 : vector<1x1x32x128xf32> to vector<32x128xf32>
    %1319 = vector.shape_cast %1316 : vector<32x128xf32> to vector<1x1x32x128xf32>
    tpu.vector_store %arg5[%c0_1260, %c7_1261, %c0_1262, %c0_1263], %1319 {strides = array<i32>} : memref<1x9x32x128xf32, #tpu.memory_space<vmem>>, vector<1x1x32x128xf32>,
    %1320 = arith.mulf %1316, %1316 : vector<32x128xf32>
    %1321 = arith.addf %1148, %1320 : vector<32x128xf32>
    %c8_1264 = arith.constant 8 : index
    %c0_1265 = arith.constant 0 : index
    %1322 = memref.load %arg3[%c8_1264, %c0_1265] : memref<9x28xf32, #tpu.memory_space<smem>>
    %1323 = vector.broadcast %1322 : f32 to vector<32x128xf32>
    %1324 = arith.mulf %111, %1323 : vector<32x128xf32>
    %c8_1266 = arith.constant 8 : index
    %1325 = memref.load %arg4[%c8_1266] : memref<9xf32, #tpu.memory_space<smem>>
    %1326 = vector.broadcast %1325 : f32 to vector<32x128xf32>
    %1327 = arith.addf %1324, %1326 : vector<32x128xf32>
    %c0_1267 = arith.constant 0 : index
    %c0_1268 = arith.constant 0 : index
    %c0_1269 = arith.constant 0 : index
    %c0_1270 = arith.constant 0 : index
    %1328 = vector.load %arg2[%c0_1267, %c0_1268, %c0_1269, %c0_1270] : memref<1x27x32x128xf32, #tpu.memory_space<vmem>>, vector<1x1x32x128xf32>
    %1329 = vector.shape_cast %1328 : vector<1x1x32x128xf32> to vector<32x128xf32>
    %c8_1271 = arith.constant 8 : index
    %c1_1272 = arith.constant 1 : index
    %1330 = memref.load %arg3[%c8_1271, %c1_1272] : memref<9x28xf32, #tpu.memory_space<smem>>
    %1331 = vector.broadcast %1330 : f32 to vector<32x128xf32>
    %1332 = arith.mulf %1329, %1331 : vector<32x128xf32>
    %1333 = arith.addf %1327, %1332 : vector<32x128xf32>
    %c0_1273 = arith.constant 0 : index
    %c1_1274 = arith.constant 1 : index
    %c0_1275 = arith.constant 0 : index
    %c0_1276 = arith.constant 0 : index
    %1334 = vector.load %arg2[%c0_1273, %c1_1274, %c0_1275, %c0_1276] : memref<1x27x32x128xf32, #tpu.memory_space<vmem>>, vector<1x1x32x128xf32>
    %1335 = vector.shape_cast %1334 : vector<1x1x32x128xf32> to vector<32x128xf32>
    %c8_1277 = arith.constant 8 : index
    %c2_1278 = arith.constant 2 : index
    %1336 = memref.load %arg3[%c8_1277, %c2_1278] : memref<9x28xf32, #tpu.memory_space<smem>>
    %1337 = vector.broadcast %1336 : f32 to vector<32x128xf32>
    %1338 = arith.mulf %1335, %1337 : vector<32x128xf32>
    %1339 = arith.addf %1333, %1338 : vector<32x128xf32>
    %c0_1279 = arith.constant 0 : index
    %c2_1280 = arith.constant 2 : index
    %c0_1281 = arith.constant 0 : index
    %c0_1282 = arith.constant 0 : index
    %1340 = vector.load %arg2[%c0_1279, %c2_1280, %c0_1281, %c0_1282] : memref<1x27x32x128xf32, #tpu.memory_space<vmem>>, vector<1x1x32x128xf32>
    %1341 = vector.shape_cast %1340 : vector<1x1x32x128xf32> to vector<32x128xf32>
    %c8_1283 = arith.constant 8 : index
    %c3_1284 = arith.constant 3 : index
    %1342 = memref.load %arg3[%c8_1283, %c3_1284] : memref<9x28xf32, #tpu.memory_space<smem>>
    %1343 = vector.broadcast %1342 : f32 to vector<32x128xf32>
    %1344 = arith.mulf %1341, %1343 : vector<32x128xf32>
    %1345 = arith.addf %1339, %1344 : vector<32x128xf32>
    %c0_1285 = arith.constant 0 : index
    %c3_1286 = arith.constant 3 : index
    %c0_1287 = arith.constant 0 : index
    %c0_1288 = arith.constant 0 : index
    %1346 = vector.load %arg2[%c0_1285, %c3_1286, %c0_1287, %c0_1288] : memref<1x27x32x128xf32, #tpu.memory_space<vmem>>, vector<1x1x32x128xf32>
    %1347 = vector.shape_cast %1346 : vector<1x1x32x128xf32> to vector<32x128xf32>
    %c8_1289 = arith.constant 8 : index
    %c4_1290 = arith.constant 4 : index
    %1348 = memref.load %arg3[%c8_1289, %c4_1290] : memref<9x28xf32, #tpu.memory_space<smem>>
    %1349 = vector.broadcast %1348 : f32 to vector<32x128xf32>
    %1350 = arith.mulf %1347, %1349 : vector<32x128xf32>
    %1351 = arith.addf %1345, %1350 : vector<32x128xf32>
    %c0_1291 = arith.constant 0 : index
    %c4_1292 = arith.constant 4 : index
    %c0_1293 = arith.constant 0 : index
    %c0_1294 = arith.constant 0 : index
    %1352 = vector.load %arg2[%c0_1291, %c4_1292, %c0_1293, %c0_1294] : memref<1x27x32x128xf32, #tpu.memory_space<vmem>>, vector<1x1x32x128xf32>
    %1353 = vector.shape_cast %1352 : vector<1x1x32x128xf32> to vector<32x128xf32>
    %c8_1295 = arith.constant 8 : index
    %c5_1296 = arith.constant 5 : index
    %1354 = memref.load %arg3[%c8_1295, %c5_1296] : memref<9x28xf32, #tpu.memory_space<smem>>
    %1355 = vector.broadcast %1354 : f32 to vector<32x128xf32>
    %1356 = arith.mulf %1353, %1355 : vector<32x128xf32>
    %1357 = arith.addf %1351, %1356 : vector<32x128xf32>
    %c0_1297 = arith.constant 0 : index
    %c5_1298 = arith.constant 5 : index
    %c0_1299 = arith.constant 0 : index
    %c0_1300 = arith.constant 0 : index
    %1358 = vector.load %arg2[%c0_1297, %c5_1298, %c0_1299, %c0_1300] : memref<1x27x32x128xf32, #tpu.memory_space<vmem>>, vector<1x1x32x128xf32>
    %1359 = vector.shape_cast %1358 : vector<1x1x32x128xf32> to vector<32x128xf32>
    %c8_1301 = arith.constant 8 : index
    %c6_1302 = arith.constant 6 : index
    %1360 = memref.load %arg3[%c8_1301, %c6_1302] : memref<9x28xf32, #tpu.memory_space<smem>>
    %1361 = vector.broadcast %1360 : f32 to vector<32x128xf32>
    %1362 = arith.mulf %1359, %1361 : vector<32x128xf32>
    %1363 = arith.addf %1357, %1362 : vector<32x128xf32>
    %c0_1303 = arith.constant 0 : index
    %c6_1304 = arith.constant 6 : index
    %c0_1305 = arith.constant 0 : index
    %c0_1306 = arith.constant 0 : index
    %1364 = vector.load %arg2[%c0_1303, %c6_1304, %c0_1305, %c0_1306] : memref<1x27x32x128xf32, #tpu.memory_space<vmem>>, vector<1x1x32x128xf32>
    %1365 = vector.shape_cast %1364 : vector<1x1x32x128xf32> to vector<32x128xf32>
    %c8_1307 = arith.constant 8 : index
    %c7_1308 = arith.constant 7 : index
    %1366 = memref.load %arg3[%c8_1307, %c7_1308] : memref<9x28xf32, #tpu.memory_space<smem>>
    %1367 = vector.broadcast %1366 : f32 to vector<32x128xf32>
    %1368 = arith.mulf %1365, %1367 : vector<32x128xf32>
    %1369 = arith.addf %1363, %1368 : vector<32x128xf32>
    %c0_1309 = arith.constant 0 : index
    %c7_1310 = arith.constant 7 : index
    %c0_1311 = arith.constant 0 : index
    %c0_1312 = arith.constant 0 : index
    %1370 = vector.load %arg2[%c0_1309, %c7_1310, %c0_1311, %c0_1312] : memref<1x27x32x128xf32, #tpu.memory_space<vmem>>, vector<1x1x32x128xf32>
    %1371 = vector.shape_cast %1370 : vector<1x1x32x128xf32> to vector<32x128xf32>
    %c8_1313 = arith.constant 8 : index
    %c8_1314 = arith.constant 8 : index
    %1372 = memref.load %arg3[%c8_1313, %c8_1314] : memref<9x28xf32, #tpu.memory_space<smem>>
    %1373 = vector.broadcast %1372 : f32 to vector<32x128xf32>
    %1374 = arith.mulf %1371, %1373 : vector<32x128xf32>
    %1375 = arith.addf %1369, %1374 : vector<32x128xf32>
    %c0_1315 = arith.constant 0 : index
    %c8_1316 = arith.constant 8 : index
    %c0_1317 = arith.constant 0 : index
    %c0_1318 = arith.constant 0 : index
    %1376 = vector.load %arg2[%c0_1315, %c8_1316, %c0_1317, %c0_1318] : memref<1x27x32x128xf32, #tpu.memory_space<vmem>>, vector<1x1x32x128xf32>
    %1377 = vector.shape_cast %1376 : vector<1x1x32x128xf32> to vector<32x128xf32>
    %c8_1319 = arith.constant 8 : index
    %c9_1320 = arith.constant 9 : index
    %1378 = memref.load %arg3[%c8_1319, %c9_1320] : memref<9x28xf32, #tpu.memory_space<smem>>
    %1379 = vector.broadcast %1378 : f32 to vector<32x128xf32>
    %1380 = arith.mulf %1377, %1379 : vector<32x128xf32>
    %1381 = arith.addf %1375, %1380 : vector<32x128xf32>
    %c0_1321 = arith.constant 0 : index
    %c9_1322 = arith.constant 9 : index
    %c0_1323 = arith.constant 0 : index
    %c0_1324 = arith.constant 0 : index
    %1382 = vector.load %arg2[%c0_1321, %c9_1322, %c0_1323, %c0_1324] : memref<1x27x32x128xf32, #tpu.memory_space<vmem>>, vector<1x1x32x128xf32>
    %1383 = vector.shape_cast %1382 : vector<1x1x32x128xf32> to vector<32x128xf32>
    %c8_1325 = arith.constant 8 : index
    %c10_1326 = arith.constant 10 : index
    %1384 = memref.load %arg3[%c8_1325, %c10_1326] : memref<9x28xf32, #tpu.memory_space<smem>>
    %1385 = vector.broadcast %1384 : f32 to vector<32x128xf32>
    %1386 = arith.mulf %1383, %1385 : vector<32x128xf32>
    %1387 = arith.addf %1381, %1386 : vector<32x128xf32>
    %c0_1327 = arith.constant 0 : index
    %c10_1328 = arith.constant 10 : index
    %c0_1329 = arith.constant 0 : index
    %c0_1330 = arith.constant 0 : index
    %1388 = vector.load %arg2[%c0_1327, %c10_1328, %c0_1329, %c0_1330] : memref<1x27x32x128xf32, #tpu.memory_space<vmem>>, vector<1x1x32x128xf32>
    %1389 = vector.shape_cast %1388 : vector<1x1x32x128xf32> to vector<32x128xf32>
    %c8_1331 = arith.constant 8 : index
    %c11_1332 = arith.constant 11 : index
    %1390 = memref.load %arg3[%c8_1331, %c11_1332] : memref<9x28xf32, #tpu.memory_space<smem>>
    %1391 = vector.broadcast %1390 : f32 to vector<32x128xf32>
    %1392 = arith.mulf %1389, %1391 : vector<32x128xf32>
    %1393 = arith.addf %1387, %1392 : vector<32x128xf32>
    %c0_1333 = arith.constant 0 : index
    %c11_1334 = arith.constant 11 : index
    %c0_1335 = arith.constant 0 : index
    %c0_1336 = arith.constant 0 : index
    %1394 = vector.load %arg2[%c0_1333, %c11_1334, %c0_1335, %c0_1336] : memref<1x27x32x128xf32, #tpu.memory_space<vmem>>, vector<1x1x32x128xf32>
    %1395 = vector.shape_cast %1394 : vector<1x1x32x128xf32> to vector<32x128xf32>
    %c8_1337 = arith.constant 8 : index
    %c12_1338 = arith.constant 12 : index
    %1396 = memref.load %arg3[%c8_1337, %c12_1338] : memref<9x28xf32, #tpu.memory_space<smem>>
    %1397 = vector.broadcast %1396 : f32 to vector<32x128xf32>
    %1398 = arith.mulf %1395, %1397 : vector<32x128xf32>
    %1399 = arith.addf %1393, %1398 : vector<32x128xf32>
    %c0_1339 = arith.constant 0 : index
    %c12_1340 = arith.constant 12 : index
    %c0_1341 = arith.constant 0 : index
    %c0_1342 = arith.constant 0 : index
    %1400 = vector.load %arg2[%c0_1339, %c12_1340, %c0_1341, %c0_1342] : memref<1x27x32x128xf32, #tpu.memory_space<vmem>>, vector<1x1x32x128xf32>
    %1401 = vector.shape_cast %1400 : vector<1x1x32x128xf32> to vector<32x128xf32>
    %c8_1343 = arith.constant 8 : index
    %c13_1344 = arith.constant 13 : index
    %1402 = memref.load %arg3[%c8_1343, %c13_1344] : memref<9x28xf32, #tpu.memory_space<smem>>
    %1403 = vector.broadcast %1402 : f32 to vector<32x128xf32>
    %1404 = arith.mulf %1401, %1403 : vector<32x128xf32>
    %1405 = arith.addf %1399, %1404 : vector<32x128xf32>
    %c0_1345 = arith.constant 0 : index
    %c13_1346 = arith.constant 13 : index
    %c0_1347 = arith.constant 0 : index
    %c0_1348 = arith.constant 0 : index
    %1406 = vector.load %arg2[%c0_1345, %c13_1346, %c0_1347, %c0_1348] : memref<1x27x32x128xf32, #tpu.memory_space<vmem>>, vector<1x1x32x128xf32>
    %1407 = vector.shape_cast %1406 : vector<1x1x32x128xf32> to vector<32x128xf32>
    %c8_1349 = arith.constant 8 : index
    %c14_1350 = arith.constant 14 : index
    %1408 = memref.load %arg3[%c8_1349, %c14_1350] : memref<9x28xf32, #tpu.memory_space<smem>>
    %1409 = vector.broadcast %1408 : f32 to vector<32x128xf32>
    %1410 = arith.mulf %1407, %1409 : vector<32x128xf32>
    %1411 = arith.addf %1405, %1410 : vector<32x128xf32>
    %c0_1351 = arith.constant 0 : index
    %c14_1352 = arith.constant 14 : index
    %c0_1353 = arith.constant 0 : index
    %c0_1354 = arith.constant 0 : index
    %1412 = vector.load %arg2[%c0_1351, %c14_1352, %c0_1353, %c0_1354] : memref<1x27x32x128xf32, #tpu.memory_space<vmem>>, vector<1x1x32x128xf32>
    %1413 = vector.shape_cast %1412 : vector<1x1x32x128xf32> to vector<32x128xf32>
    %c8_1355 = arith.constant 8 : index
    %c15_1356 = arith.constant 15 : index
    %1414 = memref.load %arg3[%c8_1355, %c15_1356] : memref<9x28xf32, #tpu.memory_space<smem>>
    %1415 = vector.broadcast %1414 : f32 to vector<32x128xf32>
    %1416 = arith.mulf %1413, %1415 : vector<32x128xf32>
    %1417 = arith.addf %1411, %1416 : vector<32x128xf32>
    %c0_1357 = arith.constant 0 : index
    %c15_1358 = arith.constant 15 : index
    %c0_1359 = arith.constant 0 : index
    %c0_1360 = arith.constant 0 : index
    %1418 = vector.load %arg2[%c0_1357, %c15_1358, %c0_1359, %c0_1360] : memref<1x27x32x128xf32, #tpu.memory_space<vmem>>, vector<1x1x32x128xf32>
    %1419 = vector.shape_cast %1418 : vector<1x1x32x128xf32> to vector<32x128xf32>
    %c8_1361 = arith.constant 8 : index
    %c16_1362 = arith.constant 16 : index
    %1420 = memref.load %arg3[%c8_1361, %c16_1362] : memref<9x28xf32, #tpu.memory_space<smem>>
    %1421 = vector.broadcast %1420 : f32 to vector<32x128xf32>
    %1422 = arith.mulf %1419, %1421 : vector<32x128xf32>
    %1423 = arith.addf %1417, %1422 : vector<32x128xf32>
    %c0_1363 = arith.constant 0 : index
    %c16_1364 = arith.constant 16 : index
    %c0_1365 = arith.constant 0 : index
    %c0_1366 = arith.constant 0 : index
    %1424 = vector.load %arg2[%c0_1363, %c16_1364, %c0_1365, %c0_1366] : memref<1x27x32x128xf32, #tpu.memory_space<vmem>>, vector<1x1x32x128xf32>
    %1425 = vector.shape_cast %1424 : vector<1x1x32x128xf32> to vector<32x128xf32>
    %c8_1367 = arith.constant 8 : index
    %c17_1368 = arith.constant 17 : index
    %1426 = memref.load %arg3[%c8_1367, %c17_1368] : memref<9x28xf32, #tpu.memory_space<smem>>
    %1427 = vector.broadcast %1426 : f32 to vector<32x128xf32>
    %1428 = arith.mulf %1425, %1427 : vector<32x128xf32>
    %1429 = arith.addf %1423, %1428 : vector<32x128xf32>
    %c0_1369 = arith.constant 0 : index
    %c17_1370 = arith.constant 17 : index
    %c0_1371 = arith.constant 0 : index
    %c0_1372 = arith.constant 0 : index
    %1430 = vector.load %arg2[%c0_1369, %c17_1370, %c0_1371, %c0_1372] : memref<1x27x32x128xf32, #tpu.memory_space<vmem>>, vector<1x1x32x128xf32>
    %1431 = vector.shape_cast %1430 : vector<1x1x32x128xf32> to vector<32x128xf32>
    %c8_1373 = arith.constant 8 : index
    %c18_1374 = arith.constant 18 : index
    %1432 = memref.load %arg3[%c8_1373, %c18_1374] : memref<9x28xf32, #tpu.memory_space<smem>>
    %1433 = vector.broadcast %1432 : f32 to vector<32x128xf32>
    %1434 = arith.mulf %1431, %1433 : vector<32x128xf32>
    %1435 = arith.addf %1429, %1434 : vector<32x128xf32>
    %c0_1375 = arith.constant 0 : index
    %c18_1376 = arith.constant 18 : index
    %c0_1377 = arith.constant 0 : index
    %c0_1378 = arith.constant 0 : index
    %1436 = vector.load %arg2[%c0_1375, %c18_1376, %c0_1377, %c0_1378] : memref<1x27x32x128xf32, #tpu.memory_space<vmem>>, vector<1x1x32x128xf32>
    %1437 = vector.shape_cast %1436 : vector<1x1x32x128xf32> to vector<32x128xf32>
    %c8_1379 = arith.constant 8 : index
    %c19_1380 = arith.constant 19 : index
    %1438 = memref.load %arg3[%c8_1379, %c19_1380] : memref<9x28xf32, #tpu.memory_space<smem>>
    %1439 = vector.broadcast %1438 : f32 to vector<32x128xf32>
    %1440 = arith.mulf %1437, %1439 : vector<32x128xf32>
    %1441 = arith.addf %1435, %1440 : vector<32x128xf32>
    %c0_1381 = arith.constant 0 : index
    %c19_1382 = arith.constant 19 : index
    %c0_1383 = arith.constant 0 : index
    %c0_1384 = arith.constant 0 : index
    %1442 = vector.load %arg2[%c0_1381, %c19_1382, %c0_1383, %c0_1384] : memref<1x27x32x128xf32, #tpu.memory_space<vmem>>, vector<1x1x32x128xf32>
    %1443 = vector.shape_cast %1442 : vector<1x1x32x128xf32> to vector<32x128xf32>
    %c8_1385 = arith.constant 8 : index
    %c20_1386 = arith.constant 20 : index
    %1444 = memref.load %arg3[%c8_1385, %c20_1386] : memref<9x28xf32, #tpu.memory_space<smem>>
    %1445 = vector.broadcast %1444 : f32 to vector<32x128xf32>
    %1446 = arith.mulf %1443, %1445 : vector<32x128xf32>
    %1447 = arith.addf %1441, %1446 : vector<32x128xf32>
    %c0_1387 = arith.constant 0 : index
    %c20_1388 = arith.constant 20 : index
    %c0_1389 = arith.constant 0 : index
    %c0_1390 = arith.constant 0 : index
    %1448 = vector.load %arg2[%c0_1387, %c20_1388, %c0_1389, %c0_1390] : memref<1x27x32x128xf32, #tpu.memory_space<vmem>>, vector<1x1x32x128xf32>
    %1449 = vector.shape_cast %1448 : vector<1x1x32x128xf32> to vector<32x128xf32>
    %c8_1391 = arith.constant 8 : index
    %c21_1392 = arith.constant 21 : index
    %1450 = memref.load %arg3[%c8_1391, %c21_1392] : memref<9x28xf32, #tpu.memory_space<smem>>
    %1451 = vector.broadcast %1450 : f32 to vector<32x128xf32>
    %1452 = arith.mulf %1449, %1451 : vector<32x128xf32>
    %1453 = arith.addf %1447, %1452 : vector<32x128xf32>
    %c0_1393 = arith.constant 0 : index
    %c21_1394 = arith.constant 21 : index
    %c0_1395 = arith.constant 0 : index
    %c0_1396 = arith.constant 0 : index
    %1454 = vector.load %arg2[%c0_1393, %c21_1394, %c0_1395, %c0_1396] : memref<1x27x32x128xf32, #tpu.memory_space<vmem>>, vector<1x1x32x128xf32>
    %1455 = vector.shape_cast %1454 : vector<1x1x32x128xf32> to vector<32x128xf32>
    %c8_1397 = arith.constant 8 : index
    %c22_1398 = arith.constant 22 : index
    %1456 = memref.load %arg3[%c8_1397, %c22_1398] : memref<9x28xf32, #tpu.memory_space<smem>>
    %1457 = vector.broadcast %1456 : f32 to vector<32x128xf32>
    %1458 = arith.mulf %1455, %1457 : vector<32x128xf32>
    %1459 = arith.addf %1453, %1458 : vector<32x128xf32>
    %c0_1399 = arith.constant 0 : index
    %c22_1400 = arith.constant 22 : index
    %c0_1401 = arith.constant 0 : index
    %c0_1402 = arith.constant 0 : index
    %1460 = vector.load %arg2[%c0_1399, %c22_1400, %c0_1401, %c0_1402] : memref<1x27x32x128xf32, #tpu.memory_space<vmem>>, vector<1x1x32x128xf32>
    %1461 = vector.shape_cast %1460 : vector<1x1x32x128xf32> to vector<32x128xf32>
    %c8_1403 = arith.constant 8 : index
    %c23_1404 = arith.constant 23 : index
    %1462 = memref.load %arg3[%c8_1403, %c23_1404] : memref<9x28xf32, #tpu.memory_space<smem>>
    %1463 = vector.broadcast %1462 : f32 to vector<32x128xf32>
    %1464 = arith.mulf %1461, %1463 : vector<32x128xf32>
    %1465 = arith.addf %1459, %1464 : vector<32x128xf32>
    %c0_1405 = arith.constant 0 : index
    %c23_1406 = arith.constant 23 : index
    %c0_1407 = arith.constant 0 : index
    %c0_1408 = arith.constant 0 : index
    %1466 = vector.load %arg2[%c0_1405, %c23_1406, %c0_1407, %c0_1408] : memref<1x27x32x128xf32, #tpu.memory_space<vmem>>, vector<1x1x32x128xf32>
    %1467 = vector.shape_cast %1466 : vector<1x1x32x128xf32> to vector<32x128xf32>
    %c8_1409 = arith.constant 8 : index
    %c24_1410 = arith.constant 24 : index
    %1468 = memref.load %arg3[%c8_1409, %c24_1410] : memref<9x28xf32, #tpu.memory_space<smem>>
    %1469 = vector.broadcast %1468 : f32 to vector<32x128xf32>
    %1470 = arith.mulf %1467, %1469 : vector<32x128xf32>
    %1471 = arith.addf %1465, %1470 : vector<32x128xf32>
    %c0_1411 = arith.constant 0 : index
    %c24_1412 = arith.constant 24 : index
    %c0_1413 = arith.constant 0 : index
    %c0_1414 = arith.constant 0 : index
    %1472 = vector.load %arg2[%c0_1411, %c24_1412, %c0_1413, %c0_1414] : memref<1x27x32x128xf32, #tpu.memory_space<vmem>>, vector<1x1x32x128xf32>
    %1473 = vector.shape_cast %1472 : vector<1x1x32x128xf32> to vector<32x128xf32>
    %c8_1415 = arith.constant 8 : index
    %c25_1416 = arith.constant 25 : index
    %1474 = memref.load %arg3[%c8_1415, %c25_1416] : memref<9x28xf32, #tpu.memory_space<smem>>
    %1475 = vector.broadcast %1474 : f32 to vector<32x128xf32>
    %1476 = arith.mulf %1473, %1475 : vector<32x128xf32>
    %1477 = arith.addf %1471, %1476 : vector<32x128xf32>
    %c0_1417 = arith.constant 0 : index
    %c25_1418 = arith.constant 25 : index
    %c0_1419 = arith.constant 0 : index
    %c0_1420 = arith.constant 0 : index
    %1478 = vector.load %arg2[%c0_1417, %c25_1418, %c0_1419, %c0_1420] : memref<1x27x32x128xf32, #tpu.memory_space<vmem>>, vector<1x1x32x128xf32>
    %1479 = vector.shape_cast %1478 : vector<1x1x32x128xf32> to vector<32x128xf32>
    %c8_1421 = arith.constant 8 : index
    %c26_1422 = arith.constant 26 : index
    %1480 = memref.load %arg3[%c8_1421, %c26_1422] : memref<9x28xf32, #tpu.memory_space<smem>>
    %1481 = vector.broadcast %1480 : f32 to vector<32x128xf32>
    %1482 = arith.mulf %1479, %1481 : vector<32x128xf32>
    %1483 = arith.addf %1477, %1482 : vector<32x128xf32>
    %c0_1423 = arith.constant 0 : index
    %c26_1424 = arith.constant 26 : index
    %c0_1425 = arith.constant 0 : index
    %c0_1426 = arith.constant 0 : index
    %1484 = vector.load %arg2[%c0_1423, %c26_1424, %c0_1425, %c0_1426] : memref<1x27x32x128xf32, #tpu.memory_space<vmem>>, vector<1x1x32x128xf32>
    %1485 = vector.shape_cast %1484 : vector<1x1x32x128xf32> to vector<32x128xf32>
    %c8_1427 = arith.constant 8 : index
    %c27_1428 = arith.constant 27 : index
    %1486 = memref.load %arg3[%c8_1427, %c27_1428] : memref<9x28xf32, #tpu.memory_space<smem>>
    %1487 = vector.broadcast %1486 : f32 to vector<32x128xf32>
    %1488 = arith.mulf %1485, %1487 : vector<32x128xf32>
    %1489 = arith.addf %1483, %1488 : vector<32x128xf32>
    %c0_1429 = arith.constant 0 : index
    %c8_1430 = arith.constant 8 : index
    %c0_1431 = arith.constant 0 : index
    %c0_1432 = arith.constant 0 : index
    %1490 = vector.load %arg5[%c0_1429, %c8_1430, %c0_1431, %c0_1432] : memref<1x9x32x128xf32, #tpu.memory_space<vmem>>, vector<1x1x32x128xf32>
    %1491 = vector.shape_cast %1490 : vector<1x1x32x128xf32> to vector<32x128xf32>
    %1492 = vector.shape_cast %1489 : vector<32x128xf32> to vector<1x1x32x128xf32>
    tpu.vector_store %arg5[%c0_1429, %c8_1430, %c0_1431, %c0_1432], %1492 {strides = array<i32>} : memref<1x9x32x128xf32, #tpu.memory_space<vmem>>, vector<1x1x32x128xf32>,
    %1493 = arith.mulf %1489, %1489 : vector<32x128xf32>
    %1494 = arith.addf %1321, %1493 : vector<32x128xf32>
    %cst_1433 = arith.constant 1.000000e+00 : f32
    %1495 = vector.broadcast %cst_1433 : f32 to vector<32x128xf32>
    %1496 = arith.addf %1494, %1495 : vector<32x128xf32>
    %1497 = math.sqrt %1496 : vector<32x128xf32>
    %cst_1434 = arith.constant 1.000000e-15 : f32
    %1498 = vector.broadcast %cst_1434 : f32 to vector<32x128xf32>
    %1499 = arith.maximumf %1494, %1498 : vector<32x128xf32>
    %1500 = math.rsqrt %1499 : vector<32x128xf32>
    %1501 = arith.mulf %1494, %1500 : vector<32x128xf32>
    %1502 = arith.addf %1497, %1501 : vector<32x128xf32>
    %cst_1435 = arith.constant 1.000000e+00 : f32
    %1503 = vector.broadcast %cst_1435 : f32 to vector<32x128xf32>
    %1504 = arith.mulf %1502, %1503 : vector<32x128xf32>
    %1505 = math.log %1504 : vector<32x128xf32>
    %cst_1436 = arith.constant 0.999994993 : f32
    %1506 = vector.broadcast %cst_1436 : f32 to vector<32x128xf32>
    %1507 = arith.mulf %1505, %1506 : vector<32x128xf32>
    %1508 = math.exp %1507 : vector<32x128xf32>
    %1509 = tpu.reciprocal %1508 {approx = true} : vector<32x128xf32> -> vector<32x128xf32>
    %1510 = arith.mulf %1508, %1509 : vector<32x128xf32>
    %cst_1437 = arith.constant 2.000000e+00 : f32
    %1511 = vector.broadcast %cst_1437 : f32 to vector<32x128xf32>
    %1512 = arith.subf %1511, %1510 : vector<32x128xf32>
    %1513 = arith.mulf %1509, %1512 : vector<32x128xf32>
    %1514 = arith.subf %1508, %1513 : vector<32x128xf32>
    %cst_1438 = arith.constant 5.000000e-01 : f32
    %1515 = vector.broadcast %cst_1438 : f32 to vector<32x128xf32>
    %1516 = arith.mulf %1515, %1514 : vector<32x128xf32>
    %cst_1439 = arith.constant 1.000000e+00 : f32
    %1517 = vector.broadcast %cst_1439 : f32 to vector<32x128xf32>
    %1518 = arith.mulf %1517, %1516 : vector<32x128xf32>
    %1519 = arith.mulf %1518, %1500 : vector<32x128xf32>
    %c0_1440 = arith.constant 0 : index
    %c1_1441 = arith.constant 1 : index
    %c0_1442 = arith.constant 0 : index
    %c0_1443 = arith.constant 0 : index
    %1520 = vector.load %arg5[%c0_1440, %c1_1441, %c0_1442, %c0_1443] : memref<1x9x32x128xf32, #tpu.memory_space<vmem>>, vector<1x1x32x128xf32>
    %1521 = vector.shape_cast %1520 : vector<1x1x32x128xf32> to vector<32x128xf32>
    %1522 = arith.mulf %1521, %1519 : vector<32x128xf32>
    %cst_1444 = arith.constant 0.000000e+00 : f32
    %1523 = vector.broadcast %cst_1444 : f32 to vector<32x128xf32>
    %1524 = arith.maximumf %1522, %1523 : vector<32x128xf32>
    %c0_1445 = arith.constant 0 : index
    %c1_1446 = arith.constant 1 : index
    %c0_1447 = arith.constant 0 : index
    %c0_1448 = arith.constant 0 : index
    %1525 = vector.load %arg5[%c0_1445, %c1_1446, %c0_1447, %c0_1448] : memref<1x9x32x128xf32, #tpu.memory_space<vmem>>, vector<1x1x32x128xf32>
    %1526 = vector.shape_cast %1525 : vector<1x1x32x128xf32> to vector<32x128xf32>
    %1527 = vector.shape_cast %1524 : vector<32x128xf32> to vector<1x1x32x128xf32>
    tpu.vector_store %arg5[%c0_1445, %c1_1446, %c0_1447, %c0_1448], %1527 {strides = array<i32>} : memref<1x9x32x128xf32, #tpu.memory_space<vmem>>, vector<1x1x32x128xf32>,
    %1528 = arith.mulf %1524, %1524 : vector<32x128xf32>
    %c0_1449 = arith.constant 0 : index
    %c2_1450 = arith.constant 2 : index
    %c0_1451 = arith.constant 0 : index
    %c0_1452 = arith.constant 0 : index
    %1529 = vector.load %arg5[%c0_1449, %c2_1450, %c0_1451, %c0_1452] : memref<1x9x32x128xf32, #tpu.memory_space<vmem>>, vector<1x1x32x128xf32>
    %1530 = vector.shape_cast %1529 : vector<1x1x32x128xf32> to vector<32x128xf32>
    %1531 = arith.mulf %1530, %1519 : vector<32x128xf32>
    %cst_1453 = arith.constant 0.000000e+00 : f32
    %1532 = vector.broadcast %cst_1453 : f32 to vector<32x128xf32>
    %1533 = arith.maximumf %1531, %1532 : vector<32x128xf32>
    %c0_1454 = arith.constant 0 : index
    %c2_1455 = arith.constant 2 : index
    %c0_1456 = arith.constant 0 : index
    %c0_1457 = arith.constant 0 : index
    %1534 = vector.load %arg5[%c0_1454, %c2_1455, %c0_1456, %c0_1457] : memref<1x9x32x128xf32, #tpu.memory_space<vmem>>, vector<1x1x32x128xf32>
    %1535 = vector.shape_cast %1534 : vector<1x1x32x128xf32> to vector<32x128xf32>
    %1536 = vector.shape_cast %1533 : vector<32x128xf32> to vector<1x1x32x128xf32>
    tpu.vector_store %arg5[%c0_1454, %c2_1455, %c0_1456, %c0_1457], %1536 {strides = array<i32>} : memref<1x9x32x128xf32, #tpu.memory_space<vmem>>, vector<1x1x32x128xf32>,
    %1537 = arith.mulf %1533, %1533 : vector<32x128xf32>
    %1538 = arith.addf %1528, %1537 : vector<32x128xf32>
    %c0_1458 = arith.constant 0 : index
    %c3_1459 = arith.constant 3 : index
    %c0_1460 = arith.constant 0 : index
    %c0_1461 = arith.constant 0 : index
    %1539 = vector.load %arg5[%c0_1458, %c3_1459, %c0_1460, %c0_1461] : memref<1x9x32x128xf32, #tpu.memory_space<vmem>>, vector<1x1x32x128xf32>
    %1540 = vector.shape_cast %1539 : vector<1x1x32x128xf32> to vector<32x128xf32>
    %1541 = arith.mulf %1540, %1519 : vector<32x128xf32>
    %cst_1462 = arith.constant 0.000000e+00 : f32
    %1542 = vector.broadcast %cst_1462 : f32 to vector<32x128xf32>
    %1543 = arith.maximumf %1541, %1542 : vector<32x128xf32>
    %c0_1463 = arith.constant 0 : index
    %c3_1464 = arith.constant 3 : index
    %c0_1465 = arith.constant 0 : index
    %c0_1466 = arith.constant 0 : index
    %1544 = vector.load %arg5[%c0_1463, %c3_1464, %c0_1465, %c0_1466] : memref<1x9x32x128xf32, #tpu.memory_space<vmem>>, vector<1x1x32x128xf32>
    %1545 = vector.shape_cast %1544 : vector<1x1x32x128xf32> to vector<32x128xf32>
    %1546 = vector.shape_cast %1543 : vector<32x128xf32> to vector<1x1x32x128xf32>
    tpu.vector_store %arg5[%c0_1463, %c3_1464, %c0_1465, %c0_1466], %1546 {strides = array<i32>} : memref<1x9x32x128xf32, #tpu.memory_space<vmem>>, vector<1x1x32x128xf32>,
    %1547 = arith.mulf %1543, %1543 : vector<32x128xf32>
    %1548 = arith.addf %1538, %1547 : vector<32x128xf32>
    %c0_1467 = arith.constant 0 : index
    %c4_1468 = arith.constant 4 : index
    %c0_1469 = arith.constant 0 : index
    %c0_1470 = arith.constant 0 : index
    %1549 = vector.load %arg5[%c0_1467, %c4_1468, %c0_1469, %c0_1470] : memref<1x9x32x128xf32, #tpu.memory_space<vmem>>, vector<1x1x32x128xf32>
    %1550 = vector.shape_cast %1549 : vector<1x1x32x128xf32> to vector<32x128xf32>
    %1551 = arith.mulf %1550, %1519 : vector<32x128xf32>
    %cst_1471 = arith.constant 0.000000e+00 : f32
    %1552 = vector.broadcast %cst_1471 : f32 to vector<32x128xf32>
    %1553 = arith.maximumf %1551, %1552 : vector<32x128xf32>
    %c0_1472 = arith.constant 0 : index
    %c4_1473 = arith.constant 4 : index
    %c0_1474 = arith.constant 0 : index
    %c0_1475 = arith.constant 0 : index
    %1554 = vector.load %arg5[%c0_1472, %c4_1473, %c0_1474, %c0_1475] : memref<1x9x32x128xf32, #tpu.memory_space<vmem>>, vector<1x1x32x128xf32>
    %1555 = vector.shape_cast %1554 : vector<1x1x32x128xf32> to vector<32x128xf32>
    %1556 = vector.shape_cast %1553 : vector<32x128xf32> to vector<1x1x32x128xf32>
    tpu.vector_store %arg5[%c0_1472, %c4_1473, %c0_1474, %c0_1475], %1556 {strides = array<i32>} : memref<1x9x32x128xf32, #tpu.memory_space<vmem>>, vector<1x1x32x128xf32>,
    %1557 = arith.mulf %1553, %1553 : vector<32x128xf32>
    %1558 = arith.addf %1548, %1557 : vector<32x128xf32>
    %c0_1476 = arith.constant 0 : index
    %c5_1477 = arith.constant 5 : index
    %c0_1478 = arith.constant 0 : index
    %c0_1479 = arith.constant 0 : index
    %1559 = vector.load %arg5[%c0_1476, %c5_1477, %c0_1478, %c0_1479] : memref<1x9x32x128xf32, #tpu.memory_space<vmem>>, vector<1x1x32x128xf32>
    %1560 = vector.shape_cast %1559 : vector<1x1x32x128xf32> to vector<32x128xf32>
    %1561 = arith.mulf %1560, %1519 : vector<32x128xf32>
    %cst_1480 = arith.constant 0.000000e+00 : f32
    %1562 = vector.broadcast %cst_1480 : f32 to vector<32x128xf32>
    %1563 = arith.maximumf %1561, %1562 : vector<32x128xf32>
    %c0_1481 = arith.constant 0 : index
    %c5_1482 = arith.constant 5 : index
    %c0_1483 = arith.constant 0 : index
    %c0_1484 = arith.constant 0 : index
    %1564 = vector.load %arg5[%c0_1481, %c5_1482, %c0_1483, %c0_1484] : memref<1x9x32x128xf32, #tpu.memory_space<vmem>>, vector<1x1x32x128xf32>
    %1565 = vector.shape_cast %1564 : vector<1x1x32x128xf32> to vector<32x128xf32>
    %1566 = vector.shape_cast %1563 : vector<32x128xf32> to vector<1x1x32x128xf32>
    tpu.vector_store %arg5[%c0_1481, %c5_1482, %c0_1483, %c0_1484], %1566 {strides = array<i32>} : memref<1x9x32x128xf32, #tpu.memory_space<vmem>>, vector<1x1x32x128xf32>,
    %1567 = arith.mulf %1563, %1563 : vector<32x128xf32>
    %1568 = arith.addf %1558, %1567 : vector<32x128xf32>
    %c0_1485 = arith.constant 0 : index
    %c6_1486 = arith.constant 6 : index
    %c0_1487 = arith.constant 0 : index
    %c0_1488 = arith.constant 0 : index
    %1569 = vector.load %arg5[%c0_1485, %c6_1486, %c0_1487, %c0_1488] : memref<1x9x32x128xf32, #tpu.memory_space<vmem>>, vector<1x1x32x128xf32>
    %1570 = vector.shape_cast %1569 : vector<1x1x32x128xf32> to vector<32x128xf32>
    %1571 = arith.mulf %1570, %1519 : vector<32x128xf32>
    %cst_1489 = arith.constant 0.000000e+00 : f32
    %1572 = vector.broadcast %cst_1489 : f32 to vector<32x128xf32>
    %1573 = arith.maximumf %1571, %1572 : vector<32x128xf32>
    %c0_1490 = arith.constant 0 : index
    %c6_1491 = arith.constant 6 : index
    %c0_1492 = arith.constant 0 : index
    %c0_1493 = arith.constant 0 : index
    %1574 = vector.load %arg5[%c0_1490, %c6_1491, %c0_1492, %c0_1493] : memref<1x9x32x128xf32, #tpu.memory_space<vmem>>, vector<1x1x32x128xf32>
    %1575 = vector.shape_cast %1574 : vector<1x1x32x128xf32> to vector<32x128xf32>
    %1576 = vector.shape_cast %1573 : vector<32x128xf32> to vector<1x1x32x128xf32>
    tpu.vector_store %arg5[%c0_1490, %c6_1491, %c0_1492, %c0_1493], %1576 {strides = array<i32>} : memref<1x9x32x128xf32, #tpu.memory_space<vmem>>, vector<1x1x32x128xf32>,
    %1577 = arith.mulf %1573, %1573 : vector<32x128xf32>
    %1578 = arith.addf %1568, %1577 : vector<32x128xf32>
    %c0_1494 = arith.constant 0 : index
    %c7_1495 = arith.constant 7 : index
    %c0_1496 = arith.constant 0 : index
    %c0_1497 = arith.constant 0 : index
    %1579 = vector.load %arg5[%c0_1494, %c7_1495, %c0_1496, %c0_1497] : memref<1x9x32x128xf32, #tpu.memory_space<vmem>>, vector<1x1x32x128xf32>
    %1580 = vector.shape_cast %1579 : vector<1x1x32x128xf32> to vector<32x128xf32>
    %1581 = arith.mulf %1580, %1519 : vector<32x128xf32>
    %cst_1498 = arith.constant 0.000000e+00 : f32
    %1582 = vector.broadcast %cst_1498 : f32 to vector<32x128xf32>
    %1583 = arith.maximumf %1581, %1582 : vector<32x128xf32>
    %c0_1499 = arith.constant 0 : index
    %c7_1500 = arith.constant 7 : index
    %c0_1501 = arith.constant 0 : index
    %c0_1502 = arith.constant 0 : index
    %1584 = vector.load %arg5[%c0_1499, %c7_1500, %c0_1501, %c0_1502] : memref<1x9x32x128xf32, #tpu.memory_space<vmem>>, vector<1x1x32x128xf32>
    %1585 = vector.shape_cast %1584 : vector<1x1x32x128xf32> to vector<32x128xf32>
    %1586 = vector.shape_cast %1583 : vector<32x128xf32> to vector<1x1x32x128xf32>
    tpu.vector_store %arg5[%c0_1499, %c7_1500, %c0_1501, %c0_1502], %1586 {strides = array<i32>} : memref<1x9x32x128xf32, #tpu.memory_space<vmem>>, vector<1x1x32x128xf32>,
    %1587 = arith.mulf %1583, %1583 : vector<32x128xf32>
    %1588 = arith.addf %1578, %1587 : vector<32x128xf32>
    %c0_1503 = arith.constant 0 : index
    %c8_1504 = arith.constant 8 : index
    %c0_1505 = arith.constant 0 : index
    %c0_1506 = arith.constant 0 : index
    %1589 = vector.load %arg5[%c0_1503, %c8_1504, %c0_1505, %c0_1506] : memref<1x9x32x128xf32, #tpu.memory_space<vmem>>, vector<1x1x32x128xf32>
    %1590 = vector.shape_cast %1589 : vector<1x1x32x128xf32> to vector<32x128xf32>
    %1591 = arith.mulf %1590, %1519 : vector<32x128xf32>
    %cst_1507 = arith.constant 0.000000e+00 : f32
    %1592 = vector.broadcast %cst_1507 : f32 to vector<32x128xf32>
    %1593 = arith.maximumf %1591, %1592 : vector<32x128xf32>
    %c0_1508 = arith.constant 0 : index
    %c8_1509 = arith.constant 8 : index
    %c0_1510 = arith.constant 0 : index
    %c0_1511 = arith.constant 0 : index
    %1594 = vector.load %arg5[%c0_1508, %c8_1509, %c0_1510, %c0_1511] : memref<1x9x32x128xf32, #tpu.memory_space<vmem>>, vector<1x1x32x128xf32>
    %1595 = vector.shape_cast %1594 : vector<1x1x32x128xf32> to vector<32x128xf32>
    %1596 = vector.shape_cast %1593 : vector<32x128xf32> to vector<1x1x32x128xf32>
    tpu.vector_store %arg5[%c0_1508, %c8_1509, %c0_1510, %c0_1511], %1596 {strides = array<i32>} : memref<1x9x32x128xf32, #tpu.memory_space<vmem>>, vector<1x1x32x128xf32>,
    %1597 = arith.mulf %1593, %1593 : vector<32x128xf32>
    %1598 = arith.addf %1588, %1597 : vector<32x128xf32>
    %cst_1512 = arith.constant 1.000000e+00 : f32
    %1599 = vector.broadcast %cst_1512 : f32 to vector<32x128xf32>
    %1600 = arith.addf %1598, %1599 : vector<32x128xf32>
    %1601 = math.sqrt %1600 : vector<32x128xf32>
    %c0_1513 = arith.constant 0 : index
    %c0_1514 = arith.constant 0 : index
    %c0_1515 = arith.constant 0 : index
    %c0_1516 = arith.constant 0 : index
    %1602 = vector.load %arg5[%c0_1513, %c0_1514, %c0_1515, %c0_1516] : memref<1x9x32x128xf32, #tpu.memory_space<vmem>>, vector<1x1x32x128xf32>
    %1603 = vector.shape_cast %1602 : vector<1x1x32x128xf32> to vector<32x128xf32>
    %1604 = vector.shape_cast %1601 : vector<32x128xf32> to vector<1x1x32x128xf32>
    tpu.vector_store %arg5[%c0_1513, %c0_1514, %c0_1515, %c0_1516], %1604 {strides = array<i32>} : memref<1x9x32x128xf32, #tpu.memory_space<vmem>>, vector<1x1x32x128xf32>,
    return
  }
  func.func @transform_0(%arg0: i32, %arg1: i32) -> (i32, i32, i32, i32) {
    %c0_i32 = arith.constant 0 : i32
    %c0_i32_0 = arith.constant 0 : i32
    %c0_i32_1 = arith.constant 0 : i32
    return %arg0, %c0_i32, %arg1, %c0_i32_0 : i32, i32, i32, i32
  }
  func.func @transform_1(%arg0: i32, %arg1: i32) -> (i32, i32) {
    %c0_i32 = arith.constant 0 : i32
    %c0_i32_0 = arith.constant 0 : i32
    %c0_i32_1 = arith.constant 0 : i32
    return %c0_i32, %c0_i32_0 : i32, i32
  }
  func.func @transform_2(%arg0: i32, %arg1: i32) -> i32 {
    %c0_i32 = arith.constant 0 : i32
    %c0_i32_0 = arith.constant 0 : i32
    return %c0_i32 : i32
  }
  func.func @transform_3(%arg0: i32, %arg1: i32) -> (i32, i32, i32, i32) {
    %c0_i32 = arith.constant 0 : i32
    %c0_i32_0 = arith.constant 0 : i32
    %c0_i32_1 = arith.constant 0 : i32
    return %arg0, %c0_i32, %arg1, %c0_i32_0 : i32, i32, i32, i32
  }
}

</mosaic_0001>

<llo_original>
// kernel: lorentz_input_block.1
$region0: #{lorentz_input_block.1}
  #allocation0 [shape = 'u32[]', space=smem, size = 0x4, offset = 0x4, fixed_abs, tag = 'smem constant byte address 0x4 - core index']
  #allocation1 [shape = 'u32[144,128]{1,0:T(1,128)}', space=vmem, size = 0x12000, scoped, tag = 'internal scratch']
  %s0 = inlined_call_operand.vmem [shape: f32[2,27,32,128], index: 0, kind: input, shape index: {}]
  %s1 = inlined_call_operand.vmem [shape: f32[9,28], index: 1, kind: input, shape index: {}]
  %s2 = inlined_call_operand.vmem [shape: f32[9], index: 2, kind: input, shape index: {}]
  %s3 = inlined_call_operand.vmem [shape: f32[2,9,32,128], index: 3, kind: output, shape index: {}]
  %s4 = sld [smem:[#allocation0]]
  $region53: #{lorentz_input_block.1} parent=0
    _
  %s6 = ssub.s32 1, %s4
  %s7 = scalar_select 0, %s6, %s4
  $region1: #{lorentz_input_block.1} parent=0
    #allocation2 [shape = 'u8[8192]{0}', space=smem, size = 0x2000, scoped, tag = 'input window, operand 1, single buffered']
    #allocation3 [shape = 's32[2]{0}', space=sflag, size = 0x8, scoped, tag = 'scoped memory for lorentz_input_block.1']
    #allocation4 [shape = 'u8[512]{0}', space=smem, size = 0x200, scoped, tag = 'input window, operand 2, single buffered']
    #allocation5 [shape = 's32[1]{0}', space=sflag, size = 0x4, scoped, tag = 'scoped memory for lorentz_input_block.1']
    %8 = vsyncpa [#allocation3], 0
    %9 = vsyncpa [#allocation5], 0
    loop: start=0, step=1, limit=4
    $region2: #{lorentz_input_block.1} parent=1 // loop_pre_header
      _
    $region3: #{lorentz_input_block.1} parent=1 // loop_header
      %s11 = sphi 0, %s15
      %p12 = scmp.ge.s32.totalorder %s11, 4
      %s18 = sphi 0, %s30
      %s19 = sphi 0, %s26
      %s20 = sphi 0, %s18
      %s21 = sphi 0, %s19
      %s22 = sphi 0, %s20
      %s23 = sphi 0, %s21
      %s35 = sphi 0, %s37
      %s38 = sphi 0, %s35
      %s39 = sphi 0, %s38
      %s55 = sphi 0, %s39
      %s59 = sphi 0, %s59
      %s61 = sphi 0, %s59
      %s62 = sphi 0, %s61
      %s76 = sphi 0, %s62
      %s80 = sphi 0, %s80
      %s82 = sphi 0, %s80
      %s83 = sphi 0, %s82
      %s97 = sphi 0, %s83
      %s105 = sphi 0, %s107
      %s108 = sphi 0, %s105
      %s109 = sphi 0, %s108
      %s125 = sphi 0, %s109
    $region4: #{lorentz_input_block.1} parent=1 // loop_header_branch
      %14 = sbr.rel (%p12) target = $region8
    $region5: #{lorentz_input_block.1} parent=1 // loop_body
      %s16 = ssub.s32 %s11, 1
      %s17 = ssub.s32 %s11, 2
      %s24 = sadd.s32 1, %s19
      %p25 = scmp.ge.s32.totalorder %s24, 1
      %s26 = scalar_select %p25, 0, %s24
      %s27 = sadd.s32 1, %s18
      %s28 = scalar_select %p25, %s27, %s18
      %p29 = scmp.ge.s32.totalorder %s28, 2
      %s30 = scalar_select %p29, 0, %s28
      %s31 = ssub.s32 %s18, %s30
      %s32 = ssub.s32 %s19, %s26
      %s33 = sor.u32 %s31, %s32
      %p34 = scmp.eq.s32.totalorder %s33, 0
      %s36 = sadd.s32 %s35, 1
      %s37 = scalar_select %p34, %s35, %s36
      %p40 = pneg %p34
      %p41 = scmp.eq.s32.totalorder %s11, 1
      %p42 = por %p40, %p41
      %p43 = scmp.ne.s32.totalorder %s35, %s38
      %p44 = scmp.eq.s32.totalorder %s11, 0
      %p45 = por %p43, %p44
      %p46 = scmp.ne.s32.totalorder %s35, %s38
      %p47 = scmp.eq.s32.totalorder %s16, 1
      %p48 = por %p46, %p47
      %p49 = scmp.ne.s32.totalorder %s38, %s39
      %p50 = scmp.eq.s32.totalorder %s16, 0
      %p51 = por %p49, %p50
      %p52 = scmp.ne.s32.totalorder %s38, %s39
      %p53 = scmp.eq.s32.totalorder %s17, 1
      %p54 = por %p52, %p53
      %p56 = scmp.ne.s32.totalorder %s39, %s55
      %p57 = scmp.eq.s32.totalorder %s17, 0
      %p58 = por %p56, %p57
      %s60 = sadd.s32 %s59, 1
      %p63 = scmp.eq.s32.totalorder %s11, 1
      %p64 = scmp.ne.s32.totalorder %s59, %s61
      %p65 = scmp.eq.s32.totalorder %s11, 0
      %p66 = por %p64, %p65
      %p67 = scmp.ne.s32.totalorder %s59, %s61
      %p68 = scmp.eq.s32.totalorder %s16, 1
      %p69 = por %p67, %p68
      %p70 = scmp.ne.s32.totalorder %s61, %s62
      %p71 = scmp.eq.s32.totalorder %s16, 0
      %p72 = por %p70, %p71
      %p73 = scmp.ne.s32.totalorder %s61, %s62
      %p74 = scmp.eq.s32.totalorder %s17, 1
      %p75 = por %p73, %p74
      %p77 = scmp.ne.s32.totalorder %s62, %s76
      %p78 = scmp.eq.s32.totalorder %s17, 0
      %p79 = por %p77, %p78
      %s81 = sadd.s32 %s80, 1
      %p84 = scmp.eq.s32.totalorder %s11, 1
      %p85 = scmp.ne.s32.totalorder %s80, %s82
      %p86 = scmp.eq.s32.totalorder %s11, 0
      %p87 = por %p85, %p86
      %p88 = scmp.ne.s32.totalorder %s80, %s82
      %p89 = scmp.eq.s32.totalorder %s16, 1
      %p90 = por %p88, %p89
      %p91 = scmp.ne.s32.totalorder %s82, %s83
      %p92 = scmp.eq.s32.totalorder %s16, 0
      %p93 = por %p91, %p92
      %p94 = scmp.ne.s32.totalorder %s82, %s83
      %p95 = scmp.eq.s32.totalorder %s17, 1
      %p96 = por %p94, %p95
      %p98 = scmp.ne.s32.totalorder %s83, %s97
      %p99 = scmp.eq.s32.totalorder %s17, 0
      %p100 = por %p98, %p99
      %s101 = ssub.s32 %s18, %s30
      %s102 = ssub.s32 %s19, %s26
      %s103 = sor.u32 %s101, %s102
      %p104 = scmp.eq.s32.totalorder %s103, 0
      %s106 = sadd.s32 %s105, 1
      %s107 = scalar_select %p104, %s105, %s106
      %p110 = pneg %p104
      %p111 = scmp.eq.s32.totalorder %s11, 1
      %p112 = por %p110, %p111
      %p113 = scmp.ne.s32.totalorder %s105, %s108
      %p114 = scmp.eq.s32.totalorder %s11, 0
      %p115 = por %p113, %p114
      %p116 = scmp.ne.s32.totalorder %s105, %s108
      %p117 = scmp.eq.s32.totalorder %s16, 1
      %p118 = por %p116, %p117
      %p119 = scmp.ne.s32.totalorder %s108, %s109
      %p120 = scmp.eq.s32.totalorder %s16, 0
      %p121 = por %p119, %p120
      %p122 = scmp.ne.s32.totalorder %s108, %s109
      %p123 = scmp.eq.s32.totalorder %s17, 1
      %p124 = por %p122, %p123
      %p126 = scmp.ne.s32.totalorder %s109, %s125
      %p127 = scmp.eq.s32.totalorder %s17, 0
      %p128 = por %p126, %p127
      %p129 = scmp.le.s32.totalorder 1, %s11
      %p130 = scmp.lt.s32.totalorder %s11, 3
      %p131 = pnand %p129, %p130
      %p132 = pneg %p131
      // Predicated region
      $region9: #{lorentz_input_block.1} parent=5 // pred_check
        _
      $region10: #{lorentz_input_block.1} parent=5 // pred_check_branch
        %134 = sbr.rel (%p131) target = $region12
      $region11: #{lorentz_input_block.1} parent=5 // pred_region
        %s135 = ssub.s32 %s11, 1
        // Predicated region
        $region13: #{lorentz_input_block.1} parent=11 // pred_check
          %p136 = pneg %p72
        $region14: #{lorentz_input_block.1} parent=11 // pred_check_branch
          %138 = sbr.rel (%p136) target = $region16
        $region15: #{lorentz_input_block.1} parent=11 // pred_region
          %s140 = ssub.s32 256, 256
          %141 = vsyncadd [#allocation3], %s140
          %s142 = sshll.u32 %s1, 4
          %s143 = int_to_ptr.vmem [resolvable:$true] %s142
          %148 = dma.vmem_to_smem %s143, 256, [#allocation2], [#allocation3], 128, 128, 8
        $region16: #{lorentz_input_block.1} parent=11 // pred_fallthru
          _
        // Predicated region
        $region17: #{lorentz_input_block.1} parent=11 // pred_check
          %p149 = pneg %p93
        $region18: #{lorentz_input_block.1} parent=11 // pred_check_branch
          %151 = sbr.rel (%p149) target = $region20
        $region19: #{lorentz_input_block.1} parent=11 // pred_region
          %s153 = ssub.s32 16, 16
          %154 = vsyncadd [#allocation5], %s153
          %s156 = sshll.u32 %s2, 4
          %s157 = int_to_ptr.vmem [resolvable:$true] %s156
          %159 = dma.vmem_to_smem %s157, 16, [#allocation4], [#allocation5]
        $region20: #{lorentz_input_block.1} parent=11 // pred_fallthru
          _
      $region12: #{lorentz_input_block.1} parent=5 // pred_fallthru
        _
      %p160 = scmp.lt.s32.totalorder %s11, 2
      // Predicated region
      $region21: #{lorentz_input_block.1} parent=5 // pred_check
        %p161 = pneg %p160
      $region22: #{lorentz_input_block.1} parent=5 // pred_check_branch
        %163 = sbr.rel (%p161) target = $region24
      $region23: #{lorentz_input_block.1} parent=5 // pred_region
        // Predicated region
        $region25: #{lorentz_input_block.1} parent=23 // pred_check
          %p164 = pneg %p45
        $region26: #{lorentz_input_block.1} parent=23 // pred_check_branch
          %166 = sbr.rel (%p164) target = $region28
        $region27: #{lorentz_input_block.1} parent=23 // pred_region
          %s167 = smul.u32 4, %s19
          %p168 = scmp.lt.s32.totalorder %s18, 1
          %s169 = scalar_select %p168, %s18, 1
          %p170 = scmp.lt.s32.totalorder %s167, 3
          %s171 = scalar_select %p170, %s167, 3
          %s172 = smul.addr %s169, 108
          %s173 = sadd.s32 %s171, %s172
          %s174 = smul.addr %s173, 8
          %s175 = scalar_lea.vmem %s0, %s174
          %s176 = smul.u32 4, %s19
        $region28: #{lorentz_input_block.1} parent=23 // pred_fallthru
          _
      $region24: #{lorentz_input_block.1} parent=5 // pred_fallthru
        _
      %p177 = scmp.le.s32.totalorder 1, %s11
      %p178 = scmp.lt.s32.totalorder %s11, 3
      %p179 = pnand %p177, %p178
      %p180 = pneg %p179
      // Predicated region
      $region29: #{lorentz_input_block.1} parent=5 // pred_check
        _
      $region30: #{lorentz_input_block.1} parent=5 // pred_check_branch
        %182 = sbr.rel (%p179) target = $region32
      $region31: #{lorentz_input_block.1} parent=5 // pred_region
        %s183 = ssub.s32 %s11, 1
        // Predicated region
        $region33: #{lorentz_input_block.1} parent=31 // pred_check
          %p184 = pneg %p72
        $region34: #{lorentz_input_block.1} parent=31 // pred_check_branch
          %186 = sbr.rel (%p184) target = $region36
        $region35: #{lorentz_input_block.1} parent=31 // pred_region
          %187 = dma.done [#allocation3], 256
        $region36: #{lorentz_input_block.1} parent=31 // pred_fallthru
          _
        // Predicated region
        $region37: #{lorentz_input_block.1} parent=31 // pred_check
          %p188 = pneg %p93
        $region38: #{lorentz_input_block.1} parent=31 // pred_check_branch
          %190 = sbr.rel (%p188) target = $region40
        $region39: #{lorentz_input_block.1} parent=31 // pred_region
          %191 = dma.done [#allocation5], 16
        $region40: #{lorentz_input_block.1} parent=31 // pred_fallthru
          _
        %192 = sfence
        %s193 = smul.u32 4, %s21
        %p194 = scmp.lt.s32.totalorder %s20, 1
        %s195 = scalar_select %p194, %s20, 1
        %p196 = scmp.lt.s32.totalorder %s193, 3
        %s197 = scalar_select %p196, %s193, 3
        %s198 = smul.addr %s195, 108
        %s199 = sadd.s32 %s197, %s198
        %s200 = smul.addr %s199, 8
        %s201 = scalar_lea.vmem %s0, %s200
        %p202 = pneg %p51
        %p203 = pneg %p48
        %p204 = pneg %p72
        %p205 = pneg %p69
        %p206 = pneg %p93
        %p207 = pneg %p90
        %p208 = pneg %p121
        %p209 = pneg %p118
        %s210 = smul.u32 4, %s21
        %p211 = scmp.lt.s32.totalorder %s20, 1
        %s212 = scalar_select %p211, %s20, 1
        %p213 = scmp.lt.s32.totalorder %s210, 3
        %s214 = scalar_select %p213, %s210, 3
        %s215 = smul.addr %s212, 36
        %s216 = sadd.s32 %s214, %s215
        %s217 = smul.addr %s216, 8
        %s218 = scalar_lea.vmem %s3, %s217
        %s219 = smul.u32 4, %s21
        %p220 = scmp.lt.s32.totalorder %s20, 1
        %s221 = scalar_select %p220, %s20, 1
        %p222 = scmp.lt.s32.totalorder %s219, 3
        %s223 = scalar_select %p222, %s219, 3
        %s224 = smul.addr %s221, 108
        %s225 = sadd.s32 %s223, %s224
        %s226 = smul.addr %s225, 8
        %s227 = scalar_lea.vmem %s0, %s226
        %s228 = smul.u32 4, %s21
        %s229 = smul.u32 4, %s21
        %p230 = scmp.lt.s32.totalorder %s20, 1
        %s231 = scalar_select %p230, %s20, 1
        %p232 = scmp.lt.s32.totalorder %s229, 3
        %s233 = scalar_select %p232, %s229, 3
        %s234 = smul.addr %s231, 36
        %s235 = sadd.s32 %s233, %s234
        %s236 = smul.addr %s235, 8
        %s237 = scalar_lea.vmem %s3, %s236
        %s238 = smul.u32 4, %s21
        %v239 = vld [vmem:[%s227] sm:$0xff]
        %v240 = vld [vmem:[%s227 + $0x8] sm:$0xff]
        %v241 = vld [vmem:[%s227 + $0x10] sm:$0xff]
        %v242 = vld [vmem:[%s227 + $0x18] sm:$0xff]
        %v243 = vmul.f32 %v239, %v239
        %v244 = vmul.f32 %v240, %v240
        %v245 = vmul.f32 %v241, %v241
        %v246 = vmul.f32 %v242, %v242
        %s247 = scalar_lea.vmem %s227, 32
        %v248 = vld [vmem:[%s247] sm:$0xff]
        %v249 = vld [vmem:[%s247 + $0x8] sm:$0xff]
        %v250 = vld [vmem:[%s247 + $0x10] sm:$0xff]
        %v251 = vld [vmem:[%s247 + $0x18] sm:$0xff]
        %v252 = vmul.f32 %v248, %v248
        %v253 = vmul.f32 %v249, %v249
        %v254 = vmul.f32 %v250, %v250
        %v255 = vmul.f32 %v251, %v251
        %v256 = vadd.f32 %v243, %v252
        %v257 = vadd.f32 %v244, %v253
        %v258 = vadd.f32 %v245, %v254
        %v259 = vadd.f32 %v246, %v255
        %s260 = scalar_lea.vmem %s227, 64
        %v261 = vld [vmem:[%s260] sm:$0xff]
        %v262 = vld [vmem:[%s260 + $0x8] sm:$0xff]
        %v263 = vld [vmem:[%s260 + $0x10] sm:$0xff]
        %v264 = vld [vmem:[%s260 + $0x18] sm:$0xff]
        %v265 = vmul.f32 %v261, %v261
        %v266 = vmul.f32 %v262, %v262
        %v267 = vmul.f32 %v263, %v263
        %v268 = vmul.f32 %v264, %v264
        %v269 = vadd.f32 %v256, %v265
        %v270 = vadd.f32 %v257, %v266
        %v271 = vadd.f32 %v258, %v267
        %v272 = vadd.f32 %v259, %v268
        %s273 = scalar_lea.vmem %s227, 96
        %v274 = vld [vmem:[%s273] sm:$0xff]
        %v275 = vld [vmem:[%s273 + $0x8] sm:$0xff]
        %v276 = vld [vmem:[%s273 + $0x10] sm:$0xff]
        %v277 = vld [vmem:[%s273 + $0x18] sm:$0xff]
        %v278 = vmul.f32 %v274, %v274
        %v279 = vmul.f32 %v275, %v275
        %v280 = vmul.f32 %v276, %v276
        %v281 = vmul.f32 %v277, %v277
        %v282 = vadd.f32 %v269, %v278
        %v283 = vadd.f32 %v270, %v279
        %v284 = vadd.f32 %v271, %v280
        %v285 = vadd.f32 %v272, %v281
        %s286 = scalar_lea.vmem %s227, 128
        %v287 = vld [vmem:[%s286] sm:$0xff]
        %v288 = vld [vmem:[%s286 + $0x8] sm:$0xff]
        %v289 = vld [vmem:[%s286 + $0x10] sm:$0xff]
        %v290 = vld [vmem:[%s286 + $0x18] sm:$0xff]
        %v291 = vmul.f32 %v287, %v287
        %v292 = vmul.f32 %v288, %v288
        %v293 = vmul.f32 %v289, %v289
        %v294 = vmul.f32 %v290, %v290
        %v295 = vadd.f32 %v282, %v291
        %v296 = vadd.f32 %v283, %v292
        %v297 = vadd.f32 %v284, %v293
        %v298 = vadd.f32 %v285, %v294
        %s299 = scalar_lea.vmem %s227, 160
        %v300 = vld [vmem:[%s299] sm:$0xff]
        %v301 = vld [vmem:[%s299 + $0x8] sm:$0xff]
        %v302 = vld [vmem:[%s299 + $0x10] sm:$0xff]
        %v303 = vld [vmem:[%s299 + $0x18] sm:$0xff]
        %v304 = vmul.f32 %v300, %v300
        %v305 = vmul.f32 %v301, %v301
        %v306 = vmul.f32 %v302, %v302
        %v307 = vmul.f32 %v303, %v303
        %v308 = vadd.f32 %v295, %v304
        %v309 = vadd.f32 %v296, %v305
        %v310 = vadd.f32 %v297, %v306
        %v311 = vadd.f32 %v298, %v307
        %s312 = scalar_lea.vmem %s227, 192
        %v313 = vld [vmem:[%s312] sm:$0xff]
        %v314 = vld [vmem:[%s312 + $0x8] sm:$0xff]
        %v315 = vld [vmem:[%s312 + $0x10] sm:$0xff]
        %v316 = vld [vmem:[%s312 + $0x18] sm:$0xff]
        %v317 = vmul.f32 %v313, %v313
        %v318 = vmul.f32 %v314, %v314
        %v319 = vmul.f32 %v315, %v315
        %v320 = vmul.f32 %v316, %v316
        %v321 = vadd.f32 %v308, %v317
        %v322 = vadd.f32 %v309, %v318
        %v323 = vadd.f32 %v310, %v319
        %v324 = vadd.f32 %v311, %v320
        %s325 = scalar_lea.vmem %s227, 224
        %v326 = vld [vmem:[%s325] sm:$0xff]
        %v327 = vld [vmem:[%s325 + $0x8] sm:$0xff]
        %v328 = vld [vmem:[%s325 + $0x10] sm:$0xff]
        %v329 = vld [vmem:[%s325 + $0x18] sm:$0xff]
        %v330 = vmul.f32 %v326, %v326
        %v331 = vmul.f32 %v327, %v327
        %v332 = vmul.f32 %v328, %v328
        %v333 = vmul.f32 %v329, %v329
        %v334 = vadd.f32 %v321, %v330
        %v335 = vadd.f32 %v322, %v331
        %v336 = vadd.f32 %v323, %v332
        %v337 = vadd.f32 %v324, %v333
        %s338 = scalar_lea.vmem %s227, 256
        %v339 = vld [vmem:[%s338] sm:$0xff]
        %v340 = vld [vmem:[%s338 + $0x8] sm:$0xff]
        %v341 = vld [vmem:[%s338 + $0x10] sm:$0xff]
        %v342 = vld [vmem:[%s338 + $0x18] sm:$0xff]
        %v343 = vmul.f32 %v339, %v339
        %v344 = vmul.f32 %v340, %v340
        %v345 = vmul.f32 %v341, %v341
        %v346 = vmul.f32 %v342, %v342
        %v347 = vadd.f32 %v334, %v343
        %v348 = vadd.f32 %v335, %v344
        %v349 = vadd.f32 %v336, %v345
        %v350 = vadd.f32 %v337, %v346
        %s351 = scalar_lea.vmem %s227, 288
        %v352 = vld [vmem:[%s351] sm:$0xff]
        %v353 = vld [vmem:[%s351 + $0x8] sm:$0xff]
        %v354 = vld [vmem:[%s351 + $0x10] sm:$0xff]
        %v355 = vld [vmem:[%s351 + $0x18] sm:$0xff]
        %v356 = vmul.f32 %v352, %v352
        %v357 = vmul.f32 %v353, %v353
        %v358 = vmul.f32 %v354, %v354
        %v359 = vmul.f32 %v355, %v355
        %v360 = vadd.f32 %v347, %v356
        %v361 = vadd.f32 %v348, %v357
        %v362 = vadd.f32 %v349, %v358
        %v363 = vadd.f32 %v350, %v359
        %s364 = scalar_lea.vmem %s227, 320
        %v365 = vld [vmem:[%s364] sm:$0xff]
        %v366 = vld [vmem:[%s364 + $0x8] sm:$0xff]
        %v367 = vld [vmem:[%s364 + $0x10] sm:$0xff]
        %v368 = vld [vmem:[%s364 + $0x18] sm:$0xff]
        %v369 = vmul.f32 %v365, %v365
        %v370 = vmul.f32 %v366, %v366
        %v371 = vmul.f32 %v367, %v367
        %v372 = vmul.f32 %v368, %v368
        %v373 = vadd.f32 %v360, %v369
        %v374 = vadd.f32 %v361, %v370
        %v375 = vadd.f32 %v362, %v371
        %v376 = vadd.f32 %v363, %v372
        %s377 = scalar_lea.vmem %s227, 352
        %v378 = vld [vmem:[%s377] sm:$0xff]
        %v379 = vld [vmem:[%s377 + $0x8] sm:$0xff]
        %v380 = vld [vmem:[%s377 + $0x10] sm:$0xff]
        %v381 = vld [vmem:[%s377 + $0x18] sm:$0xff]
        %v382 = vmul.f32 %v378, %v378
        %v383 = vmul.f32 %v379, %v379
        %v384 = vmul.f32 %v380, %v380
        %v385 = vmul.f32 %v381, %v381
        %v386 = vadd.f32 %v373, %v382
        %v387 = vadd.f32 %v374, %v383
        %v388 = vadd.f32 %v375, %v384
        %v389 = vadd.f32 %v376, %v385
        %s390 = scalar_lea.vmem %s227, 384
        %v391 = vld [vmem:[%s390] sm:$0xff]
        %v392 = vld [vmem:[%s390 + $0x8] sm:$0xff]
        %v393 = vld [vmem:[%s390 + $0x10] sm:$0xff]
        %v394 = vld [vmem:[%s390 + $0x18] sm:$0xff]
        %v395 = vmul.f32 %v391, %v391
        %v396 = vmul.f32 %v392, %v392
        %v397 = vmul.f32 %v393, %v393
        %v398 = vmul.f32 %v394, %v394
        %v399 = vadd.f32 %v386, %v395
        %v400 = vadd.f32 %v387, %v396
        %v401 = vadd.f32 %v388, %v397
        %v402 = vadd.f32 %v389, %v398
        %s403 = scalar_lea.vmem %s227, 416
        %v404 = vld [vmem:[%s403] sm:$0xff]
        %v405 = vld [vmem:[%s403 + $0x8] sm:$0xff]
        %v406 = vld [vmem:[%s403 + $0x10] sm:$0xff]
        %v407 = vld [vmem:[%s403 + $0x18] sm:$0xff]
        %v408 = vmul.f32 %v404, %v404
        %v409 = vmul.f32 %v405, %v405
        %v410 = vmul.f32 %v406, %v406
        %v411 = vmul.f32 %v407, %v407
        %v412 = vadd.f32 %v399, %v408
        %v413 = vadd.f32 %v400, %v409
        %v414 = vadd.f32 %v401, %v410
        %v415 = vadd.f32 %v402, %v411
        %s416 = scalar_lea.vmem %s227, 448
        %v417 = vld [vmem:[%s416] sm:$0xff]
        %v418 = vld [vmem:[%s416 + $0x8] sm:$0xff]
        %v419 = vld [vmem:[%s416 + $0x10] sm:$0xff]
        %v420 = vld [vmem:[%s416 + $0x18] sm:$0xff]
        %v421 = vmul.f32 %v417, %v417
        %v422 = vmul.f32 %v418, %v418
        %v423 = vmul.f32 %v419, %v419
        %v424 = vmul.f32 %v420, %v420
        %v425 = vadd.f32 %v412, %v421
        %v426 = vadd.f32 %v413, %v422
        %v427 = vadd.f32 %v414, %v423
        %v428 = vadd.f32 %v415, %v424
        %s429 = scalar_lea.vmem %s227, 480
        %v430 = vld [vmem:[%s429] sm:$0xff]
        %v431 = vld [vmem:[%s429 + $0x8] sm:$0xff]
        %v432 = vld [vmem:[%s429 + $0x10] sm:$0xff]
        %v433 = vld [vmem:[%s429 + $0x18] sm:$0xff]
        %v434 = vmul.f32 %v430, %v430
        %v435 = vmul.f32 %v431, %v431
        %v436 = vmul.f32 %v432, %v432
        %v437 = vmul.f32 %v433, %v433
        %v438 = vadd.f32 %v425, %v434
        %v439 = vadd.f32 %v426, %v435
        %v440 = vadd.f32 %v427, %v436
        %v441 = vadd.f32 %v428, %v437
        %s442 = scalar_lea.vmem %s227, 512
        %v443 = vld [vmem:[%s442] sm:$0xff]
        %v444 = vld [vmem:[%s442 + $0x8] sm:$0xff]
        %v445 = vld [vmem:[%s442 + $0x10] sm:$0xff]
        %v446 = vld [vmem:[%s442 + $0x18] sm:$0xff]
        %v447 = vmul.f32 %v443, %v443
        %v448 = vmul.f32 %v444, %v444
        %v449 = vmul.f32 %v445, %v445
        %v450 = vmul.f32 %v446, %v446
        %v451 = vadd.f32 %v438, %v447
        %v452 = vadd.f32 %v439, %v448
        %v453 = vadd.f32 %v440, %v449
        %v454 = vadd.f32 %v441, %v450
        %s455 = scalar_lea.vmem %s227, 544
        %v456 = vld [vmem:[%s455] sm:$0xff]
        %v457 = vld [vmem:[%s455 + $0x8] sm:$0xff]
        %v458 = vld [vmem:[%s455 + $0x10] sm:$0xff]
        %v459 = vld [vmem:[%s455 + $0x18] sm:$0xff]
        %v460 = vmul.f32 %v456, %v456
        %v461 = vmul.f32 %v457, %v457
        %v462 = vmul.f32 %v458, %v458
        %v463 = vmul.f32 %v459, %v459
        %v464 = vadd.f32 %v451, %v460
        %v465 = vadd.f32 %v452, %v461
        %v466 = vadd.f32 %v453, %v462
        %v467 = vadd.f32 %v454, %v463
        %s468 = scalar_lea.vmem %s227, 576
        %v469 = vld [vmem:[%s468] sm:$0xff]
        %v470 = vld [vmem:[%s468 + $0x8] sm:$0xff]
        %v471 = vld [vmem:[%s468 + $0x10] sm:$0xff]
        %v472 = vld [vmem:[%s468 + $0x18] sm:$0xff]
        %v473 = vmul.f32 %v469, %v469
        %v474 = vmul.f32 %v470, %v470
        %v475 = vmul.f32 %v471, %v471
        %v476 = vmul.f32 %v472, %v472
        %v477 = vadd.f32 %v464, %v473
        %v478 = vadd.f32 %v465, %v474
        %v479 = vadd.f32 %v466, %v475
        %v480 = vadd.f32 %v467, %v476
        %s481 = scalar_lea.vmem %s227, 608
        %v482 = vld [vmem:[%s481] sm:$0xff]
        %v483 = vld [vmem:[%s481 + $0x8] sm:$0xff]
        %v484 = vld [vmem:[%s481 + $0x10] sm:$0xff]
        %v485 = vld [vmem:[%s481 + $0x18] sm:$0xff]
        %v486 = vmul.f32 %v482, %v482
        %v487 = vmul.f32 %v483, %v483
        %v488 = vmul.f32 %v484, %v484
        %v489 = vmul.f32 %v485, %v485
        %v490 = vadd.f32 %v477, %v486
        %v491 = vadd.f32 %v478, %v487
        %v492 = vadd.f32 %v479, %v488
        %v493 = vadd.f32 %v480, %v489
        %s494 = scalar_lea.vmem %s227, 640
        %v495 = vld [vmem:[%s494] sm:$0xff]
        %v496 = vld [vmem:[%s494 + $0x8] sm:$0xff]
        %v497 = vld [vmem:[%s494 + $0x10] sm:$0xff]
        %v498 = vld [vmem:[%s494 + $0x18] sm:$0xff]
        %v499 = vmul.f32 %v495, %v495
        %v500 = vmul.f32 %v496, %v496
        %v501 = vmul.f32 %v497, %v497
        %v502 = vmul.f32 %v498, %v498
        %v503 = vadd.f32 %v490, %v499
        %v504 = vadd.f32 %v491, %v500
        %v505 = vadd.f32 %v492, %v501
        %v506 = vadd.f32 %v493, %v502
        %s507 = scalar_lea.vmem %s227, 672
        %v508 = vld [vmem:[%s507] sm:$0xff]
        %v509 = vld [vmem:[%s507 + $0x8] sm:$0xff]
        %v510 = vld [vmem:[%s507 + $0x10] sm:$0xff]
        %v511 = vld [vmem:[%s507 + $0x18] sm:$0xff]
        %v512 = vmul.f32 %v508, %v508
        %v513 = vmul.f32 %v509, %v509
        %v514 = vmul.f32 %v510, %v510
        %v515 = vmul.f32 %v511, %v511
        %v516 = vadd.f32 %v503, %v512
        %v517 = vadd.f32 %v504, %v513
        %v518 = vadd.f32 %v505, %v514
        %v519 = vadd.f32 %v506, %v515
        %s520 = scalar_lea.vmem %s227, 704
        %v521 = vld [vmem:[%s520] sm:$0xff]
        %v522 = vld [vmem:[%s520 + $0x8] sm:$0xff]
        %v523 = vld [vmem:[%s520 + $0x10] sm:$0xff]
        %v524 = vld [vmem:[%s520 + $0x18] sm:$0xff]
        %v525 = vmul.f32 %v521, %v521
        %v526 = vmul.f32 %v522, %v522
        %v527 = vmul.f32 %v523, %v523
        %v528 = vmul.f32 %v524, %v524
        %v529 = vadd.f32 %v516, %v525
        %v530 = vadd.f32 %v517, %v526
        %v531 = vadd.f32 %v518, %v527
        %v532 = vadd.f32 %v519, %v528
        %s533 = scalar_lea.vmem %s227, 736
        %v534 = vld [vmem:[%s533] sm:$0xff]
        %v535 = vld [vmem:[%s533 + $0x8] sm:$0xff]
        %v536 = vld [vmem:[%s533 + $0x10] sm:$0xff]
        %v537 = vld [vmem:[%s533 + $0x18] sm:$0xff]
        %v538 = vmul.f32 %v534, %v534
        %v539 = vmul.f32 %v535, %v535
        %v540 = vmul.f32 %v536, %v536
        %v541 = vmul.f32 %v537, %v537
        %v542 = vadd.f32 %v529, %v538
        %v543 = vadd.f32 %v530, %v539
        %v544 = vadd.f32 %v531, %v540
        %v545 = vadd.f32 %v532, %v541
        %s546 = scalar_lea.vmem %s227, 768
        %v547 = vld [vmem:[%s546] sm:$0xff]
        %v548 = vld [vmem:[%s546 + $0x8] sm:$0xff]
        %v549 = vld [vmem:[%s546 + $0x10] sm:$0xff]
        %v550 = vld [vmem:[%s546 + $0x18] sm:$0xff]
        %v551 = vmul.f32 %v547, %v547
        %v552 = vmul.f32 %v548, %v548
        %v553 = vmul.f32 %v549, %v549
        %v554 = vmul.f32 %v550, %v550
        %v555 = vadd.f32 %v542, %v551
        %v556 = vadd.f32 %v543, %v552
        %v557 = vadd.f32 %v544, %v553
        %v558 = vadd.f32 %v545, %v554
        %s559 = scalar_lea.vmem %s227, 800
        %v560 = vld [vmem:[%s559] sm:$0xff]
        %v561 = vld [vmem:[%s559 + $0x8] sm:$0xff]
        %v562 = vld [vmem:[%s559 + $0x10] sm:$0xff]
        %v563 = vld [vmem:[%s559 + $0x18] sm:$0xff]
        %v564 = vmul.f32 %v560, %v560
        %v565 = vmul.f32 %v561, %v561
        %v566 = vmul.f32 %v562, %v562
        %v567 = vmul.f32 %v563, %v563
        %v568 = vadd.f32 %v555, %v564
        %v569 = vadd.f32 %v556, %v565
        %v570 = vadd.f32 %v557, %v566
        %v571 = vadd.f32 %v558, %v567
        %s572 = scalar_lea.vmem %s227, 832
        %v573 = vld [vmem:[%s572] sm:$0xff]
        %v574 = vld [vmem:[%s572 + $0x8] sm:$0xff]
        %v575 = vld [vmem:[%s572 + $0x10] sm:$0xff]
        %v576 = vld [vmem:[%s572 + $0x18] sm:$0xff]
        %v577 = vmul.f32 %v573, %v573
        %v578 = vmul.f32 %v574, %v574
        %v579 = vmul.f32 %v575, %v575
        %v580 = vmul.f32 %v576, %v576
        %v581 = vadd.f32 %v568, %v577
        %v582 = vadd.f32 %v569, %v578
        %v583 = vadd.f32 %v570, %v579
        %v584 = vadd.f32 %v571, %v580
        %v585 = vadd.f32 %v581, 1.0
        %v586 = vadd.f32 %v582, 1.0
        %v587 = vadd.f32 %v583, 1.0
        %v588 = vadd.f32 %v584, 1.0
        %v589 = vmax.f32 %v585, 1e-08
        %v590 = vmax.f32 %v586, 1e-08
        %v591 = vmax.f32 %v587, 1e-08
        %v592 = vmax.f32 %v588, 1e-08
        %v593 = vrsqrt.pop %v589
        %v594 = vmul.f32 %v589, %v593
        %vm595 = vcmp.eq.f32.partialorder %v589, inf
        %v596 = vsel %vm595, %v589, %v594
        %vm597 = vcmp.eq.f32.partialorder %v589, 0.0
        %v598 = vand.u32 %v589, 2147483648
        %v599 = vsel %vm597, %v598, %v596
        %v600 = vrsqrt.pop %v590
        %v601 = vmul.f32 %v590, %v600
        %vm602 = vcmp.eq.f32.partialorder %v590, inf
        %v603 = vsel %vm602, %v590, %v601
        %vm604 = vcmp.eq.f32.partialorder %v590, 0.0
        %v605 = vand.u32 %v590, 2147483648
        %v606 = vsel %vm604, %v605, %v603
        %v607 = vrsqrt.pop %v591
        %v608 = vmul.f32 %v591, %v607
        %vm609 = vcmp.eq.f32.partialorder %v591, inf
        %v610 = vsel %vm609, %v591, %v608
        %vm611 = vcmp.eq.f32.partialorder %v591, 0.0
        %v612 = vand.u32 %v591, 2147483648
        %v613 = vsel %vm611, %v612, %v610
        %v614 = vrsqrt.pop %v592
        %v615 = vmul.f32 %v592, %v614
        %vm616 = vcmp.eq.f32.partialorder %v592, inf
        %v617 = vsel %vm616, %v592, %v615
        %vm618 = vcmp.eq.f32.partialorder %v592, 0.0
        %v619 = vand.u32 %v592, 2147483648
        %v620 = vsel %vm618, %v619, %v617
        %s621 = sld [smem:[#allocation2 + $0x80]]
        %v622 = vstv %s621
        %v623 = vmul.f32 %v599, %v622
        %v624 = vmul.f32 %v606, %v622
        %v625 = vmul.f32 %v613, %v622
        %v626 = vmul.f32 %v620, %v622
        %s627 = sld [smem:[#allocation4 + $0x1]]
        %v628 = vstv %s627
        %v629 = vadd.f32 %v623, %v628
        %v630 = vadd.f32 %v624, %v628
        %v631 = vadd.f32 %v625, %v628
        %v632 = vadd.f32 %v626, %v628
        %s633 = sld [smem:[#allocation2 + $0x81]]
        %v634 = vstv %s633
        %v635 = vmul.f32 %v239, %v634
        %v636 = vmul.f32 %v240, %v634
        %v637 = vmul.f32 %v241, %v634
        %v638 = vmul.f32 %v242, %v634
        %v639 = vadd.f32 %v629, %v635
        %v640 = vadd.f32 %v630, %v636
        %v641 = vadd.f32 %v631, %v637
        %v642 = vadd.f32 %v632, %v638
        %s643 = sld [smem:[#allocation2 + $0x82]]
        %v644 = vstv %s643
        %v645 = vmul.f32 %v248, %v644
        %v646 = vmul.f32 %v249, %v644
        %v647 = vmul.f32 %v250, %v644
        %v648 = vmul.f32 %v251, %v644
        %v649 = vadd.f32 %v639, %v645
        %v650 = vadd.f32 %v640, %v646
        %v651 = vadd.f32 %v641, %v647
        %v652 = vadd.f32 %v642, %v648
        %s653 = sld [smem:[#allocation2 + $0x83]]
        %v654 = vstv %s653
        %v655 = vmul.f32 %v261, %v654
        %v656 = vmul.f32 %v262, %v654
        %v657 = vmul.f32 %v263, %v654
        %v658 = vmul.f32 %v264, %v654
        %v659 = vadd.f32 %v649, %v655
        %v660 = vadd.f32 %v650, %v656
        %v661 = vadd.f32 %v651, %v657
        %v662 = vadd.f32 %v652, %v658
        %s663 = sld [smem:[#allocation2 + $0x84]]
        %v664 = vstv %s663
        %v665 = vmul.f32 %v274, %v664
        %v666 = vmul.f32 %v275, %v664
        %v667 = vmul.f32 %v276, %v664
        %v668 = vmul.f32 %v277, %v664
        %v669 = vadd.f32 %v659, %v665
        %v670 = vadd.f32 %v660, %v666
        %v671 = vadd.f32 %v661, %v667
        %v672 = vadd.f32 %v662, %v668
        %s673 = sld [smem:[#allocation2 + $0x85]]
        %v674 = vstv %s673
        %v675 = vmul.f32 %v287, %v674
        %v676 = vmul.f32 %v288, %v674
        %v677 = vmul.f32 %v289, %v674
        %v678 = vmul.f32 %v290, %v674
        %v679 = vadd.f32 %v669, %v675
        %v680 = vadd.f32 %v670, %v676
        %v681 = vadd.f32 %v671, %v677
        %v682 = vadd.f32 %v672, %v678
        %s683 = sld [smem:[#allocation2 + $0x86]]
        %v684 = vstv %s683
        %v685 = vmul.f32 %v300, %v684
        %v686 = vmul.f32 %v301, %v684
        %v687 = vmul.f32 %v302, %v684
        %v688 = vmul.f32 %v303, %v684
        %v689 = vadd.f32 %v679, %v685
        %v690 = vadd.f32 %v680, %v686
        %v691 = vadd.f32 %v681, %v687
        %v692 = vadd.f32 %v682, %v688
        %s693 = sld [smem:[#allocation2 + $0x87]]
        %v694 = vstv %s693
        %v695 = vmul.f32 %v313, %v694
        %v696 = vmul.f32 %v314, %v694
        %v697 = vmul.f32 %v315, %v694
        %v698 = vmul.f32 %v316, %v694
        %v699 = vadd.f32 %v689, %v695
        %v700 = vadd.f32 %v690, %v696
        %v701 = vadd.f32 %v691, %v697
        %v702 = vadd.f32 %v692, %v698
        %s703 = sld [smem:[#allocation2 + $0x88]]
        %v704 = vstv %s703
        %v705 = vmul.f32 %v326, %v704
        %v706 = vmul.f32 %v327, %v704
        %v707 = vmul.f32 %v328, %v704
        %v708 = vmul.f32 %v329, %v704
        %v709 = vadd.f32 %v699, %v705
        %v710 = vadd.f32 %v700, %v706
        %v711 = vadd.f32 %v701, %v707
        %v712 = vadd.f32 %v702, %v708
        %s713 = sld [smem:[#allocation2 + $0x89]]
        %v714 = vstv %s713
        %v715 = vmul.f32 %v339, %v714
        %v716 = vmul.f32 %v340, %v714
        %v717 = vmul.f32 %v341, %v714
        %v718 = vmul.f32 %v342, %v714
        %v719 = vadd.f32 %v709, %v715
        %v720 = vadd.f32 %v710, %v716
        %v721 = vadd.f32 %v711, %v717
        %v722 = vadd.f32 %v712, %v718
        %s723 = sld [smem:[#allocation2 + $0x8a]]
        %v724 = vstv %s723
        %v725 = vmul.f32 %v352, %v724
        %v726 = vmul.f32 %v353, %v724
        %v727 = vmul.f32 %v354, %v724
        %v728 = vmul.f32 %v355, %v724
        %v729 = vadd.f32 %v719, %v725
        %v730 = vadd.f32 %v720, %v726
        %v731 = vadd.f32 %v721, %v727
        %v732 = vadd.f32 %v722, %v728
        %s733 = sld [smem:[#allocation2 + $0x8b]]
        %v734 = vstv %s733
        %v735 = vmul.f32 %v365, %v734
        %v736 = vmul.f32 %v366, %v734
        %v737 = vmul.f32 %v367, %v734
        %v738 = vmul.f32 %v368, %v734
        %v739 = vadd.f32 %v729, %v735
        %v740 = vadd.f32 %v730, %v736
        %v741 = vadd.f32 %v731, %v737
        %v742 = vadd.f32 %v732, %v738
        %s743 = sld [smem:[#allocation2 + $0x8c]]
        %v744 = vstv %s743
        %v745 = vmul.f32 %v378, %v744
        %v746 = vmul.f32 %v379, %v744
        %v747 = vmul.f32 %v380, %v744
        %v748 = vmul.f32 %v381, %v744
        %v749 = vadd.f32 %v739, %v745
        %v750 = vadd.f32 %v740, %v746
        %v751 = vadd.f32 %v741, %v747
        %v752 = vadd.f32 %v742, %v748
        %s753 = sld [smem:[#allocation2 + $0x8d]]
        %v754 = vstv %s753
        %v755 = vmul.f32 %v391, %v754
        %v756 = vmul.f32 %v392, %v754
        %v757 = vmul.f32 %v393, %v754
        %v758 = vmul.f32 %v394, %v754
        %v759 = vadd.f32 %v749, %v755
        %v760 = vadd.f32 %v750, %v756
        %v761 = vadd.f32 %v751, %v757
        %v762 = vadd.f32 %v752, %v758
        %s763 = sld [smem:[#allocation2 + $0x8e]]
        %v764 = vstv %s763
        %v765 = vmul.f32 %v404, %v764
        %v766 = vmul.f32 %v405, %v764
        %v767 = vmul.f32 %v406, %v764
        %v768 = vmul.f32 %v407, %v764
        %v769 = vadd.f32 %v759, %v765
        %v770 = vadd.f32 %v760, %v766
        %v771 = vadd.f32 %v761, %v767
        %v772 = vadd.f32 %v762, %v768
        %s773 = sld [smem:[#allocation2 + $0x8f]]
        %v774 = vstv %s773
        %v775 = vmul.f32 %v417, %v774
        %v776 = vmul.f32 %v418, %v774
        %v777 = vmul.f32 %v419, %v774
        %v778 = vmul.f32 %v420, %v774
        %v779 = vadd.f32 %v769, %v775
        %v780 = vadd.f32 %v770, %v776
        %v781 = vadd.f32 %v771, %v777
        %v782 = vadd.f32 %v772, %v778
        %s783 = sld [smem:[#allocation2 + $0x90]]
        %v784 = vstv %s783
        %v785 = vmul.f32 %v430, %v784
        %v786 = vmul.f32 %v431, %v784
        %v787 = vmul.f32 %v432, %v784
        %v788 = vmul.f32 %v433, %v784
        %v789 = vadd.f32 %v779, %v785
        %v790 = vadd.f32 %v780, %v786
        %v791 = vadd.f32 %v781, %v787
        %v792 = vadd.f32 %v782, %v788
        %s793 = sld [smem:[#allocation2 + $0x91]]
        %v794 = vstv %s793
        %v795 = vmul.f32 %v443, %v794
        %v796 = vmul.f32 %v444, %v794
        %v797 = vmul.f32 %v445, %v794
        %v798 = vmul.f32 %v446, %v794
        %v799 = vadd.f32 %v789, %v795
        %v800 = vadd.f32 %v790, %v796
        %v801 = vadd.f32 %v791, %v797
        %v802 = vadd.f32 %v792, %v798
        %s803 = sld [smem:[#allocation2 + $0x92]]
        %v804 = vstv %s803
        %v805 = vmul.f32 %v456, %v804
        %v806 = vmul.f32 %v457, %v804
        %v807 = vmul.f32 %v458, %v804
        %v808 = vmul.f32 %v459, %v804
        %v809 = vadd.f32 %v799, %v805
        %v810 = vadd.f32 %v800, %v806
        %v811 = vadd.f32 %v801, %v807
        %v812 = vadd.f32 %v802, %v808
        %s813 = sld [smem:[#allocation2 + $0x93]]
        %v814 = vstv %s813
        %v815 = vmul.f32 %v469, %v814
        %v816 = vmul.f32 %v470, %v814
        %v817 = vmul.f32 %v471, %v814
        %v818 = vmul.f32 %v472, %v814
        %v819 = vadd.f32 %v809, %v815
        %v820 = vadd.f32 %v810, %v816
        %v821 = vadd.f32 %v811, %v817
        %v822 = vadd.f32 %v812, %v818
        %s823 = sld [smem:[#allocation2 + $0x94]]
        %v824 = vstv %s823
        %v825 = vmul.f32 %v482, %v824
        %v826 = vmul.f32 %v483, %v824
        %v827 = vmul.f32 %v484, %v824
        %v828 = vmul.f32 %v485, %v824
        %v829 = vadd.f32 %v819, %v825
        %v830 = vadd.f32 %v820, %v826
        %v831 = vadd.f32 %v821, %v827
        %v832 = vadd.f32 %v822, %v828
        %s833 = sld [smem:[#allocation2 + $0x95]]
        %v834 = vstv %s833
        %v835 = vmul.f32 %v495, %v834
        %v836 = vmul.f32 %v496, %v834
        %v837 = vmul.f32 %v497, %v834
        %v838 = vmul.f32 %v498, %v834
        %v839 = vadd.f32 %v829, %v835
        %v840 = vadd.f32 %v830, %v836
        %v841 = vadd.f32 %v831, %v837
        %v842 = vadd.f32 %v832, %v838
        %s843 = sld [smem:[#allocation2 + $0x96]]
        %v844 = vstv %s843
        %v845 = vmul.f32 %v508, %v844
        %v846 = vmul.f32 %v509, %v844
        %v847 = vmul.f32 %v510, %v844
        %v848 = vmul.f32 %v511, %v844
        %v849 = vadd.f32 %v839, %v845
        %v850 = vadd.f32 %v840, %v846
        %v851 = vadd.f32 %v841, %v847
        %v852 = vadd.f32 %v842, %v848
        %s853 = sld [smem:[#allocation2 + $0x97]]
        %v854 = vstv %s853
        %v855 = vmul.f32 %v521, %v854
        %v856 = vmul.f32 %v522, %v854
        %v857 = vmul.f32 %v523, %v854
        %v858 = vmul.f32 %v524, %v854
        %v859 = vadd.f32 %v849, %v855
        %v860 = vadd.f32 %v850, %v856
        %v861 = vadd.f32 %v851, %v857
        %v862 = vadd.f32 %v852, %v858
        %s863 = sld [smem:[#allocation2 + $0x98]]
        %v864 = vstv %s863
        %v865 = vmul.f32 %v534, %v864
        %v866 = vmul.f32 %v535, %v864
        %v867 = vmul.f32 %v536, %v864
        %v868 = vmul.f32 %v537, %v864
        %v869 = vadd.f32 %v859, %v865
        %v870 = vadd.f32 %v860, %v866
        %v871 = vadd.f32 %v861, %v867
        %v872 = vadd.f32 %v862, %v868
        %s873 = sld [smem:[#allocation2 + $0x99]]
        %v874 = vstv %s873
        %v875 = vmul.f32 %v547, %v874
        %v876 = vmul.f32 %v548, %v874
        %v877 = vmul.f32 %v549, %v874
        %v878 = vmul.f32 %v550, %v874
        %v879 = vadd.f32 %v869, %v875
        %v880 = vadd.f32 %v870, %v876
        %v881 = vadd.f32 %v871, %v877
        %v882 = vadd.f32 %v872, %v878
        %s883 = sld [smem:[#allocation2 + $0x9a]]
        %v884 = vstv %s883
        %v885 = vmul.f32 %v560, %v884
        %v886 = vmul.f32 %v561, %v884
        %v887 = vmul.f32 %v562, %v884
        %v888 = vmul.f32 %v563, %v884
        %v889 = vadd.f32 %v879, %v885
        %v890 = vadd.f32 %v880, %v886
        %v891 = vadd.f32 %v881, %v887
        %v892 = vadd.f32 %v882, %v888
        %s893 = sld [smem:[#allocation2 + $0x9b]]
        %v894 = vstv %s893
        %v895 = vmul.f32 %v573, %v894
        %v896 = vmul.f32 %v574, %v894
        %v897 = vmul.f32 %v575, %v894
        %v898 = vmul.f32 %v576, %v894
        %v899 = vadd.f32 %v889, %v895
        %v900 = vadd.f32 %v890, %v896
        %v901 = vadd.f32 %v891, %v897
        %v902 = vadd.f32 %v892, %v898
        %s903 = scalar_lea.vmem %s237, 32
        %904 = vst [vmem:[%s903] sm:$0xff] %v899
        %905 = vst [vmem:[%s903 + $0x8] sm:$0xff] %v900
        %906 = vst [vmem:[%s903 + $0x10] sm:$0xff] %v901
        %907 = vst [vmem:[%s903 + $0x18] sm:$0xff] %v902
        %v908 = vmul.f32 %v899, %v899
        %v909 = vmul.f32 %v900, %v900
        %v910 = vmul.f32 %v901, %v901
        %v911 = vmul.f32 %v902, %v902
        %s912 = sld [smem:[#allocation2 + $0x100]]
        %v913 = vstv %s912
        %v914 = vmul.f32 %v599, %v913
        %v915 = vmul.f32 %v606, %v913
        %v916 = vmul.f32 %v613, %v913
        %v917 = vmul.f32 %v620, %v913
        %s918 = sld [smem:[#allocation4 + $0x2]]
        %v919 = vstv %s918
        %v920 = vadd.f32 %v914, %v919
        %v921 = vadd.f32 %v915, %v919
        %v922 = vadd.f32 %v916, %v919
        %v923 = vadd.f32 %v917, %v919
        %v924 = vld [vmem:[%s227] sm:$0xff]
        %v925 = vld [vmem:[%s227 + $0x8] sm:$0xff]
        %v926 = vld [vmem:[%s227 + $0x10] sm:$0xff]
        %v927 = vld [vmem:[%s227 + $0x18] sm:$0xff]
        %s928 = sld [smem:[#allocation2 + $0x101]]
        %v929 = vstv %s928
        %v930 = vmul.f32 %v924, %v929
        %v931 = vmul.f32 %v925, %v929
        %v932 = vmul.f32 %v926, %v929
        %v933 = vmul.f32 %v927, %v929
        %v934 = vadd.f32 %v920, %v930
        %v935 = vadd.f32 %v921, %v931
        %v936 = vadd.f32 %v922, %v932
        %v937 = vadd.f32 %v923, %v933
        %v938 = vld [vmem:[%s247] sm:$0xff]
        %v939 = vld [vmem:[%s247 + $0x8] sm:$0xff]
        %v940 = vld [vmem:[%s247 + $0x10] sm:$0xff]
        %v941 = vld [vmem:[%s247 + $0x18] sm:$0xff]
        %s942 = sld [smem:[#allocation2 + $0x102]]
        %v943 = vstv %s942
        %v944 = vmul.f32 %v938, %v943
        %v945 = vmul.f32 %v939, %v943
        %v946 = vmul.f32 %v940, %v943
        %v947 = vmul.f32 %v941, %v943
        %v948 = vadd.f32 %v934, %v944
        %v949 = vadd.f32 %v935, %v945
        %v950 = vadd.f32 %v936, %v946
        %v951 = vadd.f32 %v937, %v947
        %v952 = vld [vmem:[%s260] sm:$0xff]
        %v953 = vld [vmem:[%s260 + $0x8] sm:$0xff]
        %v954 = vld [vmem:[%s260 + $0x10] sm:$0xff]
        %v955 = vld [vmem:[%s260 + $0x18] sm:$0xff]
        %s956 = sld [smem:[#allocation2 + $0x103]]
        %v957 = vstv %s956
        %v958 = vmul.f32 %v952, %v957
        %v959 = vmul.f32 %v953, %v957
        %v960 = vmul.f32 %v954, %v957
        %v961 = vmul.f32 %v955, %v957
        %v962 = vadd.f32 %v948, %v958
        %v963 = vadd.f32 %v949, %v959
        %v964 = vadd.f32 %v950, %v960
        %v965 = vadd.f32 %v951, %v961
        %v966 = vld [vmem:[%s273] sm:$0xff]
        %v967 = vld [vmem:[%s273 + $0x8] sm:$0xff]
        %v968 = vld [vmem:[%s273 + $0x10] sm:$0xff]
        %v969 = vld [vmem:[%s273 + $0x18] sm:$0xff]
        %s970 = sld [smem:[#allocation2 + $0x104]]
        %v971 = vstv %s970
        %v972 = vmul.f32 %v966, %v971
        %v973 = vmul.f32 %v967, %v971
        %v974 = vmul.f32 %v968, %v971
        %v975 = vmul.f32 %v969, %v971
        %v976 = vadd.f32 %v962, %v972
        %v977 = vadd.f32 %v963, %v973
        %v978 = vadd.f32 %v964, %v974
        %v979 = vadd.f32 %v965, %v975
        %v980 = vld [vmem:[%s286] sm:$0xff]
        %v981 = vld [vmem:[%s286 + $0x8] sm:$0xff]
        %v982 = vld [vmem:[%s286 + $0x10] sm:$0xff]
        %v983 = vld [vmem:[%s286 + $0x18] sm:$0xff]
        %s984 = sld [smem:[#allocation2 + $0x105]]
        %v985 = vstv %s984
        %v986 = vmul.f32 %v980, %v985
        %v987 = vmul.f32 %v981, %v985
        %v988 = vmul.f32 %v982, %v985
        %v989 = vmul.f32 %v983, %v985
        %v990 = vadd.f32 %v976, %v986
        %v991 = vadd.f32 %v977, %v987
        %v992 = vadd.f32 %v978, %v988
        %v993 = vadd.f32 %v979, %v989
        %v994 = vld [vmem:[%s299] sm:$0xff]
        %v995 = vld [vmem:[%s299 + $0x8] sm:$0xff]
        %v996 = vld [vmem:[%s299 + $0x10] sm:$0xff]
        %v997 = vld [vmem:[%s299 + $0x18] sm:$0xff]
        %s998 = sld [smem:[#allocation2 + $0x106]]
        %v999 = vstv %s998
        %v1000 = vmul.f32 %v994, %v999
        %v1001 = vmul.f32 %v995, %v999
        %v1002 = vmul.f32 %v996, %v999
        %v1003 = vmul.f32 %v997, %v999
        %v1004 = vadd.f32 %v990, %v1000
        %v1005 = vadd.f32 %v991, %v1001
        %v1006 = vadd.f32 %v992, %v1002
        %v1007 = vadd.f32 %v993, %v1003
        %v1008 = vld [vmem:[%s312] sm:$0xff]
        %v1009 = vld [vmem:[%s312 + $0x8] sm:$0xff]
        %v1010 = vld [vmem:[%s312 + $0x10] sm:$0xff]
        %v1011 = vld [vmem:[%s312 + $0x18] sm:$0xff]
        %s1012 = sld [smem:[#allocation2 + $0x107]]
        %v1013 = vstv %s1012
        %v1014 = vmul.f32 %v1008, %v1013
        %v1015 = vmul.f32 %v1009, %v1013
        %v1016 = vmul.f32 %v1010, %v1013
        %v1017 = vmul.f32 %v1011, %v1013
        %v1018 = vadd.f32 %v1004, %v1014
        %v1019 = vadd.f32 %v1005, %v1015
        %v1020 = vadd.f32 %v1006, %v1016
        %v1021 = vadd.f32 %v1007, %v1017
        %v1022 = vld [vmem:[%s325] sm:$0xff]
        %v1023 = vld [vmem:[%s325 + $0x8] sm:$0xff]
        %v1024 = vld [vmem:[%s325 + $0x10] sm:$0xff]
        %v1025 = vld [vmem:[%s325 + $0x18] sm:$0xff]
        %s1026 = sld [smem:[#allocation2 + $0x108]]
        %v1027 = vstv %s1026
        %v1028 = vmul.f32 %v1022, %v1027
        %v1029 = vmul.f32 %v1023, %v1027
        %v1030 = vmul.f32 %v1024, %v1027
        %v1031 = vmul.f32 %v1025, %v1027
        %v1032 = vadd.f32 %v1018, %v1028
        %v1033 = vadd.f32 %v1019, %v1029
        %v1034 = vadd.f32 %v1020, %v1030
        %v1035 = vadd.f32 %v1021, %v1031
        %v1036 = vld [vmem:[%s338] sm:$0xff]
        %v1037 = vld [vmem:[%s338 + $0x8] sm:$0xff]
        %v1038 = vld [vmem:[%s338 + $0x10] sm:$0xff]
        %v1039 = vld [vmem:[%s338 + $0x18] sm:$0xff]
        %s1040 = sld [smem:[#allocation2 + $0x109]]
        %v1041 = vstv %s1040
        %v1042 = vmul.f32 %v1036, %v1041
        %v1043 = vmul.f32 %v1037, %v1041
        %v1044 = vmul.f32 %v1038, %v1041
        %v1045 = vmul.f32 %v1039, %v1041
        %v1046 = vadd.f32 %v1032, %v1042
        %v1047 = vadd.f32 %v1033, %v1043
        %v1048 = vadd.f32 %v1034, %v1044
        %v1049 = vadd.f32 %v1035, %v1045
        %v1050 = vld [vmem:[%s351] sm:$0xff]
        %v1051 = vld [vmem:[%s351 + $0x8] sm:$0xff]
        %v1052 = vld [vmem:[%s351 + $0x10] sm:$0xff]
        %v1053 = vld [vmem:[%s351 + $0x18] sm:$0xff]
        %s1054 = sld [smem:[#allocation2 + $0x10a]]
        %v1055 = vstv %s1054
        %v1056 = vmul.f32 %v1050, %v1055
        %v1057 = vmul.f32 %v1051, %v1055
        %v1058 = vmul.f32 %v1052, %v1055
        %v1059 = vmul.f32 %v1053, %v1055
        %v1060 = vadd.f32 %v1046, %v1056
        %v1061 = vadd.f32 %v1047, %v1057
        %v1062 = vadd.f32 %v1048, %v1058
        %v1063 = vadd.f32 %v1049, %v1059
        %v1064 = vld [vmem:[%s364] sm:$0xff]
        %v1065 = vld [vmem:[%s364 + $0x8] sm:$0xff]
        %v1066 = vld [vmem:[%s364 + $0x10] sm:$0xff]
        %v1067 = vld [vmem:[%s364 + $0x18] sm:$0xff]
        %s1068 = sld [smem:[#allocation2 + $0x10b]]
        %v1069 = vstv %s1068
        %v1070 = vmul.f32 %v1064, %v1069
        %v1071 = vmul.f32 %v1065, %v1069
        %v1072 = vmul.f32 %v1066, %v1069
        %v1073 = vmul.f32 %v1067, %v1069
        %v1074 = vadd.f32 %v1060, %v1070
        %v1075 = vadd.f32 %v1061, %v1071
        %v1076 = vadd.f32 %v1062, %v1072
        %v1077 = vadd.f32 %v1063, %v1073
        %v1078 = vld [vmem:[%s377] sm:$0xff]
        %v1079 = vld [vmem:[%s377 + $0x8] sm:$0xff]
        %v1080 = vld [vmem:[%s377 + $0x10] sm:$0xff]
        %v1081 = vld [vmem:[%s377 + $0x18] sm:$0xff]
        %s1082 = sld [smem:[#allocation2 + $0x10c]]
        %v1083 = vstv %s1082
        %v1084 = vmul.f32 %v1078, %v1083
        %v1085 = vmul.f32 %v1079, %v1083
        %v1086 = vmul.f32 %v1080, %v1083
        %v1087 = vmul.f32 %v1081, %v1083
        %v1088 = vadd.f32 %v1074, %v1084
        %v1089 = vadd.f32 %v1075, %v1085
        %v1090 = vadd.f32 %v1076, %v1086
        %v1091 = vadd.f32 %v1077, %v1087
        %v1092 = vld [vmem:[%s390] sm:$0xff]
        %v1093 = vld [vmem:[%s390 + $0x8] sm:$0xff]
        %v1094 = vld [vmem:[%s390 + $0x10] sm:$0xff]
        %v1095 = vld [vmem:[%s390 + $0x18] sm:$0xff]
        %s1096 = sld [smem:[#allocation2 + $0x10d]]
        %v1097 = vstv %s1096
        %v1098 = vmul.f32 %v1092, %v1097
        %v1099 = vmul.f32 %v1093, %v1097
        %v1100 = vmul.f32 %v1094, %v1097
        %v1101 = vmul.f32 %v1095, %v1097
        %v1102 = vadd.f32 %v1088, %v1098
        %v1103 = vadd.f32 %v1089, %v1099
        %v1104 = vadd.f32 %v1090, %v1100
        %v1105 = vadd.f32 %v1091, %v1101
        %v1106 = vld [vmem:[%s403] sm:$0xff]
        %v1107 = vld [vmem:[%s403 + $0x8] sm:$0xff]
        %v1108 = vld [vmem:[%s403 + $0x10] sm:$0xff]
        %v1109 = vld [vmem:[%s403 + $0x18] sm:$0xff]
        %s1110 = sld [smem:[#allocation2 + $0x10e]]
        %v1111 = vstv %s1110
        %v1112 = vmul.f32 %v1106, %v1111
        %v1113 = vmul.f32 %v1107, %v1111
        %v1114 = vmul.f32 %v1108, %v1111
        %v1115 = vmul.f32 %v1109, %v1111
        %v1116 = vadd.f32 %v1102, %v1112
        %v1117 = vadd.f32 %v1103, %v1113
        %v1118 = vadd.f32 %v1104, %v1114
        %v1119 = vadd.f32 %v1105, %v1115
        %v1120 = vld [vmem:[%s416] sm:$0xff]
        %v1121 = vld [vmem:[%s416 + $0x8] sm:$0xff]
        %v1122 = vld [vmem:[%s416 + $0x10] sm:$0xff]
        %v1123 = vld [vmem:[%s416 + $0x18] sm:$0xff]
        %s1124 = sld [smem:[#allocation2 + $0x10f]]
        %v1125 = vstv %s1124
        %v1126 = vmul.f32 %v1120, %v1125
        %v1127 = vmul.f32 %v1121, %v1125
        %v1128 = vmul.f32 %v1122, %v1125
        %v1129 = vmul.f32 %v1123, %v1125
        %v1130 = vadd.f32 %v1116, %v1126
        %v1131 = vadd.f32 %v1117, %v1127
        %v1132 = vadd.f32 %v1118, %v1128
        %v1133 = vadd.f32 %v1119, %v1129
        %v1134 = vld [vmem:[%s429] sm:$0xff]
        %v1135 = vld [vmem:[%s429 + $0x8] sm:$0xff]
        %v1136 = vld [vmem:[%s429 + $0x10] sm:$0xff]
        %v1137 = vld [vmem:[%s429 + $0x18] sm:$0xff]
        %s1138 = sld [smem:[#allocation2 + $0x110]]
        %v1139 = vstv %s1138
        %v1140 = vmul.f32 %v1134, %v1139
        %v1141 = vmul.f32 %v1135, %v1139
        %v1142 = vmul.f32 %v1136, %v1139
        %v1143 = vmul.f32 %v1137, %v1139
        %v1144 = vadd.f32 %v1130, %v1140
        %v1145 = vadd.f32 %v1131, %v1141
        %v1146 = vadd.f32 %v1132, %v1142
        %v1147 = vadd.f32 %v1133, %v1143
        %v1148 = vld [vmem:[%s442] sm:$0xff]
        %v1149 = vld [vmem:[%s442 + $0x8] sm:$0xff]
        %v1150 = vld [vmem:[%s442 + $0x10] sm:$0xff]
        %v1151 = vld [vmem:[%s442 + $0x18] sm:$0xff]
        %s1152 = sld [smem:[#allocation2 + $0x111]]
        %v1153 = vstv %s1152
        %v1154 = vmul.f32 %v1148, %v1153
        %v1155 = vmul.f32 %v1149, %v1153
        %v1156 = vmul.f32 %v1150, %v1153
        %v1157 = vmul.f32 %v1151, %v1153
        %v1158 = vadd.f32 %v1144, %v1154
        %v1159 = vadd.f32 %v1145, %v1155
        %v1160 = vadd.f32 %v1146, %v1156
        %v1161 = vadd.f32 %v1147, %v1157
        %v1162 = vld [vmem:[%s455] sm:$0xff]
        %v1163 = vld [vmem:[%s455 + $0x8] sm:$0xff]
        %v1164 = vld [vmem:[%s455 + $0x10] sm:$0xff]
        %v1165 = vld [vmem:[%s455 + $0x18] sm:$0xff]
        %s1166 = sld [smem:[#allocation2 + $0x112]]
        %v1167 = vstv %s1166
        %v1168 = vmul.f32 %v1162, %v1167
        %v1169 = vmul.f32 %v1163, %v1167
        %v1170 = vmul.f32 %v1164, %v1167
        %v1171 = vmul.f32 %v1165, %v1167
        %v1172 = vadd.f32 %v1158, %v1168
        %v1173 = vadd.f32 %v1159, %v1169
        %v1174 = vadd.f32 %v1160, %v1170
        %v1175 = vadd.f32 %v1161, %v1171
        %v1176 = vld [vmem:[%s468] sm:$0xff]
        %v1177 = vld [vmem:[%s468 + $0x8] sm:$0xff]
        %v1178 = vld [vmem:[%s468 + $0x10] sm:$0xff]
        %v1179 = vld [vmem:[%s468 + $0x18] sm:$0xff]
        %s1180 = sld [smem:[#allocation2 + $0x113]]
        %v1181 = vstv %s1180
        %v1182 = vmul.f32 %v1176, %v1181
        %v1183 = vmul.f32 %v1177, %v1181
        %v1184 = vmul.f32 %v1178, %v1181
        %v1185 = vmul.f32 %v1179, %v1181
        %v1186 = vadd.f32 %v1172, %v1182
        %v1187 = vadd.f32 %v1173, %v1183
        %v1188 = vadd.f32 %v1174, %v1184
        %v1189 = vadd.f32 %v1175, %v1185
        %v1190 = vld [vmem:[%s481] sm:$0xff]
        %v1191 = vld [vmem:[%s481 + $0x8] sm:$0xff]
        %v1192 = vld [vmem:[%s481 + $0x10] sm:$0xff]
        %v1193 = vld [vmem:[%s481 + $0x18] sm:$0xff]
        %s1194 = sld [smem:[#allocation2 + $0x114]]
        %v1195 = vstv %s1194
        %v1196 = vmul.f32 %v1190, %v1195
        %v1197 = vmul.f32 %v1191, %v1195
        %v1198 = vmul.f32 %v1192, %v1195
        %v1199 = vmul.f32 %v1193, %v1195
        %v1200 = vadd.f32 %v1186, %v1196
        %v1201 = vadd.f32 %v1187, %v1197
        %v1202 = vadd.f32 %v1188, %v1198
        %v1203 = vadd.f32 %v1189, %v1199
        %v1204 = vld [vmem:[%s494] sm:$0xff]
        %v1205 = vld [vmem:[%s494 + $0x8] sm:$0xff]
        %v1206 = vld [vmem:[%s494 + $0x10] sm:$0xff]
        %v1207 = vld [vmem:[%s494 + $0x18] sm:$0xff]
        %s1208 = sld [smem:[#allocation2 + $0x115]]
        %v1209 = vstv %s1208
        %v1210 = vmul.f32 %v1204, %v1209
        %v1211 = vmul.f32 %v1205, %v1209
        %v1212 = vmul.f32 %v1206, %v1209
        %v1213 = vmul.f32 %v1207, %v1209
        %v1214 = vadd.f32 %v1200, %v1210
        %v1215 = vadd.f32 %v1201, %v1211
        %v1216 = vadd.f32 %v1202, %v1212
        %v1217 = vadd.f32 %v1203, %v1213
        %v1218 = vld [vmem:[%s507] sm:$0xff]
        %v1219 = vld [vmem:[%s507 + $0x8] sm:$0xff]
        %v1220 = vld [vmem:[%s507 + $0x10] sm:$0xff]
        %v1221 = vld [vmem:[%s507 + $0x18] sm:$0xff]
        %s1222 = sld [smem:[#allocation2 + $0x116]]
        %v1223 = vstv %s1222
        %v1224 = vmul.f32 %v1218, %v1223
        %v1225 = vmul.f32 %v1219, %v1223
        %v1226 = vmul.f32 %v1220, %v1223
        %v1227 = vmul.f32 %v1221, %v1223
        %v1228 = vadd.f32 %v1214, %v1224
        %v1229 = vadd.f32 %v1215, %v1225
        %v1230 = vadd.f32 %v1216, %v1226
        %v1231 = vadd.f32 %v1217, %v1227
        %v1232 = vld [vmem:[%s520] sm:$0xff]
        %v1233 = vld [vmem:[%s520 + $0x8] sm:$0xff]
        %v1234 = vld [vmem:[%s520 + $0x10] sm:$0xff]
        %v1235 = vld [vmem:[%s520 + $0x18] sm:$0xff]
        %s1236 = sld [smem:[#allocation2 + $0x117]]
        %v1237 = vstv %s1236
        %v1238 = vmul.f32 %v1232, %v1237
        %v1239 = vmul.f32 %v1233, %v1237
        %v1240 = vmul.f32 %v1234, %v1237
        %v1241 = vmul.f32 %v1235, %v1237
        %v1242 = vadd.f32 %v1228, %v1238
        %v1243 = vadd.f32 %v1229, %v1239
        %v1244 = vadd.f32 %v1230, %v1240
        %v1245 = vadd.f32 %v1231, %v1241
        %v1246 = vld [vmem:[%s533] sm:$0xff]
        %v1247 = vld [vmem:[%s533 + $0x8] sm:$0xff]
        %v1248 = vld [vmem:[%s533 + $0x10] sm:$0xff]
        %v1249 = vld [vmem:[%s533 + $0x18] sm:$0xff]
        %s1250 = sld [smem:[#allocation2 + $0x118]]
        %v1251 = vstv %s1250
        %v1252 = vmul.f32 %v1246, %v1251
        %v1253 = vmul.f32 %v1247, %v1251
        %v1254 = vmul.f32 %v1248, %v1251
        %v1255 = vmul.f32 %v1249, %v1251
        %v1256 = vadd.f32 %v1242, %v1252
        %v1257 = vadd.f32 %v1243, %v1253
        %v1258 = vadd.f32 %v1244, %v1254
        %v1259 = vadd.f32 %v1245, %v1255
        %v1260 = vld [vmem:[%s546] sm:$0xff]
        %v1261 = vld [vmem:[%s546 + $0x8] sm:$0xff]
        %v1262 = vld [vmem:[%s546 + $0x10] sm:$0xff]
        %v1263 = vld [vmem:[%s546 + $0x18] sm:$0xff]
        %s1264 = sld [smem:[#allocation2 + $0x119]]
        %v1265 = vstv %s1264
        %v1266 = vmul.f32 %v1260, %v1265
        %v1267 = vmul.f32 %v1261, %v1265
        %v1268 = vmul.f32 %v1262, %v1265
        %v1269 = vmul.f32 %v1263, %v1265
        %v1270 = vadd.f32 %v1256, %v1266
        %v1271 = vadd.f32 %v1257, %v1267
        %v1272 = vadd.f32 %v1258, %v1268
        %v1273 = vadd.f32 %v1259, %v1269
        %v1274 = vld [vmem:[%s559] sm:$0xff]
        %v1275 = vld [vmem:[%s559 + $0x8] sm:$0xff]
        %v1276 = vld [vmem:[%s559 + $0x10] sm:$0xff]
        %v1277 = vld [vmem:[%s559 + $0x18] sm:$0xff]
        %s1278 = sld [smem:[#allocation2 + $0x11a]]
        %v1279 = vstv %s1278
        %v1280 = vmul.f32 %v1274, %v1279
        %v1281 = vmul.f32 %v1275, %v1279
        %v1282 = vmul.f32 %v1276, %v1279
        %v1283 = vmul.f32 %v1277, %v1279
        %v1284 = vadd.f32 %v1270, %v1280
        %v1285 = vadd.f32 %v1271, %v1281
        %v1286 = vadd.f32 %v1272, %v1282
        %v1287 = vadd.f32 %v1273, %v1283
        %v1288 = vld [vmem:[%s572] sm:$0xff]
        %v1289 = vld [vmem:[%s572 + $0x8] sm:$0xff]
        %v1290 = vld [vmem:[%s572 + $0x10] sm:$0xff]
        %v1291 = vld [vmem:[%s572 + $0x18] sm:$0xff]
        %s1292 = sld [smem:[#allocation2 + $0x11b]]
        %v1293 = vstv %s1292
        %v1294 = vmul.f32 %v1288, %v1293
        %v1295 = vmul.f32 %v1289, %v1293
        %v1296 = vmul.f32 %v1290, %v1293
        %v1297 = vmul.f32 %v1291, %v1293
        %v1298 = vadd.f32 %v1284, %v1294
        %v1299 = vadd.f32 %v1285, %v1295
        %v1300 = vadd.f32 %v1286, %v1296
        %v1301 = vadd.f32 %v1287, %v1297
        %s1302 = scalar_lea.vmem %s237, 64
        %1303 = vst [vmem:[%s1302] sm:$0xff] %v1298
        %1304 = vst [vmem:[%s1302 + $0x8] sm:$0xff] %v1299
        %1305 = vst [vmem:[%s1302 + $0x10] sm:$0xff] %v1300
        %1306 = vst [vmem:[%s1302 + $0x18] sm:$0xff] %v1301
        %v1307 = vmul.f32 %v1298, %v1298
        %v1308 = vmul.f32 %v1299, %v1299
        %v1309 = vmul.f32 %v1300, %v1300
        %v1310 = vmul.f32 %v1301, %v1301
        %v1311 = vadd.f32 %v908, %v1307
        %v1312 = vadd.f32 %v909, %v1308
        %v1313 = vadd.f32 %v910, %v1309
        %v1314 = vadd.f32 %v911, %v1310
        %s1315 = sld [smem:[#allocation2 + $0x180]]
        %v1316 = vstv %s1315
        %v1317 = vmul.f32 %v599, %v1316
        %v1318 = vmul.f32 %v606, %v1316
        %v1319 = vmul.f32 %v613, %v1316
        %v1320 = vmul.f32 %v620, %v1316
        %s1321 = sld [smem:[#allocation4 + $0x3]]
        %v1322 = vstv %s1321
        %v1323 = vadd.f32 %v1317, %v1322
        %v1324 = vadd.f32 %v1318, %v1322
        %v1325 = vadd.f32 %v1319, %v1322
        %v1326 = vadd.f32 %v1320, %v1322
        %v1327 = vld [vmem:[%s227] sm:$0xff]
        %v1328 = vld [vmem:[%s227 + $0x8] sm:$0xff]
        %v1329 = vld [vmem:[%s227 + $0x10] sm:$0xff]
        %v1330 = vld [vmem:[%s227 + $0x18] sm:$0xff]
        %s1331 = sld [smem:[#allocation2 + $0x181]]
        %v1332 = vstv %s1331
        %v1333 = vmul.f32 %v1327, %v1332
        %v1334 = vmul.f32 %v1328, %v1332
        %v1335 = vmul.f32 %v1329, %v1332
        %v1336 = vmul.f32 %v1330, %v1332
        %v1337 = vadd.f32 %v1323, %v1333
        %v1338 = vadd.f32 %v1324, %v1334
        %v1339 = vadd.f32 %v1325, %v1335
        %v1340 = vadd.f32 %v1326, %v1336
        %v1341 = vld [vmem:[%s247] sm:$0xff]
        %v1342 = vld [vmem:[%s247 + $0x8] sm:$0xff]
        %v1343 = vld [vmem:[%s247 + $0x10] sm:$0xff]
        %v1344 = vld [vmem:[%s247 + $0x18] sm:$0xff]
        %s1345 = sld [smem:[#allocation2 + $0x182]]
        %v1346 = vstv %s1345
        %v1347 = vmul.f32 %v1341, %v1346
        %v1348 = vmul.f32 %v1342, %v1346
        %v1349 = vmul.f32 %v1343, %v1346
        %v1350 = vmul.f32 %v1344, %v1346
        %v1351 = vadd.f32 %v1337, %v1347
        %v1352 = vadd.f32 %v1338, %v1348
        %v1353 = vadd.f32 %v1339, %v1349
        %v1354 = vadd.f32 %v1340, %v1350
        %v1355 = vld [vmem:[%s260] sm:$0xff]
        %v1356 = vld [vmem:[%s260 + $0x8] sm:$0xff]
        %v1357 = vld [vmem:[%s260 + $0x10] sm:$0xff]
        %v1358 = vld [vmem:[%s260 + $0x18] sm:$0xff]
        %s1359 = sld [smem:[#allocation2 + $0x183]]
        %v1360 = vstv %s1359
        %v1361 = vmul.f32 %v1355, %v1360
        %v1362 = vmul.f32 %v1356, %v1360
        %v1363 = vmul.f32 %v1357, %v1360
        %v1364 = vmul.f32 %v1358, %v1360
        %v1365 = vadd.f32 %v1351, %v1361
        %v1366 = vadd.f32 %v1352, %v1362
        %v1367 = vadd.f32 %v1353, %v1363
        %v1368 = vadd.f32 %v1354, %v1364
        %v1369 = vld [vmem:[%s273] sm:$0xff]
        %v1370 = vld [vmem:[%s273 + $0x8] sm:$0xff]
        %v1371 = vld [vmem:[%s273 + $0x10] sm:$0xff]
        %v1372 = vld [vmem:[%s273 + $0x18] sm:$0xff]
        %s1373 = sld [smem:[#allocation2 + $0x184]]
        %v1374 = vstv %s1373
        %v1375 = vmul.f32 %v1369, %v1374
        %v1376 = vmul.f32 %v1370, %v1374
        %v1377 = vmul.f32 %v1371, %v1374
        %v1378 = vmul.f32 %v1372, %v1374
        %v1379 = vadd.f32 %v1365, %v1375
        %v1380 = vadd.f32 %v1366, %v1376
        %v1381 = vadd.f32 %v1367, %v1377
        %v1382 = vadd.f32 %v1368, %v1378
        %v1383 = vld [vmem:[%s286] sm:$0xff]
        %v1384 = vld [vmem:[%s286 + $0x8] sm:$0xff]
        %v1385 = vld [vmem:[%s286 + $0x10] sm:$0xff]
        %v1386 = vld [vmem:[%s286 + $0x18] sm:$0xff]
        %s1387 = sld [smem:[#allocation2 + $0x185]]
        %v1388 = vstv %s1387
        %v1389 = vmul.f32 %v1383, %v1388
        %v1390 = vmul.f32 %v1384, %v1388
        %v1391 = vmul.f32 %v1385, %v1388
        %v1392 = vmul.f32 %v1386, %v1388
        %v1393 = vadd.f32 %v1379, %v1389
        %v1394 = vadd.f32 %v1380, %v1390
        %v1395 = vadd.f32 %v1381, %v1391
        %v1396 = vadd.f32 %v1382, %v1392
        %v1397 = vld [vmem:[%s299] sm:$0xff]
        %v1398 = vld [vmem:[%s299 + $0x8] sm:$0xff]
        %v1399 = vld [vmem:[%s299 + $0x10] sm:$0xff]
        %v1400 = vld [vmem:[%s299 + $0x18] sm:$0xff]
        %s1401 = sld [smem:[#allocation2 + $0x186]]
        %v1402 = vstv %s1401
        %v1403 = vmul.f32 %v1397, %v1402
        %v1404 = vmul.f32 %v1398, %v1402
        %v1405 = vmul.f32 %v1399, %v1402
        %v1406 = vmul.f32 %v1400, %v1402
        %v1407 = vadd.f32 %v1393, %v1403
        %v1408 = vadd.f32 %v1394, %v1404
        %v1409 = vadd.f32 %v1395, %v1405
        %v1410 = vadd.f32 %v1396, %v1406
        %v1411 = vld [vmem:[%s312] sm:$0xff]
        %v1412 = vld [vmem:[%s312 + $0x8] sm:$0xff]
        %v1413 = vld [vmem:[%s312 + $0x10] sm:$0xff]
        %v1414 = vld [vmem:[%s312 + $0x18] sm:$0xff]
        %s1415 = sld [smem:[#allocation2 + $0x187]]
        %v1416 = vstv %s1415
        %v1417 = vmul.f32 %v1411, %v1416
        %v1418 = vmul.f32 %v1412, %v1416
        %v1419 = vmul.f32 %v1413, %v1416
        %v1420 = vmul.f32 %v1414, %v1416
        %v1421 = vadd.f32 %v1407, %v1417
        %v1422 = vadd.f32 %v1408, %v1418
        %v1423 = vadd.f32 %v1409, %v1419
        %v1424 = vadd.f32 %v1410, %v1420
        %v1425 = vld [vmem:[%s325] sm:$0xff]
        %v1426 = vld [vmem:[%s325 + $0x8] sm:$0xff]
        %v1427 = vld [vmem:[%s325 + $0x10] sm:$0xff]
        %v1428 = vld [vmem:[%s325 + $0x18] sm:$0xff]
        %s1429 = sld [smem:[#allocation2 + $0x188]]
        %v1430 = vstv %s1429
        %v1431 = vmul.f32 %v1425, %v1430
        %v1432 = vmul.f32 %v1426, %v1430
        %v1433 = vmul.f32 %v1427, %v1430
        %v1434 = vmul.f32 %v1428, %v1430
        %v1435 = vadd.f32 %v1421, %v1431
        %v1436 = vadd.f32 %v1422, %v1432
        %v1437 = vadd.f32 %v1423, %v1433
        %v1438 = vadd.f32 %v1424, %v1434
        %v1439 = vld [vmem:[%s338] sm:$0xff]
        %v1440 = vld [vmem:[%s338 + $0x8] sm:$0xff]
        %v1441 = vld [vmem:[%s338 + $0x10] sm:$0xff]
        %v1442 = vld [vmem:[%s338 + $0x18] sm:$0xff]
        %s1443 = sld [smem:[#allocation2 + $0x189]]
        %v1444 = vstv %s1443
        %v1445 = vmul.f32 %v1439, %v1444
        %v1446 = vmul.f32 %v1440, %v1444
        %v1447 = vmul.f32 %v1441, %v1444
        %v1448 = vmul.f32 %v1442, %v1444
        %v1449 = vadd.f32 %v1435, %v1445
        %v1450 = vadd.f32 %v1436, %v1446
        %v1451 = vadd.f32 %v1437, %v1447
        %v1452 = vadd.f32 %v1438, %v1448
        %v1453 = vld [vmem:[%s351] sm:$0xff]
        %v1454 = vld [vmem:[%s351 + $0x8] sm:$0xff]
        %v1455 = vld [vmem:[%s351 + $0x10] sm:$0xff]
        %v1456 = vld [vmem:[%s351 + $0x18] sm:$0xff]
        %s1457 = sld [smem:[#allocation2 + $0x18a]]
        %v1458 = vstv %s1457
        %v1459 = vmul.f32 %v1453, %v1458
        %v1460 = vmul.f32 %v1454, %v1458
        %v1461 = vmul.f32 %v1455, %v1458
        %v1462 = vmul.f32 %v1456, %v1458
        %v1463 = vadd.f32 %v1449, %v1459
        %v1464 = vadd.f32 %v1450, %v1460
        %v1465 = vadd.f32 %v1451, %v1461
        %v1466 = vadd.f32 %v1452, %v1462
        %v1467 = vld [vmem:[%s364] sm:$0xff]
        %v1468 = vld [vmem:[%s364 + $0x8] sm:$0xff]
        %v1469 = vld [vmem:[%s364 + $0x10] sm:$0xff]
        %v1470 = vld [vmem:[%s364 + $0x18] sm:$0xff]
        %s1471 = sld [smem:[#allocation2 + $0x18b]]
        %v1472 = vstv %s1471
        %v1473 = vmul.f32 %v1467, %v1472
        %v1474 = vmul.f32 %v1468, %v1472
        %v1475 = vmul.f32 %v1469, %v1472
        %v1476 = vmul.f32 %v1470, %v1472
        %v1477 = vadd.f32 %v1463, %v1473
        %v1478 = vadd.f32 %v1464, %v1474
        %v1479 = vadd.f32 %v1465, %v1475
        %v1480 = vadd.f32 %v1466, %v1476
        %v1481 = vld [vmem:[%s377] sm:$0xff]
        %v1482 = vld [vmem:[%s377 + $0x8] sm:$0xff]
        %v1483 = vld [vmem:[%s377 + $0x10] sm:$0xff]
        %v1484 = vld [vmem:[%s377 + $0x18] sm:$0xff]
        %s1485 = sld [smem:[#allocation2 + $0x18c]]
        %v1486 = vstv %s1485
        %v1487 = vmul.f32 %v1481, %v1486
        %v1488 = vmul.f32 %v1482, %v1486
        %v1489 = vmul.f32 %v1483, %v1486
        %v1490 = vmul.f32 %v1484, %v1486
        %v1491 = vadd.f32 %v1477, %v1487
        %v1492 = vadd.f32 %v1478, %v1488
        %v1493 = vadd.f32 %v1479, %v1489
        %v1494 = vadd.f32 %v1480, %v1490
        %v1495 = vld [vmem:[%s390] sm:$0xff]
        %v1496 = vld [vmem:[%s390 + $0x8] sm:$0xff]
        %v1497 = vld [vmem:[%s390 + $0x10] sm:$0xff]
        %v1498 = vld [vmem:[%s390 + $0x18] sm:$0xff]
        %s1499 = sld [smem:[#allocation2 + $0x18d]]
        %v1500 = vstv %s1499
        %v1501 = vmul.f32 %v1495, %v1500
        %v1502 = vmul.f32 %v1496, %v1500
        %v1503 = vmul.f32 %v1497, %v1500
        %v1504 = vmul.f32 %v1498, %v1500
        %v1505 = vadd.f32 %v1491, %v1501
        %v1506 = vadd.f32 %v1492, %v1502
        %v1507 = vadd.f32 %v1493, %v1503
        %v1508 = vadd.f32 %v1494, %v1504
        %v1509 = vld [vmem:[%s403] sm:$0xff]
        %v1510 = vld [vmem:[%s403 + $0x8] sm:$0xff]
        %v1511 = vld [vmem:[%s403 + $0x10] sm:$0xff]
        %v1512 = vld [vmem:[%s403 + $0x18] sm:$0xff]
        %s1513 = sld [smem:[#allocation2 + $0x18e]]
        %v1514 = vstv %s1513
        %v1515 = vmul.f32 %v1509, %v1514
        %v1516 = vmul.f32 %v1510, %v1514
        %v1517 = vmul.f32 %v1511, %v1514
        %v1518 = vmul.f32 %v1512, %v1514
        %v1519 = vadd.f32 %v1505, %v1515
        %v1520 = vadd.f32 %v1506, %v1516
        %v1521 = vadd.f32 %v1507, %v1517
        %v1522 = vadd.f32 %v1508, %v1518
        %v1523 = vld [vmem:[%s416] sm:$0xff]
        %v1524 = vld [vmem:[%s416 + $0x8] sm:$0xff]
        %v1525 = vld [vmem:[%s416 + $0x10] sm:$0xff]
        %v1526 = vld [vmem:[%s416 + $0x18] sm:$0xff]
        %s1527 = sld [smem:[#allocation2 + $0x18f]]
        %v1528 = vstv %s1527
        %v1529 = vmul.f32 %v1523, %v1528
        %v1530 = vmul.f32 %v1524, %v1528
        %v1531 = vmul.f32 %v1525, %v1528
        %v1532 = vmul.f32 %v1526, %v1528
        %v1533 = vadd.f32 %v1519, %v1529
        %v1534 = vadd.f32 %v1520, %v1530
        %v1535 = vadd.f32 %v1521, %v1531
        %v1536 = vadd.f32 %v1522, %v1532
        %v1537 = vld [vmem:[%s429] sm:$0xff]
        %v1538 = vld [vmem:[%s429 + $0x8] sm:$0xff]
        %v1539 = vld [vmem:[%s429 + $0x10] sm:$0xff]
        %v1540 = vld [vmem:[%s429 + $0x18] sm:$0xff]
        %s1541 = sld [smem:[#allocation2 + $0x190]]
        %v1542 = vstv %s1541
        %v1543 = vmul.f32 %v1537, %v1542
        %v1544 = vmul.f32 %v1538, %v1542
        %v1545 = vmul.f32 %v1539, %v1542
        %v1546 = vmul.f32 %v1540, %v1542
        %v1547 = vadd.f32 %v1533, %v1543
        %v1548 = vadd.f32 %v1534, %v1544
        %v1549 = vadd.f32 %v1535, %v1545
        %v1550 = vadd.f32 %v1536, %v1546
        %v1551 = vld [vmem:[%s442] sm:$0xff]
        %v1552 = vld [vmem:[%s442 + $0x8] sm:$0xff]
        %v1553 = vld [vmem:[%s442 + $0x10] sm:$0xff]
        %v1554 = vld [vmem:[%s442 + $0x18] sm:$0xff]
        %s1555 = sld [smem:[#allocation2 + $0x191]]
        %v1556 = vstv %s1555
        %v1557 = vmul.f32 %v1551, %v1556
        %v1558 = vmul.f32 %v1552, %v1556
        %v1559 = vmul.f32 %v1553, %v1556
        %v1560 = vmul.f32 %v1554, %v1556
        %v1561 = vadd.f32 %v1547, %v1557
        %v1562 = vadd.f32 %v1548, %v1558
        %v1563 = vadd.f32 %v1549, %v1559
        %v1564 = vadd.f32 %v1550, %v1560
        %v1565 = vld [vmem:[%s455] sm:$0xff]
        %v1566 = vld [vmem:[%s455 + $0x8] sm:$0xff]
        %v1567 = vld [vmem:[%s455 + $0x10] sm:$0xff]
        %v1568 = vld [vmem:[%s455 + $0x18] sm:$0xff]
        %s1569 = sld [smem:[#allocation2 + $0x192]]
        %v1570 = vstv %s1569
        %v1571 = vmul.f32 %v1565, %v1570
        %v1572 = vmul.f32 %v1566, %v1570
        %v1573 = vmul.f32 %v1567, %v1570
        %v1574 = vmul.f32 %v1568, %v1570
        %v1575 = vadd.f32 %v1561, %v1571
        %v1576 = vadd.f32 %v1562, %v1572
        %v1577 = vadd.f32 %v1563, %v1573
        %v1578 = vadd.f32 %v1564, %v1574
        %v1579 = vld [vmem:[%s468] sm:$0xff]
        %v1580 = vld [vmem:[%s468 + $0x8] sm:$0xff]
        %v1581 = vld [vmem:[%s468 + $0x10] sm:$0xff]
        %v1582 = vld [vmem:[%s468 + $0x18] sm:$0xff]
        %s1583 = sld [smem:[#allocation2 + $0x193]]
        %v1584 = vstv %s1583
        %v1585 = vmul.f32 %v1579, %v1584
        %v1586 = vmul.f32 %v1580, %v1584
        %v1587 = vmul.f32 %v1581, %v1584
        %v1588 = vmul.f32 %v1582, %v1584
        %v1589 = vadd.f32 %v1575, %v1585
        %v1590 = vadd.f32 %v1576, %v1586
        %v1591 = vadd.f32 %v1577, %v1587
        %v1592 = vadd.f32 %v1578, %v1588
        %v1593 = vld [vmem:[%s481] sm:$0xff]
        %v1594 = vld [vmem:[%s481 + $0x8] sm:$0xff]
        %v1595 = vld [vmem:[%s481 + $0x10] sm:$0xff]
        %v1596 = vld [vmem:[%s481 + $0x18] sm:$0xff]
        %s1597 = sld [smem:[#allocation2 + $0x194]]
        %v1598 = vstv %s1597
        %v1599 = vmul.f32 %v1593, %v1598
        %v1600 = vmul.f32 %v1594, %v1598
        %v1601 = vmul.f32 %v1595, %v1598
        %v1602 = vmul.f32 %v1596, %v1598
        %v1603 = vadd.f32 %v1589, %v1599
        %v1604 = vadd.f32 %v1590, %v1600
        %v1605 = vadd.f32 %v1591, %v1601
        %v1606 = vadd.f32 %v1592, %v1602
        %v1607 = vld [vmem:[%s494] sm:$0xff]
        %v1608 = vld [vmem:[%s494 + $0x8] sm:$0xff]
        %v1609 = vld [vmem:[%s494 + $0x10] sm:$0xff]
        %v1610 = vld [vmem:[%s494 + $0x18] sm:$0xff]
        %s1611 = sld [smem:[#allocation2 + $0x195]]
        %v1612 = vstv %s1611
        %v1613 = vmul.f32 %v1607, %v1612
        %v1614 = vmul.f32 %v1608, %v1612
        %v1615 = vmul.f32 %v1609, %v1612
        %v1616 = vmul.f32 %v1610, %v1612
        %v1617 = vadd.f32 %v1603, %v1613
        %v1618 = vadd.f32 %v1604, %v1614
        %v1619 = vadd.f32 %v1605, %v1615
        %v1620 = vadd.f32 %v1606, %v1616
        %v1621 = vld [vmem:[%s507] sm:$0xff]
        %v1622 = vld [vmem:[%s507 + $0x8] sm:$0xff]
        %v1623 = vld [vmem:[%s507 + $0x10] sm:$0xff]
        %v1624 = vld [vmem:[%s507 + $0x18] sm:$0xff]
        %s1625 = sld [smem:[#allocation2 + $0x196]]
        %v1626 = vstv %s1625
        %v1627 = vmul.f32 %v1621, %v1626
        %v1628 = vmul.f32 %v1622, %v1626
        %v1629 = vmul.f32 %v1623, %v1626
        %v1630 = vmul.f32 %v1624, %v1626
        %v1631 = vadd.f32 %v1617, %v1627
        %v1632 = vadd.f32 %v1618, %v1628
        %v1633 = vadd.f32 %v1619, %v1629
        %v1634 = vadd.f32 %v1620, %v1630
        %v1635 = vld [vmem:[%s520] sm:$0xff]
        %v1636 = vld [vmem:[%s520 + $0x8] sm:$0xff]
        %v1637 = vld [vmem:[%s520 + $0x10] sm:$0xff]
        %v1638 = vld [vmem:[%s520 + $0x18] sm:$0xff]
        %s1639 = sld [smem:[#allocation2 + $0x197]]
        %v1640 = vstv %s1639
        %v1641 = vmul.f32 %v1635, %v1640
        %v1642 = vmul.f32 %v1636, %v1640
        %v1643 = vmul.f32 %v1637, %v1640
        %v1644 = vmul.f32 %v1638, %v1640
        %v1645 = vadd.f32 %v1631, %v1641
        %v1646 = vadd.f32 %v1632, %v1642
        %v1647 = vadd.f32 %v1633, %v1643
        %v1648 = vadd.f32 %v1634, %v1644
        %v1649 = vld [vmem:[%s533] sm:$0xff]
        %v1650 = vld [vmem:[%s533 + $0x8] sm:$0xff]
        %v1651 = vld [vmem:[%s533 + $0x10] sm:$0xff]
        %v1652 = vld [vmem:[%s533 + $0x18] sm:$0xff]
        %s1653 = sld [smem:[#allocation2 + $0x198]]
        %v1654 = vstv %s1653
        %v1655 = vmul.f32 %v1649, %v1654
        %v1656 = vmul.f32 %v1650, %v1654
        %v1657 = vmul.f32 %v1651, %v1654
        %v1658 = vmul.f32 %v1652, %v1654
        %v1659 = vadd.f32 %v1645, %v1655
        %v1660 = vadd.f32 %v1646, %v1656
        %v1661 = vadd.f32 %v1647, %v1657
        %v1662 = vadd.f32 %v1648, %v1658
        %v1663 = vld [vmem:[%s546] sm:$0xff]
        %v1664 = vld [vmem:[%s546 + $0x8] sm:$0xff]
        %v1665 = vld [vmem:[%s546 + $0x10] sm:$0xff]
        %v1666 = vld [vmem:[%s546 + $0x18] sm:$0xff]
        %s1667 = sld [smem:[#allocation2 + $0x199]]
        %v1668 = vstv %s1667
        %v1669 = vmul.f32 %v1663, %v1668
        %v1670 = vmul.f32 %v1664, %v1668
        %v1671 = vmul.f32 %v1665, %v1668
        %v1672 = vmul.f32 %v1666, %v1668
        %v1673 = vadd.f32 %v1659, %v1669
        %v1674 = vadd.f32 %v1660, %v1670
        %v1675 = vadd.f32 %v1661, %v1671
        %v1676 = vadd.f32 %v1662, %v1672
        %v1677 = vld [vmem:[%s559] sm:$0xff]
        %v1678 = vld [vmem:[%s559 + $0x8] sm:$0xff]
        %v1679 = vld [vmem:[%s559 + $0x10] sm:$0xff]
        %v1680 = vld [vmem:[%s559 + $0x18] sm:$0xff]
        %s1681 = sld [smem:[#allocation2 + $0x19a]]
        %v1682 = vstv %s1681
        %v1683 = vmul.f32 %v1677, %v1682
        %v1684 = vmul.f32 %v1678, %v1682
        %v1685 = vmul.f32 %v1679, %v1682
        %v1686 = vmul.f32 %v1680, %v1682
        %v1687 = vadd.f32 %v1673, %v1683
        %v1688 = vadd.f32 %v1674, %v1684
        %v1689 = vadd.f32 %v1675, %v1685
        %v1690 = vadd.f32 %v1676, %v1686
        %v1691 = vld [vmem:[%s572] sm:$0xff]
        %v1692 = vld [vmem:[%s572 + $0x8] sm:$0xff]
        %v1693 = vld [vmem:[%s572 + $0x10] sm:$0xff]
        %v1694 = vld [vmem:[%s572 + $0x18] sm:$0xff]
        %s1695 = sld [smem:[#allocation2 + $0x19b]]
        %v1696 = vstv %s1695
        %v1697 = vmul.f32 %v1691, %v1696
        %v1698 = vmul.f32 %v1692, %v1696
        %v1699 = vmul.f32 %v1693, %v1696
        %v1700 = vmul.f32 %v1694, %v1696
        %v1701 = vadd.f32 %v1687, %v1697
        %v1702 = vadd.f32 %v1688, %v1698
        %v1703 = vadd.f32 %v1689, %v1699
        %v1704 = vadd.f32 %v1690, %v1700
        %s1705 = scalar_lea.vmem %s237, 96
        %1706 = vst [vmem:[%s1705] sm:$0xff] %v1701
        %1707 = vst [vmem:[%s1705 + $0x8] sm:$0xff] %v1702
        %1708 = vst [vmem:[%s1705 + $0x10] sm:$0xff] %v1703
        %1709 = vst [vmem:[%s1705 + $0x18] sm:$0xff] %v1704
        %v1710 = vmul.f32 %v1701, %v1701
        %v1711 = vmul.f32 %v1702, %v1702
        %v1712 = vmul.f32 %v1703, %v1703
        %v1713 = vmul.f32 %v1704, %v1704
        %v1714 = vadd.f32 %v1311, %v1710
        %v1715 = vadd.f32 %v1312, %v1711
        %v1716 = vadd.f32 %v1313, %v1712
        %v1717 = vadd.f32 %v1314, %v1713
        %s1718 = sld [smem:[#allocation2 + $0x200]]
        %v1719 = vstv %s1718
        %v1720 = vmul.f32 %v599, %v1719
        %v1721 = vmul.f32 %v606, %v1719
        %v1722 = vmul.f32 %v613, %v1719
        %v1723 = vmul.f32 %v620, %v1719
        %s1724 = sld [smem:[#allocation4 + $0x4]]
        %v1725 = vstv %s1724
        %v1726 = vadd.f32 %v1720, %v1725
        %v1727 = vadd.f32 %v1721, %v1725
        %v1728 = vadd.f32 %v1722, %v1725
        %v1729 = vadd.f32 %v1723, %v1725
        %v1730 = vld [vmem:[%s227] sm:$0xff]
        %v1731 = vld [vmem:[%s227 + $0x8] sm:$0xff]
        %v1732 = vld [vmem:[%s227 + $0x10] sm:$0xff]
        %v1733 = vld [vmem:[%s227 + $0x18] sm:$0xff]
        %s1734 = sld [smem:[#allocation2 + $0x201]]
        %v1735 = vstv %s1734
        %v1736 = vmul.f32 %v1730, %v1735
        %v1737 = vmul.f32 %v1731, %v1735
        %v1738 = vmul.f32 %v1732, %v1735
        %v1739 = vmul.f32 %v1733, %v1735
        %v1740 = vadd.f32 %v1726, %v1736
        %v1741 = vadd.f32 %v1727, %v1737
        %v1742 = vadd.f32 %v1728, %v1738
        %v1743 = vadd.f32 %v1729, %v1739
        %v1744 = vld [vmem:[%s247] sm:$0xff]
        %v1745 = vld [vmem:[%s247 + $0x8] sm:$0xff]
        %v1746 = vld [vmem:[%s247 + $0x10] sm:$0xff]
        %v1747 = vld [vmem:[%s247 + $0x18] sm:$0xff]
        %s1748 = sld [smem:[#allocation2 + $0x202]]
        %v1749 = vstv %s1748
        %v1750 = vmul.f32 %v1744, %v1749
        %v1751 = vmul.f32 %v1745, %v1749
        %v1752 = vmul.f32 %v1746, %v1749
        %v1753 = vmul.f32 %v1747, %v1749
        %v1754 = vadd.f32 %v1740, %v1750
        %v1755 = vadd.f32 %v1741, %v1751
        %v1756 = vadd.f32 %v1742, %v1752
        %v1757 = vadd.f32 %v1743, %v1753
        %v1758 = vld [vmem:[%s260] sm:$0xff]
        %v1759 = vld [vmem:[%s260 + $0x8] sm:$0xff]
        %v1760 = vld [vmem:[%s260 + $0x10] sm:$0xff]
        %v1761 = vld [vmem:[%s260 + $0x18] sm:$0xff]
        %s1762 = sld [smem:[#allocation2 + $0x203]]
        %v1763 = vstv %s1762
        %v1764 = vmul.f32 %v1758, %v1763
        %v1765 = vmul.f32 %v1759, %v1763
        %v1766 = vmul.f32 %v1760, %v1763
        %v1767 = vmul.f32 %v1761, %v1763
        %v1768 = vadd.f32 %v1754, %v1764
        %v1769 = vadd.f32 %v1755, %v1765
        %v1770 = vadd.f32 %v1756, %v1766
        %v1771 = vadd.f32 %v1757, %v1767
        %v1772 = vld [vmem:[%s273] sm:$0xff]
        %v1773 = vld [vmem:[%s273 + $0x8] sm:$0xff]
        %v1774 = vld [vmem:[%s273 + $0x10] sm:$0xff]
        %v1775 = vld [vmem:[%s273 + $0x18] sm:$0xff]
        %s1776 = sld [smem:[#allocation2 + $0x204]]
        %v1777 = vstv %s1776
        %v1778 = vmul.f32 %v1772, %v1777
        %v1779 = vmul.f32 %v1773, %v1777
        %v1780 = vmul.f32 %v1774, %v1777
        %v1781 = vmul.f32 %v1775, %v1777
        %v1782 = vadd.f32 %v1768, %v1778
        %v1783 = vadd.f32 %v1769, %v1779
        %v1784 = vadd.f32 %v1770, %v1780
        %v1785 = vadd.f32 %v1771, %v1781
        %v1786 = vld [vmem:[%s286] sm:$0xff]
        %v1787 = vld [vmem:[%s286 + $0x8] sm:$0xff]
        %v1788 = vld [vmem:[%s286 + $0x10] sm:$0xff]
        %v1789 = vld [vmem:[%s286 + $0x18] sm:$0xff]
        %s1790 = sld [smem:[#allocation2 + $0x205]]
        %v1791 = vstv %s1790
        %v1792 = vmul.f32 %v1786, %v1791
        %v1793 = vmul.f32 %v1787, %v1791
        %v1794 = vmul.f32 %v1788, %v1791
        %v1795 = vmul.f32 %v1789, %v1791
        %v1796 = vadd.f32 %v1782, %v1792
        %v1797 = vadd.f32 %v1783, %v1793
        %v1798 = vadd.f32 %v1784, %v1794
        %v1799 = vadd.f32 %v1785, %v1795
        %v1800 = vld [vmem:[%s299] sm:$0xff]
        %v1801 = vld [vmem:[%s299 + $0x8] sm:$0xff]
        %v1802 = vld [vmem:[%s299 + $0x10] sm:$0xff]
        %v1803 = vld [vmem:[%s299 + $0x18] sm:$0xff]
        %s1804 = sld [smem:[#allocation2 + $0x206]]
        %v1805 = vstv %s1804
        %v1806 = vmul.f32 %v1800, %v1805
        %v1807 = vmul.f32 %v1801, %v1805
        %v1808 = vmul.f32 %v1802, %v1805
        %v1809 = vmul.f32 %v1803, %v1805
        %v1810 = vadd.f32 %v1796, %v1806
        %v1811 = vadd.f32 %v1797, %v1807
        %v1812 = vadd.f32 %v1798, %v1808
        %v1813 = vadd.f32 %v1799, %v1809
        %v1814 = vld [vmem:[%s312] sm:$0xff]
        %v1815 = vld [vmem:[%s312 + $0x8] sm:$0xff]
        %v1816 = vld [vmem:[%s312 + $0x10] sm:$0xff]
        %v1817 = vld [vmem:[%s312 + $0x18] sm:$0xff]
        %s1818 = sld [smem:[#allocation2 + $0x207]]
        %v1819 = vstv %s1818
        %v1820 = vmul.f32 %v1814, %v1819
        %v1821 = vmul.f32 %v1815, %v1819
        %v1822 = vmul.f32 %v1816, %v1819
        %v1823 = vmul.f32 %v1817, %v1819
        %v1824 = vadd.f32 %v1810, %v1820
        %v1825 = vadd.f32 %v1811, %v1821
        %v1826 = vadd.f32 %v1812, %v1822
        %v1827 = vadd.f32 %v1813, %v1823
        %v1828 = vld [vmem:[%s325] sm:$0xff]
        %v1829 = vld [vmem:[%s325 + $0x8] sm:$0xff]
        %v1830 = vld [vmem:[%s325 + $0x10] sm:$0xff]
        %v1831 = vld [vmem:[%s325 + $0x18] sm:$0xff]
        %s1832 = sld [smem:[#allocation2 + $0x208]]
        %v1833 = vstv %s1832
        %v1834 = vmul.f32 %v1828, %v1833
        %v1835 = vmul.f32 %v1829, %v1833
        %v1836 = vmul.f32 %v1830, %v1833
        %v1837 = vmul.f32 %v1831, %v1833
        %v1838 = vadd.f32 %v1824, %v1834
        %v1839 = vadd.f32 %v1825, %v1835
        %v1840 = vadd.f32 %v1826, %v1836
        %v1841 = vadd.f32 %v1827, %v1837
        %v1842 = vld [vmem:[%s338] sm:$0xff]
        %v1843 = vld [vmem:[%s338 + $0x8] sm:$0xff]
        %v1844 = vld [vmem:[%s338 + $0x10] sm:$0xff]
        %v1845 = vld [vmem:[%s338 + $0x18] sm:$0xff]
        %s1846 = sld [smem:[#allocation2 + $0x209]]
        %v1847 = vstv %s1846
        %v1848 = vmul.f32 %v1842, %v1847
        %v1849 = vmul.f32 %v1843, %v1847
        %v1850 = vmul.f32 %v1844, %v1847
        %v1851 = vmul.f32 %v1845, %v1847
        %v1852 = vadd.f32 %v1838, %v1848
        %v1853 = vadd.f32 %v1839, %v1849
        %v1854 = vadd.f32 %v1840, %v1850
        %v1855 = vadd.f32 %v1841, %v1851
        %v1856 = vld [vmem:[%s351] sm:$0xff]
        %v1857 = vld [vmem:[%s351 + $0x8] sm:$0xff]
        %v1858 = vld [vmem:[%s351 + $0x10] sm:$0xff]
        %v1859 = vld [vmem:[%s351 + $0x18] sm:$0xff]
        %s1860 = sld [smem:[#allocation2 + $0x20a]]
        %v1861 = vstv %s1860
        %v1862 = vmul.f32 %v1856, %v1861
        %v1863 = vmul.f32 %v1857, %v1861
        %v1864 = vmul.f32 %v1858, %v1861
        %v1865 = vmul.f32 %v1859, %v1861
        %v1866 = vadd.f32 %v1852, %v1862
        %v1867 = vadd.f32 %v1853, %v1863
        %v1868 = vadd.f32 %v1854, %v1864
        %v1869 = vadd.f32 %v1855, %v1865
        %v1870 = vld [vmem:[%s364] sm:$0xff]
        %v1871 = vld [vmem:[%s364 + $0x8] sm:$0xff]
        %v1872 = vld [vmem:[%s364 + $0x10] sm:$0xff]
        %v1873 = vld [vmem:[%s364 + $0x18] sm:$0xff]
        %s1874 = sld [smem:[#allocation2 + $0x20b]]
        %v1875 = vstv %s1874
        %v1876 = vmul.f32 %v1870, %v1875
        %v1877 = vmul.f32 %v1871, %v1875
        %v1878 = vmul.f32 %v1872, %v1875
        %v1879 = vmul.f32 %v1873, %v1875
        %v1880 = vadd.f32 %v1866, %v1876
        %v1881 = vadd.f32 %v1867, %v1877
        %v1882 = vadd.f32 %v1868, %v1878
        %v1883 = vadd.f32 %v1869, %v1879
        %v1884 = vld [vmem:[%s377] sm:$0xff]
        %v1885 = vld [vmem:[%s377 + $0x8] sm:$0xff]
        %v1886 = vld [vmem:[%s377 + $0x10] sm:$0xff]
        %v1887 = vld [vmem:[%s377 + $0x18] sm:$0xff]
        %s1888 = sld [smem:[#allocation2 + $0x20c]]
        %v1889 = vstv %s1888
        %v1890 = vmul.f32 %v1884, %v1889
        %v1891 = vmul.f32 %v1885, %v1889
        %v1892 = vmul.f32 %v1886, %v1889
        %v1893 = vmul.f32 %v1887, %v1889
        %v1894 = vadd.f32 %v1880, %v1890
        %v1895 = vadd.f32 %v1881, %v1891
        %v1896 = vadd.f32 %v1882, %v1892
        %v1897 = vadd.f32 %v1883, %v1893
        %v1898 = vld [vmem:[%s390] sm:$0xff]
        %v1899 = vld [vmem:[%s390 + $0x8] sm:$0xff]
        %v1900 = vld [vmem:[%s390 + $0x10] sm:$0xff]
        %v1901 = vld [vmem:[%s390 + $0x18] sm:$0xff]
        %s1902 = sld [smem:[#allocation2 + $0x20d]]
        %v1903 = vstv %s1902
        %v1904 = vmul.f32 %v1898, %v1903
        %v1905 = vmul.f32 %v1899, %v1903
        %v1906 = vmul.f32 %v1900, %v1903
        %v1907 = vmul.f32 %v1901, %v1903
        %v1908 = vadd.f32 %v1894, %v1904
        %v1909 = vadd.f32 %v1895, %v1905
        %v1910 = vadd.f32 %v1896, %v1906
        %v1911 = vadd.f32 %v1897, %v1907
        %v1912 = vld [vmem:[%s403] sm:$0xff]
        %v1913 = vld [vmem:[%s403 + $0x8] sm:$0xff]
        %v1914 = vld [vmem:[%s403 + $0x10] sm:$0xff]
        %v1915 = vld [vmem:[%s403 + $0x18] sm:$0xff]
        %s1916 = sld [smem:[#allocation2 + $0x20e]]
        %v1917 = vstv %s1916
        %v1918 = vmul.f32 %v1912, %v1917
        %v1919 = vmul.f32 %v1913, %v1917
        %v1920 = vmul.f32 %v1914, %v1917
        %v1921 = vmul.f32 %v1915, %v1917
        %v1922 = vadd.f32 %v1908, %v1918
        %v1923 = vadd.f32 %v1909, %v1919
        %v1924 = vadd.f32 %v1910, %v1920
        %v1925 = vadd.f32 %v1911, %v1921
        %v1926 = vld [vmem:[%s416] sm:$0xff]
        %v1927 = vld [vmem:[%s416 + $0x8] sm:$0xff]
        %v1928 = vld [vmem:[%s416 + $0x10] sm:$0xff]
        %v1929 = vld [vmem:[%s416 + $0x18] sm:$0xff]
        %s1930 = sld [smem:[#allocation2 + $0x20f]]
        %v1931 = vstv %s1930
        %v1932 = vmul.f32 %v1926, %v1931
        %v1933 = vmul.f32 %v1927, %v1931
        %v1934 = vmul.f32 %v1928, %v1931
        %v1935 = vmul.f32 %v1929, %v1931
        %v1936 = vadd.f32 %v1922, %v1932
        %v1937 = vadd.f32 %v1923, %v1933
        %v1938 = vadd.f32 %v1924, %v1934
        %v1939 = vadd.f32 %v1925, %v1935
        %v1940 = vld [vmem:[%s429] sm:$0xff]
        %v1941 = vld [vmem:[%s429 + $0x8] sm:$0xff]
        %v1942 = vld [vmem:[%s429 + $0x10] sm:$0xff]
        %v1943 = vld [vmem:[%s429 + $0x18] sm:$0xff]
        %s1944 = sld [smem:[#allocation2 + $0x210]]
        %v1945 = vstv %s1944
        %v1946 = vmul.f32 %v1940, %v1945
        %v1947 = vmul.f32 %v1941, %v1945
        %v1948 = vmul.f32 %v1942, %v1945
        %v1949 = vmul.f32 %v1943, %v1945
        %v1950 = vadd.f32 %v1936, %v1946
        %v1951 = vadd.f32 %v1937, %v1947
        %v1952 = vadd.f32 %v1938, %v1948
        %v1953 = vadd.f32 %v1939, %v1949
        %v1954 = vld [vmem:[%s442] sm:$0xff]
        %v1955 = vld [vmem:[%s442 + $0x8] sm:$0xff]
        %v1956 = vld [vmem:[%s442 + $0x10] sm:$0xff]
        %v1957 = vld [vmem:[%s442 + $0x18] sm:$0xff]
        %s1958 = sld [smem:[#allocation2 + $0x211]]
        %v1959 = vstv %s1958
        %v1960 = vmul.f32 %v1954, %v1959
        %v1961 = vmul.f32 %v1955, %v1959
        %v1962 = vmul.f32 %v1956, %v1959
        %v1963 = vmul.f32 %v1957, %v1959
        %v1964 = vadd.f32 %v1950, %v1960
        %v1965 = vadd.f32 %v1951, %v1961
        %v1966 = vadd.f32 %v1952, %v1962
        %v1967 = vadd.f32 %v1953, %v1963
        %v1968 = vld [vmem:[%s455] sm:$0xff]
        %v1969 = vld [vmem:[%s455 + $0x8] sm:$0xff]
        %v1970 = vld [vmem:[%s455 + $0x10] sm:$0xff]
        %v1971 = vld [vmem:[%s455 + $0x18] sm:$0xff]
        %s1972 = sld [smem:[#allocation2 + $0x212]]
        %v1973 = vstv %s1972
        %v1974 = vmul.f32 %v1968, %v1973
        %v1975 = vmul.f32 %v1969, %v1973
        %v1976 = vmul.f32 %v1970, %v1973
        %v1977 = vmul.f32 %v1971, %v1973
        %v1978 = vadd.f32 %v1964, %v1974
        %v1979 = vadd.f32 %v1965, %v1975
        %v1980 = vadd.f32 %v1966, %v1976
        %v1981 = vadd.f32 %v1967, %v1977
        %v1982 = vld [vmem:[%s468] sm:$0xff]
        %v1983 = vld [vmem:[%s468 + $0x8] sm:$0xff]
        %v1984 = vld [vmem:[%s468 + $0x10] sm:$0xff]
        %v1985 = vld [vmem:[%s468 + $0x18] sm:$0xff]
        %s1986 = sld [smem:[#allocation2 + $0x213]]
        %v1987 = vstv %s1986
        %v1988 = vmul.f32 %v1982, %v1987
        %v1989 = vmul.f32 %v1983, %v1987
        %v1990 = vmul.f32 %v1984, %v1987
        %v1991 = vmul.f32 %v1985, %v1987
        %v1992 = vadd.f32 %v1978, %v1988
        %v1993 = vadd.f32 %v1979, %v1989
        %v1994 = vadd.f32 %v1980, %v1990
        %v1995 = vadd.f32 %v1981, %v1991
        %v1996 = vld [vmem:[%s481] sm:$0xff]
        %v1997 = vld [vmem:[%s481 + $0x8] sm:$0xff]
        %v1998 = vld [vmem:[%s481 + $0x10] sm:$0xff]
        %v1999 = vld [vmem:[%s481 + $0x18] sm:$0xff]
        %s2000 = sld [smem:[#allocation2 + $0x214]]
        %v2001 = vstv %s2000
        %v2002 = vmul.f32 %v1996, %v2001
        %v2003 = vmul.f32 %v1997, %v2001
        %v2004 = vmul.f32 %v1998, %v2001
        %v2005 = vmul.f32 %v1999, %v2001
        %v2006 = vadd.f32 %v1992, %v2002
        %v2007 = vadd.f32 %v1993, %v2003
        %v2008 = vadd.f32 %v1994, %v2004
        %v2009 = vadd.f32 %v1995, %v2005
        %v2010 = vld [vmem:[%s494] sm:$0xff]
        %v2011 = vld [vmem:[%s494 + $0x8] sm:$0xff]
        %v2012 = vld [vmem:[%s494 + $0x10] sm:$0xff]
        %v2013 = vld [vmem:[%s494 + $0x18] sm:$0xff]
        %s2014 = sld [smem:[#allocation2 + $0x215]]
        %v2015 = vstv %s2014
        %v2016 = vmul.f32 %v2010, %v2015
        %v2017 = vmul.f32 %v2011, %v2015
        %v2018 = vmul.f32 %v2012, %v2015
        %v2019 = vmul.f32 %v2013, %v2015
        %v2020 = vadd.f32 %v2006, %v2016
        %v2021 = vadd.f32 %v2007, %v2017
        %v2022 = vadd.f32 %v2008, %v2018
        %v2023 = vadd.f32 %v2009, %v2019
        %v2024 = vld [vmem:[%s507] sm:$0xff]
        %v2025 = vld [vmem:[%s507 + $0x8] sm:$0xff]
        %v2026 = vld [vmem:[%s507 + $0x10] sm:$0xff]
        %v2027 = vld [vmem:[%s507 + $0x18] sm:$0xff]
        %s2028 = sld [smem:[#allocation2 + $0x216]]
        %v2029 = vstv %s2028
        %v2030 = vmul.f32 %v2024, %v2029
        %v2031 = vmul.f32 %v2025, %v2029
        %v2032 = vmul.f32 %v2026, %v2029
        %v2033 = vmul.f32 %v2027, %v2029
        %v2034 = vadd.f32 %v2020, %v2030
        %v2035 = vadd.f32 %v2021, %v2031
        %v2036 = vadd.f32 %v2022, %v2032
        %v2037 = vadd.f32 %v2023, %v2033
        %v2038 = vld [vmem:[%s520] sm:$0xff]
        %v2039 = vld [vmem:[%s520 + $0x8] sm:$0xff]
        %v2040 = vld [vmem:[%s520 + $0x10] sm:$0xff]
        %v2041 = vld [vmem:[%s520 + $0x18] sm:$0xff]
        %s2042 = sld [smem:[#allocation2 + $0x217]]
        %v2043 = vstv %s2042
        %v2044 = vmul.f32 %v2038, %v2043
        %v2045 = vmul.f32 %v2039, %v2043
        %v2046 = vmul.f32 %v2040, %v2043
        %v2047 = vmul.f32 %v2041, %v2043
        %v2048 = vadd.f32 %v2034, %v2044
        %v2049 = vadd.f32 %v2035, %v2045
        %v2050 = vadd.f32 %v2036, %v2046
        %v2051 = vadd.f32 %v2037, %v2047
        %v2052 = vld [vmem:[%s533] sm:$0xff]
        %v2053 = vld [vmem:[%s533 + $0x8] sm:$0xff]
        %v2054 = vld [vmem:[%s533 + $0x10] sm:$0xff]
        %v2055 = vld [vmem:[%s533 + $0x18] sm:$0xff]
        %s2056 = sld [smem:[#allocation2 + $0x218]]
        %v2057 = vstv %s2056
        %v2058 = vmul.f32 %v2052, %v2057
        %v2059 = vmul.f32 %v2053, %v2057
        %v2060 = vmul.f32 %v2054, %v2057
        %v2061 = vmul.f32 %v2055, %v2057
        %v2062 = vadd.f32 %v2048, %v2058
        %v2063 = vadd.f32 %v2049, %v2059
        %v2064 = vadd.f32 %v2050, %v2060
        %v2065 = vadd.f32 %v2051, %v2061
        %v2066 = vld [vmem:[%s546] sm:$0xff]
        %v2067 = vld [vmem:[%s546 + $0x8] sm:$0xff]
        %v2068 = vld [vmem:[%s546 + $0x10] sm:$0xff]
        %v2069 = vld [vmem:[%s546 + $0x18] sm:$0xff]
        %s2070 = sld [smem:[#allocation2 + $0x219]]
        %v2071 = vstv %s2070
        %v2072 = vmul.f32 %v2066, %v2071
        %v2073 = vmul.f32 %v2067, %v2071
        %v2074 = vmul.f32 %v2068, %v2071
        %v2075 = vmul.f32 %v2069, %v2071
        %v2076 = vadd.f32 %v2062, %v2072
        %v2077 = vadd.f32 %v2063, %v2073
        %v2078 = vadd.f32 %v2064, %v2074
        %v2079 = vadd.f32 %v2065, %v2075
        %v2080 = vld [vmem:[%s559] sm:$0xff]
        %v2081 = vld [vmem:[%s559 + $0x8] sm:$0xff]
        %v2082 = vld [vmem:[%s559 + $0x10] sm:$0xff]
        %v2083 = vld [vmem:[%s559 + $0x18] sm:$0xff]
        %s2084 = sld [smem:[#allocation2 + $0x21a]]
        %v2085 = vstv %s2084
        %v2086 = vmul.f32 %v2080, %v2085
        %v2087 = vmul.f32 %v2081, %v2085
        %v2088 = vmul.f32 %v2082, %v2085
        %v2089 = vmul.f32 %v2083, %v2085
        %v2090 = vadd.f32 %v2076, %v2086
        %v2091 = vadd.f32 %v2077, %v2087
        %v2092 = vadd.f32 %v2078, %v2088
        %v2093 = vadd.f32 %v2079, %v2089
        %v2094 = vld [vmem:[%s572] sm:$0xff]
        %v2095 = vld [vmem:[%s572 + $0x8] sm:$0xff]
        %v2096 = vld [vmem:[%s572 + $0x10] sm:$0xff]
        %v2097 = vld [vmem:[%s572 + $0x18] sm:$0xff]
        %s2098 = sld [smem:[#allocation2 + $0x21b]]
        %v2099 = vstv %s2098
        %v2100 = vmul.f32 %v2094, %v2099
        %v2101 = vmul.f32 %v2095, %v2099
        %v2102 = vmul.f32 %v2096, %v2099
        %v2103 = vmul.f32 %v2097, %v2099
        %v2104 = vadd.f32 %v2090, %v2100
        %v2105 = vadd.f32 %v2091, %v2101
        %v2106 = vadd.f32 %v2092, %v2102
        %v2107 = vadd.f32 %v2093, %v2103
        %s2108 = scalar_lea.vmem %s237, 128
        %2109 = vst [vmem:[%s2108] sm:$0xff] %v2104
        %2110 = vst [vmem:[%s2108 + $0x8] sm:$0xff] %v2105
        %2111 = vst [vmem:[%s2108 + $0x10] sm:$0xff] %v2106
        %2112 = vst [vmem:[%s2108 + $0x18] sm:$0xff] %v2107
        %v2113 = vmul.f32 %v2104, %v2104
        %v2114 = vmul.f32 %v2105, %v2105
        %v2115 = vmul.f32 %v2106, %v2106
        %v2116 = vmul.f32 %v2107, %v2107
        %v2117 = vadd.f32 %v1714, %v2113
        %v2118 = vadd.f32 %v1715, %v2114
        %v2119 = vadd.f32 %v1716, %v2115
        %v2120 = vadd.f32 %v1717, %v2116
        %s2121 = sld [smem:[#allocation2 + $0x280]]
        %v2122 = vstv %s2121
        %v2123 = vmul.f32 %v599, %v2122
        %v2124 = vmul.f32 %v606, %v2122
        %v2125 = vmul.f32 %v613, %v2122
        %v2126 = vmul.f32 %v620, %v2122
        %s2127 = sld [smem:[#allocation4 + $0x5]]
        %v2128 = vstv %s2127
        %v2129 = vadd.f32 %v2123, %v2128
        %v2130 = vadd.f32 %v2124, %v2128
        %v2131 = vadd.f32 %v2125, %v2128
        %v2132 = vadd.f32 %v2126, %v2128
        %v2133 = vld [vmem:[%s227] sm:$0xff]
        %v2134 = vld [vmem:[%s227 + $0x8] sm:$0xff]
        %v2135 = vld [vmem:[%s227 + $0x10] sm:$0xff]
        %v2136 = vld [vmem:[%s227 + $0x18] sm:$0xff]
        %s2137 = sld [smem:[#allocation2 + $0x281]]
        %v2138 = vstv %s2137
        %v2139 = vmul.f32 %v2133, %v2138
        %v2140 = vmul.f32 %v2134, %v2138
        %v2141 = vmul.f32 %v2135, %v2138
        %v2142 = vmul.f32 %v2136, %v2138
        %v2143 = vadd.f32 %v2129, %v2139
        %v2144 = vadd.f32 %v2130, %v2140
        %v2145 = vadd.f32 %v2131, %v2141
        %v2146 = vadd.f32 %v2132, %v2142
        %v2147 = vld [vmem:[%s247] sm:$0xff]
        %v2148 = vld [vmem:[%s247 + $0x8] sm:$0xff]
        %v2149 = vld [vmem:[%s247 + $0x10] sm:$0xff]
        %v2150 = vld [vmem:[%s247 + $0x18] sm:$0xff]
        %s2151 = sld [smem:[#allocation2 + $0x282]]
        %v2152 = vstv %s2151
        %v2153 = vmul.f32 %v2147, %v2152
        %v2154 = vmul.f32 %v2148, %v2152
        %v2155 = vmul.f32 %v2149, %v2152
        %v2156 = vmul.f32 %v2150, %v2152
        %v2157 = vadd.f32 %v2143, %v2153
        %v2158 = vadd.f32 %v2144, %v2154
        %v2159 = vadd.f32 %v2145, %v2155
        %v2160 = vadd.f32 %v2146, %v2156
        %v2161 = vld [vmem:[%s260] sm:$0xff]
        %v2162 = vld [vmem:[%s260 + $0x8] sm:$0xff]
        %v2163 = vld [vmem:[%s260 + $0x10] sm:$0xff]
        %v2164 = vld [vmem:[%s260 + $0x18] sm:$0xff]
        %s2165 = sld [smem:[#allocation2 + $0x283]]
        %v2166 = vstv %s2165
        %v2167 = vmul.f32 %v2161, %v2166
        %v2168 = vmul.f32 %v2162, %v2166
        %v2169 = vmul.f32 %v2163, %v2166
        %v2170 = vmul.f32 %v2164, %v2166
        %v2171 = vadd.f32 %v2157, %v2167
        %v2172 = vadd.f32 %v2158, %v2168
        %v2173 = vadd.f32 %v2159, %v2169
        %v2174 = vadd.f32 %v2160, %v2170
        %v2175 = vld [vmem:[%s273] sm:$0xff]
        %v2176 = vld [vmem:[%s273 + $0x8] sm:$0xff]
        %v2177 = vld [vmem:[%s273 + $0x10] sm:$0xff]
        %v2178 = vld [vmem:[%s273 + $0x18] sm:$0xff]
        %s2179 = sld [smem:[#allocation2 + $0x284]]
        %v2180 = vstv %s2179
        %v2181 = vmul.f32 %v2175, %v2180
        %v2182 = vmul.f32 %v2176, %v2180
        %v2183 = vmul.f32 %v2177, %v2180
        %v2184 = vmul.f32 %v2178, %v2180
        %v2185 = vadd.f32 %v2171, %v2181
        %v2186 = vadd.f32 %v2172, %v2182
        %v2187 = vadd.f32 %v2173, %v2183
        %v2188 = vadd.f32 %v2174, %v2184
        %v2189 = vld [vmem:[%s286] sm:$0xff]
        %v2190 = vld [vmem:[%s286 + $0x8] sm:$0xff]
        %v2191 = vld [vmem:[%s286 + $0x10] sm:$0xff]
        %v2192 = vld [vmem:[%s286 + $0x18] sm:$0xff]
        %s2193 = sld [smem:[#allocation2 + $0x285]]
        %v2194 = vstv %s2193
        %v2195 = vmul.f32 %v2189, %v2194
        %v2196 = vmul.f32 %v2190, %v2194
        %v2197 = vmul.f32 %v2191, %v2194
        %v2198 = vmul.f32 %v2192, %v2194
        %v2199 = vadd.f32 %v2185, %v2195
        %v2200 = vadd.f32 %v2186, %v2196
        %v2201 = vadd.f32 %v2187, %v2197
        %v2202 = vadd.f32 %v2188, %v2198
        %v2203 = vld [vmem:[%s299] sm:$0xff]
        %v2204 = vld [vmem:[%s299 + $0x8] sm:$0xff]
        %v2205 = vld [vmem:[%s299 + $0x10] sm:$0xff]
        %v2206 = vld [vmem:[%s299 + $0x18] sm:$0xff]
        %s2207 = sld [smem:[#allocation2 + $0x286]]
        %v2208 = vstv %s2207
        %v2209 = vmul.f32 %v2203, %v2208
        %v2210 = vmul.f32 %v2204, %v2208
        %v2211 = vmul.f32 %v2205, %v2208
        %v2212 = vmul.f32 %v2206, %v2208
        %v2213 = vadd.f32 %v2199, %v2209
        %v2214 = vadd.f32 %v2200, %v2210
        %v2215 = vadd.f32 %v2201, %v2211
        %v2216 = vadd.f32 %v2202, %v2212
        %v2217 = vld [vmem:[%s312] sm:$0xff]
        %v2218 = vld [vmem:[%s312 + $0x8] sm:$0xff]
        %v2219 = vld [vmem:[%s312 + $0x10] sm:$0xff]
        %v2220 = vld [vmem:[%s312 + $0x18] sm:$0xff]
        %s2221 = sld [smem:[#allocation2 + $0x287]]
        %v2222 = vstv %s2221
        %v2223 = vmul.f32 %v2217, %v2222
        %v2224 = vmul.f32 %v2218, %v2222
        %v2225 = vmul.f32 %v2219, %v2222
        %v2226 = vmul.f32 %v2220, %v2222
        %v2227 = vadd.f32 %v2213, %v2223
        %v2228 = vadd.f32 %v2214, %v2224
        %v2229 = vadd.f32 %v2215, %v2225
        %v2230 = vadd.f32 %v2216, %v2226
        %v2231 = vld [vmem:[%s325] sm:$0xff]
        %v2232 = vld [vmem:[%s325 + $0x8] sm:$0xff]
        %v2233 = vld [vmem:[%s325 + $0x10] sm:$0xff]
        %v2234 = vld [vmem:[%s325 + $0x18] sm:$0xff]
        %s2235 = sld [smem:[#allocation2 + $0x288]]
        %v2236 = vstv %s2235
        %v2237 = vmul.f32 %v2231, %v2236
        %v2238 = vmul.f32 %v2232, %v2236
        %v2239 = vmul.f32 %v2233, %v2236
        %v2240 = vmul.f32 %v2234, %v2236
        %v2241 = vadd.f32 %v2227, %v2237
        %v2242 = vadd.f32 %v2228, %v2238
        %v2243 = vadd.f32 %v2229, %v2239
        %v2244 = vadd.f32 %v2230, %v2240
        %v2245 = vld [vmem:[%s338] sm:$0xff]
        %v2246 = vld [vmem:[%s338 + $0x8] sm:$0xff]
        %v2247 = vld [vmem:[%s338 + $0x10] sm:$0xff]
        %v2248 = vld [vmem:[%s338 + $0x18] sm:$0xff]
        %s2249 = sld [smem:[#allocation2 + $0x289]]
        %v2250 = vstv %s2249
        %v2251 = vmul.f32 %v2245, %v2250
        %v2252 = vmul.f32 %v2246, %v2250
        %v2253 = vmul.f32 %v2247, %v2250
        %v2254 = vmul.f32 %v2248, %v2250
        %v2255 = vadd.f32 %v2241, %v2251
        %v2256 = vadd.f32 %v2242, %v2252
        %v2257 = vadd.f32 %v2243, %v2253
        %v2258 = vadd.f32 %v2244, %v2254
        %v2259 = vld [vmem:[%s351] sm:$0xff]
        %v2260 = vld [vmem:[%s351 + $0x8] sm:$0xff]
        %v2261 = vld [vmem:[%s351 + $0x10] sm:$0xff]
        %v2262 = vld [vmem:[%s351 + $0x18] sm:$0xff]
        %s2263 = sld [smem:[#allocation2 + $0x28a]]
        %v2264 = vstv %s2263
        %v2265 = vmul.f32 %v2259, %v2264
        %v2266 = vmul.f32 %v2260, %v2264
        %v2267 = vmul.f32 %v2261, %v2264
        %v2268 = vmul.f32 %v2262, %v2264
        %v2269 = vadd.f32 %v2255, %v2265
        %v2270 = vadd.f32 %v2256, %v2266
        %v2271 = vadd.f32 %v2257, %v2267
        %v2272 = vadd.f32 %v2258, %v2268
        %v2273 = vld [vmem:[%s364] sm:$0xff]
        %v2274 = vld [vmem:[%s364 + $0x8] sm:$0xff]
        %v2275 = vld [vmem:[%s364 + $0x10] sm:$0xff]
        %v2276 = vld [vmem:[%s364 + $0x18] sm:$0xff]
        %s2277 = sld [smem:[#allocation2 + $0x28b]]
        %v2278 = vstv %s2277
        %v2279 = vmul.f32 %v2273, %v2278
        %v2280 = vmul.f32 %v2274, %v2278
        %v2281 = vmul.f32 %v2275, %v2278
        %v2282 = vmul.f32 %v2276, %v2278
        %v2283 = vadd.f32 %v2269, %v2279
        %v2284 = vadd.f32 %v2270, %v2280
        %v2285 = vadd.f32 %v2271, %v2281
        %v2286 = vadd.f32 %v2272, %v2282
        %v2287 = vld [vmem:[%s377] sm:$0xff]
        %v2288 = vld [vmem:[%s377 + $0x8] sm:$0xff]
        %v2289 = vld [vmem:[%s377 + $0x10] sm:$0xff]
        %v2290 = vld [vmem:[%s377 + $0x18] sm:$0xff]
        %s2291 = sld [smem:[#allocation2 + $0x28c]]
        %v2292 = vstv %s2291
        %v2293 = vmul.f32 %v2287, %v2292
        %v2294 = vmul.f32 %v2288, %v2292
        %v2295 = vmul.f32 %v2289, %v2292
        %v2296 = vmul.f32 %v2290, %v2292
        %v2297 = vadd.f32 %v2283, %v2293
        %v2298 = vadd.f32 %v2284, %v2294
        %v2299 = vadd.f32 %v2285, %v2295
        %v2300 = vadd.f32 %v2286, %v2296
        %v2301 = vld [vmem:[%s390] sm:$0xff]
        %v2302 = vld [vmem:[%s390 + $0x8] sm:$0xff]
        %v2303 = vld [vmem:[%s390 + $0x10] sm:$0xff]
        %v2304 = vld [vmem:[%s390 + $0x18] sm:$0xff]
        %s2305 = sld [smem:[#allocation2 + $0x28d]]
        %v2306 = vstv %s2305
        %v2307 = vmul.f32 %v2301, %v2306
        %v2308 = vmul.f32 %v2302, %v2306
        %v2309 = vmul.f32 %v2303, %v2306
        %v2310 = vmul.f32 %v2304, %v2306
        %v2311 = vadd.f32 %v2297, %v2307
        %v2312 = vadd.f32 %v2298, %v2308
        %v2313 = vadd.f32 %v2299, %v2309
        %v2314 = vadd.f32 %v2300, %v2310
        %v2315 = vld [vmem:[%s403] sm:$0xff]
        %v2316 = vld [vmem:[%s403 + $0x8] sm:$0xff]
        %v2317 = vld [vmem:[%s403 + $0x10] sm:$0xff]
        %v2318 = vld [vmem:[%s403 + $0x18] sm:$0xff]
        %s2319 = sld [smem:[#allocation2 + $0x28e]]
        %v2320 = vstv %s2319
        %v2321 = vmul.f32 %v2315, %v2320
        %v2322 = vmul.f32 %v2316, %v2320
        %v2323 = vmul.f32 %v2317, %v2320
        %v2324 = vmul.f32 %v2318, %v2320
        %v2325 = vadd.f32 %v2311, %v2321
        %v2326 = vadd.f32 %v2312, %v2322
        %v2327 = vadd.f32 %v2313, %v2323
        %v2328 = vadd.f32 %v2314, %v2324
        %v2329 = vld [vmem:[%s416] sm:$0xff]
        %v2330 = vld [vmem:[%s416 + $0x8] sm:$0xff]
        %v2331 = vld [vmem:[%s416 + $0x10] sm:$0xff]
        %v2332 = vld [vmem:[%s416 + $0x18] sm:$0xff]
        %s2333 = sld [smem:[#allocation2 + $0x28f]]
        %v2334 = vstv %s2333
        %v2335 = vmul.f32 %v2329, %v2334
        %v2336 = vmul.f32 %v2330, %v2334
        %v2337 = vmul.f32 %v2331, %v2334
        %v2338 = vmul.f32 %v2332, %v2334
        %v2339 = vadd.f32 %v2325, %v2335
        %v2340 = vadd.f32 %v2326, %v2336
        %v2341 = vadd.f32 %v2327, %v2337
        %v2342 = vadd.f32 %v2328, %v2338
        %v2343 = vld [vmem:[%s429] sm:$0xff]
        %v2344 = vld [vmem:[%s429 + $0x8] sm:$0xff]
        %v2345 = vld [vmem:[%s429 + $0x10] sm:$0xff]
        %v2346 = vld [vmem:[%s429 + $0x18] sm:$0xff]
        %s2347 = sld [smem:[#allocation2 + $0x290]]
        %v2348 = vstv %s2347
        %v2349 = vmul.f32 %v2343, %v2348
        %v2350 = vmul.f32 %v2344, %v2348
        %v2351 = vmul.f32 %v2345, %v2348
        %v2352 = vmul.f32 %v2346, %v2348
        %v2353 = vadd.f32 %v2339, %v2349
        %v2354 = vadd.f32 %v2340, %v2350
        %v2355 = vadd.f32 %v2341, %v2351
        %v2356 = vadd.f32 %v2342, %v2352
        %v2357 = vld [vmem:[%s442] sm:$0xff]
        %v2358 = vld [vmem:[%s442 + $0x8] sm:$0xff]
        %v2359 = vld [vmem:[%s442 + $0x10] sm:$0xff]
        %v2360 = vld [vmem:[%s442 + $0x18] sm:$0xff]
        %s2361 = sld [smem:[#allocation2 + $0x291]]
        %v2362 = vstv %s2361
        %v2363 = vmul.f32 %v2357, %v2362
        %v2364 = vmul.f32 %v2358, %v2362
        %v2365 = vmul.f32 %v2359, %v2362
        %v2366 = vmul.f32 %v2360, %v2362
        %v2367 = vadd.f32 %v2353, %v2363
        %v2368 = vadd.f32 %v2354, %v2364
        %v2369 = vadd.f32 %v2355, %v2365
        %v2370 = vadd.f32 %v2356, %v2366
        %v2371 = vld [vmem:[%s455] sm:$0xff]
        %v2372 = vld [vmem:[%s455 + $0x8] sm:$0xff]
        %v2373 = vld [vmem:[%s455 + $0x10] sm:$0xff]
        %v2374 = vld [vmem:[%s455 + $0x18] sm:$0xff]
        %s2375 = sld [smem:[#allocation2 + $0x292]]
        %v2376 = vstv %s2375
        %v2377 = vmul.f32 %v2371, %v2376
        %v2378 = vmul.f32 %v2372, %v2376
        %v2379 = vmul.f32 %v2373, %v2376
        %v2380 = vmul.f32 %v2374, %v2376
        %v2381 = vadd.f32 %v2367, %v2377
        %v2382 = vadd.f32 %v2368, %v2378
        %v2383 = vadd.f32 %v2369, %v2379
        %v2384 = vadd.f32 %v2370, %v2380
        %v2385 = vld [vmem:[%s468] sm:$0xff]
        %v2386 = vld [vmem:[%s468 + $0x8] sm:$0xff]
        %v2387 = vld [vmem:[%s468 + $0x10] sm:$0xff]
        %v2388 = vld [vmem:[%s468 + $0x18] sm:$0xff]
        %s2389 = sld [smem:[#allocation2 + $0x293]]
        %v2390 = vstv %s2389
        %v2391 = vmul.f32 %v2385, %v2390
        %v2392 = vmul.f32 %v2386, %v2390
        %v2393 = vmul.f32 %v2387, %v2390
        %v2394 = vmul.f32 %v2388, %v2390
        %v2395 = vadd.f32 %v2381, %v2391
        %v2396 = vadd.f32 %v2382, %v2392
        %v2397 = vadd.f32 %v2383, %v2393
        %v2398 = vadd.f32 %v2384, %v2394
        %v2399 = vld [vmem:[%s481] sm:$0xff]
        %v2400 = vld [vmem:[%s481 + $0x8] sm:$0xff]
        %v2401 = vld [vmem:[%s481 + $0x10] sm:$0xff]
        %v2402 = vld [vmem:[%s481 + $0x18] sm:$0xff]
        %s2403 = sld [smem:[#allocation2 + $0x294]]
        %v2404 = vstv %s2403
        %v2405 = vmul.f32 %v2399, %v2404
        %v2406 = vmul.f32 %v2400, %v2404
        %v2407 = vmul.f32 %v2401, %v2404
        %v2408 = vmul.f32 %v2402, %v2404
        %v2409 = vadd.f32 %v2395, %v2405
        %v2410 = vadd.f32 %v2396, %v2406
        %v2411 = vadd.f32 %v2397, %v2407
        %v2412 = vadd.f32 %v2398, %v2408
        %v2413 = vld [vmem:[%s494] sm:$0xff]
        %v2414 = vld [vmem:[%s494 + $0x8] sm:$0xff]
        %v2415 = vld [vmem:[%s494 + $0x10] sm:$0xff]
        %v2416 = vld [vmem:[%s494 + $0x18] sm:$0xff]
        %s2417 = sld [smem:[#allocation2 + $0x295]]
        %v2418 = vstv %s2417
        %v2419 = vmul.f32 %v2413, %v2418
        %v2420 = vmul.f32 %v2414, %v2418
        %v2421 = vmul.f32 %v2415, %v2418
        %v2422 = vmul.f32 %v2416, %v2418
        %v2423 = vadd.f32 %v2409, %v2419
        %v2424 = vadd.f32 %v2410, %v2420
        %v2425 = vadd.f32 %v2411, %v2421
        %v2426 = vadd.f32 %v2412, %v2422
        %v2427 = vld [vmem:[%s507] sm:$0xff]
        %v2428 = vld [vmem:[%s507 + $0x8] sm:$0xff]
        %v2429 = vld [vmem:[%s507 + $0x10] sm:$0xff]
        %v2430 = vld [vmem:[%s507 + $0x18] sm:$0xff]
        %s2431 = sld [smem:[#allocation2 + $0x296]]
        %v2432 = vstv %s2431
        %v2433 = vmul.f32 %v2427, %v2432
        %v2434 = vmul.f32 %v2428, %v2432
        %v2435 = vmul.f32 %v2429, %v2432
        %v2436 = vmul.f32 %v2430, %v2432
        %v2437 = vadd.f32 %v2423, %v2433
        %v2438 = vadd.f32 %v2424, %v2434
        %v2439 = vadd.f32 %v2425, %v2435
        %v2440 = vadd.f32 %v2426, %v2436
        %v2441 = vld [vmem:[%s520] sm:$0xff]
        %v2442 = vld [vmem:[%s520 + $0x8] sm:$0xff]
        %v2443 = vld [vmem:[%s520 + $0x10] sm:$0xff]
        %v2444 = vld [vmem:[%s520 + $0x18] sm:$0xff]
        %s2445 = sld [smem:[#allocation2 + $0x297]]
        %v2446 = vstv %s2445
        %v2447 = vmul.f32 %v2441, %v2446
        %v2448 = vmul.f32 %v2442, %v2446
        %v2449 = vmul.f32 %v2443, %v2446
        %v2450 = vmul.f32 %v2444, %v2446
        %v2451 = vadd.f32 %v2437, %v2447
        %v2452 = vadd.f32 %v2438, %v2448
        %v2453 = vadd.f32 %v2439, %v2449
        %v2454 = vadd.f32 %v2440, %v2450
        %v2455 = vld [vmem:[%s533] sm:$0xff]
        %v2456 = vld [vmem:[%s533 + $0x8] sm:$0xff]
        %v2457 = vld [vmem:[%s533 + $0x10] sm:$0xff]
        %v2458 = vld [vmem:[%s533 + $0x18] sm:$0xff]
        %s2459 = sld [smem:[#allocation2 + $0x298]]
        %v2460 = vstv %s2459
        %v2461 = vmul.f32 %v2455, %v2460
        %v2462 = vmul.f32 %v2456, %v2460
        %v2463 = vmul.f32 %v2457, %v2460
        %v2464 = vmul.f32 %v2458, %v2460
        %v2465 = vadd.f32 %v2451, %v2461
        %v2466 = vadd.f32 %v2452, %v2462
        %v2467 = vadd.f32 %v2453, %v2463
        %v2468 = vadd.f32 %v2454, %v2464
        %v2469 = vld [vmem:[%s546] sm:$0xff]
        %v2470 = vld [vmem:[%s546 + $0x8] sm:$0xff]
        %v2471 = vld [vmem:[%s546 + $0x10] sm:$0xff]
        %v2472 = vld [vmem:[%s546 + $0x18] sm:$0xff]
        %s2473 = sld [smem:[#allocation2 + $0x299]]
        %v2474 = vstv %s2473
        %v2475 = vmul.f32 %v2469, %v2474
        %v2476 = vmul.f32 %v2470, %v2474
        %v2477 = vmul.f32 %v2471, %v2474
        %v2478 = vmul.f32 %v2472, %v2474
        %v2479 = vadd.f32 %v2465, %v2475
        %v2480 = vadd.f32 %v2466, %v2476
        %v2481 = vadd.f32 %v2467, %v2477
        %v2482 = vadd.f32 %v2468, %v2478
        %v2483 = vld [vmem:[%s559] sm:$0xff]
        %v2484 = vld [vmem:[%s559 + $0x8] sm:$0xff]
        %v2485 = vld [vmem:[%s559 + $0x10] sm:$0xff]
        %v2486 = vld [vmem:[%s559 + $0x18] sm:$0xff]
        %s2487 = sld [smem:[#allocation2 + $0x29a]]
        %v2488 = vstv %s2487
        %v2489 = vmul.f32 %v2483, %v2488
        %v2490 = vmul.f32 %v2484, %v2488
        %v2491 = vmul.f32 %v2485, %v2488
        %v2492 = vmul.f32 %v2486, %v2488
        %v2493 = vadd.f32 %v2479, %v2489
        %v2494 = vadd.f32 %v2480, %v2490
        %v2495 = vadd.f32 %v2481, %v2491
        %v2496 = vadd.f32 %v2482, %v2492
        %v2497 = vld [vmem:[%s572] sm:$0xff]
        %v2498 = vld [vmem:[%s572 + $0x8] sm:$0xff]
        %v2499 = vld [vmem:[%s572 + $0x10] sm:$0xff]
        %v2500 = vld [vmem:[%s572 + $0x18] sm:$0xff]
        %s2501 = sld [smem:[#allocation2 + $0x29b]]
        %v2502 = vstv %s2501
        %v2503 = vmul.f32 %v2497, %v2502
        %v2504 = vmul.f32 %v2498, %v2502
        %v2505 = vmul.f32 %v2499, %v2502
        %v2506 = vmul.f32 %v2500, %v2502
        %v2507 = vadd.f32 %v2493, %v2503
        %v2508 = vadd.f32 %v2494, %v2504
        %v2509 = vadd.f32 %v2495, %v2505
        %v2510 = vadd.f32 %v2496, %v2506
        %s2511 = scalar_lea.vmem %s237, 160
        %2512 = vst [vmem:[%s2511] sm:$0xff] %v2507
        %2513 = vst [vmem:[%s2511 + $0x8] sm:$0xff] %v2508
        %2514 = vst [vmem:[%s2511 + $0x10] sm:$0xff] %v2509
        %2515 = vst [vmem:[%s2511 + $0x18] sm:$0xff] %v2510
        %v2516 = vmul.f32 %v2507, %v2507
        %v2517 = vmul.f32 %v2508, %v2508
        %v2518 = vmul.f32 %v2509, %v2509
        %v2519 = vmul.f32 %v2510, %v2510
        %v2520 = vadd.f32 %v2117, %v2516
        %v2521 = vadd.f32 %v2118, %v2517
        %v2522 = vadd.f32 %v2119, %v2518
        %v2523 = vadd.f32 %v2120, %v2519
        %s2524 = sld [smem:[#allocation2 + $0x300]]
        %v2525 = vstv %s2524
        %v2526 = vmul.f32 %v599, %v2525
        %v2527 = vmul.f32 %v606, %v2525
        %v2528 = vmul.f32 %v613, %v2525
        %v2529 = vmul.f32 %v620, %v2525
        %s2530 = sld [smem:[#allocation4 + $0x6]]
        %v2531 = vstv %s2530
        %v2532 = vadd.f32 %v2526, %v2531
        %v2533 = vadd.f32 %v2527, %v2531
        %v2534 = vadd.f32 %v2528, %v2531
        %v2535 = vadd.f32 %v2529, %v2531
        %v2536 = vld [vmem:[%s227] sm:$0xff]
        %v2537 = vld [vmem:[%s227 + $0x8] sm:$0xff]
        %v2538 = vld [vmem:[%s227 + $0x10] sm:$0xff]
        %v2539 = vld [vmem:[%s227 + $0x18] sm:$0xff]
        %s2540 = sld [smem:[#allocation2 + $0x301]]
        %v2541 = vstv %s2540
        %v2542 = vmul.f32 %v2536, %v2541
        %v2543 = vmul.f32 %v2537, %v2541
        %v2544 = vmul.f32 %v2538, %v2541
        %v2545 = vmul.f32 %v2539, %v2541
        %v2546 = vadd.f32 %v2532, %v2542
        %v2547 = vadd.f32 %v2533, %v2543
        %v2548 = vadd.f32 %v2534, %v2544
        %v2549 = vadd.f32 %v2535, %v2545
        %v2550 = vld [vmem:[%s247] sm:$0xff]
        %v2551 = vld [vmem:[%s247 + $0x8] sm:$0xff]
        %v2552 = vld [vmem:[%s247 + $0x10] sm:$0xff]
        %v2553 = vld [vmem:[%s247 + $0x18] sm:$0xff]
        %s2554 = sld [smem:[#allocation2 + $0x302]]
        %v2555 = vstv %s2554
        %v2556 = vmul.f32 %v2550, %v2555
        %v2557 = vmul.f32 %v2551, %v2555
        %v2558 = vmul.f32 %v2552, %v2555
        %v2559 = vmul.f32 %v2553, %v2555
        %v2560 = vadd.f32 %v2546, %v2556
        %v2561 = vadd.f32 %v2547, %v2557
        %v2562 = vadd.f32 %v2548, %v2558
        %v2563 = vadd.f32 %v2549, %v2559
        %v2564 = vld [vmem:[%s260] sm:$0xff]
        %v2565 = vld [vmem:[%s260 + $0x8] sm:$0xff]
        %v2566 = vld [vmem:[%s260 + $0x10] sm:$0xff]
        %v2567 = vld [vmem:[%s260 + $0x18] sm:$0xff]
        %s2568 = sld [smem:[#allocation2 + $0x303]]
        %v2569 = vstv %s2568
        %v2570 = vmul.f32 %v2564, %v2569
        %v2571 = vmul.f32 %v2565, %v2569
        %v2572 = vmul.f32 %v2566, %v2569
        %v2573 = vmul.f32 %v2567, %v2569
        %v2574 = vadd.f32 %v2560, %v2570
        %v2575 = vadd.f32 %v2561, %v2571
        %v2576 = vadd.f32 %v2562, %v2572
        %v2577 = vadd.f32 %v2563, %v2573
        %v2578 = vld [vmem:[%s273] sm:$0xff]
        %v2579 = vld [vmem:[%s273 + $0x8] sm:$0xff]
        %v2580 = vld [vmem:[%s273 + $0x10] sm:$0xff]
        %v2581 = vld [vmem:[%s273 + $0x18] sm:$0xff]
        %s2582 = sld [smem:[#allocation2 + $0x304]]
        %v2583 = vstv %s2582
        %v2584 = vmul.f32 %v2578, %v2583
        %v2585 = vmul.f32 %v2579, %v2583
        %v2586 = vmul.f32 %v2580, %v2583
        %v2587 = vmul.f32 %v2581, %v2583
        %v2588 = vadd.f32 %v2574, %v2584
        %v2589 = vadd.f32 %v2575, %v2585
        %v2590 = vadd.f32 %v2576, %v2586
        %v2591 = vadd.f32 %v2577, %v2587
        %v2592 = vld [vmem:[%s286] sm:$0xff]
        %v2593 = vld [vmem:[%s286 + $0x8] sm:$0xff]
        %v2594 = vld [vmem:[%s286 + $0x10] sm:$0xff]
        %v2595 = vld [vmem:[%s286 + $0x18] sm:$0xff]
        %s2596 = sld [smem:[#allocation2 + $0x305]]
        %v2597 = vstv %s2596
        %v2598 = vmul.f32 %v2592, %v2597
        %v2599 = vmul.f32 %v2593, %v2597
        %v2600 = vmul.f32 %v2594, %v2597
        %v2601 = vmul.f32 %v2595, %v2597
        %v2602 = vadd.f32 %v2588, %v2598
        %v2603 = vadd.f32 %v2589, %v2599
        %v2604 = vadd.f32 %v2590, %v2600
        %v2605 = vadd.f32 %v2591, %v2601
        %v2606 = vld [vmem:[%s299] sm:$0xff]
        %v2607 = vld [vmem:[%s299 + $0x8] sm:$0xff]
        %v2608 = vld [vmem:[%s299 + $0x10] sm:$0xff]
        %v2609 = vld [vmem:[%s299 + $0x18] sm:$0xff]
        %s2610 = sld [smem:[#allocation2 + $0x306]]
        %v2611 = vstv %s2610
        %v2612 = vmul.f32 %v2606, %v2611
        %v2613 = vmul.f32 %v2607, %v2611
        %v2614 = vmul.f32 %v2608, %v2611
        %v2615 = vmul.f32 %v2609, %v2611
        %v2616 = vadd.f32 %v2602, %v2612
        %v2617 = vadd.f32 %v2603, %v2613
        %v2618 = vadd.f32 %v2604, %v2614
        %v2619 = vadd.f32 %v2605, %v2615
        %v2620 = vld [vmem:[%s312] sm:$0xff]
        %v2621 = vld [vmem:[%s312 + $0x8] sm:$0xff]
        %v2622 = vld [vmem:[%s312 + $0x10] sm:$0xff]
        %v2623 = vld [vmem:[%s312 + $0x18] sm:$0xff]
        %s2624 = sld [smem:[#allocation2 + $0x307]]
        %v2625 = vstv %s2624
        %v2626 = vmul.f32 %v2620, %v2625
        %v2627 = vmul.f32 %v2621, %v2625
        %v2628 = vmul.f32 %v2622, %v2625
        %v2629 = vmul.f32 %v2623, %v2625
        %v2630 = vadd.f32 %v2616, %v2626
        %v2631 = vadd.f32 %v2617, %v2627
        %v2632 = vadd.f32 %v2618, %v2628
        %v2633 = vadd.f32 %v2619, %v2629
        %v2634 = vld [vmem:[%s325] sm:$0xff]
        %v2635 = vld [vmem:[%s325 + $0x8] sm:$0xff]
        %v2636 = vld [vmem:[%s325 + $0x10] sm:$0xff]
        %v2637 = vld [vmem:[%s325 + $0x18] sm:$0xff]
        %s2638 = sld [smem:[#allocation2 + $0x308]]
        %v2639 = vstv %s2638
        %v2640 = vmul.f32 %v2634, %v2639
        %v2641 = vmul.f32 %v2635, %v2639
        %v2642 = vmul.f32 %v2636, %v2639
        %v2643 = vmul.f32 %v2637, %v2639
        %v2644 = vadd.f32 %v2630, %v2640
        %v2645 = vadd.f32 %v2631, %v2641
        %v2646 = vadd.f32 %v2632, %v2642
        %v2647 = vadd.f32 %v2633, %v2643
        %v2648 = vld [vmem:[%s338] sm:$0xff]
        %v2649 = vld [vmem:[%s338 + $0x8] sm:$0xff]
        %v2650 = vld [vmem:[%s338 + $0x10] sm:$0xff]
        %v2651 = vld [vmem:[%s338 + $0x18] sm:$0xff]
        %s2652 = sld [smem:[#allocation2 + $0x309]]
        %v2653 = vstv %s2652
        %v2654 = vmul.f32 %v2648, %v2653
        %v2655 = vmul.f32 %v2649, %v2653
        %v2656 = vmul.f32 %v2650, %v2653
        %v2657 = vmul.f32 %v2651, %v2653
        %v2658 = vadd.f32 %v2644, %v2654
        %v2659 = vadd.f32 %v2645, %v2655
        %v2660 = vadd.f32 %v2646, %v2656
        %v2661 = vadd.f32 %v2647, %v2657
        %v2662 = vld [vmem:[%s351] sm:$0xff]
        %v2663 = vld [vmem:[%s351 + $0x8] sm:$0xff]
        %v2664 = vld [vmem:[%s351 + $0x10] sm:$0xff]
        %v2665 = vld [vmem:[%s351 + $0x18] sm:$0xff]
        %s2666 = sld [smem:[#allocation2 + $0x30a]]
        %v2667 = vstv %s2666
        %v2668 = vmul.f32 %v2662, %v2667
        %v2669 = vmul.f32 %v2663, %v2667
        %v2670 = vmul.f32 %v2664, %v2667
        %v2671 = vmul.f32 %v2665, %v2667
        %v2672 = vadd.f32 %v2658, %v2668
        %v2673 = vadd.f32 %v2659, %v2669
        %v2674 = vadd.f32 %v2660, %v2670
        %v2675 = vadd.f32 %v2661, %v2671
        %v2676 = vld [vmem:[%s364] sm:$0xff]
        %v2677 = vld [vmem:[%s364 + $0x8] sm:$0xff]
        %v2678 = vld [vmem:[%s364 + $0x10] sm:$0xff]
        %v2679 = vld [vmem:[%s364 + $0x18] sm:$0xff]
        %s2680 = sld [smem:[#allocation2 + $0x30b]]
        %v2681 = vstv %s2680
        %v2682 = vmul.f32 %v2676, %v2681
        %v2683 = vmul.f32 %v2677, %v2681
        %v2684 = vmul.f32 %v2678, %v2681
        %v2685 = vmul.f32 %v2679, %v2681
        %v2686 = vadd.f32 %v2672, %v2682
        %v2687 = vadd.f32 %v2673, %v2683
        %v2688 = vadd.f32 %v2674, %v2684
        %v2689 = vadd.f32 %v2675, %v2685
        %v2690 = vld [vmem:[%s377] sm:$0xff]
        %v2691 = vld [vmem:[%s377 + $0x8] sm:$0xff]
        %v2692 = vld [vmem:[%s377 + $0x10] sm:$0xff]
        %v2693 = vld [vmem:[%s377 + $0x18] sm:$0xff]
        %s2694 = sld [smem:[#allocation2 + $0x30c]]
        %v2695 = vstv %s2694
        %v2696 = vmul.f32 %v2690, %v2695
        %v2697 = vmul.f32 %v2691, %v2695
        %v2698 = vmul.f32 %v2692, %v2695
        %v2699 = vmul.f32 %v2693, %v2695
        %v2700 = vadd.f32 %v2686, %v2696
        %v2701 = vadd.f32 %v2687, %v2697
        %v2702 = vadd.f32 %v2688, %v2698
        %v2703 = vadd.f32 %v2689, %v2699
        %v2704 = vld [vmem:[%s390] sm:$0xff]
        %v2705 = vld [vmem:[%s390 + $0x8] sm:$0xff]
        %v2706 = vld [vmem:[%s390 + $0x10] sm:$0xff]
        %v2707 = vld [vmem:[%s390 + $0x18] sm:$0xff]
        %s2708 = sld [smem:[#allocation2 + $0x30d]]
        %v2709 = vstv %s2708
        %v2710 = vmul.f32 %v2704, %v2709
        %v2711 = vmul.f32 %v2705, %v2709
        %v2712 = vmul.f32 %v2706, %v2709
        %v2713 = vmul.f32 %v2707, %v2709
        %v2714 = vadd.f32 %v2700, %v2710
        %v2715 = vadd.f32 %v2701, %v2711
        %v2716 = vadd.f32 %v2702, %v2712
        %v2717 = vadd.f32 %v2703, %v2713
        %v2718 = vld [vmem:[%s403] sm:$0xff]
        %v2719 = vld [vmem:[%s403 + $0x8] sm:$0xff]
        %v2720 = vld [vmem:[%s403 + $0x10] sm:$0xff]
        %v2721 = vld [vmem:[%s403 + $0x18] sm:$0xff]
        %s2722 = sld [smem:[#allocation2 + $0x30e]]
        %v2723 = vstv %s2722
        %v2724 = vmul.f32 %v2718, %v2723
        %v2725 = vmul.f32 %v2719, %v2723
        %v2726 = vmul.f32 %v2720, %v2723
        %v2727 = vmul.f32 %v2721, %v2723
        %v2728 = vadd.f32 %v2714, %v2724
        %v2729 = vadd.f32 %v2715, %v2725
        %v2730 = vadd.f32 %v2716, %v2726
        %v2731 = vadd.f32 %v2717, %v2727
        %v2732 = vld [vmem:[%s416] sm:$0xff]
        %v2733 = vld [vmem:[%s416 + $0x8] sm:$0xff]
        %v2734 = vld [vmem:[%s416 + $0x10] sm:$0xff]
        %v2735 = vld [vmem:[%s416 + $0x18] sm:$0xff]
        %s2736 = sld [smem:[#allocation2 + $0x30f]]
        %v2737 = vstv %s2736
        %v2738 = vmul.f32 %v2732, %v2737
        %v2739 = vmul.f32 %v2733, %v2737
        %v2740 = vmul.f32 %v2734, %v2737
        %v2741 = vmul.f32 %v2735, %v2737
        %v2742 = vadd.f32 %v2728, %v2738
        %v2743 = vadd.f32 %v2729, %v2739
        %v2744 = vadd.f32 %v2730, %v2740
        %v2745 = vadd.f32 %v2731, %v2741
        %v2746 = vld [vmem:[%s429] sm:$0xff]
        %v2747 = vld [vmem:[%s429 + $0x8] sm:$0xff]
        %v2748 = vld [vmem:[%s429 + $0x10] sm:$0xff]
        %v2749 = vld [vmem:[%s429 + $0x18] sm:$0xff]
        %s2750 = sld [smem:[#allocation2 + $0x310]]
        %v2751 = vstv %s2750
        %v2752 = vmul.f32 %v2746, %v2751
        %v2753 = vmul.f32 %v2747, %v2751
        %v2754 = vmul.f32 %v2748, %v2751
        %v2755 = vmul.f32 %v2749, %v2751
        %v2756 = vadd.f32 %v2742, %v2752
        %v2757 = vadd.f32 %v2743, %v2753
        %v2758 = vadd.f32 %v2744, %v2754
        %v2759 = vadd.f32 %v2745, %v2755
        %v2760 = vld [vmem:[%s442] sm:$0xff]
        %v2761 = vld [vmem:[%s442 + $0x8] sm:$0xff]
        %v2762 = vld [vmem:[%s442 + $0x10] sm:$0xff]
        %v2763 = vld [vmem:[%s442 + $0x18] sm:$0xff]
        %s2764 = sld [smem:[#allocation2 + $0x311]]
        %v2765 = vstv %s2764
        %v2766 = vmul.f32 %v2760, %v2765
        %v2767 = vmul.f32 %v2761, %v2765
        %v2768 = vmul.f32 %v2762, %v2765
        %v2769 = vmul.f32 %v2763, %v2765
        %v2770 = vadd.f32 %v2756, %v2766
        %v2771 = vadd.f32 %v2757, %v2767
        %v2772 = vadd.f32 %v2758, %v2768
        %v2773 = vadd.f32 %v2759, %v2769
        %v2774 = vld [vmem:[%s455] sm:$0xff]
        %v2775 = vld [vmem:[%s455 + $0x8] sm:$0xff]
        %v2776 = vld [vmem:[%s455 + $0x10] sm:$0xff]
        %v2777 = vld [vmem:[%s455 + $0x18] sm:$0xff]
        %s2778 = sld [smem:[#allocation2 + $0x312]]
        %v2779 = vstv %s2778
        %v2780 = vmul.f32 %v2774, %v2779
        %v2781 = vmul.f32 %v2775, %v2779
        %v2782 = vmul.f32 %v2776, %v2779
        %v2783 = vmul.f32 %v2777, %v2779
        %v2784 = vadd.f32 %v2770, %v2780
        %v2785 = vadd.f32 %v2771, %v2781
        %v2786 = vadd.f32 %v2772, %v2782
        %v2787 = vadd.f32 %v2773, %v2783
        %v2788 = vld [vmem:[%s468] sm:$0xff]
        %v2789 = vld [vmem:[%s468 + $0x8] sm:$0xff]
        %v2790 = vld [vmem:[%s468 + $0x10] sm:$0xff]
        %v2791 = vld [vmem:[%s468 + $0x18] sm:$0xff]
        %s2792 = sld [smem:[#allocation2 + $0x313]]
        %v2793 = vstv %s2792
        %v2794 = vmul.f32 %v2788, %v2793
        %v2795 = vmul.f32 %v2789, %v2793
        %v2796 = vmul.f32 %v2790, %v2793
        %v2797 = vmul.f32 %v2791, %v2793
        %v2798 = vadd.f32 %v2784, %v2794
        %v2799 = vadd.f32 %v2785, %v2795
        %v2800 = vadd.f32 %v2786, %v2796
        %v2801 = vadd.f32 %v2787, %v2797
        %v2802 = vld [vmem:[%s481] sm:$0xff]
        %v2803 = vld [vmem:[%s481 + $0x8] sm:$0xff]
        %v2804 = vld [vmem:[%s481 + $0x10] sm:$0xff]
        %v2805 = vld [vmem:[%s481 + $0x18] sm:$0xff]
        %s2806 = sld [smem:[#allocation2 + $0x314]]
        %v2807 = vstv %s2806
        %v2808 = vmul.f32 %v2802, %v2807
        %v2809 = vmul.f32 %v2803, %v2807
        %v2810 = vmul.f32 %v2804, %v2807
        %v2811 = vmul.f32 %v2805, %v2807
        %v2812 = vadd.f32 %v2798, %v2808
        %v2813 = vadd.f32 %v2799, %v2809
        %v2814 = vadd.f32 %v2800, %v2810
        %v2815 = vadd.f32 %v2801, %v2811
        %v2816 = vld [vmem:[%s494] sm:$0xff]
        %v2817 = vld [vmem:[%s494 + $0x8] sm:$0xff]
        %v2818 = vld [vmem:[%s494 + $0x10] sm:$0xff]
        %v2819 = vld [vmem:[%s494 + $0x18] sm:$0xff]
        %s2820 = sld [smem:[#allocation2 + $0x315]]
        %v2821 = vstv %s2820
        %v2822 = vmul.f32 %v2816, %v2821
        %v2823 = vmul.f32 %v2817, %v2821
        %v2824 = vmul.f32 %v2818, %v2821
        %v2825 = vmul.f32 %v2819, %v2821
        %v2826 = vadd.f32 %v2812, %v2822
        %v2827 = vadd.f32 %v2813, %v2823
        %v2828 = vadd.f32 %v2814, %v2824
        %v2829 = vadd.f32 %v2815, %v2825
        %v2830 = vld [vmem:[%s507] sm:$0xff]
        %v2831 = vld [vmem:[%s507 + $0x8] sm:$0xff]
        %v2832 = vld [vmem:[%s507 + $0x10] sm:$0xff]
        %v2833 = vld [vmem:[%s507 + $0x18] sm:$0xff]
        %s2834 = sld [smem:[#allocation2 + $0x316]]
        %v2835 = vstv %s2834
        %v2836 = vmul.f32 %v2830, %v2835
        %v2837 = vmul.f32 %v2831, %v2835
        %v2838 = vmul.f32 %v2832, %v2835
        %v2839 = vmul.f32 %v2833, %v2835
        %v2840 = vadd.f32 %v2826, %v2836
        %v2841 = vadd.f32 %v2827, %v2837
        %v2842 = vadd.f32 %v2828, %v2838
        %v2843 = vadd.f32 %v2829, %v2839
        %v2844 = vld [vmem:[%s520] sm:$0xff]
        %v2845 = vld [vmem:[%s520 + $0x8] sm:$0xff]
        %v2846 = vld [vmem:[%s520 + $0x10] sm:$0xff]
        %v2847 = vld [vmem:[%s520 + $0x18] sm:$0xff]
        %s2848 = sld [smem:[#allocation2 + $0x317]]
        %v2849 = vstv %s2848
        %v2850 = vmul.f32 %v2844, %v2849
        %v2851 = vmul.f32 %v2845, %v2849
        %v2852 = vmul.f32 %v2846, %v2849
        %v2853 = vmul.f32 %v2847, %v2849
        %v2854 = vadd.f32 %v2840, %v2850
        %v2855 = vadd.f32 %v2841, %v2851
        %v2856 = vadd.f32 %v2842, %v2852
        %v2857 = vadd.f32 %v2843, %v2853
        %v2858 = vld [vmem:[%s533] sm:$0xff]
        %v2859 = vld [vmem:[%s533 + $0x8] sm:$0xff]
        %v2860 = vld [vmem:[%s533 + $0x10] sm:$0xff]
        %v2861 = vld [vmem:[%s533 + $0x18] sm:$0xff]
        %s2862 = sld [smem:[#allocation2 + $0x318]]
        %v2863 = vstv %s2862
        %v2864 = vmul.f32 %v2858, %v2863
        %v2865 = vmul.f32 %v2859, %v2863
        %v2866 = vmul.f32 %v2860, %v2863
        %v2867 = vmul.f32 %v2861, %v2863
        %v2868 = vadd.f32 %v2854, %v2864
        %v2869 = vadd.f32 %v2855, %v2865
        %v2870 = vadd.f32 %v2856, %v2866
        %v2871 = vadd.f32 %v2857, %v2867
        %v2872 = vld [vmem:[%s546] sm:$0xff]
        %v2873 = vld [vmem:[%s546 + $0x8] sm:$0xff]
        %v2874 = vld [vmem:[%s546 + $0x10] sm:$0xff]
        %v2875 = vld [vmem:[%s546 + $0x18] sm:$0xff]
        %s2876 = sld [smem:[#allocation2 + $0x319]]
        %v2877 = vstv %s2876
        %v2878 = vmul.f32 %v2872, %v2877
        %v2879 = vmul.f32 %v2873, %v2877
        %v2880 = vmul.f32 %v2874, %v2877
        %v2881 = vmul.f32 %v2875, %v2877
        %v2882 = vadd.f32 %v2868, %v2878
        %v2883 = vadd.f32 %v2869, %v2879
        %v2884 = vadd.f32 %v2870, %v2880
        %v2885 = vadd.f32 %v2871, %v2881
        %v2886 = vld [vmem:[%s559] sm:$0xff]
        %v2887 = vld [vmem:[%s559 + $0x8] sm:$0xff]
        %v2888 = vld [vmem:[%s559 + $0x10] sm:$0xff]
        %v2889 = vld [vmem:[%s559 + $0x18] sm:$0xff]
        %s2890 = sld [smem:[#allocation2 + $0x31a]]
        %v2891 = vstv %s2890
        %v2892 = vmul.f32 %v2886, %v2891
        %v2893 = vmul.f32 %v2887, %v2891
        %v2894 = vmul.f32 %v2888, %v2891
        %v2895 = vmul.f32 %v2889, %v2891
        %v2896 = vadd.f32 %v2882, %v2892
        %v2897 = vadd.f32 %v2883, %v2893
        %v2898 = vadd.f32 %v2884, %v2894
        %v2899 = vadd.f32 %v2885, %v2895
        %v2900 = vld [vmem:[%s572] sm:$0xff]
        %v2901 = vld [vmem:[%s572 + $0x8] sm:$0xff]
        %v2902 = vld [vmem:[%s572 + $0x10] sm:$0xff]
        %v2903 = vld [vmem:[%s572 + $0x18] sm:$0xff]
        %s2904 = sld [smem:[#allocation2 + $0x31b]]
        %v2905 = vstv %s2904
        %v2906 = vmul.f32 %v2900, %v2905
        %v2907 = vmul.f32 %v2901, %v2905
        %v2908 = vmul.f32 %v2902, %v2905
        %v2909 = vmul.f32 %v2903, %v2905
        %v2910 = vadd.f32 %v2896, %v2906
        %v2911 = vadd.f32 %v2897, %v2907
        %v2912 = vadd.f32 %v2898, %v2908
        %v2913 = vadd.f32 %v2899, %v2909
        %s2914 = scalar_lea.vmem %s237, 192
        %2915 = vst [vmem:[%s2914] sm:$0xff] %v2910
        %2916 = vst [vmem:[%s2914 + $0x8] sm:$0xff] %v2911
        %2917 = vst [vmem:[%s2914 + $0x10] sm:$0xff] %v2912
        %2918 = vst [vmem:[%s2914 + $0x18] sm:$0xff] %v2913
        %v2919 = vmul.f32 %v2910, %v2910
        %v2920 = vmul.f32 %v2911, %v2911
        %v2921 = vmul.f32 %v2912, %v2912
        %v2922 = vmul.f32 %v2913, %v2913
        %v2923 = vadd.f32 %v2520, %v2919
        %v2924 = vadd.f32 %v2521, %v2920
        %v2925 = vadd.f32 %v2522, %v2921
        %v2926 = vadd.f32 %v2523, %v2922
        %s2927 = sld [smem:[#allocation2 + $0x380]]
        %v2928 = vstv %s2927
        %v2929 = vmul.f32 %v599, %v2928
        %v2930 = vmul.f32 %v606, %v2928
        %v2931 = vmul.f32 %v613, %v2928
        %v2932 = vmul.f32 %v620, %v2928
        %s2933 = sld [smem:[#allocation4 + $0x7]]
        %v2934 = vstv %s2933
        %v2935 = vadd.f32 %v2929, %v2934
        %v2936 = vadd.f32 %v2930, %v2934
        %v2937 = vadd.f32 %v2931, %v2934
        %v2938 = vadd.f32 %v2932, %v2934
        %v2939 = vld [vmem:[%s227] sm:$0xff]
        %v2940 = vld [vmem:[%s227 + $0x8] sm:$0xff]
        %v2941 = vld [vmem:[%s227 + $0x10] sm:$0xff]
        %v2942 = vld [vmem:[%s227 + $0x18] sm:$0xff]
        %s2943 = sld [smem:[#allocation2 + $0x381]]
        %v2944 = vstv %s2943
        %v2945 = vmul.f32 %v2939, %v2944
        %v2946 = vmul.f32 %v2940, %v2944
        %v2947 = vmul.f32 %v2941, %v2944
        %v2948 = vmul.f32 %v2942, %v2944
        %v2949 = vadd.f32 %v2935, %v2945
        %v2950 = vadd.f32 %v2936, %v2946
        %v2951 = vadd.f32 %v2937, %v2947
        %v2952 = vadd.f32 %v2938, %v2948
        %v2953 = vld [vmem:[%s247] sm:$0xff]
        %v2954 = vld [vmem:[%s247 + $0x8] sm:$0xff]
        %v2955 = vld [vmem:[%s247 + $0x10] sm:$0xff]
        %v2956 = vld [vmem:[%s247 + $0x18] sm:$0xff]
        %s2957 = sld [smem:[#allocation2 + $0x382]]
        %v2958 = vstv %s2957
        %v2959 = vmul.f32 %v2953, %v2958
        %v2960 = vmul.f32 %v2954, %v2958
        %v2961 = vmul.f32 %v2955, %v2958
        %v2962 = vmul.f32 %v2956, %v2958
        %v2963 = vadd.f32 %v2949, %v2959
        %v2964 = vadd.f32 %v2950, %v2960
        %v2965 = vadd.f32 %v2951, %v2961
        %v2966 = vadd.f32 %v2952, %v2962
        %v2967 = vld [vmem:[%s260] sm:$0xff]
        %v2968 = vld [vmem:[%s260 + $0x8] sm:$0xff]
        %v2969 = vld [vmem:[%s260 + $0x10] sm:$0xff]
        %v2970 = vld [vmem:[%s260 + $0x18] sm:$0xff]
        %s2971 = sld [smem:[#allocation2 + $0x383]]
        %v2972 = vstv %s2971
        %v2973 = vmul.f32 %v2967, %v2972
        %v2974 = vmul.f32 %v2968, %v2972
        %v2975 = vmul.f32 %v2969, %v2972
        %v2976 = vmul.f32 %v2970, %v2972
        %v2977 = vadd.f32 %v2963, %v2973
        %v2978 = vadd.f32 %v2964, %v2974
        %v2979 = vadd.f32 %v2965, %v2975
        %v2980 = vadd.f32 %v2966, %v2976
        %v2981 = vld [vmem:[%s273] sm:$0xff]
        %v2982 = vld [vmem:[%s273 + $0x8] sm:$0xff]
        %v2983 = vld [vmem:[%s273 + $0x10] sm:$0xff]
        %v2984 = vld [vmem:[%s273 + $0x18] sm:$0xff]
        %s2985 = sld [smem:[#allocation2 + $0x384]]
        %v2986 = vstv %s2985
        %v2987 = vmul.f32 %v2981, %v2986
        %v2988 = vmul.f32 %v2982, %v2986
        %v2989 = vmul.f32 %v2983, %v2986
        %v2990 = vmul.f32 %v2984, %v2986
        %v2991 = vadd.f32 %v2977, %v2987
        %v2992 = vadd.f32 %v2978, %v2988
        %v2993 = vadd.f32 %v2979, %v2989
        %v2994 = vadd.f32 %v2980, %v2990
        %v2995 = vld [vmem:[%s286] sm:$0xff]
        %v2996 = vld [vmem:[%s286 + $0x8] sm:$0xff]
        %v2997 = vld [vmem:[%s286 + $0x10] sm:$0xff]
        %v2998 = vld [vmem:[%s286 + $0x18] sm:$0xff]
        %s2999 = sld [smem:[#allocation2 + $0x385]]
        %v3000 = vstv %s2999
        %v3001 = vmul.f32 %v2995, %v3000
        %v3002 = vmul.f32 %v2996, %v3000
        %v3003 = vmul.f32 %v2997, %v3000
        %v3004 = vmul.f32 %v2998, %v3000
        %v3005 = vadd.f32 %v2991, %v3001
        %v3006 = vadd.f32 %v2992, %v3002
        %v3007 = vadd.f32 %v2993, %v3003
        %v3008 = vadd.f32 %v2994, %v3004
        %v3009 = vld [vmem:[%s299] sm:$0xff]
        %v3010 = vld [vmem:[%s299 + $0x8] sm:$0xff]
        %v3011 = vld [vmem:[%s299 + $0x10] sm:$0xff]
        %v3012 = vld [vmem:[%s299 + $0x18] sm:$0xff]
        %s3013 = sld [smem:[#allocation2 + $0x386]]
        %v3014 = vstv %s3013
        %v3015 = vmul.f32 %v3009, %v3014
        %v3016 = vmul.f32 %v3010, %v3014
        %v3017 = vmul.f32 %v3011, %v3014
        %v3018 = vmul.f32 %v3012, %v3014
        %v3019 = vadd.f32 %v3005, %v3015
        %v3020 = vadd.f32 %v3006, %v3016
        %v3021 = vadd.f32 %v3007, %v3017
        %v3022 = vadd.f32 %v3008, %v3018
        %v3023 = vld [vmem:[%s312] sm:$0xff]
        %v3024 = vld [vmem:[%s312 + $0x8] sm:$0xff]
        %v3025 = vld [vmem:[%s312 + $0x10] sm:$0xff]
        %v3026 = vld [vmem:[%s312 + $0x18] sm:$0xff]
        %s3027 = sld [smem:[#allocation2 + $0x387]]
        %v3028 = vstv %s3027
        %v3029 = vmul.f32 %v3023, %v3028
        %v3030 = vmul.f32 %v3024, %v3028
        %v3031 = vmul.f32 %v3025, %v3028
        %v3032 = vmul.f32 %v3026, %v3028
        %v3033 = vadd.f32 %v3019, %v3029
        %v3034 = vadd.f32 %v3020, %v3030
        %v3035 = vadd.f32 %v3021, %v3031
        %v3036 = vadd.f32 %v3022, %v3032
        %v3037 = vld [vmem:[%s325] sm:$0xff]
        %v3038 = vld [vmem:[%s325 + $0x8] sm:$0xff]
        %v3039 = vld [vmem:[%s325 + $0x10] sm:$0xff]
        %v3040 = vld [vmem:[%s325 + $0x18] sm:$0xff]
        %s3041 = sld [smem:[#allocation2 + $0x388]]
        %v3042 = vstv %s3041
        %v3043 = vmul.f32 %v3037, %v3042
        %v3044 = vmul.f32 %v3038, %v3042
        %v3045 = vmul.f32 %v3039, %v3042
        %v3046 = vmul.f32 %v3040, %v3042
        %v3047 = vadd.f32 %v3033, %v3043
        %v3048 = vadd.f32 %v3034, %v3044
        %v3049 = vadd.f32 %v3035, %v3045
        %v3050 = vadd.f32 %v3036, %v3046
        %v3051 = vld [vmem:[%s338] sm:$0xff]
        %v3052 = vld [vmem:[%s338 + $0x8] sm:$0xff]
        %v3053 = vld [vmem:[%s338 + $0x10] sm:$0xff]
        %v3054 = vld [vmem:[%s338 + $0x18] sm:$0xff]
        %s3055 = sld [smem:[#allocation2 + $0x389]]
        %v3056 = vstv %s3055
        %v3057 = vmul.f32 %v3051, %v3056
        %v3058 = vmul.f32 %v3052, %v3056
        %v3059 = vmul.f32 %v3053, %v3056
        %v3060 = vmul.f32 %v3054, %v3056
        %v3061 = vadd.f32 %v3047, %v3057
        %v3062 = vadd.f32 %v3048, %v3058
        %v3063 = vadd.f32 %v3049, %v3059
        %v3064 = vadd.f32 %v3050, %v3060
        %v3065 = vld [vmem:[%s351] sm:$0xff]
        %v3066 = vld [vmem:[%s351 + $0x8] sm:$0xff]
        %v3067 = vld [vmem:[%s351 + $0x10] sm:$0xff]
        %v3068 = vld [vmem:[%s351 + $0x18] sm:$0xff]
        %s3069 = sld [smem:[#allocation2 + $0x38a]]
        %v3070 = vstv %s3069
        %v3071 = vmul.f32 %v3065, %v3070
        %v3072 = vmul.f32 %v3066, %v3070
        %v3073 = vmul.f32 %v3067, %v3070
        %v3074 = vmul.f32 %v3068, %v3070
        %v3075 = vadd.f32 %v3061, %v3071
        %v3076 = vadd.f32 %v3062, %v3072
        %v3077 = vadd.f32 %v3063, %v3073
        %v3078 = vadd.f32 %v3064, %v3074
        %v3079 = vld [vmem:[%s364] sm:$0xff]
        %v3080 = vld [vmem:[%s364 + $0x8] sm:$0xff]
        %v3081 = vld [vmem:[%s364 + $0x10] sm:$0xff]
        %v3082 = vld [vmem:[%s364 + $0x18] sm:$0xff]
        %s3083 = sld [smem:[#allocation2 + $0x38b]]
        %v3084 = vstv %s3083
        %v3085 = vmul.f32 %v3079, %v3084
        %v3086 = vmul.f32 %v3080, %v3084
        %v3087 = vmul.f32 %v3081, %v3084
        %v3088 = vmul.f32 %v3082, %v3084
        %v3089 = vadd.f32 %v3075, %v3085
        %v3090 = vadd.f32 %v3076, %v3086
        %v3091 = vadd.f32 %v3077, %v3087
        %v3092 = vadd.f32 %v3078, %v3088
        %v3093 = vld [vmem:[%s377] sm:$0xff]
        %v3094 = vld [vmem:[%s377 + $0x8] sm:$0xff]
        %v3095 = vld [vmem:[%s377 + $0x10] sm:$0xff]
        %v3096 = vld [vmem:[%s377 + $0x18] sm:$0xff]
        %s3097 = sld [smem:[#allocation2 + $0x38c]]
        %v3098 = vstv %s3097
        %v3099 = vmul.f32 %v3093, %v3098
        %v3100 = vmul.f32 %v3094, %v3098
        %v3101 = vmul.f32 %v3095, %v3098
        %v3102 = vmul.f32 %v3096, %v3098
        %v3103 = vadd.f32 %v3089, %v3099
        %v3104 = vadd.f32 %v3090, %v3100
        %v3105 = vadd.f32 %v3091, %v3101
        %v3106 = vadd.f32 %v3092, %v3102
        %v3107 = vld [vmem:[%s390] sm:$0xff]
        %v3108 = vld [vmem:[%s390 + $0x8] sm:$0xff]
        %v3109 = vld [vmem:[%s390 + $0x10] sm:$0xff]
        %v3110 = vld [vmem:[%s390 + $0x18] sm:$0xff]
        %s3111 = sld [smem:[#allocation2 + $0x38d]]
        %v3112 = vstv %s3111
        %v3113 = vmul.f32 %v3107, %v3112
        %v3114 = vmul.f32 %v3108, %v3112
        %v3115 = vmul.f32 %v3109, %v3112
        %v3116 = vmul.f32 %v3110, %v3112
        %v3117 = vadd.f32 %v3103, %v3113
        %v3118 = vadd.f32 %v3104, %v3114
        %v3119 = vadd.f32 %v3105, %v3115
        %v3120 = vadd.f32 %v3106, %v3116
        %v3121 = vld [vmem:[%s403] sm:$0xff]
        %v3122 = vld [vmem:[%s403 + $0x8] sm:$0xff]
        %v3123 = vld [vmem:[%s403 + $0x10] sm:$0xff]
        %v3124 = vld [vmem:[%s403 + $0x18] sm:$0xff]
        %s3125 = sld [smem:[#allocation2 + $0x38e]]
        %v3126 = vstv %s3125
        %v3127 = vmul.f32 %v3121, %v3126
        %v3128 = vmul.f32 %v3122, %v3126
        %v3129 = vmul.f32 %v3123, %v3126
        %v3130 = vmul.f32 %v3124, %v3126
        %v3131 = vadd.f32 %v3117, %v3127
        %v3132 = vadd.f32 %v3118, %v3128
        %v3133 = vadd.f32 %v3119, %v3129
        %v3134 = vadd.f32 %v3120, %v3130
        %v3135 = vld [vmem:[%s416] sm:$0xff]
        %v3136 = vld [vmem:[%s416 + $0x8] sm:$0xff]
        %v3137 = vld [vmem:[%s416 + $0x10] sm:$0xff]
        %v3138 = vld [vmem:[%s416 + $0x18] sm:$0xff]
        %s3139 = sld [smem:[#allocation2 + $0x38f]]
        %v3140 = vstv %s3139
        %v3141 = vmul.f32 %v3135, %v3140
        %v3142 = vmul.f32 %v3136, %v3140
        %v3143 = vmul.f32 %v3137, %v3140
        %v3144 = vmul.f32 %v3138, %v3140
        %v3145 = vadd.f32 %v3131, %v3141
        %v3146 = vadd.f32 %v3132, %v3142
        %v3147 = vadd.f32 %v3133, %v3143
        %v3148 = vadd.f32 %v3134, %v3144
        %v3149 = vld [vmem:[%s429] sm:$0xff]
        %v3150 = vld [vmem:[%s429 + $0x8] sm:$0xff]
        %v3151 = vld [vmem:[%s429 + $0x10] sm:$0xff]
        %v3152 = vld [vmem:[%s429 + $0x18] sm:$0xff]
        %s3153 = sld [smem:[#allocation2 + $0x390]]
        %v3154 = vstv %s3153
        %v3155 = vmul.f32 %v3149, %v3154
        %v3156 = vmul.f32 %v3150, %v3154
        %v3157 = vmul.f32 %v3151, %v3154
        %v3158 = vmul.f32 %v3152, %v3154
        %v3159 = vadd.f32 %v3145, %v3155
        %v3160 = vadd.f32 %v3146, %v3156
        %v3161 = vadd.f32 %v3147, %v3157
        %v3162 = vadd.f32 %v3148, %v3158
        %v3163 = vld [vmem:[%s442] sm:$0xff]
        %v3164 = vld [vmem:[%s442 + $0x8] sm:$0xff]
        %v3165 = vld [vmem:[%s442 + $0x10] sm:$0xff]
        %v3166 = vld [vmem:[%s442 + $0x18] sm:$0xff]
        %s3167 = sld [smem:[#allocation2 + $0x391]]
        %v3168 = vstv %s3167
        %v3169 = vmul.f32 %v3163, %v3168
        %v3170 = vmul.f32 %v3164, %v3168
        %v3171 = vmul.f32 %v3165, %v3168
        %v3172 = vmul.f32 %v3166, %v3168
        %v3173 = vadd.f32 %v3159, %v3169
        %v3174 = vadd.f32 %v3160, %v3170
        %v3175 = vadd.f32 %v3161, %v3171
        %v3176 = vadd.f32 %v3162, %v3172
        %v3177 = vld [vmem:[%s455] sm:$0xff]
        %v3178 = vld [vmem:[%s455 + $0x8] sm:$0xff]
        %v3179 = vld [vmem:[%s455 + $0x10] sm:$0xff]
        %v3180 = vld [vmem:[%s455 + $0x18] sm:$0xff]
        %s3181 = sld [smem:[#allocation2 + $0x392]]
        %v3182 = vstv %s3181
        %v3183 = vmul.f32 %v3177, %v3182
        %v3184 = vmul.f32 %v3178, %v3182
        %v3185 = vmul.f32 %v3179, %v3182
        %v3186 = vmul.f32 %v3180, %v3182
        %v3187 = vadd.f32 %v3173, %v3183
        %v3188 = vadd.f32 %v3174, %v3184
        %v3189 = vadd.f32 %v3175, %v3185
        %v3190 = vadd.f32 %v3176, %v3186
        %v3191 = vld [vmem:[%s468] sm:$0xff]
        %v3192 = vld [vmem:[%s468 + $0x8] sm:$0xff]
        %v3193 = vld [vmem:[%s468 + $0x10] sm:$0xff]
        %v3194 = vld [vmem:[%s468 + $0x18] sm:$0xff]
        %s3195 = sld [smem:[#allocation2 + $0x393]]
        %v3196 = vstv %s3195
        %v3197 = vmul.f32 %v3191, %v3196
        %v3198 = vmul.f32 %v3192, %v3196
        %v3199 = vmul.f32 %v3193, %v3196
        %v3200 = vmul.f32 %v3194, %v3196
        %v3201 = vadd.f32 %v3187, %v3197
        %v3202 = vadd.f32 %v3188, %v3198
        %v3203 = vadd.f32 %v3189, %v3199
        %v3204 = vadd.f32 %v3190, %v3200
        %v3205 = vld [vmem:[%s481] sm:$0xff]
        %v3206 = vld [vmem:[%s481 + $0x8] sm:$0xff]
        %v3207 = vld [vmem:[%s481 + $0x10] sm:$0xff]
        %v3208 = vld [vmem:[%s481 + $0x18] sm:$0xff]
        %s3209 = sld [smem:[#allocation2 + $0x394]]
        %v3210 = vstv %s3209
        %v3211 = vmul.f32 %v3205, %v3210
        %v3212 = vmul.f32 %v3206, %v3210
        %v3213 = vmul.f32 %v3207, %v3210
        %v3214 = vmul.f32 %v3208, %v3210
        %v3215 = vadd.f32 %v3201, %v3211
        %v3216 = vadd.f32 %v3202, %v3212
        %v3217 = vadd.f32 %v3203, %v3213
        %v3218 = vadd.f32 %v3204, %v3214
        %v3219 = vld [vmem:[%s494] sm:$0xff]
        %v3220 = vld [vmem:[%s494 + $0x8] sm:$0xff]
        %v3221 = vld [vmem:[%s494 + $0x10] sm:$0xff]
        %v3222 = vld [vmem:[%s494 + $0x18] sm:$0xff]
        %s3223 = sld [smem:[#allocation2 + $0x395]]
        %v3224 = vstv %s3223
        %v3225 = vmul.f32 %v3219, %v3224
        %v3226 = vmul.f32 %v3220, %v3224
        %v3227 = vmul.f32 %v3221, %v3224
        %v3228 = vmul.f32 %v3222, %v3224
        %v3229 = vadd.f32 %v3215, %v3225
        %v3230 = vadd.f32 %v3216, %v3226
        %v3231 = vadd.f32 %v3217, %v3227
        %v3232 = vadd.f32 %v3218, %v3228
        %v3233 = vld [vmem:[%s507] sm:$0xff]
        %v3234 = vld [vmem:[%s507 + $0x8] sm:$0xff]
        %v3235 = vld [vmem:[%s507 + $0x10] sm:$0xff]
        %v3236 = vld [vmem:[%s507 + $0x18] sm:$0xff]
        %s3237 = sld [smem:[#allocation2 + $0x396]]
        %v3238 = vstv %s3237
        %v3239 = vmul.f32 %v3233, %v3238
        %v3240 = vmul.f32 %v3234, %v3238
        %v3241 = vmul.f32 %v3235, %v3238
        %v3242 = vmul.f32 %v3236, %v3238
        %v3243 = vadd.f32 %v3229, %v3239
        %v3244 = vadd.f32 %v3230, %v3240
        %v3245 = vadd.f32 %v3231, %v3241
        %v3246 = vadd.f32 %v3232, %v3242
        %v3247 = vld [vmem:[%s520] sm:$0xff]
        %v3248 = vld [vmem:[%s520 + $0x8] sm:$0xff]
        %v3249 = vld [vmem:[%s520 + $0x10] sm:$0xff]
        %v3250 = vld [vmem:[%s520 + $0x18] sm:$0xff]
        %s3251 = sld [smem:[#allocation2 + $0x397]]
        %v3252 = vstv %s3251
        %v3253 = vmul.f32 %v3247, %v3252
        %v3254 = vmul.f32 %v3248, %v3252
        %v3255 = vmul.f32 %v3249, %v3252
        %v3256 = vmul.f32 %v3250, %v3252
        %v3257 = vadd.f32 %v3243, %v3253
        %v3258 = vadd.f32 %v3244, %v3254
        %v3259 = vadd.f32 %v3245, %v3255
        %v3260 = vadd.f32 %v3246, %v3256
        %v3261 = vld [vmem:[%s533] sm:$0xff]
        %v3262 = vld [vmem:[%s533 + $0x8] sm:$0xff]
        %v3263 = vld [vmem:[%s533 + $0x10] sm:$0xff]
        %v3264 = vld [vmem:[%s533 + $0x18] sm:$0xff]
        %s3265 = sld [smem:[#allocation2 + $0x398]]
        %v3266 = vstv %s3265
        %v3267 = vmul.f32 %v3261, %v3266
        %v3268 = vmul.f32 %v3262, %v3266
        %v3269 = vmul.f32 %v3263, %v3266
        %v3270 = vmul.f32 %v3264, %v3266
        %v3271 = vadd.f32 %v3257, %v3267
        %v3272 = vadd.f32 %v3258, %v3268
        %v3273 = vadd.f32 %v3259, %v3269
        %v3274 = vadd.f32 %v3260, %v3270
        %v3275 = vld [vmem:[%s546] sm:$0xff]
        %v3276 = vld [vmem:[%s546 + $0x8] sm:$0xff]
        %v3277 = vld [vmem:[%s546 + $0x10] sm:$0xff]
        %v3278 = vld [vmem:[%s546 + $0x18] sm:$0xff]
        %s3279 = sld [smem:[#allocation2 + $0x399]]
        %v3280 = vstv %s3279
        %v3281 = vmul.f32 %v3275, %v3280
        %v3282 = vmul.f32 %v3276, %v3280
        %v3283 = vmul.f32 %v3277, %v3280
        %v3284 = vmul.f32 %v3278, %v3280
        %v3285 = vadd.f32 %v3271, %v3281
        %v3286 = vadd.f32 %v3272, %v3282
        %v3287 = vadd.f32 %v3273, %v3283
        %v3288 = vadd.f32 %v3274, %v3284
        %v3289 = vld [vmem:[%s559] sm:$0xff]
        %v3290 = vld [vmem:[%s559 + $0x8] sm:$0xff]
        %v3291 = vld [vmem:[%s559 + $0x10] sm:$0xff]
        %v3292 = vld [vmem:[%s559 + $0x18] sm:$0xff]
        %s3293 = sld [smem:[#allocation2 + $0x39a]]
        %v3294 = vstv %s3293
        %v3295 = vmul.f32 %v3289, %v3294
        %v3296 = vmul.f32 %v3290, %v3294
        %v3297 = vmul.f32 %v3291, %v3294
        %v3298 = vmul.f32 %v3292, %v3294
        %v3299 = vadd.f32 %v3285, %v3295
        %v3300 = vadd.f32 %v3286, %v3296
        %v3301 = vadd.f32 %v3287, %v3297
        %v3302 = vadd.f32 %v3288, %v3298
        %v3303 = vld [vmem:[%s572] sm:$0xff]
        %v3304 = vld [vmem:[%s572 + $0x8] sm:$0xff]
        %v3305 = vld [vmem:[%s572 + $0x10] sm:$0xff]
        %v3306 = vld [vmem:[%s572 + $0x18] sm:$0xff]
        %s3307 = sld [smem:[#allocation2 + $0x39b]]
        %v3308 = vstv %s3307
        %v3309 = vmul.f32 %v3303, %v3308
        %v3310 = vmul.f32 %v3304, %v3308
        %v3311 = vmul.f32 %v3305, %v3308
        %v3312 = vmul.f32 %v3306, %v3308
        %v3313 = vadd.f32 %v3299, %v3309
        %v3314 = vadd.f32 %v3300, %v3310
        %v3315 = vadd.f32 %v3301, %v3311
        %v3316 = vadd.f32 %v3302, %v3312
        %s3317 = scalar_lea.vmem %s237, 224
        %3318 = vst [vmem:[%s3317] sm:$0xff] %v3313
        %3319 = vst [vmem:[%s3317 + $0x8] sm:$0xff] %v3314
        %3320 = vst [vmem:[%s3317 + $0x10] sm:$0xff] %v3315
        %3321 = vst [vmem:[%s3317 + $0x18] sm:$0xff] %v3316
        %v3322 = vmul.f32 %v3313, %v3313
        %v3323 = vmul.f32 %v3314, %v3314
        %v3324 = vmul.f32 %v3315, %v3315
        %v3325 = vmul.f32 %v3316, %v3316
        %v3326 = vadd.f32 %v2923, %v3322
        %v3327 = vadd.f32 %v2924, %v3323
        %v3328 = vadd.f32 %v2925, %v3324
        %v3329 = vadd.f32 %v2926, %v3325
        %s3330 = sld [smem:[#allocation2 + $0x400]]
        %v3331 = vstv %s3330
        %v3332 = vmul.f32 %v599, %v3331
        %v3333 = vmul.f32 %v606, %v3331
        %v3334 = vmul.f32 %v613, %v3331
        %v3335 = vmul.f32 %v620, %v3331
        %s3336 = sld [smem:[#allocation4 + $0x8]]
        %v3337 = vstv %s3336
        %v3338 = vadd.f32 %v3332, %v3337
        %v3339 = vadd.f32 %v3333, %v3337
        %v3340 = vadd.f32 %v3334, %v3337
        %v3341 = vadd.f32 %v3335, %v3337
        %v3342 = vld [vmem:[%s227] sm:$0xff]
        %v3343 = vld [vmem:[%s227 + $0x8] sm:$0xff]
        %v3344 = vld [vmem:[%s227 + $0x10] sm:$0xff]
        %v3345 = vld [vmem:[%s227 + $0x18] sm:$0xff]
        %s3346 = sld [smem:[#allocation2 + $0x401]]
        %v3347 = vstv %s3346
        %v3348 = vmul.f32 %v3342, %v3347
        %v3349 = vmul.f32 %v3343, %v3347
        %v3350 = vmul.f32 %v3344, %v3347
        %v3351 = vmul.f32 %v3345, %v3347
        %v3352 = vadd.f32 %v3338, %v3348
        %v3353 = vadd.f32 %v3339, %v3349
        %v3354 = vadd.f32 %v3340, %v3350
        %v3355 = vadd.f32 %v3341, %v3351
        %v3356 = vld [vmem:[%s247] sm:$0xff]
        %v3357 = vld [vmem:[%s247 + $0x8] sm:$0xff]
        %v3358 = vld [vmem:[%s247 + $0x10] sm:$0xff]
        %v3359 = vld [vmem:[%s247 + $0x18] sm:$0xff]
        %s3360 = sld [smem:[#allocation2 + $0x402]]
        %v3361 = vstv %s3360
        %v3362 = vmul.f32 %v3356, %v3361
        %v3363 = vmul.f32 %v3357, %v3361
        %v3364 = vmul.f32 %v3358, %v3361
        %v3365 = vmul.f32 %v3359, %v3361
        %v3366 = vadd.f32 %v3352, %v3362
        %v3367 = vadd.f32 %v3353, %v3363
        %v3368 = vadd.f32 %v3354, %v3364
        %v3369 = vadd.f32 %v3355, %v3365
        %v3370 = vld [vmem:[%s260] sm:$0xff]
        %v3371 = vld [vmem:[%s260 + $0x8] sm:$0xff]
        %v3372 = vld [vmem:[%s260 + $0x10] sm:$0xff]
        %v3373 = vld [vmem:[%s260 + $0x18] sm:$0xff]
        %s3374 = sld [smem:[#allocation2 + $0x403]]
        %v3375 = vstv %s3374
        %v3376 = vmul.f32 %v3370, %v3375
        %v3377 = vmul.f32 %v3371, %v3375
        %v3378 = vmul.f32 %v3372, %v3375
        %v3379 = vmul.f32 %v3373, %v3375
        %v3380 = vadd.f32 %v3366, %v3376
        %v3381 = vadd.f32 %v3367, %v3377
        %v3382 = vadd.f32 %v3368, %v3378
        %v3383 = vadd.f32 %v3369, %v3379
        %v3384 = vld [vmem:[%s273] sm:$0xff]
        %v3385 = vld [vmem:[%s273 + $0x8] sm:$0xff]
        %v3386 = vld [vmem:[%s273 + $0x10] sm:$0xff]
        %v3387 = vld [vmem:[%s273 + $0x18] sm:$0xff]
        %s3388 = sld [smem:[#allocation2 + $0x404]]
        %v3389 = vstv %s3388
        %v3390 = vmul.f32 %v3384, %v3389
        %v3391 = vmul.f32 %v3385, %v3389
        %v3392 = vmul.f32 %v3386, %v3389
        %v3393 = vmul.f32 %v3387, %v3389
        %v3394 = vadd.f32 %v3380, %v3390
        %v3395 = vadd.f32 %v3381, %v3391
        %v3396 = vadd.f32 %v3382, %v3392
        %v3397 = vadd.f32 %v3383, %v3393
        %v3398 = vld [vmem:[%s286] sm:$0xff]
        %v3399 = vld [vmem:[%s286 + $0x8] sm:$0xff]
        %v3400 = vld [vmem:[%s286 + $0x10] sm:$0xff]
        %v3401 = vld [vmem:[%s286 + $0x18] sm:$0xff]
        %s3402 = sld [smem:[#allocation2 + $0x405]]
        %v3403 = vstv %s3402
        %v3404 = vmul.f32 %v3398, %v3403
        %v3405 = vmul.f32 %v3399, %v3403
        %v3406 = vmul.f32 %v3400, %v3403
        %v3407 = vmul.f32 %v3401, %v3403
        %v3408 = vadd.f32 %v3394, %v3404
        %v3409 = vadd.f32 %v3395, %v3405
        %v3410 = vadd.f32 %v3396, %v3406
        %v3411 = vadd.f32 %v3397, %v3407
        %v3412 = vld [vmem:[%s299] sm:$0xff]
        %v3413 = vld [vmem:[%s299 + $0x8] sm:$0xff]
        %v3414 = vld [vmem:[%s299 + $0x10] sm:$0xff]
        %v3415 = vld [vmem:[%s299 + $0x18] sm:$0xff]
        %s3416 = sld [smem:[#allocation2 + $0x406]]
        %v3417 = vstv %s3416
        %v3418 = vmul.f32 %v3412, %v3417
        %v3419 = vmul.f32 %v3413, %v3417
        %v3420 = vmul.f32 %v3414, %v3417
        %v3421 = vmul.f32 %v3415, %v3417
        %v3422 = vadd.f32 %v3408, %v3418
        %v3423 = vadd.f32 %v3409, %v3419
        %v3424 = vadd.f32 %v3410, %v3420
        %v3425 = vadd.f32 %v3411, %v3421
        %v3426 = vld [vmem:[%s312] sm:$0xff]
        %v3427 = vld [vmem:[%s312 + $0x8] sm:$0xff]
        %v3428 = vld [vmem:[%s312 + $0x10] sm:$0xff]
        %v3429 = vld [vmem:[%s312 + $0x18] sm:$0xff]
        %s3430 = sld [smem:[#allocation2 + $0x407]]
        %v3431 = vstv %s3430
        %v3432 = vmul.f32 %v3426, %v3431
        %v3433 = vmul.f32 %v3427, %v3431
        %v3434 = vmul.f32 %v3428, %v3431
        %v3435 = vmul.f32 %v3429, %v3431
        %v3436 = vadd.f32 %v3422, %v3432
        %v3437 = vadd.f32 %v3423, %v3433
        %v3438 = vadd.f32 %v3424, %v3434
        %v3439 = vadd.f32 %v3425, %v3435
        %v3440 = vld [vmem:[%s325] sm:$0xff]
        %v3441 = vld [vmem:[%s325 + $0x8] sm:$0xff]
        %v3442 = vld [vmem:[%s325 + $0x10] sm:$0xff]
        %v3443 = vld [vmem:[%s325 + $0x18] sm:$0xff]
        %s3444 = sld [smem:[#allocation2 + $0x408]]
        %v3445 = vstv %s3444
        %v3446 = vmul.f32 %v3440, %v3445
        %v3447 = vmul.f32 %v3441, %v3445
        %v3448 = vmul.f32 %v3442, %v3445
        %v3449 = vmul.f32 %v3443, %v3445
        %v3450 = vadd.f32 %v3436, %v3446
        %v3451 = vadd.f32 %v3437, %v3447
        %v3452 = vadd.f32 %v3438, %v3448
        %v3453 = vadd.f32 %v3439, %v3449
        %v3454 = vld [vmem:[%s338] sm:$0xff]
        %v3455 = vld [vmem:[%s338 + $0x8] sm:$0xff]
        %v3456 = vld [vmem:[%s338 + $0x10] sm:$0xff]
        %v3457 = vld [vmem:[%s338 + $0x18] sm:$0xff]
        %s3458 = sld [smem:[#allocation2 + $0x409]]
        %v3459 = vstv %s3458
        %v3460 = vmul.f32 %v3454, %v3459
        %v3461 = vmul.f32 %v3455, %v3459
        %v3462 = vmul.f32 %v3456, %v3459
        %v3463 = vmul.f32 %v3457, %v3459
        %v3464 = vadd.f32 %v3450, %v3460
        %v3465 = vadd.f32 %v3451, %v3461
        %v3466 = vadd.f32 %v3452, %v3462
        %v3467 = vadd.f32 %v3453, %v3463
        %v3468 = vld [vmem:[%s351] sm:$0xff]
        %v3469 = vld [vmem:[%s351 + $0x8] sm:$0xff]
        %v3470 = vld [vmem:[%s351 + $0x10] sm:$0xff]
        %v3471 = vld [vmem:[%s351 + $0x18] sm:$0xff]
        %s3472 = sld [smem:[#allocation2 + $0x40a]]
        %v3473 = vstv %s3472
        %v3474 = vmul.f32 %v3468, %v3473
        %v3475 = vmul.f32 %v3469, %v3473
        %v3476 = vmul.f32 %v3470, %v3473
        %v3477 = vmul.f32 %v3471, %v3473
        %v3478 = vadd.f32 %v3464, %v3474
        %v3479 = vadd.f32 %v3465, %v3475
        %v3480 = vadd.f32 %v3466, %v3476
        %v3481 = vadd.f32 %v3467, %v3477
        %v3482 = vld [vmem:[%s364] sm:$0xff]
        %v3483 = vld [vmem:[%s364 + $0x8] sm:$0xff]
        %v3484 = vld [vmem:[%s364 + $0x10] sm:$0xff]
        %v3485 = vld [vmem:[%s364 + $0x18] sm:$0xff]
        %s3486 = sld [smem:[#allocation2 + $0x40b]]
        %v3487 = vstv %s3486
        %v3488 = vmul.f32 %v3482, %v3487
        %v3489 = vmul.f32 %v3483, %v3487
        %v3490 = vmul.f32 %v3484, %v3487
        %v3491 = vmul.f32 %v3485, %v3487
        %v3492 = vadd.f32 %v3478, %v3488
        %v3493 = vadd.f32 %v3479, %v3489
        %v3494 = vadd.f32 %v3480, %v3490
        %v3495 = vadd.f32 %v3481, %v3491
        %v3496 = vld [vmem:[%s377] sm:$0xff]
        %v3497 = vld [vmem:[%s377 + $0x8] sm:$0xff]
        %v3498 = vld [vmem:[%s377 + $0x10] sm:$0xff]
        %v3499 = vld [vmem:[%s377 + $0x18] sm:$0xff]
        %s3500 = sld [smem:[#allocation2 + $0x40c]]
        %v3501 = vstv %s3500
        %v3502 = vmul.f32 %v3496, %v3501
        %v3503 = vmul.f32 %v3497, %v3501
        %v3504 = vmul.f32 %v3498, %v3501
        %v3505 = vmul.f32 %v3499, %v3501
        %v3506 = vadd.f32 %v3492, %v3502
        %v3507 = vadd.f32 %v3493, %v3503
        %v3508 = vadd.f32 %v3494, %v3504
        %v3509 = vadd.f32 %v3495, %v3505
        %v3510 = vld [vmem:[%s390] sm:$0xff]
        %v3511 = vld [vmem:[%s390 + $0x8] sm:$0xff]
        %v3512 = vld [vmem:[%s390 + $0x10] sm:$0xff]
        %v3513 = vld [vmem:[%s390 + $0x18] sm:$0xff]
        %s3514 = sld [smem:[#allocation2 + $0x40d]]
        %v3515 = vstv %s3514
        %v3516 = vmul.f32 %v3510, %v3515
        %v3517 = vmul.f32 %v3511, %v3515
        %v3518 = vmul.f32 %v3512, %v3515
        %v3519 = vmul.f32 %v3513, %v3515
        %v3520 = vadd.f32 %v3506, %v3516
        %v3521 = vadd.f32 %v3507, %v3517
        %v3522 = vadd.f32 %v3508, %v3518
        %v3523 = vadd.f32 %v3509, %v3519
        %v3524 = vld [vmem:[%s403] sm:$0xff]
        %v3525 = vld [vmem:[%s403 + $0x8] sm:$0xff]
        %v3526 = vld [vmem:[%s403 + $0x10] sm:$0xff]
        %v3527 = vld [vmem:[%s403 + $0x18] sm:$0xff]
        %s3528 = sld [smem:[#allocation2 + $0x40e]]
        %v3529 = vstv %s3528
        %v3530 = vmul.f32 %v3524, %v3529
        %v3531 = vmul.f32 %v3525, %v3529
        %v3532 = vmul.f32 %v3526, %v3529
        %v3533 = vmul.f32 %v3527, %v3529
        %v3534 = vadd.f32 %v3520, %v3530
        %v3535 = vadd.f32 %v3521, %v3531
        %v3536 = vadd.f32 %v3522, %v3532
        %v3537 = vadd.f32 %v3523, %v3533
        %v3538 = vld [vmem:[%s416] sm:$0xff]
        %v3539 = vld [vmem:[%s416 + $0x8] sm:$0xff]
        %v3540 = vld [vmem:[%s416 + $0x10] sm:$0xff]
        %v3541 = vld [vmem:[%s416 + $0x18] sm:$0xff]
        %s3542 = sld [smem:[#allocation2 + $0x40f]]
        %v3543 = vstv %s3542
        %v3544 = vmul.f32 %v3538, %v3543
        %v3545 = vmul.f32 %v3539, %v3543
        %v3546 = vmul.f32 %v3540, %v3543
        %v3547 = vmul.f32 %v3541, %v3543
        %v3548 = vadd.f32 %v3534, %v3544
        %v3549 = vadd.f32 %v3535, %v3545
        %v3550 = vadd.f32 %v3536, %v3546
        %v3551 = vadd.f32 %v3537, %v3547
        %v3552 = vld [vmem:[%s429] sm:$0xff]
        %v3553 = vld [vmem:[%s429 + $0x8] sm:$0xff]
        %v3554 = vld [vmem:[%s429 + $0x10] sm:$0xff]
        %v3555 = vld [vmem:[%s429 + $0x18] sm:$0xff]
        %s3556 = sld [smem:[#allocation2 + $0x410]]
        %v3557 = vstv %s3556
        %v3558 = vmul.f32 %v3552, %v3557
        %v3559 = vmul.f32 %v3553, %v3557
        %v3560 = vmul.f32 %v3554, %v3557
        %v3561 = vmul.f32 %v3555, %v3557
        %v3562 = vadd.f32 %v3548, %v3558
        %v3563 = vadd.f32 %v3549, %v3559
        %v3564 = vadd.f32 %v3550, %v3560
        %v3565 = vadd.f32 %v3551, %v3561
        %v3566 = vld [vmem:[%s442] sm:$0xff]
        %v3567 = vld [vmem:[%s442 + $0x8] sm:$0xff]
        %v3568 = vld [vmem:[%s442 + $0x10] sm:$0xff]
        %v3569 = vld [vmem:[%s442 + $0x18] sm:$0xff]
        %s3570 = sld [smem:[#allocation2 + $0x411]]
        %v3571 = vstv %s3570
        %v3572 = vmul.f32 %v3566, %v3571
        %v3573 = vmul.f32 %v3567, %v3571
        %v3574 = vmul.f32 %v3568, %v3571
        %v3575 = vmul.f32 %v3569, %v3571
        %v3576 = vadd.f32 %v3562, %v3572
        %v3577 = vadd.f32 %v3563, %v3573
        %v3578 = vadd.f32 %v3564, %v3574
        %v3579 = vadd.f32 %v3565, %v3575
        %v3580 = vld [vmem:[%s455] sm:$0xff]
        %v3581 = vld [vmem:[%s455 + $0x8] sm:$0xff]
        %v3582 = vld [vmem:[%s455 + $0x10] sm:$0xff]
        %v3583 = vld [vmem:[%s455 + $0x18] sm:$0xff]
        %s3584 = sld [smem:[#allocation2 + $0x412]]
        %v3585 = vstv %s3584
        %v3586 = vmul.f32 %v3580, %v3585
        %v3587 = vmul.f32 %v3581, %v3585
        %v3588 = vmul.f32 %v3582, %v3585
        %v3589 = vmul.f32 %v3583, %v3585
        %v3590 = vadd.f32 %v3576, %v3586
        %v3591 = vadd.f32 %v3577, %v3587
        %v3592 = vadd.f32 %v3578, %v3588
        %v3593 = vadd.f32 %v3579, %v3589
        %v3594 = vld [vmem:[%s468] sm:$0xff]
        %v3595 = vld [vmem:[%s468 + $0x8] sm:$0xff]
        %v3596 = vld [vmem:[%s468 + $0x10] sm:$0xff]
        %v3597 = vld [vmem:[%s468 + $0x18] sm:$0xff]
        %s3598 = sld [smem:[#allocation2 + $0x413]]
        %v3599 = vstv %s3598
        %v3600 = vmul.f32 %v3594, %v3599
        %v3601 = vmul.f32 %v3595, %v3599
        %v3602 = vmul.f32 %v3596, %v3599
        %v3603 = vmul.f32 %v3597, %v3599
        %v3604 = vadd.f32 %v3590, %v3600
        %v3605 = vadd.f32 %v3591, %v3601
        %v3606 = vadd.f32 %v3592, %v3602
        %v3607 = vadd.f32 %v3593, %v3603
        %v3608 = vld [vmem:[%s481] sm:$0xff]
        %v3609 = vld [vmem:[%s481 + $0x8] sm:$0xff]
        %v3610 = vld [vmem:[%s481 + $0x10] sm:$0xff]
        %v3611 = vld [vmem:[%s481 + $0x18] sm:$0xff]
        %s3612 = sld [smem:[#allocation2 + $0x414]]
        %v3613 = vstv %s3612
        %v3614 = vmul.f32 %v3608, %v3613
        %v3615 = vmul.f32 %v3609, %v3613
        %v3616 = vmul.f32 %v3610, %v3613
        %v3617 = vmul.f32 %v3611, %v3613
        %v3618 = vadd.f32 %v3604, %v3614
        %v3619 = vadd.f32 %v3605, %v3615
        %v3620 = vadd.f32 %v3606, %v3616
        %v3621 = vadd.f32 %v3607, %v3617
        %v3622 = vld [vmem:[%s494] sm:$0xff]
        %v3623 = vld [vmem:[%s494 + $0x8] sm:$0xff]
        %v3624 = vld [vmem:[%s494 + $0x10] sm:$0xff]
        %v3625 = vld [vmem:[%s494 + $0x18] sm:$0xff]
        %s3626 = sld [smem:[#allocation2 + $0x415]]
        %v3627 = vstv %s3626
        %v3628 = vmul.f32 %v3622, %v3627
        %v3629 = vmul.f32 %v3623, %v3627
        %v3630 = vmul.f32 %v3624, %v3627
        %v3631 = vmul.f32 %v3625, %v3627
        %v3632 = vadd.f32 %v3618, %v3628
        %v3633 = vadd.f32 %v3619, %v3629
        %v3634 = vadd.f32 %v3620, %v3630
        %v3635 = vadd.f32 %v3621, %v3631
        %v3636 = vld [vmem:[%s507] sm:$0xff]
        %v3637 = vld [vmem:[%s507 + $0x8] sm:$0xff]
        %v3638 = vld [vmem:[%s507 + $0x10] sm:$0xff]
        %v3639 = vld [vmem:[%s507 + $0x18] sm:$0xff]
        %s3640 = sld [smem:[#allocation2 + $0x416]]
        %v3641 = vstv %s3640
        %v3642 = vmul.f32 %v3636, %v3641
        %v3643 = vmul.f32 %v3637, %v3641
        %v3644 = vmul.f32 %v3638, %v3641
        %v3645 = vmul.f32 %v3639, %v3641
        %v3646 = vadd.f32 %v3632, %v3642
        %v3647 = vadd.f32 %v3633, %v3643
        %v3648 = vadd.f32 %v3634, %v3644
        %v3649 = vadd.f32 %v3635, %v3645
        %v3650 = vld [vmem:[%s520] sm:$0xff]
        %v3651 = vld [vmem:[%s520 + $0x8] sm:$0xff]
        %v3652 = vld [vmem:[%s520 + $0x10] sm:$0xff]
        %v3653 = vld [vmem:[%s520 + $0x18] sm:$0xff]
        %s3654 = sld [smem:[#allocation2 + $0x417]]
        %v3655 = vstv %s3654
        %v3656 = vmul.f32 %v3650, %v3655
        %v3657 = vmul.f32 %v3651, %v3655
        %v3658 = vmul.f32 %v3652, %v3655
        %v3659 = vmul.f32 %v3653, %v3655
        %v3660 = vadd.f32 %v3646, %v3656
        %v3661 = vadd.f32 %v3647, %v3657
        %v3662 = vadd.f32 %v3648, %v3658
        %v3663 = vadd.f32 %v3649, %v3659
        %v3664 = vld [vmem:[%s533] sm:$0xff]
        %v3665 = vld [vmem:[%s533 + $0x8] sm:$0xff]
        %v3666 = vld [vmem:[%s533 + $0x10] sm:$0xff]
        %v3667 = vld [vmem:[%s533 + $0x18] sm:$0xff]
        %s3668 = sld [smem:[#allocation2 + $0x418]]
        %v3669 = vstv %s3668
        %v3670 = vmul.f32 %v3664, %v3669
        %v3671 = vmul.f32 %v3665, %v3669
        %v3672 = vmul.f32 %v3666, %v3669
        %v3673 = vmul.f32 %v3667, %v3669
        %v3674 = vadd.f32 %v3660, %v3670
        %v3675 = vadd.f32 %v3661, %v3671
        %v3676 = vadd.f32 %v3662, %v3672
        %v3677 = vadd.f32 %v3663, %v3673
        %v3678 = vld [vmem:[%s546] sm:$0xff]
        %v3679 = vld [vmem:[%s546 + $0x8] sm:$0xff]
        %v3680 = vld [vmem:[%s546 + $0x10] sm:$0xff]
        %v3681 = vld [vmem:[%s546 + $0x18] sm:$0xff]
        %s3682 = sld [smem:[#allocation2 + $0x419]]
        %v3683 = vstv %s3682
        %v3684 = vmul.f32 %v3678, %v3683
        %v3685 = vmul.f32 %v3679, %v3683
        %v3686 = vmul.f32 %v3680, %v3683
        %v3687 = vmul.f32 %v3681, %v3683
        %v3688 = vadd.f32 %v3674, %v3684
        %v3689 = vadd.f32 %v3675, %v3685
        %v3690 = vadd.f32 %v3676, %v3686
        %v3691 = vadd.f32 %v3677, %v3687
        %v3692 = vld [vmem:[%s559] sm:$0xff]
        %v3693 = vld [vmem:[%s559 + $0x8] sm:$0xff]
        %v3694 = vld [vmem:[%s559 + $0x10] sm:$0xff]
        %v3695 = vld [vmem:[%s559 + $0x18] sm:$0xff]
        %s3696 = sld [smem:[#allocation2 + $0x41a]]
        %v3697 = vstv %s3696
        %v3698 = vmul.f32 %v3692, %v3697
        %v3699 = vmul.f32 %v3693, %v3697
        %v3700 = vmul.f32 %v3694, %v3697
        %v3701 = vmul.f32 %v3695, %v3697
        %v3702 = vadd.f32 %v3688, %v3698
        %v3703 = vadd.f32 %v3689, %v3699
        %v3704 = vadd.f32 %v3690, %v3700
        %v3705 = vadd.f32 %v3691, %v3701
        %v3706 = vld [vmem:[%s572] sm:$0xff]
        %v3707 = vld [vmem:[%s572 + $0x8] sm:$0xff]
        %v3708 = vld [vmem:[%s572 + $0x10] sm:$0xff]
        %v3709 = vld [vmem:[%s572 + $0x18] sm:$0xff]
        %s3710 = sld [smem:[#allocation2 + $0x41b]]
        %v3711 = vstv %s3710
        %v3712 = vmul.f32 %v3706, %v3711
        %v3713 = vmul.f32 %v3707, %v3711
        %v3714 = vmul.f32 %v3708, %v3711
        %v3715 = vmul.f32 %v3709, %v3711
        %v3716 = vadd.f32 %v3702, %v3712
        %v3717 = vadd.f32 %v3703, %v3713
        %v3718 = vadd.f32 %v3704, %v3714
        %v3719 = vadd.f32 %v3705, %v3715
        %s3720 = scalar_lea.vmem %s237, 256
        %3721 = vst [vmem:[%s3720] sm:$0xff] %v3716
        %3722 = vst [vmem:[%s3720 + $0x8] sm:$0xff] %v3717
        %3723 = vst [vmem:[%s3720 + $0x10] sm:$0xff] %v3718
        %3724 = vst [vmem:[%s3720 + $0x18] sm:$0xff] %v3719
        %v3725 = vmul.f32 %v3716, %v3716
        %v3726 = vmul.f32 %v3717, %v3717
        %v3727 = vmul.f32 %v3718, %v3718
        %v3728 = vmul.f32 %v3719, %v3719
        %v3729 = vadd.f32 %v3326, %v3725
        %v3730 = vadd.f32 %v3327, %v3726
        %v3731 = vadd.f32 %v3328, %v3727
        %v3732 = vadd.f32 %v3329, %v3728
        %v3733 = vadd.f32 %v3729, 1.0
        %v3734 = vadd.f32 %v3730, 1.0
        %v3735 = vadd.f32 %v3731, 1.0
        %v3736 = vadd.f32 %v3732, 1.0
        %v3737 = vrsqrt.pop %v3733
        %v3738 = vmul.f32 %v3733, %v3737
        %vm3739 = vcmp.eq.f32.partialorder %v3733, inf
        %v3740 = vsel %vm3739, %v3733, %v3738
        %vm3741 = vcmp.eq.f32.partialorder %v3733, 0.0
        %v3742 = vand.u32 %v3733, 2147483648
        %v3743 = vsel %vm3741, %v3742, %v3740
        %v3744 = vrsqrt.pop %v3734
        %v3745 = vmul.f32 %v3734, %v3744
        %vm3746 = vcmp.eq.f32.partialorder %v3734, inf
        %v3747 = vsel %vm3746, %v3734, %v3745
        %vm3748 = vcmp.eq.f32.partialorder %v3734, 0.0
        %v3749 = vand.u32 %v3734, 2147483648
        %v3750 = vsel %vm3748, %v3749, %v3747
        %v3751 = vrsqrt.pop %v3735
        %v3752 = vmul.f32 %v3735, %v3751
        %vm3753 = vcmp.eq.f32.partialorder %v3735, inf
        %v3754 = vsel %vm3753, %v3735, %v3752
        %vm3755 = vcmp.eq.f32.partialorder %v3735, 0.0
        %v3756 = vand.u32 %v3735, 2147483648
        %v3757 = vsel %vm3755, %v3756, %v3754
        %v3758 = vrsqrt.pop %v3736
        %v3759 = vmul.f32 %v3736, %v3758
        %vm3760 = vcmp.eq.f32.partialorder %v3736, inf
        %v3761 = vsel %vm3760, %v3736, %v3759
        %vm3762 = vcmp.eq.f32.partialorder %v3736, 0.0
        %v3763 = vand.u32 %v3736, 2147483648
        %v3764 = vsel %vm3762, %v3763, %v3761
        %v3765 = vmax.f32 %v3729, 1e-15
        %v3766 = vmax.f32 %v3730, 1e-15
        %v3767 = vmax.f32 %v3731, 1e-15
        %v3768 = vmax.f32 %v3732, 1e-15
        %v3769 = vrsqrt.pop %v3765
        %v3770 = vrsqrt.pop %v3766
        %v3771 = vrsqrt.pop %v3767
        %v3772 = vrsqrt.pop %v3768
        %v3773 = vmul.f32 %v3729, %v3769
        %v3774 = vmul.f32 %v3730, %v3770
        %v3775 = vmul.f32 %v3731, %v3771
        %v3776 = vmul.f32 %v3732, %v3772
        %v3777 = vadd.f32 %v3743, %v3773
        %v3778 = vadd.f32 %v3750, %v3774
        %v3779 = vadd.f32 %v3757, %v3775
        %v3780 = vadd.f32 %v3764, %v3776
        %v3781 = vlog2.pop %v3777
        %v3782 = vmul.f32 %v3781, 0.6931472
        %v3783 = vlog2.pop %v3778
        %v3784 = vmul.f32 %v3783, 0.6931472
        %v3785 = vlog2.pop %v3779
        %v3786 = vmul.f32 %v3785, 0.6931472
        %v3787 = vlog2.pop %v3780
        %v3788 = vmul.f32 %v3787, 0.6931472
        %v3789 = vmul.f32 %v3782, 0.999995
        %v3790 = vmul.f32 %v3784, 0.999995
        %v3791 = vmul.f32 %v3786, 0.999995
        %v3792 = vmul.f32 %v3788, 0.999995
        %v3793 = vmul.f32 %v3789, 1.442695
        %v3794 = vpow.pop %v3793
        %v3795 = vmul.f32 %v3790, 1.442695
        %v3796 = vpow.pop %v3795
        %v3797 = vmul.f32 %v3791, 1.442695
        %v3798 = vpow.pop %v3797
        %v3799 = vmul.f32 %v3792, 1.442695
        %v3800 = vpow.pop %v3799
        %v3801 = vrcp.pop %v3794
        %v3802 = vrcp.pop %v3796
        %v3803 = vrcp.pop %v3798
        %v3804 = vrcp.pop %v3800
        %v3805 = vmul.f32 %v3794, %v3801
        %v3806 = vmul.f32 %v3796, %v3802
        %v3807 = vmul.f32 %v3798, %v3803
        %v3808 = vmul.f32 %v3800, %v3804
        %v3809 = vsub.f32 2.0, %v3805
        %v3810 = vsub.f32 2.0, %v3806
        %v3811 = vsub.f32 2.0, %v3807
        %v3812 = vsub.f32 2.0, %v3808
        %v3813 = vmul.f32 %v3801, %v3809
        %v3814 = vmul.f32 %v3802, %v3810
        %v3815 = vmul.f32 %v3803, %v3811
        %v3816 = vmul.f32 %v3804, %v3812
        %v3817 = vsub.f32 %v3794, %v3813
        %v3818 = vsub.f32 %v3796, %v3814
        %v3819 = vsub.f32 %v3798, %v3815
        %v3820 = vsub.f32 %v3800, %v3816
        %v3821 = vmul.f32 %v3817, 0.5
        %v3822 = vmul.f32 %v3818, 0.5
        %v3823 = vmul.f32 %v3819, 0.5
        %v3824 = vmul.f32 %v3820, 0.5
        %v3825 = vmul.f32 %v3821, %v3769
        %v3826 = vmul.f32 %v3822, %v3770
        %v3827 = vmul.f32 %v3823, %v3771
        %v3828 = vmul.f32 %v3824, %v3772
        %v3829 = vld [vmem:[%s903] sm:$0xff]
        %v3830 = vld [vmem:[%s903 + $0x8] sm:$0xff]
        %v3831 = vld [vmem:[%s903 + $0x10] sm:$0xff]
        %v3832 = vld [vmem:[%s903 + $0x18] sm:$0xff]
        %v3833 = vmul.f32 %v3829, %v3825
        %v3834 = vmul.f32 %v3830, %v3826
        %v3835 = vmul.f32 %v3831, %v3827
        %v3836 = vmul.f32 %v3832, %v3828
        %v3837 = vmax.f32 %v3833, 0.0
        %v3838 = vmax.f32 %v3834, 0.0
        %v3839 = vmax.f32 %v3835, 0.0
        %v3840 = vmax.f32 %v3836, 0.0
        %3841 = vst [vmem:[%s903] sm:$0xff] %v3837
        %3842 = vst [vmem:[%s903 + $0x8] sm:$0xff] %v3838
        %3843 = vst [vmem:[%s903 + $0x10] sm:$0xff] %v3839
        %3844 = vst [vmem:[%s903 + $0x18] sm:$0xff] %v3840
        %v3845 = vmul.f32 %v3837, %v3837
        %v3846 = vmul.f32 %v3838, %v3838
        %v3847 = vmul.f32 %v3839, %v3839
        %v3848 = vmul.f32 %v3840, %v3840
        %v3849 = vld [vmem:[%s1302] sm:$0xff]
        %v3850 = vld [vmem:[%s1302 + $0x8] sm:$0xff]
        %v3851 = vld [vmem:[%s1302 + $0x10] sm:$0xff]
        %v3852 = vld [vmem:[%s1302 + $0x18] sm:$0xff]
        %v3853 = vmul.f32 %v3849, %v3825
        %v3854 = vmul.f32 %v3850, %v3826
        %v3855 = vmul.f32 %v3851, %v3827
        %v3856 = vmul.f32 %v3852, %v3828
        %v3857 = vmax.f32 %v3853, 0.0
        %v3858 = vmax.f32 %v3854, 0.0
        %v3859 = vmax.f32 %v3855, 0.0
        %v3860 = vmax.f32 %v3856, 0.0
        %3861 = vst [vmem:[%s1302] sm:$0xff] %v3857
        %3862 = vst [vmem:[%s1302 + $0x8] sm:$0xff] %v3858
        %3863 = vst [vmem:[%s1302 + $0x10] sm:$0xff] %v3859
        %3864 = vst [vmem:[%s1302 + $0x18] sm:$0xff] %v3860
        %v3865 = vmul.f32 %v3857, %v3857
        %v3866 = vmul.f32 %v3858, %v3858
        %v3867 = vmul.f32 %v3859, %v3859
        %v3868 = vmul.f32 %v3860, %v3860
        %v3869 = vadd.f32 %v3845, %v3865
        %v3870 = vadd.f32 %v3846, %v3866
        %v3871 = vadd.f32 %v3847, %v3867
        %v3872 = vadd.f32 %v3848, %v3868
        %v3873 = vld [vmem:[%s1705] sm:$0xff]
        %v3874 = vld [vmem:[%s1705 + $0x8] sm:$0xff]
        %v3875 = vld [vmem:[%s1705 + $0x10] sm:$0xff]
        %v3876 = vld [vmem:[%s1705 + $0x18] sm:$0xff]
        %v3877 = vmul.f32 %v3873, %v3825
        %v3878 = vmul.f32 %v3874, %v3826
        %v3879 = vmul.f32 %v3875, %v3827
        %v3880 = vmul.f32 %v3876, %v3828
        %v3881 = vmax.f32 %v3877, 0.0
        %v3882 = vmax.f32 %v3878, 0.0
        %v3883 = vmax.f32 %v3879, 0.0
        %v3884 = vmax.f32 %v3880, 0.0
        %3885 = vst [vmem:[%s1705] sm:$0xff] %v3881
        %3886 = vst [vmem:[%s1705 + $0x8] sm:$0xff] %v3882
        %3887 = vst [vmem:[%s1705 + $0x10] sm:$0xff] %v3883
        %3888 = vst [vmem:[%s1705 + $0x18] sm:$0xff] %v3884
        %v3889 = vmul.f32 %v3881, %v3881
        %v3890 = vmul.f32 %v3882, %v3882
        %v3891 = vmul.f32 %v3883, %v3883
        %v3892 = vmul.f32 %v3884, %v3884
        %v3893 = vadd.f32 %v3869, %v3889
        %v3894 = vadd.f32 %v3870, %v3890
        %v3895 = vadd.f32 %v3871, %v3891
        %v3896 = vadd.f32 %v3872, %v3892
        %v3897 = vld [vmem:[%s2108] sm:$0xff]
        %v3898 = vld [vmem:[%s2108 + $0x8] sm:$0xff]
        %v3899 = vld [vmem:[%s2108 + $0x10] sm:$0xff]
        %v3900 = vld [vmem:[%s2108 + $0x18] sm:$0xff]
        %v3901 = vmul.f32 %v3897, %v3825
        %v3902 = vmul.f32 %v3898, %v3826
        %v3903 = vmul.f32 %v3899, %v3827
        %v3904 = vmul.f32 %v3900, %v3828
        %v3905 = vmax.f32 %v3901, 0.0
        %v3906 = vmax.f32 %v3902, 0.0
        %v3907 = vmax.f32 %v3903, 0.0
        %v3908 = vmax.f32 %v3904, 0.0
        %3909 = vst [vmem:[%s2108] sm:$0xff] %v3905
        %3910 = vst [vmem:[%s2108 + $0x8] sm:$0xff] %v3906
        %3911 = vst [vmem:[%s2108 + $0x10] sm:$0xff] %v3907
        %3912 = vst [vmem:[%s2108 + $0x18] sm:$0xff] %v3908
        %v3913 = vmul.f32 %v3905, %v3905
        %v3914 = vmul.f32 %v3906, %v3906
        %v3915 = vmul.f32 %v3907, %v3907
        %v3916 = vmul.f32 %v3908, %v3908
        %v3917 = vadd.f32 %v3893, %v3913
        %v3918 = vadd.f32 %v3894, %v3914
        %v3919 = vadd.f32 %v3895, %v3915
        %v3920 = vadd.f32 %v3896, %v3916
        %v3921 = vld [vmem:[%s2511] sm:$0xff]
        %v3922 = vld [vmem:[%s2511 + $0x8] sm:$0xff]
        %v3923 = vld [vmem:[%s2511 + $0x10] sm:$0xff]
        %v3924 = vld [vmem:[%s2511 + $0x18] sm:$0xff]
        %v3925 = vmul.f32 %v3921, %v3825
        %v3926 = vmul.f32 %v3922, %v3826
        %v3927 = vmul.f32 %v3923, %v3827
        %v3928 = vmul.f32 %v3924, %v3828
        %v3929 = vmax.f32 %v3925, 0.0
        %v3930 = vmax.f32 %v3926, 0.0
        %v3931 = vmax.f32 %v3927, 0.0
        %v3932 = vmax.f32 %v3928, 0.0
        %3933 = vst [vmem:[%s2511] sm:$0xff] %v3929
        %3934 = vst [vmem:[%s2511 + $0x8] sm:$0xff] %v3930
        %3935 = vst [vmem:[%s2511 + $0x10] sm:$0xff] %v3931
        %3936 = vst [vmem:[%s2511 + $0x18] sm:$0xff] %v3932
        %v3937 = vmul.f32 %v3929, %v3929
        %v3938 = vmul.f32 %v3930, %v3930
        %v3939 = vmul.f32 %v3931, %v3931
        %v3940 = vmul.f32 %v3932, %v3932
        %v3941 = vadd.f32 %v3917, %v3937
        %v3942 = vadd.f32 %v3918, %v3938
        %v3943 = vadd.f32 %v3919, %v3939
        %v3944 = vadd.f32 %v3920, %v3940
        %v3945 = vld [vmem:[%s2914] sm:$0xff]
        %v3946 = vld [vmem:[%s2914 + $0x8] sm:$0xff]
        %v3947 = vld [vmem:[%s2914 + $0x10] sm:$0xff]
        %v3948 = vld [vmem:[%s2914 + $0x18] sm:$0xff]
        %v3949 = vmul.f32 %v3945, %v3825
        %v3950 = vmul.f32 %v3946, %v3826
        %v3951 = vmul.f32 %v3947, %v3827
        %v3952 = vmul.f32 %v3948, %v3828
        %v3953 = vmax.f32 %v3949, 0.0
        %v3954 = vmax.f32 %v3950, 0.0
        %v3955 = vmax.f32 %v3951, 0.0
        %v3956 = vmax.f32 %v3952, 0.0
        %3957 = vst [vmem:[%s2914] sm:$0xff] %v3953
        %3958 = vst [vmem:[%s2914 + $0x8] sm:$0xff] %v3954
        %3959 = vst [vmem:[%s2914 + $0x10] sm:$0xff] %v3955
        %3960 = vst [vmem:[%s2914 + $0x18] sm:$0xff] %v3956
        %v3961 = vmul.f32 %v3953, %v3953
        %v3962 = vmul.f32 %v3954, %v3954
        %v3963 = vmul.f32 %v3955, %v3955
        %v3964 = vmul.f32 %v3956, %v3956
        %v3965 = vadd.f32 %v3941, %v3961
        %v3966 = vadd.f32 %v3942, %v3962
        %v3967 = vadd.f32 %v3943, %v3963
        %v3968 = vadd.f32 %v3944, %v3964
        %v3969 = vld [vmem:[%s3317] sm:$0xff]
        %v3970 = vld [vmem:[%s3317 + $0x8] sm:$0xff]
        %v3971 = vld [vmem:[%s3317 + $0x10] sm:$0xff]
        %v3972 = vld [vmem:[%s3317 + $0x18] sm:$0xff]
        %v3973 = vmul.f32 %v3969, %v3825
        %v3974 = vmul.f32 %v3970, %v3826
        %v3975 = vmul.f32 %v3971, %v3827
        %v3976 = vmul.f32 %v3972, %v3828
        %v3977 = vmax.f32 %v3973, 0.0
        %v3978 = vmax.f32 %v3974, 0.0
        %v3979 = vmax.f32 %v3975, 0.0
        %v3980 = vmax.f32 %v3976, 0.0
        %3981 = vst [vmem:[%s3317] sm:$0xff] %v3977
        %3982 = vst [vmem:[%s3317 + $0x8] sm:$0xff] %v3978
        %3983 = vst [vmem:[%s3317 + $0x10] sm:$0xff] %v3979
        %3984 = vst [vmem:[%s3317 + $0x18] sm:$0xff] %v3980
        %v3985 = vmul.f32 %v3977, %v3977
        %v3986 = vmul.f32 %v3978, %v3978
        %v3987 = vmul.f32 %v3979, %v3979
        %v3988 = vmul.f32 %v3980, %v3980
        %v3989 = vadd.f32 %v3965, %v3985
        %v3990 = vadd.f32 %v3966, %v3986
        %v3991 = vadd.f32 %v3967, %v3987
        %v3992 = vadd.f32 %v3968, %v3988
        %v3993 = vld [vmem:[%s3720] sm:$0xff]
        %v3994 = vld [vmem:[%s3720 + $0x8] sm:$0xff]
        %v3995 = vld [vmem:[%s3720 + $0x10] sm:$0xff]
        %v3996 = vld [vmem:[%s3720 + $0x18] sm:$0xff]
        %v3997 = vmul.f32 %v3993, %v3825
        %v3998 = vmul.f32 %v3994, %v3826
        %v3999 = vmul.f32 %v3995, %v3827
        %v4000 = vmul.f32 %v3996, %v3828
        %v4001 = vmax.f32 %v3997, 0.0
        %v4002 = vmax.f32 %v3998, 0.0
        %v4003 = vmax.f32 %v3999, 0.0
        %v4004 = vmax.f32 %v4000, 0.0
        %4005 = vst [vmem:[%s3720] sm:$0xff] %v4001
        %4006 = vst [vmem:[%s3720 + $0x8] sm:$0xff] %v4002
        %4007 = vst [vmem:[%s3720 + $0x10] sm:$0xff] %v4003
        %4008 = vst [vmem:[%s3720 + $0x18] sm:$0xff] %v4004
        %v4009 = vmul.f32 %v4001, %v4001
        %v4010 = vmul.f32 %v4002, %v4002
        %v4011 = vmul.f32 %v4003, %v4003
        %v4012 = vmul.f32 %v4004, %v4004
        %v4013 = vadd.f32 %v3989, %v4009
        %v4014 = vadd.f32 %v3990, %v4010
        %v4015 = vadd.f32 %v3991, %v4011
        %v4016 = vadd.f32 %v3992, %v4012
        %v4017 = vadd.f32 %v4013, 1.0
        %v4018 = vadd.f32 %v4014, 1.0
        %v4019 = vadd.f32 %v4015, 1.0
        %v4020 = vadd.f32 %v4016, 1.0
        %v4021 = vrsqrt.pop %v4017
        %v4022 = vmul.f32 %v4017, %v4021
        %vm4023 = vcmp.eq.f32.partialorder %v4017, inf
        %v4024 = vsel %vm4023, %v4017, %v4022
        %vm4025 = vcmp.eq.f32.partialorder %v4017, 0.0
        %v4026 = vand.u32 %v4017, 2147483648
        %v4027 = vsel %vm4025, %v4026, %v4024
        %v4028 = vrsqrt.pop %v4018
        %v4029 = vmul.f32 %v4018, %v4028
        %vm4030 = vcmp.eq.f32.partialorder %v4018, inf
        %v4031 = vsel %vm4030, %v4018, %v4029
        %vm4032 = vcmp.eq.f32.partialorder %v4018, 0.0
        %v4033 = vand.u32 %v4018, 2147483648
        %v4034 = vsel %vm4032, %v4033, %v4031
        %v4035 = vrsqrt.pop %v4019
        %v4036 = vmul.f32 %v4019, %v4035
        %vm4037 = vcmp.eq.f32.partialorder %v4019, inf
        %v4038 = vsel %vm4037, %v4019, %v4036
        %vm4039 = vcmp.eq.f32.partialorder %v4019, 0.0
        %v4040 = vand.u32 %v4019, 2147483648
        %v4041 = vsel %vm4039, %v4040, %v4038
        %v4042 = vrsqrt.pop %v4020
        %v4043 = vmul.f32 %v4020, %v4042
        %vm4044 = vcmp.eq.f32.partialorder %v4020, inf
        %v4045 = vsel %vm4044, %v4020, %v4043
        %vm4046 = vcmp.eq.f32.partialorder %v4020, 0.0
        %v4047 = vand.u32 %v4020, 2147483648
        %v4048 = vsel %vm4046, %v4047, %v4045
        %4049 = vst [vmem:[%s237] sm:$0xff] %v4027
        %4050 = vst [vmem:[%s237 + $0x8] sm:$0xff] %v4034
        %4051 = vst [vmem:[%s237 + $0x10] sm:$0xff] %v4041
        %4052 = vst [vmem:[%s237 + $0x18] sm:$0xff] %v4048
        %s4053 = smul.u32 4, %s21
        %p4054 = scmp.lt.s32.totalorder %s20, 1
        %s4055 = scalar_select %p4054, %s20, 1
        %p4056 = scmp.lt.s32.totalorder %s4053, 3
        %s4057 = scalar_select %p4056, %s4053, 3
        %s4058 = smul.addr %s4055, 36
        %s4059 = sadd.s32 %s4057, %s4058
        %s4060 = smul.addr %s4059, 8
        %s4061 = scalar_lea.vmem %s3, %s4060
        // Predicated region
        $region41: #{lorentz_input_block.1} parent=31 // pred_check
          %p4062 = pneg %p118
        $region42: #{lorentz_input_block.1} parent=31 // pred_check_branch
          %4064 = sbr.rel (%p4062) target = $region44
        $region43: #{lorentz_input_block.1} parent=31 // pred_region
          %s4065 = smul.u32 4, %s21
        $region44: #{lorentz_input_block.1} parent=31 // pred_fallthru
          _
      $region32: #{lorentz_input_block.1} parent=5 // pred_fallthru
        _
      %p4066 = scmp.le.s32.totalorder 2, %s11
      // Predicated region
      $region45: #{lorentz_input_block.1} parent=5 // pred_check
        %p4067 = pneg %p4066
      $region46: #{lorentz_input_block.1} parent=5 // pred_check_branch
        %4069 = sbr.rel (%p4067) target = $region48
      $region47: #{lorentz_input_block.1} parent=5 // pred_region
        %s4070 = ssub.s32 %s11, 2
        // Predicated region
        $region49: #{lorentz_input_block.1} parent=47 // pred_check
          %p4071 = pneg %p124
        $region50: #{lorentz_input_block.1} parent=47 // pred_check_branch
          %4073 = sbr.rel (%p4071) target = $region52
        $region51: #{lorentz_input_block.1} parent=47 // pred_region
          %s4074 = smul.u32 4, %s23
          %p4075 = scmp.lt.s32.totalorder %s22, 1
          %s4076 = scalar_select %p4075, %s22, 1
          %p4077 = scmp.lt.s32.totalorder %s4074, 3
          %s4078 = scalar_select %p4077, %s4074, 3
          %s4079 = smul.addr %s4076, 36
          %s4080 = sadd.s32 %s4078, %s4079
          %s4081 = smul.addr %s4080, 8
          %s4082 = scalar_lea.vmem %s3, %s4081
        $region52: #{lorentz_input_block.1} parent=47 // pred_fallthru
          _
      $region48: #{lorentz_input_block.1} parent=5 // pred_fallthru
        _
    $region6: #{lorentz_input_block.1} parent=1 // loop_footer
      %s15 = sadd.s32 1, %s11
    $region7: #{lorentz_input_block.1} parent=1 // loop_footer_branch
      %10 = sbr.rel target = $region3
    $region8: #{lorentz_input_block.1} parent=1 // loop_exit
      _
    %4083 = vsyncpa [#allocation3], 1
    %s4084 = scalar_lea.sflag [#allocation3], 1
    %4085 = vsyncpa %s4084, 1
    %4086 = vsyncpa [#allocation5], 1

</llo_original>
